<compile_context>
chip_gen: v7x
topology: tpu7x:2x2x1
jax: 0.10.0
libtpu: 0.0.40
codegen_flags: <defaults>
</compile_context>

<pallas_src>
import math
import functools

import jax
import jax.numpy as jnp
from jax.experimental import pallas as pl
from jax.experimental.pallas import tpu as pltpu

NEG_INF = -1e9          # additive mask value (equivalent to -inf after softmax)
LN_EPS = 1e-5
VMEM_LIMIT = 32 * 1024 * 1024   # >= v5e's 16 MiB scoped default, <= every chip's physical VMEM


# ----------------------------- tiling helpers -----------------------------

def _row_block(M, max_rows=512):
    """Row-tile size: multiple of 8 and >=2 grid steps when possible (keeps both v7x TCs busy)."""
    if M <= 8:
        return M, 1
    bm = min(max_rows, ((((M + 1) // 2) + 7) // 8) * 8)
    return bm, pl.cdiv(M, bm)


def _cparams(n_par):
    return pltpu.CompilerParams(dimension_semantics=("parallel",) * n_par,
                                vmem_limit_bytes=VMEM_LIMIT)


# ----------------------------- in-kernel math helpers -----------------------------

def _ln_math(x, g, b):
    mean = jnp.mean(x, axis=-1, keepdims=True)
    c = x - mean
    var = jnp.mean(c * c, axis=-1, keepdims=True)
    return c * jax.lax.rsqrt(var + LN_EPS) * g + b


def _mha_math(q, k, v, bias, nhead, hd):
    """q (L, E) bf16 (pre-scaled by 1/sqrt(hd)); k, v (S, E) bf16; bias broadcastable to (L, S) f32.
    Per-head loop keeps the f32 score tensor at (L, S) per head (VMEM-friendly on v7x)."""
    ctx = []
    for h in range(nhead):
        sl = slice(h * hd, (h + 1) * hd)
        s = jax.lax.dot_general(q[:, sl], k[:, sl], (((1,), (1,)), ((), ())),
                                preferred_element_type=jnp.float32)      # (L, S)
        s = s + bias
        s = s - jnp.max(s, axis=-1, keepdims=True)
        p = jnp.exp(s)                                                   # f32 VPU/EUP math
        p = p * pl.reciprocal(jnp.sum(p, axis=-1, keepdims=True), approx=True)
        ctx.append(jnp.dot(p.astype(jnp.bfloat16), v[:, sl],
                           preferred_element_type=jnp.float32))          # (L, hd)
    return jnp.concatenate(ctx, axis=-1)                                 # (L, E) head-merged


# ----------------------------- Pallas kernels -----------------------------

def _self_attn_block_kernel(x_ref, am_ref, kpm_ref, wqkv_ref, bqkv_ref,
                            wo_ref, bo_ref, g_ref, beta_ref, o_ref, *, nhead):
    # One batch element: LN(x + OutProj(MHA(QKV(x)))) fused in a single kernel.
    x = x_ref[0].astype(jnp.float32)                                     # (L, E) residual
    E = x.shape[-1]
    qkv = jnp.dot(x.astype(jnp.bfloat16), wqkv_ref[...],
                  preferred_element_type=jnp.float32) + bqkv_ref[...]    # (L, 3E)
    q = qkv[:, :E].astype(jnp.bfloat16)
    k = qkv[:, E:2 * E].astype(jnp.bfloat16)
    v = qkv[:, 2 * E:].astype(jnp.bfloat16)
    bias = am_ref[...] + kpm_ref[0]                                      # (L, S) built in-kernel
    ctx = _mha_math(q, k, v, bias, nhead, E // nhead)                    # (L, E) f32
    y = jnp.dot(ctx.astype(jnp.bfloat16), wo_ref[...],
                preferred_element_type=jnp.float32) + bo_ref[...]
    o_ref[0] = _ln_math(x + y, g_ref[...], beta_ref[...]).astype(o_ref.dtype)


def _cross_attn_block_kernel(x_ref, mem_ref, kpm_ref, wq_ref, bq_ref, wkv_ref, bkv_ref,
                             wo_ref, bo_ref, g_ref, beta_ref, o_ref, *, nhead):
    # One batch element: LN(x + OutProj(MHA(Q(x), KV(memory)))) fused.
    x = x_ref[0].astype(jnp.float32)                                     # (L, E)
    mem = mem_ref[0].astype(jnp.bfloat16)                                # (S, E)
    E = x.shape[-1]
    q = (jnp.dot(x.astype(jnp.bfloat16), wq_ref[...],
                 preferred_element_type=jnp.float32) + bq_ref[...]).astype(jnp.bfloat16)
    kv = jnp.dot(mem, wkv_ref[...], preferred_element_type=jnp.float32) + bkv_ref[...]
    k = kv[:, :E].astype(jnp.bfloat16)
    v = kv[:, E:].astype(jnp.bfloat16)
    bias = kpm_ref[0]                                                    # (1, S) broadcasts over L
    ctx = _mha_math(q, k, v, bias, nhead, E // nhead)
    y = jnp.dot(ctx.astype(jnp.bfloat16), wo_ref[...],
                preferred_element_type=jnp.float32) + bo_ref[...]
    o_ref[0] = _ln_math(x + y, g_ref[...], beta_ref[...]).astype(o_ref.dtype)


def _ffn_add_ln_kernel(x_ref, w1_ref, b1_ref, w2_ref, b2_ref, g_ref, beta_ref, o_ref):
    # LN(x + relu(x @ W1 + b1) @ W2 + b2); hidden never leaves VMEM.
    x = x_ref[...].astype(jnp.float32)
    h = jnp.dot(x.astype(jnp.bfloat16), w1_ref[...],
                preferred_element_type=jnp.float32) + b1_ref[...]
    h = jnp.maximum(h, 0.0)
    y = jnp.dot(h.astype(jnp.bfloat16), w2_ref[...],
                preferred_element_type=jnp.float32) + b2_ref[...]
    o_ref[...] = _ln_math(x + y, g_ref[...], beta_ref[...]).astype(o_ref.dtype)


def _ln_kernel(x_ref, g_ref, b_ref, o_ref):
    x = x_ref[...].astype(jnp.float32)
    o_ref[...] = _ln_math(x, g_ref[...], b_ref[...]).astype(o_ref.dtype)


def _linear_kernel(x_ref, w_ref, b_ref, o_ref):
    x = x_ref[...].astype(jnp.bfloat16)
    y = jnp.dot(x, w_ref[...], preferred_element_type=jnp.float32) + b_ref[...]
    o_ref[...] = y.astype(o_ref.dtype)


# ----------------------------- pallas_call wrappers -----------------------------

def self_attn_block(x, attn_mask, kpm_bias, p, ln_g, ln_b, nhead):
    """x: (N, L, E) f32; attn_mask: (L, L) f32 additive; kpm_bias: (N, L_keys) f32 additive."""
    N, L, E = x.shape
    kpm3 = kpm_bias[:, None, :]                                  # (N, 1, S) — free view
    kernel = functools.partial(_self_attn_block_kernel, nhead=nhead)
    return pl.pallas_call(
        kernel,
        out_shape=jax.ShapeDtypeStruct((N, L, E), jnp.float32),
        grid=(N,),
        in_specs=[pl.BlockSpec((1, L, E), lambda i: (i, 0, 0)),
                  pl.BlockSpec((L, L), lambda i: (0, 0)),
                  pl.BlockSpec((1, 1, L), lambda i: (i, 0, 0)),
                  pl.BlockSpec((E, 3 * E), lambda i: (0, 0)),
                  pl.BlockSpec((1, 3 * E), lambda i: (0, 0)),
                  pl.BlockSpec((E, E), lambda i: (0, 0)),
                  pl.BlockSpec((1, E), lambda i: (0, 0)),
                  pl.BlockSpec((1, E), lambda i: (0, 0)),
                  pl.BlockSpec((1, E), lambda i: (0, 0))],
        out_specs=pl.BlockSpec((1, L, E), lambda i: (i, 0, 0)),
        compiler_params=_cparams(1),
    )(x, attn_mask, kpm3, p["in_w_t"], p["in_b"], p["out_w_t"], p["out_b"], ln_g, ln_b)


def cross_attn_block(x, memory, kpm_bias, p, ln_g, ln_b, nhead):
    """x: (N, L, E); memory: (N, S, E); kpm_bias: (N, S) f32 additive."""
    N, L, E = x.shape
    S = memory.shape[1]
    kpm3 = kpm_bias[:, None, :]
    kernel = functools.partial(_cross_attn_block_kernel, nhead=nhead)
    return pl.pallas_call(
        kernel,
        out_shape=jax.ShapeDtypeStruct((N, L, E), jnp.float32),
        grid=(N,),
        in_specs=[pl.BlockSpec((1, L, E), lambda i: (i, 0, 0)),
                  pl.BlockSpec((1, S, E), lambda i: (i, 0, 0)),
                  pl.BlockSpec((1, 1, S), lambda i: (i, 0, 0)),
                  pl.BlockSpec((E, E), lambda i: (0, 0)),
                  pl.BlockSpec((1, E), lambda i: (0, 0)),
                  pl.BlockSpec((E, 2 * E), lambda i: (0, 0)),
                  pl.BlockSpec((1, 2 * E), lambda i: (0, 0)),
                  pl.BlockSpec((E, E), lambda i: (0, 0)),
                  pl.BlockSpec((1, E), lambda i: (0, 0)),
                  pl.BlockSpec((1, E), lambda i: (0, 0)),
                  pl.BlockSpec((1, E), lambda i: (0, 0))],
        out_specs=pl.BlockSpec((1, L, E), lambda i: (i, 0, 0)),
        compiler_params=_cparams(1),
    )(x, memory, kpm3, p["q_w_t"], p["q_b"], p["kv_w_t"], p["kv_b"],
      p["out_w_t"], p["out_b"], ln_g, ln_b)


def ffn_add_layernorm(x2d, w1_t, b1, w2_t, b2, g2, beta2):
    M, E = x2d.shape
    FF = w1_t.shape[1]
    bm, gm = _row_block(M)
    return pl.pallas_call(
        _ffn_add_ln_kernel,
        out_shape=jax.ShapeDtypeStruct((M, E), jnp.float32),
        grid=(gm,),
        in_specs=[pl.BlockSpec((bm, E), lambda i: (i, 0)),
                  pl.BlockSpec((E, FF), lambda i: (0, 0)),
                  pl.BlockSpec((1, FF), lambda i: (0, 0)),
                  pl.BlockSpec((FF, E), lambda i: (0, 0)),
                  pl.BlockSpec((1, E), lambda i: (0, 0)),
                  pl.BlockSpec((1, E), lambda i: (0, 0)),
                  pl.BlockSpec((1, E), lambda i: (0, 0))],
        out_specs=pl.BlockSpec((bm, E), lambda i: (i, 0)),
        compiler_params=_cparams(1),
    )(x2d, w1_t, b1, w2_t, b2, g2, beta2)


def layer_norm(x2d, g2, b2):
    M, E = x2d.shape
    bm, gm = _row_block(M)
    return pl.pallas_call(
        _ln_kernel,
        out_shape=jax.ShapeDtypeStruct((M, E), jnp.float32),
        grid=(gm,),
        in_specs=[pl.BlockSpec((bm, E), lambda i: (i, 0)),
                  pl.BlockSpec((1, E), lambda i: (0, 0)),
                  pl.BlockSpec((1, E), lambda i: (0, 0))],
        out_specs=pl.BlockSpec((bm, E), lambda i: (i, 0)),
        compiler_params=_cparams(1),
    )(x2d, g2, b2)


def output_projection(x2d, w_t, b2):
    """x2d: (M, E) f32; w_t: (E, V_pad) bf16 (V_pad multiple of 128); vocab-tiled 2-D grid."""
    M, K = x2d.shape
    V = w_t.shape[1]
    bm, gm = _row_block(M, max_rows=256)
    bn = min(2048, V)
    gn = pl.cdiv(V, bn)
    # TODO(synk): for very large E the K axis should also be tiled with a VMEM f32 accumulator.
    return pl.pallas_call(
        _linear_kernel,
        out_shape=jax.ShapeDtypeStruct((M, V), jnp.float32),
        grid=(gm, gn),
        in_specs=[pl.BlockSpec((bm, K), lambda i, j: (i, 0)),
                  pl.BlockSpec((K, bn), lambda i, j: (0, j)),
                  pl.BlockSpec((1, bn), lambda i, j: (0, j))],
        out_specs=pl.BlockSpec((bm, bn), lambda i, j: (i, j)),
        compiler_params=_cparams(2),
    )(x2d, w_t, b2)


# ----------------------------- transformer glue -----------------------------

def encoder_layer(x, p, nhead, src_am, src_kpm):
    N, S, E = x.shape
    x = self_attn_block(x, src_am, src_kpm, p["self_attn"], p["norm1_g"], p["norm1_b"], nhead)
    x2d = ffn_add_layernorm(x.reshape(N * S, E), p["lin1_w_t"], p["lin1_b"],
                            p["lin2_w_t"], p["lin2_b"], p["norm2_g"], p["norm2_b"])
    return x2d.reshape(N, S, E)


def decoder_layer(y, memory, p, nhead, tgt_am, tgt_kpm, mem_kpm):
    N, T, E = y.shape
    y = self_attn_block(y, tgt_am, tgt_kpm, p["self_attn"], p["norm1_g"], p["norm1_b"], nhead)
    y = cross_attn_block(y, memory, mem_kpm, p["cross_attn"], p["norm2_g"], p["norm2_b"], nhead)
    y2d = ffn_add_layernorm(y.reshape(N * T, E), p["lin1_w_t"], p["lin1_b"],
                            p["lin2_w_t"], p["lin2_b"], p["norm3_g"], p["norm3_b"])
    return y2d.reshape(N, T, E)


def positional_encoding_table(maxlen, E):
    den = jnp.exp(-jnp.arange(0, E, 2, dtype=jnp.float32) * math.log(10000.0) / E)
    pos = jnp.arange(0, maxlen, dtype=jnp.float32)[:, None]
    pe = jnp.zeros((maxlen, E), jnp.float32)
    pe = pe.at[:, 0::2].set(jnp.sin(pos * den))
    pe = pe.at[:, 1::2].set(jnp.cos(pos * den))
    return pe[:, None, :]   # (maxlen, 1, E) — matches unsqueeze(0).transpose(0, 1)


def seq2seq_transformer_forward(params, src, tgt, src_mask, tgt_mask,
                                src_padding_mask, tgt_padding_mask,
                                memory_key_padding_mask, nhead, tgt_vocab):
    E = params["src_emb"].shape[1]
    pe = params["pos_emb"]

    # TokenEmbedding (* sqrt(E)) + PositionalEncoding; embedding gather stays in XLA.
    src_emb = jnp.take(params["src_emb"], src, axis=0) * math.sqrt(E) + pe[: src.shape[0]]
    tgt_emb = jnp.take(params["tgt_emb"], tgt, axis=0) * math.sqrt(E) + pe[: tgt.shape[0]]

    # Batch-first internally: (N, L, E) — single small transpose, removes all per-layer ones.
    x = jnp.transpose(src_emb, (1, 0, 2))
    y = jnp.transpose(tgt_emb, (1, 0, 2))
    N, S, _ = x.shape
    T = y.shape[1]

    # Tiny additive bias tensors; the (L, S) mask is assembled inside the attention kernel.
    src_kpm = jnp.where(src_padding_mask, NEG_INF, 0.0).astype(jnp.float32)        # (N, S)
    tgt_kpm = jnp.where(tgt_padding_mask, NEG_INF, 0.0).astype(jnp.float32)        # (N, T)
    mem_kpm = jnp.where(memory_key_padding_mask, NEG_INF, 0.0).astype(jnp.float32)  # (N, S)
    src_am = (src_mask.astype(jnp.float32) if src_mask is not None
              else jnp.zeros((S, S), jnp.float32))
    tgt_am = (tgt_mask.astype(jnp.float32) if tgt_mask is not None
              else jnp.zeros((T, T), jnp.float32))
    # NOTE: rows whose keys are all padded get a uniform softmax (PyTorch would give NaNs).

    # ---- encoder stack (post-LN, relu FFN) ----
    for lp in params["enc_layers"]:
        x = encoder_layer(x, lp, nhead, src_am, src_kpm)
    memory = layer_norm(x.reshape(N * S, E),
                        params["enc_norm_g"], params["enc_norm_b"]).reshape(N, S, E)

    # ---- decoder stack ----
    for lp in params["dec_layers"]:
        y = decoder_layer(y, memory, lp, nhead, tgt_am, tgt_kpm, mem_kpm)
    y2d = layer_norm(y.reshape(N * T, E), params["dec_norm_g"], params["dec_norm_b"])

    # ---- output projection (vocab padded to 128, tiled over rows x vocab) ----
    logits = output_projection(y2d, params["out_w_t"], params["out_b"])   # (N*T, V_pad)
    logits = logits.reshape(N, T, -1)[:, :, :tgt_vocab]
    return jnp.transpose(logits, (1, 0, 2))                              # (T, N, V) seq-first


# ----------------------------- parameter init -----------------------------

def init_params(key, num_enc, num_dec, E, nhead, src_vocab, tgt_vocab, ffn, maxlen=64):
    kit = iter(jax.random.split(key, 1024))
    hd = E // nhead
    q_scale = 1.0 / math.sqrt(hd)     # folded into the Q projection weights/bias

    def w(shape, scale=0.02):
        return jax.random.normal(next(kit), shape, jnp.float32) * scale

    def self_attn_params():
        in_w_t = w((E, 3 * E))                          # pre-transposed (in, out)
        in_b = w((3 * E,))
        in_w_t = in_w_t.at[:, :E].multiply(q_scale)     # fold 1/sqrt(hd) into Wq
        in_b = in_b.at[:E].multiply(q_scale)
        return {"in_w_t": in_w_t.astype(jnp.bfloat16),
                "in_b": in_b.reshape(1, 3 * E),
                "out_w_t": w((E, E)).astype(jnp.bfloat16),
                "out_b": jnp.zeros((1, E), jnp.float32)}

    def cross_attn_params():
        return {"q_w_t": (w((E, E)) * q_scale).astype(jnp.bfloat16),
                "q_b": (w((E,)) * q_scale).reshape(1, E),
                "kv_w_t": w((E, 2 * E)).astype(jnp.bfloat16),
                "kv_b": w((2 * E,)).reshape(1, 2 * E),
                "out_w_t": w((E, E)).astype(jnp.bfloat16),
                "out_b": jnp.zeros((1, E), jnp.float32)}

    def ffn_and_norms(n_norms):
        d = {"lin1_w_t": w((E, ffn)).astype(jnp.bfloat16),
             "lin1_b": jnp.zeros((1, ffn), jnp.float32),
             "lin2_w_t": w((ffn, E)).astype(jnp.bfloat16),
             "lin2_b": jnp.zeros((1, E), jnp.float32)}
        for i in range(1, n_norms + 1):
            d[f"norm{i}_g"] = jnp.ones((1, E), jnp.float32)
            d[f"norm{i}_b"] = jnp.zeros((1, E), jnp.float32)
        return d

    def enc_layer_params():
        d = {"self_attn": self_attn_params()}
        d.update(ffn_and_norms(2))
        return d

    def dec_layer_params():
        d = {"self_attn": self_attn_params(), "cross_attn": cross_attn_params()}
        d.update(ffn_and_norms(3))
        return d

    v_pad = ((tgt_vocab + 127) // 128) * 128
    out_w_t = jnp.zeros((E, v_pad), jnp.float32).at[:, :tgt_vocab].set(w((E, tgt_vocab)))

    return {
        "src_emb": w((src_vocab, E), 1.0),
        "tgt_emb": w((tgt_vocab, E), 1.0),
        "pos_emb": positional_encoding_table(maxlen, E),
        "enc_layers": [enc_layer_params() for _ in range(num_enc)],
        "dec_layers": [dec_layer_params() for _ in range(num_dec)],
        "enc_norm_g": jnp.ones((1, E), jnp.float32), "enc_norm_b": jnp.zeros((1, E), jnp.float32),
        "dec_norm_g": jnp.ones((1, E), jnp.float32), "dec_norm_b": jnp.zeros((1, E), jnp.float32),
        "out_w_t": out_w_t.astype(jnp.bfloat16),
        "out_b": jnp.zeros((1, v_pad), jnp.float32),
    }


# ----------------------------- main -----------------------------

if __name__ == "__main__":
    # small shapes consistent with the module's forward
    S, T, N = 8, 7, 2                 # src len, tgt len, batch
    E, H, FF = 32, 4, 64              # emb_size, nhead, dim_feedforward
    SRC_V, TGT_V = 13, 11             # vocab sizes
    NUM_ENC, NUM_DEC = 2, 2

    key = jax.random.PRNGKey(0)
    kp, ks, kt = jax.random.split(key, 3)
    params = init_params(kp, NUM_ENC, NUM_DEC, E, H, SRC_V, TGT_V, FF)

    src = jax.random.randint(ks, (S, N), 0, SRC_V)            # (S, N) seq-first tokens
    tgt = jax.random.randint(kt, (T, N), 0, TGT_V)            # (T, N)

    src_mask = jnp.zeros((S, S), jnp.float32)
    tgt_mask = jnp.where(jnp.triu(jnp.ones((T, T), bool), k=1), NEG_INF, 0.0)  # causal
    src_padding_mask = jnp.zeros((N, S), bool).at[1, -2:].set(True)
    tgt_padding_mask = jnp.zeros((N, T), bool).at[1, -1:].set(True)
    memory_key_padding_mask = src_padding_mask

    fwd = jax.jit(functools.partial(seq2seq_transformer_forward, nhead=H, tgt_vocab=TGT_V))
    out = fwd(params, src, tgt, src_mask, tgt_mask,
              src_padding_mask, tgt_padding_mask, memory_key_padding_mask)
    out = jax.block_until_ready(out)

    assert out.shape == (T, N, TGT_V), out.shape
    assert bool(jnp.all(jnp.isfinite(out)))
    # TODO(synk): dropout layers are treated as identity (eval mode); no training-time RNG dropout.
    print("KERNEL_OK")
</pallas_src>

<mosaic_0001>
module attributes {stable_mosaic.version = 11 : i64} {
  func.func @_ln_kernel(%arg0: i32, %arg1: memref<8x32xf32, #tpu.memory_space<vmem>>, %arg2: memref<1x32xf32, #tpu.memory_space<vmem>>, %arg3: memref<1x32xf32, #tpu.memory_space<vmem>>, %arg4: memref<8x32xf32, #tpu.memory_space<vmem>>) attributes {dimension_semantics = [#tpu.dimension_semantics<parallel>], iteration_bounds = array<i64: 2>, scalar_prefetch = 0 : i64, scratch_operands = 0 : i64, tpu.core_type = #tpu.core_type<tc>, window_params = [{transform_indices = @transform_0, window_bounds = array<i64: 8, 32>}, {pipeline_mode = #tpu.pipeline_mode<synchronous>, transform_indices = @transform_1, window_bounds = array<i64: 1, 32>}, {pipeline_mode = #tpu.pipeline_mode<synchronous>, transform_indices = @transform_2, window_bounds = array<i64: 1, 32>}, {transform_indices = @transform_3, window_bounds = array<i64: 8, 32>}]} {
    %c0 = arith.constant 0 : index
    %c0_0 = arith.constant 0 : index
    %0 = vector.load %arg1[%c0, %c0_0] : memref<8x32xf32, #tpu.memory_space<vmem>>, vector<8x32xf32>
    %c0_1 = arith.constant 0 : index
    %c0_2 = arith.constant 0 : index
    %1 = vector.load %arg2[%c0_1, %c0_2] : memref<1x32xf32, #tpu.memory_space<vmem>>, vector<1x32xf32>
    %c0_3 = arith.constant 0 : index
    %c0_4 = arith.constant 0 : index
    %2 = vector.load %arg3[%c0_3, %c0_4] : memref<1x32xf32, #tpu.memory_space<vmem>>, vector<1x32xf32>
    %cst = arith.constant dense<0.000000e+00> : vector<8xf32>
    %3 = vector.multi_reduction <add>, %0, %cst [1] : vector<8x32xf32> to vector<8xf32>
    %4 = vector.shape_cast %3 : vector<8xf32> to vector<8x1xf32>
    %cst_5 = arith.constant 3.200000e+01 : f32
    %5 = vector.broadcast %cst_5 : f32 to vector<8x1xf32>
    %6 = arith.divf %4, %5 : vector<8x1xf32>
    %7 = vector.broadcast %6 : vector<8x1xf32> to vector<8x32xf32>
    %8 = arith.subf %0, %7 : vector<8x32xf32>
    %9 = arith.mulf %8, %8 : vector<8x32xf32>
    %cst_6 = arith.constant dense<0.000000e+00> : vector<8xf32>
    %10 = vector.multi_reduction <add>, %9, %cst_6 [1] : vector<8x32xf32> to vector<8xf32>
    %11 = vector.shape_cast %10 : vector<8xf32> to vector<8x1xf32>
    %cst_7 = arith.constant 3.200000e+01 : f32
    %12 = vector.broadcast %cst_7 : f32 to vector<8x1xf32>
    %13 = arith.divf %11, %12 : vector<8x1xf32>
    %cst_8 = arith.constant 9.99999974E-6 : f32
    %14 = vector.broadcast %cst_8 : f32 to vector<8x1xf32>
    %15 = arith.addf %13, %14 : vector<8x1xf32>
    %16 = math.rsqrt %15 : vector<8x1xf32>
    %17 = vector.broadcast %16 : vector<8x1xf32> to vector<8x32xf32>
    %18 = arith.mulf %8, %17 : vector<8x32xf32>
    %19 = vector.broadcast %1 : vector<1x32xf32> to vector<8x32xf32>
    %20 = arith.mulf %18, %19 : vector<8x32xf32>
    %21 = vector.broadcast %2 : vector<1x32xf32> to vector<8x32xf32>
    %22 = arith.addf %20, %21 : vector<8x32xf32>
    %c0_9 = arith.constant 0 : index
    %c0_10 = arith.constant 0 : index
    %23 = vector.load %arg4[%c0_9, %c0_10] : memref<8x32xf32, #tpu.memory_space<vmem>>, vector<8x32xf32>
    tpu.vector_store %arg4[%c0_9, %c0_10], %22 {strides = array<i32>} : memref<8x32xf32, #tpu.memory_space<vmem>>, vector<8x32xf32>,
    return
  }
  func.func @transform_0(%arg0: i32) -> (i32, i32) {
    %c0_i32 = arith.constant 0 : i32
    %c0_i32_0 = arith.constant 0 : i32
    return %arg0, %c0_i32 : i32, i32
  }
  func.func @transform_1(%arg0: i32) -> (i32, i32) {
    %c0_i32 = arith.constant 0 : i32
    %c0_i32_0 = arith.constant 0 : i32
    %c0_i32_1 = arith.constant 0 : i32
    return %c0_i32, %c0_i32_0 : i32, i32
  }
  func.func @transform_2(%arg0: i32) -> (i32, i32) {
    %c0_i32 = arith.constant 0 : i32
    %c0_i32_0 = arith.constant 0 : i32
    %c0_i32_1 = arith.constant 0 : i32
    return %c0_i32, %c0_i32_0 : i32, i32
  }
  func.func @transform_3(%arg0: i32) -> (i32, i32) {
    %c0_i32 = arith.constant 0 : i32
    %c0_i32_0 = arith.constant 0 : i32
    return %arg0, %c0_i32 : i32, i32
  }
}

module attributes {stable_mosaic.version = 11 : i64} {
  func.func @_self_attn_block_kernel(%arg0: i32, %arg1: memref<1x8x32xf32, #tpu.memory_space<vmem>>, %arg2: memref<8x8xf32, #tpu.memory_space<vmem>>, %arg3: memref<1x1x8xf32, #tpu.memory_space<vmem>>, %arg4: memref<32x96xbf16, #tpu.memory_space<vmem>>, %arg5: memref<1x96xf32, #tpu.memory_space<vmem>>, %arg6: memref<32x32xbf16, #tpu.memory_space<vmem>>, %arg7: memref<1x32xf32, #tpu.memory_space<vmem>>, %arg8: memref<1x32xf32, #tpu.memory_space<vmem>>, %arg9: memref<1x32xf32, #tpu.memory_space<vmem>>, %arg10: memref<1x8x32xf32, #tpu.memory_space<vmem>>) attributes {dimension_semantics = [#tpu.dimension_semantics<parallel>], iteration_bounds = array<i64: 2>, scalar_prefetch = 0 : i64, scratch_operands = 0 : i64, tpu.core_type = #tpu.core_type<tc>, window_params = [{transform_indices = @transform_0, window_bounds = array<i64: 1, 8, 32>}, {pipeline_mode = #tpu.pipeline_mode<synchronous>, transform_indices = @transform_1, window_bounds = array<i64: 8, 8>}, {transform_indices = @transform_2, window_bounds = array<i64: 1, 1, 8>}, {pipeline_mode = #tpu.pipeline_mode<synchronous>, transform_indices = @transform_3, window_bounds = array<i64: 32, 96>}, {pipeline_mode = #tpu.pipeline_mode<synchronous>, transform_indices = @transform_4, window_bounds = array<i64: 1, 96>}, {pipeline_mode = #tpu.pipeline_mode<synchronous>, transform_indices = @transform_5, window_bounds = array<i64: 32, 32>}, {pipeline_mode = #tpu.pipeline_mode<synchronous>, transform_indices = @transform_6, window_bounds = array<i64: 1, 32>}, {pipeline_mode = #tpu.pipeline_mode<synchronous>, transform_indices = @transform_7, window_bounds = array<i64: 1, 32>}, {pipeline_mode = #tpu.pipeline_mode<synchronous>, transform_indices = @transform_8, window_bounds = array<i64: 1, 32>}, {transform_indices = @transform_9, window_bounds = array<i64: 1, 8, 32>}]} {
    %c0 = arith.constant 0 : index
    %c0_0 = arith.constant 0 : index
    %c0_1 = arith.constant 0 : index
    %0 = vector.load %arg1[%c0, %c0_0, %c0_1] : memref<1x8x32xf32, #tpu.memory_space<vmem>>, vector<1x8x32xf32>
    %1 = vector.shape_cast %0 : vector<1x8x32xf32> to vector<8x32xf32>
    %2 = arith.truncf %1 : vector<8x32xf32> to vector<8x32xbf16>
    %c0_2 = arith.constant 0 : index
    %c0_3 = arith.constant 0 : index
    %3 = vector.load %arg4[%c0_2, %c0_3] : memref<32x96xbf16, #tpu.memory_space<vmem>>, vector<32x96xbf16>
    %cst = arith.constant dense<0.000000e+00> : vector<8x96xf32>
    %4 = tpu.matmul %2, %3, %cst {dimension_numbers = #tpu.dot_dimension_numbers<[1], [0], [0], [1], [0, 0, 1, 1], [], []>} : vector<8x32xbf16>, vector<32x96xbf16>, vector<8x96xf32> -> vector<8x96xf32>
    %c0_4 = arith.constant 0 : index
    %c0_5 = arith.constant 0 : index
    %5 = vector.load %arg5[%c0_4, %c0_5] : memref<1x96xf32, #tpu.memory_space<vmem>>, vector<1x96xf32>
    %6 = vector.broadcast %5 : vector<1x96xf32> to vector<8x96xf32>
    %7 = arith.addf %4, %6 : vector<8x96xf32>
    %8 = vector.extract_strided_slice %7 {offsets = [0, 0], sizes = [8, 32], strides = [1, 1]} : vector<8x96xf32> to vector<8x32xf32>
    %9 = arith.truncf %8 : vector<8x32xf32> to vector<8x32xbf16>
    %10 = vector.extract_strided_slice %7 {offsets = [0, 32], sizes = [8, 32], strides = [1, 1]} : vector<8x96xf32> to vector<8x32xf32>
    %11 = arith.truncf %10 : vector<8x32xf32> to vector<8x32xbf16>
    %12 = vector.extract_strided_slice %7 {offsets = [0, 64], sizes = [8, 32], strides = [1, 1]} : vector<8x96xf32> to vector<8x32xf32>
    %13 = arith.truncf %12 : vector<8x32xf32> to vector<8x32xbf16>
    %c0_6 = arith.constant 0 : index
    %c0_7 = arith.constant 0 : index
    %14 = vector.load %arg2[%c0_6, %c0_7] : memref<8x8xf32, #tpu.memory_space<vmem>>, vector<8x8xf32>
    %c0_8 = arith.constant 0 : index
    %c0_9 = arith.constant 0 : index
    %c0_10 = arith.constant 0 : index
    %15 = vector.load %arg3[%c0_8, %c0_9, %c0_10] : memref<1x1x8xf32, #tpu.memory_space<vmem>>, vector<1x1x8xf32>
    %16 = vector.shape_cast %15 : vector<1x1x8xf32> to vector<1x8xf32>
    %17 = vector.broadcast %16 : vector<1x8xf32> to vector<8x8xf32>
    %18 = arith.addf %14, %17 : vector<8x8xf32>
    %19 = vector.extract_strided_slice %9 {offsets = [0, 0], sizes = [8, 8], strides = [1, 1]} : vector<8x32xbf16> to vector<8x8xbf16>
    %20 = vector.extract_strided_slice %11 {offsets = [0, 0], sizes = [8, 8], strides = [1, 1]} : vector<8x32xbf16> to vector<8x8xbf16>
    %cst_11 = arith.constant dense<0.000000e+00> : vector<8x8xf32>
    %21 = tpu.matmul %19, %20, %cst_11 {dimension_numbers = #tpu.dot_dimension_numbers<[1], [1], [0], [0], [0, 0, 1, 0], [], []>} : vector<8x8xbf16>, vector<8x8xbf16>, vector<8x8xf32> -> vector<8x8xf32>
    %22 = arith.addf %21, %18 : vector<8x8xf32>
    %cst_12 = arith.constant dense<0xFF800000> : vector<8xf32>
    %23 = vector.multi_reduction <maximumf>, %22, %cst_12 [1] : vector<8x8xf32> to vector<8xf32>
    %24 = vector.shape_cast %23 : vector<8xf32> to vector<8x1xf32>
    %25 = vector.broadcast %24 : vector<8x1xf32> to vector<8x8xf32>
    %26 = arith.subf %22, %25 : vector<8x8xf32>
    %27 = math.exp %26 : vector<8x8xf32>
    %cst_13 = arith.constant dense<0.000000e+00> : vector<8xf32>
    %28 = vector.multi_reduction <add>, %27, %cst_13 [1] : vector<8x8xf32> to vector<8xf32>
    %29 = vector.shape_cast %28 : vector<8xf32> to vector<8x1xf32>
    %30 = tpu.reciprocal %29 {approx = true} : vector<8x1xf32> -> vector<8x1xf32>
    %31 = vector.broadcast %30 : vector<8x1xf32> to vector<8x8xf32>
    %32 = arith.mulf %27, %31 : vector<8x8xf32>
    %33 = arith.truncf %32 : vector<8x8xf32> to vector<8x8xbf16>
    %34 = vector.extract_strided_slice %13 {offsets = [0, 0], sizes = [8, 8], strides = [1, 1]} : vector<8x32xbf16> to vector<8x8xbf16>
    %cst_14 = arith.constant dense<0.000000e+00> : vector<8x8xf32>
    %35 = tpu.matmul %33, %34, %cst_14 {dimension_numbers = #tpu.dot_dimension_numbers<[1], [0], [0], [1], [0, 0, 1, 1], [], []>} : vector<8x8xbf16>, vector<8x8xbf16>, vector<8x8xf32> -> vector<8x8xf32>
    %36 = vector.extract_strided_slice %9 {offsets = [0, 8], sizes = [8, 8], strides = [1, 1]} : vector<8x32xbf16> to vector<8x8xbf16>
    %37 = vector.extract_strided_slice %11 {offsets = [0, 8], sizes = [8, 8], strides = [1, 1]} : vector<8x32xbf16> to vector<8x8xbf16>
    %cst_15 = arith.constant dense<0.000000e+00> : vector<8x8xf32>
    %38 = tpu.matmul %36, %37, %cst_15 {dimension_numbers = #tpu.dot_dimension_numbers<[1], [1], [0], [0], [0, 0, 1, 0], [], []>} : vector<8x8xbf16>, vector<8x8xbf16>, vector<8x8xf32> -> vector<8x8xf32>
    %39 = arith.addf %38, %18 : vector<8x8xf32>
    %cst_16 = arith.constant dense<0xFF800000> : vector<8xf32>
    %40 = vector.multi_reduction <maximumf>, %39, %cst_16 [1] : vector<8x8xf32> to vector<8xf32>
    %41 = vector.shape_cast %40 : vector<8xf32> to vector<8x1xf32>
    %42 = vector.broadcast %41 : vector<8x1xf32> to vector<8x8xf32>
    %43 = arith.subf %39, %42 : vector<8x8xf32>
    %44 = math.exp %43 : vector<8x8xf32>
    %cst_17 = arith.constant dense<0.000000e+00> : vector<8xf32>
    %45 = vector.multi_reduction <add>, %44, %cst_17 [1] : vector<8x8xf32> to vector<8xf32>
    %46 = vector.shape_cast %45 : vector<8xf32> to vector<8x1xf32>
    %47 = tpu.reciprocal %46 {approx = true} : vector<8x1xf32> -> vector<8x1xf32>
    %48 = vector.broadcast %47 : vector<8x1xf32> to vector<8x8xf32>
    %49 = arith.mulf %44, %48 : vector<8x8xf32>
    %50 = arith.truncf %49 : vector<8x8xf32> to vector<8x8xbf16>
    %51 = vector.extract_strided_slice %13 {offsets = [0, 8], sizes = [8, 8], strides = [1, 1]} : vector<8x32xbf16> to vector<8x8xbf16>
    %cst_18 = arith.constant dense<0.000000e+00> : vector<8x8xf32>
    %52 = tpu.matmul %50, %51, %cst_18 {dimension_numbers = #tpu.dot_dimension_numbers<[1], [0], [0], [1], [0, 0, 1, 1], [], []>} : vector<8x8xbf16>, vector<8x8xbf16>, vector<8x8xf32> -> vector<8x8xf32>
    %53 = vector.extract_strided_slice %9 {offsets = [0, 16], sizes = [8, 8], strides = [1, 1]} : vector<8x32xbf16> to vector<8x8xbf16>
    %54 = vector.extract_strided_slice %11 {offsets = [0, 16], sizes = [8, 8], strides = [1, 1]} : vector<8x32xbf16> to vector<8x8xbf16>
    %cst_19 = arith.constant dense<0.000000e+00> : vector<8x8xf32>
    %55 = tpu.matmul %53, %54, %cst_19 {dimension_numbers = #tpu.dot_dimension_numbers<[1], [1], [0], [0], [0, 0, 1, 0], [], []>} : vector<8x8xbf16>, vector<8x8xbf16>, vector<8x8xf32> -> vector<8x8xf32>
    %56 = arith.addf %55, %18 : vector<8x8xf32>
    %cst_20 = arith.constant dense<0xFF800000> : vector<8xf32>
    %57 = vector.multi_reduction <maximumf>, %56, %cst_20 [1] : vector<8x8xf32> to vector<8xf32>
    %58 = vector.shape_cast %57 : vector<8xf32> to vector<8x1xf32>
    %59 = vector.broadcast %58 : vector<8x1xf32> to vector<8x8xf32>
    %60 = arith.subf %56, %59 : vector<8x8xf32>
    %61 = math.exp %60 : vector<8x8xf32>
    %cst_21 = arith.constant dense<0.000000e+00> : vector<8xf32>
    %62 = vector.multi_reduction <add>, %61, %cst_21 [1] : vector<8x8xf32> to vector<8xf32>
    %63 = vector.shape_cast %62 : vector<8xf32> to vector<8x1xf32>
    %64 = tpu.reciprocal %63 {approx = true} : vector<8x1xf32> -> vector<8x1xf32>
    %65 = vector.broadcast %64 : vector<8x1xf32> to vector<8x8xf32>
    %66 = arith.mulf %61, %65 : vector<8x8xf32>
    %67 = arith.truncf %66 : vector<8x8xf32> to vector<8x8xbf16>
    %68 = vector.extract_strided_slice %13 {offsets = [0, 16], sizes = [8, 8], strides = [1, 1]} : vector<8x32xbf16> to vector<8x8xbf16>
    %cst_22 = arith.constant dense<0.000000e+00> : vector<8x8xf32>
    %69 = tpu.matmul %67, %68, %cst_22 {dimension_numbers = #tpu.dot_dimension_numbers<[1], [0], [0], [1], [0, 0, 1, 1], [], []>} : vector<8x8xbf16>, vector<8x8xbf16>, vector<8x8xf32> -> vector<8x8xf32>
    %70 = vector.extract_strided_slice %9 {offsets = [0, 24], sizes = [8, 8], strides = [1, 1]} : vector<8x32xbf16> to vector<8x8xbf16>
    %71 = vector.extract_strided_slice %11 {offsets = [0, 24], sizes = [8, 8], strides = [1, 1]} : vector<8x32xbf16> to vector<8x8xbf16>
    %cst_23 = arith.constant dense<0.000000e+00> : vector<8x8xf32>
    %72 = tpu.matmul %70, %71, %cst_23 {dimension_numbers = #tpu.dot_dimension_numbers<[1], [1], [0], [0], [0, 0, 1, 0], [], []>} : vector<8x8xbf16>, vector<8x8xbf16>, vector<8x8xf32> -> vector<8x8xf32>
    %73 = arith.addf %72, %18 : vector<8x8xf32>
    %cst_24 = arith.constant dense<0xFF800000> : vector<8xf32>
    %74 = vector.multi_reduction <maximumf>, %73, %cst_24 [1] : vector<8x8xf32> to vector<8xf32>
    %75 = vector.shape_cast %74 : vector<8xf32> to vector<8x1xf32>
    %76 = vector.broadcast %75 : vector<8x1xf32> to vector<8x8xf32>
    %77 = arith.subf %73, %76 : vector<8x8xf32>
    %78 = math.exp %77 : vector<8x8xf32>
    %cst_25 = arith.constant dense<0.000000e+00> : vector<8xf32>
    %79 = vector.multi_reduction <add>, %78, %cst_25 [1] : vector<8x8xf32> to vector<8xf32>
    %80 = vector.shape_cast %79 : vector<8xf32> to vector<8x1xf32>
    %81 = tpu.reciprocal %80 {approx = true} : vector<8x1xf32> -> vector<8x1xf32>
    %82 = vector.broadcast %81 : vector<8x1xf32> to vector<8x8xf32>
    %83 = arith.mulf %78, %82 : vector<8x8xf32>
    %84 = arith.truncf %83 : vector<8x8xf32> to vector<8x8xbf16>
    %85 = vector.extract_strided_slice %13 {offsets = [0, 24], sizes = [8, 8], strides = [1, 1]} : vector<8x32xbf16> to vector<8x8xbf16>
    %cst_26 = arith.constant dense<0.000000e+00> : vector<8x8xf32>
    %86 = tpu.matmul %84, %85, %cst_26 {dimension_numbers = #tpu.dot_dimension_numbers<[1], [0], [0], [1], [0, 0, 1, 1], [], []>} : vector<8x8xbf16>, vector<8x8xbf16>, vector<8x8xf32> -> vector<8x8xf32>
    %87 = tpu.concatenate %35, %52, %69, %86 in 1 : vector<8x8xf32>, vector<8x8xf32>, vector<8x8xf32>, vector<8x8xf32> -> vector<8x32xf32>
    %88 = arith.truncf %87 : vector<8x32xf32> to vector<8x32xbf16>
    %c0_27 = arith.constant 0 : index
    %c0_28 = arith.constant 0 : index
    %89 = vector.load %arg6[%c0_27, %c0_28] : memref<32x32xbf16, #tpu.memory_space<vmem>>, vector<32x32xbf16>
    %cst_29 = arith.constant dense<0.000000e+00> : vector<8x32xf32>
    %90 = tpu.matmul %88, %89, %cst_29 {dimension_numbers = #tpu.dot_dimension_numbers<[1], [0], [0], [1], [0, 0, 1, 1], [], []>} : vector<8x32xbf16>, vector<32x32xbf16>, vector<8x32xf32> -> vector<8x32xf32>
    %c0_30 = arith.constant 0 : index
    %c0_31 = arith.constant 0 : index
    %91 = vector.load %arg7[%c0_30, %c0_31] : memref<1x32xf32, #tpu.memory_space<vmem>>, vector<1x32xf32>
    %92 = vector.broadcast %91 : vector<1x32xf32> to vector<8x32xf32>
    %93 = arith.addf %90, %92 : vector<8x32xf32>
    %94 = arith.addf %1, %93 : vector<8x32xf32>
    %c0_32 = arith.constant 0 : index
    %c0_33 = arith.constant 0 : index
    %95 = vector.load %arg8[%c0_32, %c0_33] : memref<1x32xf32, #tpu.memory_space<vmem>>, vector<1x32xf32>
    %c0_34 = arith.constant 0 : index
    %c0_35 = arith.constant 0 : index
    %96 = vector.load %arg9[%c0_34, %c0_35] : memref<1x32xf32, #tpu.memory_space<vmem>>, vector<1x32xf32>
    %cst_36 = arith.constant dense<0.000000e+00> : vector<8xf32>
    %97 = vector.multi_reduction <add>, %94, %cst_36 [1] : vector<8x32xf32> to vector<8xf32>
    %98 = vector.shape_cast %97 : vector<8xf32> to vector<8x1xf32>
    %cst_37 = arith.constant 3.200000e+01 : f32
    %99 = vector.broadcast %cst_37 : f32 to vector<8x1xf32>
    %100 = arith.divf %98, %99 : vector<8x1xf32>
    %101 = vector.broadcast %100 : vector<8x1xf32> to vector<8x32xf32>
    %102 = arith.subf %94, %101 : vector<8x32xf32>
    %103 = arith.mulf %102, %102 : vector<8x32xf32>
    %cst_38 = arith.constant dense<0.000000e+00> : vector<8xf32>
    %104 = vector.multi_reduction <add>, %103, %cst_38 [1] : vector<8x32xf32> to vector<8xf32>
    %105 = vector.shape_cast %104 : vector<8xf32> to vector<8x1xf32>
    %cst_39 = arith.constant 3.200000e+01 : f32
    %106 = vector.broadcast %cst_39 : f32 to vector<8x1xf32>
    %107 = arith.divf %105, %106 : vector<8x1xf32>
    %cst_40 = arith.constant 9.99999974E-6 : f32
    %108 = vector.broadcast %cst_40 : f32 to vector<8x1xf32>
    %109 = arith.addf %107, %108 : vector<8x1xf32>
    %110 = math.rsqrt %109 : vector<8x1xf32>
    %111 = vector.broadcast %110 : vector<8x1xf32> to vector<8x32xf32>
    %112 = arith.mulf %102, %111 : vector<8x32xf32>
    %113 = vector.broadcast %95 : vector<1x32xf32> to vector<8x32xf32>
    %114 = arith.mulf %112, %113 : vector<8x32xf32>
    %115 = vector.broadcast %96 : vector<1x32xf32> to vector<8x32xf32>
    %116 = arith.addf %114, %115 : vector<8x32xf32>
    %c0_41 = arith.constant 0 : index
    %c0_42 = arith.constant 0 : index
    %c0_43 = arith.constant 0 : index
    %117 = vector.load %arg10[%c0_41, %c0_42, %c0_43] : memref<1x8x32xf32, #tpu.memory_space<vmem>>, vector<1x8x32xf32>
    %118 = vector.shape_cast %117 : vector<1x8x32xf32> to vector<8x32xf32>
    %119 = vector.shape_cast %116 : vector<8x32xf32> to vector<1x8x32xf32>
    tpu.vector_store %arg10[%c0_41, %c0_42, %c0_43], %119 {strides = array<i32>} : memref<1x8x32xf32, #tpu.memory_space<vmem>>, vector<1x8x32xf32>,
    return
  }
  func.func @transform_0(%arg0: i32) -> (i32, i32, i32) {
    %c0_i32 = arith.constant 0 : i32
    %c0_i32_0 = arith.constant 0 : i32
    %c0_i32_1 = arith.constant 0 : i32
    return %arg0, %c0_i32, %c0_i32_0 : i32, i32, i32
  }
  func.func @transform_1(%arg0: i32) -> (i32, i32) {
    %c0_i32 = arith.constant 0 : i32
    %c0_i32_0 = arith.constant 0 : i32
    %c0_i32_1 = arith.constant 0 : i32
    return %c0_i32, %c0_i32_0 : i32, i32
  }
  func.func @transform_2(%arg0: i32) -> (i32, i32, i32) {
    %c0_i32 = arith.constant 0 : i32
    %c0_i32_0 = arith.constant 0 : i32
    %c0_i32_1 = arith.constant 0 : i32
    return %arg0, %c0_i32, %c0_i32_0 : i32, i32, i32
  }
  func.func @transform_3(%arg0: i32) -> (i32, i32) {
    %c0_i32 = arith.constant 0 : i32
    %c0_i32_0 = arith.constant 0 : i32
    %c0_i32_1 = arith.constant 0 : i32
    return %c0_i32, %c0_i32_0 : i32, i32
  }
  func.func @transform_4(%arg0: i32) -> (i32, i32) {
    %c0_i32 = arith.constant 0 : i32
    %c0_i32_0 = arith.constant 0 : i32
    %c0_i32_1 = arith.constant 0 : i32
    return %c0_i32, %c0_i32_0 : i32, i32
  }
  func.func @transform_5(%arg0: i32) -> (i32, i32) {
    %c0_i32 = arith.constant 0 : i32
    %c0_i32_0 = arith.constant 0 : i32
    %c0_i32_1 = arith.constant 0 : i32
    return %c0_i32, %c0_i32_0 : i32, i32
  }
  func.func @transform_6(%arg0: i32) -> (i32, i32) {
    %c0_i32 = arith.constant 0 : i32
    %c0_i32_0 = arith.constant 0 : i32
    %c0_i32_1 = arith.constant 0 : i32
    return %c0_i32, %c0_i32_0 : i32, i32
  }
  func.func @transform_7(%arg0: i32) -> (i32, i32) {
    %c0_i32 = arith.constant 0 : i32
    %c0_i32_0 = arith.constant 0 : i32
    %c0_i32_1 = arith.constant 0 : i32
    return %c0_i32, %c0_i32_0 : i32, i32
  }
  func.func @transform_8(%arg0: i32) -> (i32, i32) {
    %c0_i32 = arith.constant 0 : i32
    %c0_i32_0 = arith.constant 0 : i32
    %c0_i32_1 = arith.constant 0 : i32
    return %c0_i32, %c0_i32_0 : i32, i32
  }
  func.func @transform_9(%arg0: i32) -> (i32, i32, i32) {
    %c0_i32 = arith.constant 0 : i32
    %c0_i32_0 = arith.constant 0 : i32
    %c0_i32_1 = arith.constant 0 : i32
    return %arg0, %c0_i32, %c0_i32_0 : i32, i32, i32
  }
}

module attributes {stable_mosaic.version = 11 : i64} {
  func.func @_ffn_add_ln_kernel(%arg0: i32, %arg1: memref<8x32xf32, #tpu.memory_space<vmem>>, %arg2: memref<32x64xbf16, #tpu.memory_space<vmem>>, %arg3: memref<1x64xf32, #tpu.memory_space<vmem>>, %arg4: memref<64x32xbf16, #tpu.memory_space<vmem>>, %arg5: memref<1x32xf32, #tpu.memory_space<vmem>>, %arg6: memref<1x32xf32, #tpu.memory_space<vmem>>, %arg7: memref<1x32xf32, #tpu.memory_space<vmem>>, %arg8: memref<8x32xf32, #tpu.memory_space<vmem>>) attributes {dimension_semantics = [#tpu.dimension_semantics<parallel>], iteration_bounds = array<i64: 2>, scalar_prefetch = 0 : i64, scratch_operands = 0 : i64, tpu.core_type = #tpu.core_type<tc>, window_params = [{transform_indices = @transform_0, window_bounds = array<i64: 8, 32>}, {pipeline_mode = #tpu.pipeline_mode<synchronous>, transform_indices = @transform_1, window_bounds = array<i64: 32, 64>}, {pipeline_mode = #tpu.pipeline_mode<synchronous>, transform_indices = @transform_2, window_bounds = array<i64: 1, 64>}, {pipeline_mode = #tpu.pipeline_mode<synchronous>, transform_indices = @transform_3, window_bounds = array<i64: 64, 32>}, {pipeline_mode = #tpu.pipeline_mode<synchronous>, transform_indices = @transform_4, window_bounds = array<i64: 1, 32>}, {pipeline_mode = #tpu.pipeline_mode<synchronous>, transform_indices = @transform_5, window_bounds = array<i64: 1, 32>}, {pipeline_mode = #tpu.pipeline_mode<synchronous>, transform_indices = @transform_6, window_bounds = array<i64: 1, 32>}, {transform_indices = @transform_7, window_bounds = array<i64: 8, 32>}]} {
    %c0 = arith.constant 0 : index
    %c0_0 = arith.constant 0 : index
    %0 = vector.load %arg1[%c0, %c0_0] : memref<8x32xf32, #tpu.memory_space<vmem>>, vector<8x32xf32>
    %1 = arith.truncf %0 : vector<8x32xf32> to vector<8x32xbf16>
    %c0_1 = arith.constant 0 : index
    %c0_2 = arith.constant 0 : index
    %2 = vector.load %arg2[%c0_1, %c0_2] : memref<32x64xbf16, #tpu.memory_space<vmem>>, vector<32x64xbf16>
    %cst = arith.constant dense<0.000000e+00> : vector<8x64xf32>
    %3 = tpu.matmul %1, %2, %cst {dimension_numbers = #tpu.dot_dimension_numbers<[1], [0], [0], [1], [0, 0, 1, 1], [], []>} : vector<8x32xbf16>, vector<32x64xbf16>, vector<8x64xf32> -> vector<8x64xf32>
    %c0_3 = arith.constant 0 : index
    %c0_4 = arith.constant 0 : index
    %4 = vector.load %arg3[%c0_3, %c0_4] : memref<1x64xf32, #tpu.memory_space<vmem>>, vector<1x64xf32>
    %5 = vector.broadcast %4 : vector<1x64xf32> to vector<8x64xf32>
    %6 = arith.addf %3, %5 : vector<8x64xf32>
    %cst_5 = arith.constant 0.000000e+00 : f32
    %7 = vector.broadcast %cst_5 : f32 to vector<8x64xf32>
    %8 = arith.maximumf %6, %7 : vector<8x64xf32>
    %9 = arith.truncf %8 : vector<8x64xf32> to vector<8x64xbf16>
    %c0_6 = arith.constant 0 : index
    %c0_7 = arith.constant 0 : index
    %10 = vector.load %arg4[%c0_6, %c0_7] : memref<64x32xbf16, #tpu.memory_space<vmem>>, vector<64x32xbf16>
    %cst_8 = arith.constant dense<0.000000e+00> : vector<8x32xf32>
    %11 = tpu.matmul %9, %10, %cst_8 {dimension_numbers = #tpu.dot_dimension_numbers<[1], [0], [0], [1], [0, 0, 1, 1], [], []>} : vector<8x64xbf16>, vector<64x32xbf16>, vector<8x32xf32> -> vector<8x32xf32>
    %c0_9 = arith.constant 0 : index
    %c0_10 = arith.constant 0 : index
    %12 = vector.load %arg5[%c0_9, %c0_10] : memref<1x32xf32, #tpu.memory_space<vmem>>, vector<1x32xf32>
    %13 = vector.broadcast %12 : vector<1x32xf32> to vector<8x32xf32>
    %14 = arith.addf %11, %13 : vector<8x32xf32>
    %15 = arith.addf %0, %14 : vector<8x32xf32>
    %c0_11 = arith.constant 0 : index
    %c0_12 = arith.constant 0 : index
    %16 = vector.load %arg6[%c0_11, %c0_12] : memref<1x32xf32, #tpu.memory_space<vmem>>, vector<1x32xf32>
    %c0_13 = arith.constant 0 : index
    %c0_14 = arith.constant 0 : index
    %17 = vector.load %arg7[%c0_13, %c0_14] : memref<1x32xf32, #tpu.memory_space<vmem>>, vector<1x32xf32>
    %cst_15 = arith.constant dense<0.000000e+00> : vector<8xf32>
    %18 = vector.multi_reduction <add>, %15, %cst_15 [1] : vector<8x32xf32> to vector<8xf32>
    %19 = vector.shape_cast %18 : vector<8xf32> to vector<8x1xf32>
    %cst_16 = arith.constant 3.200000e+01 : f32
    %20 = vector.broadcast %cst_16 : f32 to vector<8x1xf32>
    %21 = arith.divf %19, %20 : vector<8x1xf32>
    %22 = vector.broadcast %21 : vector<8x1xf32> to vector<8x32xf32>
    %23 = arith.subf %15, %22 : vector<8x32xf32>
    %24 = arith.mulf %23, %23 : vector<8x32xf32>
    %cst_17 = arith.constant dense<0.000000e+00> : vector<8xf32>
    %25 = vector.multi_reduction <add>, %24, %cst_17 [1] : vector<8x32xf32> to vector<8xf32>
    %26 = vector.shape_cast %25 : vector<8xf32> to vector<8x1xf32>
    %cst_18 = arith.constant 3.200000e+01 : f32
    %27 = vector.broadcast %cst_18 : f32 to vector<8x1xf32>
    %28 = arith.divf %26, %27 : vector<8x1xf32>
    %cst_19 = arith.constant 9.99999974E-6 : f32
    %29 = vector.broadcast %cst_19 : f32 to vector<8x1xf32>
    %30 = arith.addf %28, %29 : vector<8x1xf32>
    %31 = math.rsqrt %30 : vector<8x1xf32>
    %32 = vector.broadcast %31 : vector<8x1xf32> to vector<8x32xf32>
    %33 = arith.mulf %23, %32 : vector<8x32xf32>
    %34 = vector.broadcast %16 : vector<1x32xf32> to vector<8x32xf32>
    %35 = arith.mulf %33, %34 : vector<8x32xf32>
    %36 = vector.broadcast %17 : vector<1x32xf32> to vector<8x32xf32>
    %37 = arith.addf %35, %36 : vector<8x32xf32>
    %c0_20 = arith.constant 0 : index
    %c0_21 = arith.constant 0 : index
    %38 = vector.load %arg8[%c0_20, %c0_21] : memref<8x32xf32, #tpu.memory_space<vmem>>, vector<8x32xf32>
    tpu.vector_store %arg8[%c0_20, %c0_21], %37 {strides = array<i32>} : memref<8x32xf32, #tpu.memory_space<vmem>>, vector<8x32xf32>,
    return
  }
  func.func @transform_0(%arg0: i32) -> (i32, i32) {
    %c0_i32 = arith.constant 0 : i32
    %c0_i32_0 = arith.constant 0 : i32
    return %arg0, %c0_i32 : i32, i32
  }
  func.func @transform_1(%arg0: i32) -> (i32, i32) {
    %c0_i32 = arith.constant 0 : i32
    %c0_i32_0 = arith.constant 0 : i32
    %c0_i32_1 = arith.constant 0 : i32
    return %c0_i32, %c0_i32_0 : i32, i32
  }
  func.func @transform_2(%arg0: i32) -> (i32, i32) {
    %c0_i32 = arith.constant 0 : i32
    %c0_i32_0 = arith.constant 0 : i32
    %c0_i32_1 = arith.constant 0 : i32
    return %c0_i32, %c0_i32_0 : i32, i32
  }
  func.func @transform_3(%arg0: i32) -> (i32, i32) {
    %c0_i32 = arith.constant 0 : i32
    %c0_i32_0 = arith.constant 0 : i32
    %c0_i32_1 = arith.constant 0 : i32
    return %c0_i32, %c0_i32_0 : i32, i32
  }
  func.func @transform_4(%arg0: i32) -> (i32, i32) {
    %c0_i32 = arith.constant 0 : i32
    %c0_i32_0 = arith.constant 0 : i32
    %c0_i32_1 = arith.constant 0 : i32
    return %c0_i32, %c0_i32_0 : i32, i32
  }
  func.func @transform_5(%arg0: i32) -> (i32, i32) {
    %c0_i32 = arith.constant 0 : i32
    %c0_i32_0 = arith.constant 0 : i32
    %c0_i32_1 = arith.constant 0 : i32
    return %c0_i32, %c0_i32_0 : i32, i32
  }
  func.func @transform_6(%arg0: i32) -> (i32, i32) {
    %c0_i32 = arith.constant 0 : i32
    %c0_i32_0 = arith.constant 0 : i32
    %c0_i32_1 = arith.constant 0 : i32
    return %c0_i32, %c0_i32_0 : i32, i32
  }
  func.func @transform_7(%arg0: i32) -> (i32, i32) {
    %c0_i32 = arith.constant 0 : i32
    %c0_i32_0 = arith.constant 0 : i32
    return %arg0, %c0_i32 : i32, i32
  }
}

module attributes {stable_mosaic.version = 11 : i64} {
  func.func @_self_attn_block_kernel(%arg0: i32, %arg1: memref<1x7x32xf32, #tpu.memory_space<vmem>>, %arg2: memref<7x7xf32, #tpu.memory_space<vmem>>, %arg3: memref<1x1x7xf32, #tpu.memory_space<vmem>>, %arg4: memref<32x96xbf16, #tpu.memory_space<vmem>>, %arg5: memref<1x96xf32, #tpu.memory_space<vmem>>, %arg6: memref<32x32xbf16, #tpu.memory_space<vmem>>, %arg7: memref<1x32xf32, #tpu.memory_space<vmem>>, %arg8: memref<1x32xf32, #tpu.memory_space<vmem>>, %arg9: memref<1x32xf32, #tpu.memory_space<vmem>>, %arg10: memref<1x7x32xf32, #tpu.memory_space<vmem>>) attributes {dimension_semantics = [#tpu.dimension_semantics<parallel>], iteration_bounds = array<i64: 2>, scalar_prefetch = 0 : i64, scratch_operands = 0 : i64, tpu.core_type = #tpu.core_type<tc>, window_params = [{transform_indices = @transform_0, window_bounds = array<i64: 1, 7, 32>}, {pipeline_mode = #tpu.pipeline_mode<synchronous>, transform_indices = @transform_1, window_bounds = array<i64: 7, 7>}, {transform_indices = @transform_2, window_bounds = array<i64: 1, 1, 7>}, {pipeline_mode = #tpu.pipeline_mode<synchronous>, transform_indices = @transform_3, window_bounds = array<i64: 32, 96>}, {pipeline_mode = #tpu.pipeline_mode<synchronous>, transform_indices = @transform_4, window_bounds = array<i64: 1, 96>}, {pipeline_mode = #tpu.pipeline_mode<synchronous>, transform_indices = @transform_5, window_bounds = array<i64: 32, 32>}, {pipeline_mode = #tpu.pipeline_mode<synchronous>, transform_indices = @transform_6, window_bounds = array<i64: 1, 32>}, {pipeline_mode = #tpu.pipeline_mode<synchronous>, transform_indices = @transform_7, window_bounds = array<i64: 1, 32>}, {pipeline_mode = #tpu.pipeline_mode<synchronous>, transform_indices = @transform_8, window_bounds = array<i64: 1, 32>}, {transform_indices = @transform_9, window_bounds = array<i64: 1, 7, 32>}]} {
    %c0 = arith.constant 0 : index
    %c0_0 = arith.constant 0 : index
    %c0_1 = arith.constant 0 : index
    %0 = vector.load %arg1[%c0, %c0_0, %c0_1] : memref<1x7x32xf32, #tpu.memory_space<vmem>>, vector<1x7x32xf32>
    %1 = vector.shape_cast %0 : vector<1x7x32xf32> to vector<7x32xf32>
    %2 = arith.truncf %1 : vector<7x32xf32> to vector<7x32xbf16>
    %c0_2 = arith.constant 0 : index
    %c0_3 = arith.constant 0 : index
    %3 = vector.load %arg4[%c0_2, %c0_3] : memref<32x96xbf16, #tpu.memory_space<vmem>>, vector<32x96xbf16>
    %cst = arith.constant dense<0.000000e+00> : vector<7x96xf32>
    %4 = tpu.matmul %2, %3, %cst {dimension_numbers = #tpu.dot_dimension_numbers<[1], [0], [0], [1], [0, 0, 1, 1], [], []>} : vector<7x32xbf16>, vector<32x96xbf16>, vector<7x96xf32> -> vector<7x96xf32>
    %c0_4 = arith.constant 0 : index
    %c0_5 = arith.constant 0 : index
    %5 = vector.load %arg5[%c0_4, %c0_5] : memref<1x96xf32, #tpu.memory_space<vmem>>, vector<1x96xf32>
    %6 = vector.broadcast %5 : vector<1x96xf32> to vector<7x96xf32>
    %7 = arith.addf %4, %6 : vector<7x96xf32>
    %8 = vector.extract_strided_slice %7 {offsets = [0, 0], sizes = [7, 32], strides = [1, 1]} : vector<7x96xf32> to vector<7x32xf32>
    %9 = arith.truncf %8 : vector<7x32xf32> to vector<7x32xbf16>
    %10 = vector.extract_strided_slice %7 {offsets = [0, 32], sizes = [7, 32], strides = [1, 1]} : vector<7x96xf32> to vector<7x32xf32>
    %11 = arith.truncf %10 : vector<7x32xf32> to vector<7x32xbf16>
    %12 = vector.extract_strided_slice %7 {offsets = [0, 64], sizes = [7, 32], strides = [1, 1]} : vector<7x96xf32> to vector<7x32xf32>
    %13 = arith.truncf %12 : vector<7x32xf32> to vector<7x32xbf16>
    %c0_6 = arith.constant 0 : index
    %c0_7 = arith.constant 0 : index
    %14 = vector.load %arg2[%c0_6, %c0_7] : memref<7x7xf32, #tpu.memory_space<vmem>>, vector<7x7xf32>
    %c0_8 = arith.constant 0 : index
    %c0_9 = arith.constant 0 : index
    %c0_10 = arith.constant 0 : index
    %15 = vector.load %arg3[%c0_8, %c0_9, %c0_10] : memref<1x1x7xf32, #tpu.memory_space<vmem>>, vector<1x1x7xf32>
    %16 = vector.shape_cast %15 : vector<1x1x7xf32> to vector<1x7xf32>
    %17 = vector.broadcast %16 : vector<1x7xf32> to vector<7x7xf32>
    %18 = arith.addf %14, %17 : vector<7x7xf32>
    %19 = vector.extract_strided_slice %9 {offsets = [0, 0], sizes = [7, 8], strides = [1, 1]} : vector<7x32xbf16> to vector<7x8xbf16>
    %20 = vector.extract_strided_slice %11 {offsets = [0, 0], sizes = [7, 8], strides = [1, 1]} : vector<7x32xbf16> to vector<7x8xbf16>
    %cst_11 = arith.constant dense<0.000000e+00> : vector<7x7xf32>
    %21 = tpu.matmul %19, %20, %cst_11 {dimension_numbers = #tpu.dot_dimension_numbers<[1], [1], [0], [0], [0, 0, 1, 0], [], []>} : vector<7x8xbf16>, vector<7x8xbf16>, vector<7x7xf32> -> vector<7x7xf32>
    %22 = arith.addf %21, %18 : vector<7x7xf32>
    %cst_12 = arith.constant dense<0xFF800000> : vector<7xf32>
    %23 = vector.multi_reduction <maximumf>, %22, %cst_12 [1] : vector<7x7xf32> to vector<7xf32>
    %24 = vector.shape_cast %23 : vector<7xf32> to vector<7x1xf32>
    %25 = vector.broadcast %24 : vector<7x1xf32> to vector<7x7xf32>
    %26 = arith.subf %22, %25 : vector<7x7xf32>
    %27 = math.exp %26 : vector<7x7xf32>
    %cst_13 = arith.constant dense<0.000000e+00> : vector<7xf32>
    %28 = vector.multi_reduction <add>, %27, %cst_13 [1] : vector<7x7xf32> to vector<7xf32>
    %29 = vector.shape_cast %28 : vector<7xf32> to vector<7x1xf32>
    %30 = tpu.reciprocal %29 {approx = true} : vector<7x1xf32> -> vector<7x1xf32>
    %31 = vector.broadcast %30 : vector<7x1xf32> to vector<7x7xf32>
    %32 = arith.mulf %27, %31 : vector<7x7xf32>
    %33 = arith.truncf %32 : vector<7x7xf32> to vector<7x7xbf16>
    %34 = vector.extract_strided_slice %13 {offsets = [0, 0], sizes = [7, 8], strides = [1, 1]} : vector<7x32xbf16> to vector<7x8xbf16>
    %cst_14 = arith.constant dense<0.000000e+00> : vector<7x8xf32>
    %35 = tpu.matmul %33, %34, %cst_14 {dimension_numbers = #tpu.dot_dimension_numbers<[1], [0], [0], [1], [0, 0, 1, 1], [], []>} : vector<7x7xbf16>, vector<7x8xbf16>, vector<7x8xf32> -> vector<7x8xf32>
    %36 = vector.extract_strided_slice %9 {offsets = [0, 8], sizes = [7, 8], strides = [1, 1]} : vector<7x32xbf16> to vector<7x8xbf16>
    %37 = vector.extract_strided_slice %11 {offsets = [0, 8], sizes = [7, 8], strides = [1, 1]} : vector<7x32xbf16> to vector<7x8xbf16>
    %cst_15 = arith.constant dense<0.000000e+00> : vector<7x7xf32>
    %38 = tpu.matmul %36, %37, %cst_15 {dimension_numbers = #tpu.dot_dimension_numbers<[1], [1], [0], [0], [0, 0, 1, 0], [], []>} : vector<7x8xbf16>, vector<7x8xbf16>, vector<7x7xf32> -> vector<7x7xf32>
    %39 = arith.addf %38, %18 : vector<7x7xf32>
    %cst_16 = arith.constant dense<0xFF800000> : vector<7xf32>
    %40 = vector.multi_reduction <maximumf>, %39, %cst_16 [1] : vector<7x7xf32> to vector<7xf32>
    %41 = vector.shape_cast %40 : vector<7xf32> to vector<7x1xf32>
    %42 = vector.broadcast %41 : vector<7x1xf32> to vector<7x7xf32>
    %43 = arith.subf %39, %42 : vector<7x7xf32>
    %44 = math.exp %43 : vector<7x7xf32>
    %cst_17 = arith.constant dense<0.000000e+00> : vector<7xf32>
    %45 = vector.multi_reduction <add>, %44, %cst_17 [1] : vector<7x7xf32> to vector<7xf32>
    %46 = vector.shape_cast %45 : vector<7xf32> to vector<7x1xf32>
    %47 = tpu.reciprocal %46 {approx = true} : vector<7x1xf32> -> vector<7x1xf32>
    %48 = vector.broadcast %47 : vector<7x1xf32> to vector<7x7xf32>
    %49 = arith.mulf %44, %48 : vector<7x7xf32>
    %50 = arith.truncf %49 : vector<7x7xf32> to vector<7x7xbf16>
    %51 = vector.extract_strided_slice %13 {offsets = [0, 8], sizes = [7, 8], strides = [1, 1]} : vector<7x32xbf16> to vector<7x8xbf16>
    %cst_18 = arith.constant dense<0.000000e+00> : vector<7x8xf32>
    %52 = tpu.matmul %50, %51, %cst_18 {dimension_numbers = #tpu.dot_dimension_numbers<[1], [0], [0], [1], [0, 0, 1, 1], [], []>} : vector<7x7xbf16>, vector<7x8xbf16>, vector<7x8xf32> -> vector<7x8xf32>
    %53 = vector.extract_strided_slice %9 {offsets = [0, 16], sizes = [7, 8], strides = [1, 1]} : vector<7x32xbf16> to vector<7x8xbf16>
    %54 = vector.extract_strided_slice %11 {offsets = [0, 16], sizes = [7, 8], strides = [1, 1]} : vector<7x32xbf16> to vector<7x8xbf16>
    %cst_19 = arith.constant dense<0.000000e+00> : vector<7x7xf32>
    %55 = tpu.matmul %53, %54, %cst_19 {dimension_numbers = #tpu.dot_dimension_numbers<[1], [1], [0], [0], [0, 0, 1, 0], [], []>} : vector<7x8xbf16>, vector<7x8xbf16>, vector<7x7xf32> -> vector<7x7xf32>
    %56 = arith.addf %55, %18 : vector<7x7xf32>
    %cst_20 = arith.constant dense<0xFF800000> : vector<7xf32>
    %57 = vector.multi_reduction <maximumf>, %56, %cst_20 [1] : vector<7x7xf32> to vector<7xf32>
    %58 = vector.shape_cast %57 : vector<7xf32> to vector<7x1xf32>
    %59 = vector.broadcast %58 : vector<7x1xf32> to vector<7x7xf32>
    %60 = arith.subf %56, %59 : vector<7x7xf32>
    %61 = math.exp %60 : vector<7x7xf32>
    %cst_21 = arith.constant dense<0.000000e+00> : vector<7xf32>
    %62 = vector.multi_reduction <add>, %61, %cst_21 [1] : vector<7x7xf32> to vector<7xf32>
    %63 = vector.shape_cast %62 : vector<7xf32> to vector<7x1xf32>
    %64 = tpu.reciprocal %63 {approx = true} : vector<7x1xf32> -> vector<7x1xf32>
    %65 = vector.broadcast %64 : vector<7x1xf32> to vector<7x7xf32>
    %66 = arith.mulf %61, %65 : vector<7x7xf32>
    %67 = arith.truncf %66 : vector<7x7xf32> to vector<7x7xbf16>
    %68 = vector.extract_strided_slice %13 {offsets = [0, 16], sizes = [7, 8], strides = [1, 1]} : vector<7x32xbf16> to vector<7x8xbf16>
    %cst_22 = arith.constant dense<0.000000e+00> : vector<7x8xf32>
    %69 = tpu.matmul %67, %68, %cst_22 {dimension_numbers = #tpu.dot_dimension_numbers<[1], [0], [0], [1], [0, 0, 1, 1], [], []>} : vector<7x7xbf16>, vector<7x8xbf16>, vector<7x8xf32> -> vector<7x8xf32>
    %70 = vector.extract_strided_slice %9 {offsets = [0, 24], sizes = [7, 8], strides = [1, 1]} : vector<7x32xbf16> to vector<7x8xbf16>
    %71 = vector.extract_strided_slice %11 {offsets = [0, 24], sizes = [7, 8], strides = [1, 1]} : vector<7x32xbf16> to vector<7x8xbf16>
    %cst_23 = arith.constant dense<0.000000e+00> : vector<7x7xf32>
    %72 = tpu.matmul %70, %71, %cst_23 {dimension_numbers = #tpu.dot_dimension_numbers<[1], [1], [0], [0], [0, 0, 1, 0], [], []>} : vector<7x8xbf16>, vector<7x8xbf16>, vector<7x7xf32> -> vector<7x7xf32>
    %73 = arith.addf %72, %18 : vector<7x7xf32>
    %cst_24 = arith.constant dense<0xFF800000> : vector<7xf32>
    %74 = vector.multi_reduction <maximumf>, %73, %cst_24 [1] : vector<7x7xf32> to vector<7xf32>
    %75 = vector.shape_cast %74 : vector<7xf32> to vector<7x1xf32>
    %76 = vector.broadcast %75 : vector<7x1xf32> to vector<7x7xf32>
    %77 = arith.subf %73, %76 : vector<7x7xf32>
    %78 = math.exp %77 : vector<7x7xf32>
    %cst_25 = arith.constant dense<0.000000e+00> : vector<7xf32>
    %79 = vector.multi_reduction <add>, %78, %cst_25 [1] : vector<7x7xf32> to vector<7xf32>
    %80 = vector.shape_cast %79 : vector<7xf32> to vector<7x1xf32>
    %81 = tpu.reciprocal %80 {approx = true} : vector<7x1xf32> -> vector<7x1xf32>
    %82 = vector.broadcast %81 : vector<7x1xf32> to vector<7x7xf32>
    %83 = arith.mulf %78, %82 : vector<7x7xf32>
    %84 = arith.truncf %83 : vector<7x7xf32> to vector<7x7xbf16>
    %85 = vector.extract_strided_slice %13 {offsets = [0, 24], sizes = [7, 8], strides = [1, 1]} : vector<7x32xbf16> to vector<7x8xbf16>
    %cst_26 = arith.constant dense<0.000000e+00> : vector<7x8xf32>
    %86 = tpu.matmul %84, %85, %cst_26 {dimension_numbers = #tpu.dot_dimension_numbers<[1], [0], [0], [1], [0, 0, 1, 1], [], []>} : vector<7x7xbf16>, vector<7x8xbf16>, vector<7x8xf32> -> vector<7x8xf32>
    %87 = tpu.concatenate %35, %52, %69, %86 in 1 : vector<7x8xf32>, vector<7x8xf32>, vector<7x8xf32>, vector<7x8xf32> -> vector<7x32xf32>
    %88 = arith.truncf %87 : vector<7x32xf32> to vector<7x32xbf16>
    %c0_27 = arith.constant 0 : index
    %c0_28 = arith.constant 0 : index
    %89 = vector.load %arg6[%c0_27, %c0_28] : memref<32x32xbf16, #tpu.memory_space<vmem>>, vector<32x32xbf16>
    %cst_29 = arith.constant dense<0.000000e+00> : vector<7x32xf32>
    %90 = tpu.matmul %88, %89, %cst_29 {dimension_numbers = #tpu.dot_dimension_numbers<[1], [0], [0], [1], [0, 0, 1, 1], [], []>} : vector<7x32xbf16>, vector<32x32xbf16>, vector<7x32xf32> -> vector<7x32xf32>
    %c0_30 = arith.constant 0 : index
    %c0_31 = arith.constant 0 : index
    %91 = vector.load %arg7[%c0_30, %c0_31] : memref<1x32xf32, #tpu.memory_space<vmem>>, vector<1x32xf32>
    %92 = vector.broadcast %91 : vector<1x32xf32> to vector<7x32xf32>
    %93 = arith.addf %90, %92 : vector<7x32xf32>
    %94 = arith.addf %1, %93 : vector<7x32xf32>
    %c0_32 = arith.constant 0 : index
    %c0_33 = arith.constant 0 : index
    %95 = vector.load %arg8[%c0_32, %c0_33] : memref<1x32xf32, #tpu.memory_space<vmem>>, vector<1x32xf32>
    %c0_34 = arith.constant 0 : index
    %c0_35 = arith.constant 0 : index
    %96 = vector.load %arg9[%c0_34, %c0_35] : memref<1x32xf32, #tpu.memory_space<vmem>>, vector<1x32xf32>
    %cst_36 = arith.constant dense<0.000000e+00> : vector<7xf32>
    %97 = vector.multi_reduction <add>, %94, %cst_36 [1] : vector<7x32xf32> to vector<7xf32>
    %98 = vector.shape_cast %97 : vector<7xf32> to vector<7x1xf32>
    %cst_37 = arith.constant 3.200000e+01 : f32
    %99 = vector.broadcast %cst_37 : f32 to vector<7x1xf32>
    %100 = arith.divf %98, %99 : vector<7x1xf32>
    %101 = vector.broadcast %100 : vector<7x1xf32> to vector<7x32xf32>
    %102 = arith.subf %94, %101 : vector<7x32xf32>
    %103 = arith.mulf %102, %102 : vector<7x32xf32>
    %cst_38 = arith.constant dense<0.000000e+00> : vector<7xf32>
    %104 = vector.multi_reduction <add>, %103, %cst_38 [1] : vector<7x32xf32> to vector<7xf32>
    %105 = vector.shape_cast %104 : vector<7xf32> to vector<7x1xf32>
    %cst_39 = arith.constant 3.200000e+01 : f32
    %106 = vector.broadcast %cst_39 : f32 to vector<7x1xf32>
    %107 = arith.divf %105, %106 : vector<7x1xf32>
    %cst_40 = arith.constant 9.99999974E-6 : f32
    %108 = vector.broadcast %cst_40 : f32 to vector<7x1xf32>
    %109 = arith.addf %107, %108 : vector<7x1xf32>
    %110 = math.rsqrt %109 : vector<7x1xf32>
    %111 = vector.broadcast %110 : vector<7x1xf32> to vector<7x32xf32>
    %112 = arith.mulf %102, %111 : vector<7x32xf32>
    %113 = vector.broadcast %95 : vector<1x32xf32> to vector<7x32xf32>
    %114 = arith.mulf %112, %113 : vector<7x32xf32>
    %115 = vector.broadcast %96 : vector<1x32xf32> to vector<7x32xf32>
    %116 = arith.addf %114, %115 : vector<7x32xf32>
    %c0_41 = arith.constant 0 : index
    %c0_42 = arith.constant 0 : index
    %c0_43 = arith.constant 0 : index
    %117 = vector.load %arg10[%c0_41, %c0_42, %c0_43] : memref<1x7x32xf32, #tpu.memory_space<vmem>>, vector<1x7x32xf32>
    %118 = vector.shape_cast %117 : vector<1x7x32xf32> to vector<7x32xf32>
    %119 = vector.shape_cast %116 : vector<7x32xf32> to vector<1x7x32xf32>
    tpu.vector_store %arg10[%c0_41, %c0_42, %c0_43], %119 {strides = array<i32>} : memref<1x7x32xf32, #tpu.memory_space<vmem>>, vector<1x7x32xf32>,
    return
  }
  func.func @transform_0(%arg0: i32) -> (i32, i32, i32) {
    %c0_i32 = arith.constant 0 : i32
    %c0_i32_0 = arith.constant 0 : i32
    %c0_i32_1 = arith.constant 0 : i32
    return %arg0, %c0_i32, %c0_i32_0 : i32, i32, i32
  }
  func.func @transform_1(%arg0: i32) -> (i32, i32) {
    %c0_i32 = arith.constant 0 : i32
    %c0_i32_0 = arith.constant 0 : i32
    %c0_i32_1 = arith.constant 0 : i32
    return %c0_i32, %c0_i32_0 : i32, i32
  }
  func.func @transform_2(%arg0: i32) -> (i32, i32, i32) {
    %c0_i32 = arith.constant 0 : i32
    %c0_i32_0 = arith.constant 0 : i32
    %c0_i32_1 = arith.constant 0 : i32
    return %arg0, %c0_i32, %c0_i32_0 : i32, i32, i32
  }
  func.func @transform_3(%arg0: i32) -> (i32, i32) {
    %c0_i32 = arith.constant 0 : i32
    %c0_i32_0 = arith.constant 0 : i32
    %c0_i32_1 = arith.constant 0 : i32
    return %c0_i32, %c0_i32_0 : i32, i32
  }
  func.func @transform_4(%arg0: i32) -> (i32, i32) {
    %c0_i32 = arith.constant 0 : i32
    %c0_i32_0 = arith.constant 0 : i32
    %c0_i32_1 = arith.constant 0 : i32
    return %c0_i32, %c0_i32_0 : i32, i32
  }
  func.func @transform_5(%arg0: i32) -> (i32, i32) {
    %c0_i32 = arith.constant 0 : i32
    %c0_i32_0 = arith.constant 0 : i32
    %c0_i32_1 = arith.constant 0 : i32
    return %c0_i32, %c0_i32_0 : i32, i32
  }
  func.func @transform_6(%arg0: i32) -> (i32, i32) {
    %c0_i32 = arith.constant 0 : i32
    %c0_i32_0 = arith.constant 0 : i32
    %c0_i32_1 = arith.constant 0 : i32
    return %c0_i32, %c0_i32_0 : i32, i32
  }
  func.func @transform_7(%arg0: i32) -> (i32, i32) {
    %c0_i32 = arith.constant 0 : i32
    %c0_i32_0 = arith.constant 0 : i32
    %c0_i32_1 = arith.constant 0 : i32
    return %c0_i32, %c0_i32_0 : i32, i32
  }
  func.func @transform_8(%arg0: i32) -> (i32, i32) {
    %c0_i32 = arith.constant 0 : i32
    %c0_i32_0 = arith.constant 0 : i32
    %c0_i32_1 = arith.constant 0 : i32
    return %c0_i32, %c0_i32_0 : i32, i32
  }
  func.func @transform_9(%arg0: i32) -> (i32, i32, i32) {
    %c0_i32 = arith.constant 0 : i32
    %c0_i32_0 = arith.constant 0 : i32
    %c0_i32_1 = arith.constant 0 : i32
    return %arg0, %c0_i32, %c0_i32_0 : i32, i32, i32
  }
}

module attributes {stable_mosaic.version = 11 : i64} {
  func.func @_cross_attn_block_kernel(%arg0: i32, %arg1: memref<1x7x32xf32, #tpu.memory_space<vmem>>, %arg2: memref<1x8x32xf32, #tpu.memory_space<vmem>>, %arg3: memref<1x1x8xf32, #tpu.memory_space<vmem>>, %arg4: memref<32x32xbf16, #tpu.memory_space<vmem>>, %arg5: memref<1x32xf32, #tpu.memory_space<vmem>>, %arg6: memref<32x64xbf16, #tpu.memory_space<vmem>>, %arg7: memref<1x64xf32, #tpu.memory_space<vmem>>, %arg8: memref<32x32xbf16, #tpu.memory_space<vmem>>, %arg9: memref<1x32xf32, #tpu.memory_space<vmem>>, %arg10: memref<1x32xf32, #tpu.memory_space<vmem>>, %arg11: memref<1x32xf32, #tpu.memory_space<vmem>>, %arg12: memref<1x7x32xf32, #tpu.memory_space<vmem>>) attributes {dimension_semantics = [#tpu.dimension_semantics<parallel>], iteration_bounds = array<i64: 2>, scalar_prefetch = 0 : i64, scratch_operands = 0 : i64, tpu.core_type = #tpu.core_type<tc>, window_params = [{transform_indices = @transform_0, window_bounds = array<i64: 1, 7, 32>}, {transform_indices = @transform_1, window_bounds = array<i64: 1, 8, 32>}, {transform_indices = @transform_2, window_bounds = array<i64: 1, 1, 8>}, {pipeline_mode = #tpu.pipeline_mode<synchronous>, transform_indices = @transform_3, window_bounds = array<i64: 32, 32>}, {pipeline_mode = #tpu.pipeline_mode<synchronous>, transform_indices = @transform_4, window_bounds = array<i64: 1, 32>}, {pipeline_mode = #tpu.pipeline_mode<synchronous>, transform_indices = @transform_5, window_bounds = array<i64: 32, 64>}, {pipeline_mode = #tpu.pipeline_mode<synchronous>, transform_indices = @transform_6, window_bounds = array<i64: 1, 64>}, {pipeline_mode = #tpu.pipeline_mode<synchronous>, transform_indices = @transform_7, window_bounds = array<i64: 32, 32>}, {pipeline_mode = #tpu.pipeline_mode<synchronous>, transform_indices = @transform_8, window_bounds = array<i64: 1, 32>}, {pipeline_mode = #tpu.pipeline_mode<synchronous>, transform_indices = @transform_9, window_bounds = array<i64: 1, 32>}, {pipeline_mode = #tpu.pipeline_mode<synchronous>, transform_indices = @transform_10, window_bounds = array<i64: 1, 32>}, {transform_indices = @transform_11, window_bounds = array<i64: 1, 7, 32>}]} {
    %c0 = arith.constant 0 : index
    %c0_0 = arith.constant 0 : index
    %c0_1 = arith.constant 0 : index
    %0 = vector.load %arg1[%c0, %c0_0, %c0_1] : memref<1x7x32xf32, #tpu.memory_space<vmem>>, vector<1x7x32xf32>
    %1 = vector.shape_cast %0 : vector<1x7x32xf32> to vector<7x32xf32>
    %c0_2 = arith.constant 0 : index
    %c0_3 = arith.constant 0 : index
    %c0_4 = arith.constant 0 : index
    %2 = vector.load %arg2[%c0_2, %c0_3, %c0_4] : memref<1x8x32xf32, #tpu.memory_space<vmem>>, vector<1x8x32xf32>
    %3 = vector.shape_cast %2 : vector<1x8x32xf32> to vector<8x32xf32>
    %4 = arith.truncf %3 : vector<8x32xf32> to vector<8x32xbf16>
    %5 = arith.truncf %1 : vector<7x32xf32> to vector<7x32xbf16>
    %c0_5 = arith.constant 0 : index
    %c0_6 = arith.constant 0 : index
    %6 = vector.load %arg4[%c0_5, %c0_6] : memref<32x32xbf16, #tpu.memory_space<vmem>>, vector<32x32xbf16>
    %cst = arith.constant dense<0.000000e+00> : vector<7x32xf32>
    %7 = tpu.matmul %5, %6, %cst {dimension_numbers = #tpu.dot_dimension_numbers<[1], [0], [0], [1], [0, 0, 1, 1], [], []>} : vector<7x32xbf16>, vector<32x32xbf16>, vector<7x32xf32> -> vector<7x32xf32>
    %c0_7 = arith.constant 0 : index
    %c0_8 = arith.constant 0 : index
    %8 = vector.load %arg5[%c0_7, %c0_8] : memref<1x32xf32, #tpu.memory_space<vmem>>, vector<1x32xf32>
    %9 = vector.broadcast %8 : vector<1x32xf32> to vector<7x32xf32>
    %10 = arith.addf %7, %9 : vector<7x32xf32>
    %11 = arith.truncf %10 : vector<7x32xf32> to vector<7x32xbf16>
    %c0_9 = arith.constant 0 : index
    %c0_10 = arith.constant 0 : index
    %12 = vector.load %arg6[%c0_9, %c0_10] : memref<32x64xbf16, #tpu.memory_space<vmem>>, vector<32x64xbf16>
    %cst_11 = arith.constant dense<0.000000e+00> : vector<8x64xf32>
    %13 = tpu.matmul %4, %12, %cst_11 {dimension_numbers = #tpu.dot_dimension_numbers<[1], [0], [0], [1], [0, 0, 1, 1], [], []>} : vector<8x32xbf16>, vector<32x64xbf16>, vector<8x64xf32> -> vector<8x64xf32>
    %c0_12 = arith.constant 0 : index
    %c0_13 = arith.constant 0 : index
    %14 = vector.load %arg7[%c0_12, %c0_13] : memref<1x64xf32, #tpu.memory_space<vmem>>, vector<1x64xf32>
    %15 = vector.broadcast %14 : vector<1x64xf32> to vector<8x64xf32>
    %16 = arith.addf %13, %15 : vector<8x64xf32>
    %17 = vector.extract_strided_slice %16 {offsets = [0, 0], sizes = [8, 32], strides = [1, 1]} : vector<8x64xf32> to vector<8x32xf32>
    %18 = arith.truncf %17 : vector<8x32xf32> to vector<8x32xbf16>
    %19 = vector.extract_strided_slice %16 {offsets = [0, 32], sizes = [8, 32], strides = [1, 1]} : vector<8x64xf32> to vector<8x32xf32>
    %20 = arith.truncf %19 : vector<8x32xf32> to vector<8x32xbf16>
    %c0_14 = arith.constant 0 : index
    %c0_15 = arith.constant 0 : index
    %c0_16 = arith.constant 0 : index
    %21 = vector.load %arg3[%c0_14, %c0_15, %c0_16] : memref<1x1x8xf32, #tpu.memory_space<vmem>>, vector<1x1x8xf32>
    %22 = vector.shape_cast %21 : vector<1x1x8xf32> to vector<1x8xf32>
    %23 = vector.extract_strided_slice %11 {offsets = [0, 0], sizes = [7, 8], strides = [1, 1]} : vector<7x32xbf16> to vector<7x8xbf16>
    %24 = vector.extract_strided_slice %18 {offsets = [0, 0], sizes = [8, 8], strides = [1, 1]} : vector<8x32xbf16> to vector<8x8xbf16>
    %cst_17 = arith.constant dense<0.000000e+00> : vector<7x8xf32>
    %25 = tpu.matmul %23, %24, %cst_17 {dimension_numbers = #tpu.dot_dimension_numbers<[1], [1], [0], [0], [0, 0, 1, 0], [], []>} : vector<7x8xbf16>, vector<8x8xbf16>, vector<7x8xf32> -> vector<7x8xf32>
    %26 = vector.broadcast %22 : vector<1x8xf32> to vector<7x8xf32>
    %27 = arith.addf %25, %26 : vector<7x8xf32>
    %cst_18 = arith.constant dense<0xFF800000> : vector<7xf32>
    %28 = vector.multi_reduction <maximumf>, %27, %cst_18 [1] : vector<7x8xf32> to vector<7xf32>
    %29 = vector.shape_cast %28 : vector<7xf32> to vector<7x1xf32>
    %30 = vector.broadcast %29 : vector<7x1xf32> to vector<7x8xf32>
    %31 = arith.subf %27, %30 : vector<7x8xf32>
    %32 = math.exp %31 : vector<7x8xf32>
    %cst_19 = arith.constant dense<0.000000e+00> : vector<7xf32>
    %33 = vector.multi_reduction <add>, %32, %cst_19 [1] : vector<7x8xf32> to vector<7xf32>
    %34 = vector.shape_cast %33 : vector<7xf32> to vector<7x1xf32>
    %35 = tpu.reciprocal %34 {approx = true} : vector<7x1xf32> -> vector<7x1xf32>
    %36 = vector.broadcast %35 : vector<7x1xf32> to vector<7x8xf32>
    %37 = arith.mulf %32, %36 : vector<7x8xf32>
    %38 = arith.truncf %37 : vector<7x8xf32> to vector<7x8xbf16>
    %39 = vector.extract_strided_slice %20 {offsets = [0, 0], sizes = [8, 8], strides = [1, 1]} : vector<8x32xbf16> to vector<8x8xbf16>
    %cst_20 = arith.constant dense<0.000000e+00> : vector<7x8xf32>
    %40 = tpu.matmul %38, %39, %cst_20 {dimension_numbers = #tpu.dot_dimension_numbers<[1], [0], [0], [1], [0, 0, 1, 1], [], []>} : vector<7x8xbf16>, vector<8x8xbf16>, vector<7x8xf32> -> vector<7x8xf32>
    %41 = vector.extract_strided_slice %11 {offsets = [0, 8], sizes = [7, 8], strides = [1, 1]} : vector<7x32xbf16> to vector<7x8xbf16>
    %42 = vector.extract_strided_slice %18 {offsets = [0, 8], sizes = [8, 8], strides = [1, 1]} : vector<8x32xbf16> to vector<8x8xbf16>
    %cst_21 = arith.constant dense<0.000000e+00> : vector<7x8xf32>
    %43 = tpu.matmul %41, %42, %cst_21 {dimension_numbers = #tpu.dot_dimension_numbers<[1], [1], [0], [0], [0, 0, 1, 0], [], []>} : vector<7x8xbf16>, vector<8x8xbf16>, vector<7x8xf32> -> vector<7x8xf32>
    %44 = vector.broadcast %22 : vector<1x8xf32> to vector<7x8xf32>
    %45 = arith.addf %43, %44 : vector<7x8xf32>
    %cst_22 = arith.constant dense<0xFF800000> : vector<7xf32>
    %46 = vector.multi_reduction <maximumf>, %45, %cst_22 [1] : vector<7x8xf32> to vector<7xf32>
    %47 = vector.shape_cast %46 : vector<7xf32> to vector<7x1xf32>
    %48 = vector.broadcast %47 : vector<7x1xf32> to vector<7x8xf32>
    %49 = arith.subf %45, %48 : vector<7x8xf32>
    %50 = math.exp %49 : vector<7x8xf32>
    %cst_23 = arith.constant dense<0.000000e+00> : vector<7xf32>
    %51 = vector.multi_reduction <add>, %50, %cst_23 [1] : vector<7x8xf32> to vector<7xf32>
    %52 = vector.shape_cast %51 : vector<7xf32> to vector<7x1xf32>
    %53 = tpu.reciprocal %52 {approx = true} : vector<7x1xf32> -> vector<7x1xf32>
    %54 = vector.broadcast %53 : vector<7x1xf32> to vector<7x8xf32>
    %55 = arith.mulf %50, %54 : vector<7x8xf32>
    %56 = arith.truncf %55 : vector<7x8xf32> to vector<7x8xbf16>
    %57 = vector.extract_strided_slice %20 {offsets = [0, 8], sizes = [8, 8], strides = [1, 1]} : vector<8x32xbf16> to vector<8x8xbf16>
    %cst_24 = arith.constant dense<0.000000e+00> : vector<7x8xf32>
    %58 = tpu.matmul %56, %57, %cst_24 {dimension_numbers = #tpu.dot_dimension_numbers<[1], [0], [0], [1], [0, 0, 1, 1], [], []>} : vector<7x8xbf16>, vector<8x8xbf16>, vector<7x8xf32> -> vector<7x8xf32>
    %59 = vector.extract_strided_slice %11 {offsets = [0, 16], sizes = [7, 8], strides = [1, 1]} : vector<7x32xbf16> to vector<7x8xbf16>
    %60 = vector.extract_strided_slice %18 {offsets = [0, 16], sizes = [8, 8], strides = [1, 1]} : vector<8x32xbf16> to vector<8x8xbf16>
    %cst_25 = arith.constant dense<0.000000e+00> : vector<7x8xf32>
    %61 = tpu.matmul %59, %60, %cst_25 {dimension_numbers = #tpu.dot_dimension_numbers<[1], [1], [0], [0], [0, 0, 1, 0], [], []>} : vector<7x8xbf16>, vector<8x8xbf16>, vector<7x8xf32> -> vector<7x8xf32>
    %62 = vector.broadcast %22 : vector<1x8xf32> to vector<7x8xf32>
    %63 = arith.addf %61, %62 : vector<7x8xf32>
    %cst_26 = arith.constant dense<0xFF800000> : vector<7xf32>
    %64 = vector.multi_reduction <maximumf>, %63, %cst_26 [1] : vector<7x8xf32> to vector<7xf32>
    %65 = vector.shape_cast %64 : vector<7xf32> to vector<7x1xf32>
    %66 = vector.broadcast %65 : vector<7x1xf32> to vector<7x8xf32>
    %67 = arith.subf %63, %66 : vector<7x8xf32>
    %68 = math.exp %67 : vector<7x8xf32>
    %cst_27 = arith.constant dense<0.000000e+00> : vector<7xf32>
    %69 = vector.multi_reduction <add>, %68, %cst_27 [1] : vector<7x8xf32> to vector<7xf32>
    %70 = vector.shape_cast %69 : vector<7xf32> to vector<7x1xf32>
    %71 = tpu.reciprocal %70 {approx = true} : vector<7x1xf32> -> vector<7x1xf32>
    %72 = vector.broadcast %71 : vector<7x1xf32> to vector<7x8xf32>
    %73 = arith.mulf %68, %72 : vector<7x8xf32>
    %74 = arith.truncf %73 : vector<7x8xf32> to vector<7x8xbf16>
    %75 = vector.extract_strided_slice %20 {offsets = [0, 16], sizes = [8, 8], strides = [1, 1]} : vector<8x32xbf16> to vector<8x8xbf16>
    %cst_28 = arith.constant dense<0.000000e+00> : vector<7x8xf32>
    %76 = tpu.matmul %74, %75, %cst_28 {dimension_numbers = #tpu.dot_dimension_numbers<[1], [0], [0], [1], [0, 0, 1, 1], [], []>} : vector<7x8xbf16>, vector<8x8xbf16>, vector<7x8xf32> -> vector<7x8xf32>
    %77 = vector.extract_strided_slice %11 {offsets = [0, 24], sizes = [7, 8], strides = [1, 1]} : vector<7x32xbf16> to vector<7x8xbf16>
    %78 = vector.extract_strided_slice %18 {offsets = [0, 24], sizes = [8, 8], strides = [1, 1]} : vector<8x32xbf16> to vector<8x8xbf16>
    %cst_29 = arith.constant dense<0.000000e+00> : vector<7x8xf32>
    %79 = tpu.matmul %77, %78, %cst_29 {dimension_numbers = #tpu.dot_dimension_numbers<[1], [1], [0], [0], [0, 0, 1, 0], [], []>} : vector<7x8xbf16>, vector<8x8xbf16>, vector<7x8xf32> -> vector<7x8xf32>
    %80 = vector.broadcast %22 : vector<1x8xf32> to vector<7x8xf32>
    %81 = arith.addf %79, %80 : vector<7x8xf32>
    %cst_30 = arith.constant dense<0xFF800000> : vector<7xf32>
    %82 = vector.multi_reduction <maximumf>, %81, %cst_30 [1] : vector<7x8xf32> to vector<7xf32>
    %83 = vector.shape_cast %82 : vector<7xf32> to vector<7x1xf32>
    %84 = vector.broadcast %83 : vector<7x1xf32> to vector<7x8xf32>
    %85 = arith.subf %81, %84 : vector<7x8xf32>
    %86 = math.exp %85 : vector<7x8xf32>
    %cst_31 = arith.constant dense<0.000000e+00> : vector<7xf32>
    %87 = vector.multi_reduction <add>, %86, %cst_31 [1] : vector<7x8xf32> to vector<7xf32>
    %88 = vector.shape_cast %87 : vector<7xf32> to vector<7x1xf32>
    %89 = tpu.reciprocal %88 {approx = true} : vector<7x1xf32> -> vector<7x1xf32>
    %90 = vector.broadcast %89 : vector<7x1xf32> to vector<7x8xf32>
    %91 = arith.mulf %86, %90 : vector<7x8xf32>
    %92 = arith.truncf %91 : vector<7x8xf32> to vector<7x8xbf16>
    %93 = vector.extract_strided_slice %20 {offsets = [0, 24], sizes = [8, 8], strides = [1, 1]} : vector<8x32xbf16> to vector<8x8xbf16>
    %cst_32 = arith.constant dense<0.000000e+00> : vector<7x8xf32>
    %94 = tpu.matmul %92, %93, %cst_32 {dimension_numbers = #tpu.dot_dimension_numbers<[1], [0], [0], [1], [0, 0, 1, 1], [], []>} : vector<7x8xbf16>, vector<8x8xbf16>, vector<7x8xf32> -> vector<7x8xf32>
    %95 = tpu.concatenate %40, %58, %76, %94 in 1 : vector<7x8xf32>, vector<7x8xf32>, vector<7x8xf32>, vector<7x8xf32> -> vector<7x32xf32>
    %96 = arith.truncf %95 : vector<7x32xf32> to vector<7x32xbf16>
    %c0_33 = arith.constant 0 : index
    %c0_34 = arith.constant 0 : index
    %97 = vector.load %arg8[%c0_33, %c0_34] : memref<32x32xbf16, #tpu.memory_space<vmem>>, vector<32x32xbf16>
    %cst_35 = arith.constant dense<0.000000e+00> : vector<7x32xf32>
    %98 = tpu.matmul %96, %97, %cst_35 {dimension_numbers = #tpu.dot_dimension_numbers<[1], [0], [0], [1], [0, 0, 1, 1], [], []>} : vector<7x32xbf16>, vector<32x32xbf16>, vector<7x32xf32> -> vector<7x32xf32>
    %c0_36 = arith.constant 0 : index
    %c0_37 = arith.constant 0 : index
    %99 = vector.load %arg9[%c0_36, %c0_37] : memref<1x32xf32, #tpu.memory_space<vmem>>, vector<1x32xf32>
    %100 = vector.broadcast %99 : vector<1x32xf32> to vector<7x32xf32>
    %101 = arith.addf %98, %100 : vector<7x32xf32>
    %102 = arith.addf %1, %101 : vector<7x32xf32>
    %c0_38 = arith.constant 0 : index
    %c0_39 = arith.constant 0 : index
    %103 = vector.load %arg10[%c0_38, %c0_39] : memref<1x32xf32, #tpu.memory_space<vmem>>, vector<1x32xf32>
    %c0_40 = arith.constant 0 : index
    %c0_41 = arith.constant 0 : index
    %104 = vector.load %arg11[%c0_40, %c0_41] : memref<1x32xf32, #tpu.memory_space<vmem>>, vector<1x32xf32>
    %cst_42 = arith.constant dense<0.000000e+00> : vector<7xf32>
    %105 = vector.multi_reduction <add>, %102, %cst_42 [1] : vector<7x32xf32> to vector<7xf32>
    %106 = vector.shape_cast %105 : vector<7xf32> to vector<7x1xf32>
    %cst_43 = arith.constant 3.200000e+01 : f32
    %107 = vector.broadcast %cst_43 : f32 to vector<7x1xf32>
    %108 = arith.divf %106, %107 : vector<7x1xf32>
    %109 = vector.broadcast %108 : vector<7x1xf32> to vector<7x32xf32>
    %110 = arith.subf %102, %109 : vector<7x32xf32>
    %111 = arith.mulf %110, %110 : vector<7x32xf32>
    %cst_44 = arith.constant dense<0.000000e+00> : vector<7xf32>
    %112 = vector.multi_reduction <add>, %111, %cst_44 [1] : vector<7x32xf32> to vector<7xf32>
    %113 = vector.shape_cast %112 : vector<7xf32> to vector<7x1xf32>
    %cst_45 = arith.constant 3.200000e+01 : f32
    %114 = vector.broadcast %cst_45 : f32 to vector<7x1xf32>
    %115 = arith.divf %113, %114 : vector<7x1xf32>
    %cst_46 = arith.constant 9.99999974E-6 : f32
    %116 = vector.broadcast %cst_46 : f32 to vector<7x1xf32>
    %117 = arith.addf %115, %116 : vector<7x1xf32>
    %118 = math.rsqrt %117 : vector<7x1xf32>
    %119 = vector.broadcast %118 : vector<7x1xf32> to vector<7x32xf32>
    %120 = arith.mulf %110, %119 : vector<7x32xf32>
    %121 = vector.broadcast %103 : vector<1x32xf32> to vector<7x32xf32>
    %122 = arith.mulf %120, %121 : vector<7x32xf32>
    %123 = vector.broadcast %104 : vector<1x32xf32> to vector<7x32xf32>
    %124 = arith.addf %122, %123 : vector<7x32xf32>
    %c0_47 = arith.constant 0 : index
    %c0_48 = arith.constant 0 : index
    %c0_49 = arith.constant 0 : index
    %125 = vector.load %arg12[%c0_47, %c0_48, %c0_49] : memref<1x7x32xf32, #tpu.memory_space<vmem>>, vector<1x7x32xf32>
    %126 = vector.shape_cast %125 : vector<1x7x32xf32> to vector<7x32xf32>
    %127 = vector.shape_cast %124 : vector<7x32xf32> to vector<1x7x32xf32>
    tpu.vector_store %arg12[%c0_47, %c0_48, %c0_49], %127 {strides = array<i32>} : memref<1x7x32xf32, #tpu.memory_space<vmem>>, vector<1x7x32xf32>,
    return
  }
  func.func @transform_0(%arg0: i32) -> (i32, i32, i32) {
    %c0_i32 = arith.constant 0 : i32
    %c0_i32_0 = arith.constant 0 : i32
    %c0_i32_1 = arith.constant 0 : i32
    return %arg0, %c0_i32, %c0_i32_0 : i32, i32, i32
  }
  func.func @transform_1(%arg0: i32) -> (i32, i32, i32) {
    %c0_i32 = arith.constant 0 : i32
    %c0_i32_0 = arith.constant 0 : i32
    %c0_i32_1 = arith.constant 0 : i32
    return %arg0, %c0_i32, %c0_i32_0 : i32, i32, i32
  }
  func.func @transform_2(%arg0: i32) -> (i32, i32, i32) {
    %c0_i32 = arith.constant 0 : i32
    %c0_i32_0 = arith.constant 0 : i32
    %c0_i32_1 = arith.constant 0 : i32
    return %arg0, %c0_i32, %c0_i32_0 : i32, i32, i32
  }
  func.func @transform_3(%arg0: i32) -> (i32, i32) {
    %c0_i32 = arith.constant 0 : i32
    %c0_i32_0 = arith.constant 0 : i32
    %c0_i32_1 = arith.constant 0 : i32
    return %c0_i32, %c0_i32_0 : i32, i32
  }
  func.func @transform_4(%arg0: i32) -> (i32, i32) {
    %c0_i32 = arith.constant 0 : i32
    %c0_i32_0 = arith.constant 0 : i32
    %c0_i32_1 = arith.constant 0 : i32
    return %c0_i32, %c0_i32_0 : i32, i32
  }
  func.func @transform_5(%arg0: i32) -> (i32, i32) {
    %c0_i32 = arith.constant 0 : i32
    %c0_i32_0 = arith.constant 0 : i32
    %c0_i32_1 = arith.constant 0 : i32
    return %c0_i32, %c0_i32_0 : i32, i32
  }
  func.func @transform_6(%arg0: i32) -> (i32, i32) {
    %c0_i32 = arith.constant 0 : i32
    %c0_i32_0 = arith.constant 0 : i32
    %c0_i32_1 = arith.constant 0 : i32
    return %c0_i32, %c0_i32_0 : i32, i32
  }
  func.func @transform_7(%arg0: i32) -> (i32, i32) {
    %c0_i32 = arith.constant 0 : i32
    %c0_i32_0 = arith.constant 0 : i32
    %c0_i32_1 = arith.constant 0 : i32
    return %c0_i32, %c0_i32_0 : i32, i32
  }
  func.func @transform_8(%arg0: i32) -> (i32, i32) {
    %c0_i32 = arith.constant 0 : i32
    %c0_i32_0 = arith.constant 0 : i32
    %c0_i32_1 = arith.constant 0 : i32
    return %c0_i32, %c0_i32_0 : i32, i32
  }
  func.func @transform_9(%arg0: i32) -> (i32, i32) {
    %c0_i32 = arith.constant 0 : i32
    %c0_i32_0 = arith.constant 0 : i32
    %c0_i32_1 = arith.constant 0 : i32
    return %c0_i32, %c0_i32_0 : i32, i32
  }
  func.func @transform_10(%arg0: i32) -> (i32, i32) {
    %c0_i32 = arith.constant 0 : i32
    %c0_i32_0 = arith.constant 0 : i32
    %c0_i32_1 = arith.constant 0 : i32
    return %c0_i32, %c0_i32_0 : i32, i32
  }
  func.func @transform_11(%arg0: i32) -> (i32, i32, i32) {
    %c0_i32 = arith.constant 0 : i32
    %c0_i32_0 = arith.constant 0 : i32
    %c0_i32_1 = arith.constant 0 : i32
    return %arg0, %c0_i32, %c0_i32_0 : i32, i32, i32
  }
}

module attributes {stable_mosaic.version = 11 : i64} {
  func.func @_ffn_add_ln_kernel(%arg0: i32, %arg1: memref<8x32xf32, #tpu.memory_space<vmem>>, %arg2: memref<32x64xbf16, #tpu.memory_space<vmem>>, %arg3: memref<1x64xf32, #tpu.memory_space<vmem>>, %arg4: memref<64x32xbf16, #tpu.memory_space<vmem>>, %arg5: memref<1x32xf32, #tpu.memory_space<vmem>>, %arg6: memref<1x32xf32, #tpu.memory_space<vmem>>, %arg7: memref<1x32xf32, #tpu.memory_space<vmem>>, %arg8: memref<8x32xf32, #tpu.memory_space<vmem>>) attributes {dimension_semantics = [#tpu.dimension_semantics<parallel>], iteration_bounds = array<i64: 2>, scalar_prefetch = 0 : i64, scratch_operands = 0 : i64, tpu.core_type = #tpu.core_type<tc>, window_params = [{transform_indices = @transform_0, window_bounds = array<i64: 8, 32>}, {pipeline_mode = #tpu.pipeline_mode<synchronous>, transform_indices = @transform_1, window_bounds = array<i64: 32, 64>}, {pipeline_mode = #tpu.pipeline_mode<synchronous>, transform_indices = @transform_2, window_bounds = array<i64: 1, 64>}, {pipeline_mode = #tpu.pipeline_mode<synchronous>, transform_indices = @transform_3, window_bounds = array<i64: 64, 32>}, {pipeline_mode = #tpu.pipeline_mode<synchronous>, transform_indices = @transform_4, window_bounds = array<i64: 1, 32>}, {pipeline_mode = #tpu.pipeline_mode<synchronous>, transform_indices = @transform_5, window_bounds = array<i64: 1, 32>}, {pipeline_mode = #tpu.pipeline_mode<synchronous>, transform_indices = @transform_6, window_bounds = array<i64: 1, 32>}, {transform_indices = @transform_7, window_bounds = array<i64: 8, 32>}]} {
    %c0 = arith.constant 0 : index
    %c0_0 = arith.constant 0 : index
    %0 = vector.load %arg1[%c0, %c0_0] : memref<8x32xf32, #tpu.memory_space<vmem>>, vector<8x32xf32>
    %1 = arith.truncf %0 : vector<8x32xf32> to vector<8x32xbf16>
    %c0_1 = arith.constant 0 : index
    %c0_2 = arith.constant 0 : index
    %2 = vector.load %arg2[%c0_1, %c0_2] : memref<32x64xbf16, #tpu.memory_space<vmem>>, vector<32x64xbf16>
    %cst = arith.constant dense<0.000000e+00> : vector<8x64xf32>
    %3 = tpu.matmul %1, %2, %cst {dimension_numbers = #tpu.dot_dimension_numbers<[1], [0], [0], [1], [0, 0, 1, 1], [], []>} : vector<8x32xbf16>, vector<32x64xbf16>, vector<8x64xf32> -> vector<8x64xf32>
    %c0_3 = arith.constant 0 : index
    %c0_4 = arith.constant 0 : index
    %4 = vector.load %arg3[%c0_3, %c0_4] : memref<1x64xf32, #tpu.memory_space<vmem>>, vector<1x64xf32>
    %5 = vector.broadcast %4 : vector<1x64xf32> to vector<8x64xf32>
    %6 = arith.addf %3, %5 : vector<8x64xf32>
    %cst_5 = arith.constant 0.000000e+00 : f32
    %7 = vector.broadcast %cst_5 : f32 to vector<8x64xf32>
    %8 = arith.maximumf %6, %7 : vector<8x64xf32>
    %9 = arith.truncf %8 : vector<8x64xf32> to vector<8x64xbf16>
    %c0_6 = arith.constant 0 : index
    %c0_7 = arith.constant 0 : index
    %10 = vector.load %arg4[%c0_6, %c0_7] : memref<64x32xbf16, #tpu.memory_space<vmem>>, vector<64x32xbf16>
    %cst_8 = arith.constant dense<0.000000e+00> : vector<8x32xf32>
    %11 = tpu.matmul %9, %10, %cst_8 {dimension_numbers = #tpu.dot_dimension_numbers<[1], [0], [0], [1], [0, 0, 1, 1], [], []>} : vector<8x64xbf16>, vector<64x32xbf16>, vector<8x32xf32> -> vector<8x32xf32>
    %c0_9 = arith.constant 0 : index
    %c0_10 = arith.constant 0 : index
    %12 = vector.load %arg5[%c0_9, %c0_10] : memref<1x32xf32, #tpu.memory_space<vmem>>, vector<1x32xf32>
    %13 = vector.broadcast %12 : vector<1x32xf32> to vector<8x32xf32>
    %14 = arith.addf %11, %13 : vector<8x32xf32>
    %15 = arith.addf %0, %14 : vector<8x32xf32>
    %c0_11 = arith.constant 0 : index
    %c0_12 = arith.constant 0 : index
    %16 = vector.load %arg6[%c0_11, %c0_12] : memref<1x32xf32, #tpu.memory_space<vmem>>, vector<1x32xf32>
    %c0_13 = arith.constant 0 : index
    %c0_14 = arith.constant 0 : index
    %17 = vector.load %arg7[%c0_13, %c0_14] : memref<1x32xf32, #tpu.memory_space<vmem>>, vector<1x32xf32>
    %cst_15 = arith.constant dense<0.000000e+00> : vector<8xf32>
    %18 = vector.multi_reduction <add>, %15, %cst_15 [1] : vector<8x32xf32> to vector<8xf32>
    %19 = vector.shape_cast %18 : vector<8xf32> to vector<8x1xf32>
    %cst_16 = arith.constant 3.200000e+01 : f32
    %20 = vector.broadcast %cst_16 : f32 to vector<8x1xf32>
    %21 = arith.divf %19, %20 : vector<8x1xf32>
    %22 = vector.broadcast %21 : vector<8x1xf32> to vector<8x32xf32>
    %23 = arith.subf %15, %22 : vector<8x32xf32>
    %24 = arith.mulf %23, %23 : vector<8x32xf32>
    %cst_17 = arith.constant dense<0.000000e+00> : vector<8xf32>
    %25 = vector.multi_reduction <add>, %24, %cst_17 [1] : vector<8x32xf32> to vector<8xf32>
    %26 = vector.shape_cast %25 : vector<8xf32> to vector<8x1xf32>
    %cst_18 = arith.constant 3.200000e+01 : f32
    %27 = vector.broadcast %cst_18 : f32 to vector<8x1xf32>
    %28 = arith.divf %26, %27 : vector<8x1xf32>
    %cst_19 = arith.constant 9.99999974E-6 : f32
    %29 = vector.broadcast %cst_19 : f32 to vector<8x1xf32>
    %30 = arith.addf %28, %29 : vector<8x1xf32>
    %31 = math.rsqrt %30 : vector<8x1xf32>
    %32 = vector.broadcast %31 : vector<8x1xf32> to vector<8x32xf32>
    %33 = arith.mulf %23, %32 : vector<8x32xf32>
    %34 = vector.broadcast %16 : vector<1x32xf32> to vector<8x32xf32>
    %35 = arith.mulf %33, %34 : vector<8x32xf32>
    %36 = vector.broadcast %17 : vector<1x32xf32> to vector<8x32xf32>
    %37 = arith.addf %35, %36 : vector<8x32xf32>
    %c0_20 = arith.constant 0 : index
    %c0_21 = arith.constant 0 : index
    %38 = vector.load %arg8[%c0_20, %c0_21] : memref<8x32xf32, #tpu.memory_space<vmem>>, vector<8x32xf32>
    tpu.vector_store %arg8[%c0_20, %c0_21], %37 {strides = array<i32>} : memref<8x32xf32, #tpu.memory_space<vmem>>, vector<8x32xf32>,
    return
  }
  func.func @transform_0(%arg0: i32) -> (i32, i32) {
    %c0_i32 = arith.constant 0 : i32
    %c0_i32_0 = arith.constant 0 : i32
    return %arg0, %c0_i32 : i32, i32
  }
  func.func @transform_1(%arg0: i32) -> (i32, i32) {
    %c0_i32 = arith.constant 0 : i32
    %c0_i32_0 = arith.constant 0 : i32
    %c0_i32_1 = arith.constant 0 : i32
    return %c0_i32, %c0_i32_0 : i32, i32
  }
  func.func @transform_2(%arg0: i32) -> (i32, i32) {
    %c0_i32 = arith.constant 0 : i32
    %c0_i32_0 = arith.constant 0 : i32
    %c0_i32_1 = arith.constant 0 : i32
    return %c0_i32, %c0_i32_0 : i32, i32
  }
  func.func @transform_3(%arg0: i32) -> (i32, i32) {
    %c0_i32 = arith.constant 0 : i32
    %c0_i32_0 = arith.constant 0 : i32
    %c0_i32_1 = arith.constant 0 : i32
    return %c0_i32, %c0_i32_0 : i32, i32
  }
  func.func @transform_4(%arg0: i32) -> (i32, i32) {
    %c0_i32 = arith.constant 0 : i32
    %c0_i32_0 = arith.constant 0 : i32
    %c0_i32_1 = arith.constant 0 : i32
    return %c0_i32, %c0_i32_0 : i32, i32
  }
  func.func @transform_5(%arg0: i32) -> (i32, i32) {
    %c0_i32 = arith.constant 0 : i32
    %c0_i32_0 = arith.constant 0 : i32
    %c0_i32_1 = arith.constant 0 : i32
    return %c0_i32, %c0_i32_0 : i32, i32
  }
  func.func @transform_6(%arg0: i32) -> (i32, i32) {
    %c0_i32 = arith.constant 0 : i32
    %c0_i32_0 = arith.constant 0 : i32
    %c0_i32_1 = arith.constant 0 : i32
    return %c0_i32, %c0_i32_0 : i32, i32
  }
  func.func @transform_7(%arg0: i32) -> (i32, i32) {
    %c0_i32 = arith.constant 0 : i32
    %c0_i32_0 = arith.constant 0 : i32
    return %arg0, %c0_i32 : i32, i32
  }
}

module attributes {stable_mosaic.version = 11 : i64} {
  func.func @_ln_kernel(%arg0: i32, %arg1: memref<8x32xf32, #tpu.memory_space<vmem>>, %arg2: memref<1x32xf32, #tpu.memory_space<vmem>>, %arg3: memref<1x32xf32, #tpu.memory_space<vmem>>, %arg4: memref<8x32xf32, #tpu.memory_space<vmem>>) attributes {dimension_semantics = [#tpu.dimension_semantics<parallel>], iteration_bounds = array<i64: 2>, scalar_prefetch = 0 : i64, scratch_operands = 0 : i64, tpu.core_type = #tpu.core_type<tc>, window_params = [{transform_indices = @transform_0, window_bounds = array<i64: 8, 32>}, {pipeline_mode = #tpu.pipeline_mode<synchronous>, transform_indices = @transform_1, window_bounds = array<i64: 1, 32>}, {pipeline_mode = #tpu.pipeline_mode<synchronous>, transform_indices = @transform_2, window_bounds = array<i64: 1, 32>}, {transform_indices = @transform_3, window_bounds = array<i64: 8, 32>}]} {
    %c0 = arith.constant 0 : index
    %c0_0 = arith.constant 0 : index
    %0 = vector.load %arg1[%c0, %c0_0] : memref<8x32xf32, #tpu.memory_space<vmem>>, vector<8x32xf32>
    %c0_1 = arith.constant 0 : index
    %c0_2 = arith.constant 0 : index
    %1 = vector.load %arg2[%c0_1, %c0_2] : memref<1x32xf32, #tpu.memory_space<vmem>>, vector<1x32xf32>
    %c0_3 = arith.constant 0 : index
    %c0_4 = arith.constant 0 : index
    %2 = vector.load %arg3[%c0_3, %c0_4] : memref<1x32xf32, #tpu.memory_space<vmem>>, vector<1x32xf32>
    %cst = arith.constant dense<0.000000e+00> : vector<8xf32>
    %3 = vector.multi_reduction <add>, %0, %cst [1] : vector<8x32xf32> to vector<8xf32>
    %4 = vector.shape_cast %3 : vector<8xf32> to vector<8x1xf32>
    %cst_5 = arith.constant 3.200000e+01 : f32
    %5 = vector.broadcast %cst_5 : f32 to vector<8x1xf32>
    %6 = arith.divf %4, %5 : vector<8x1xf32>
    %7 = vector.broadcast %6 : vector<8x1xf32> to vector<8x32xf32>
    %8 = arith.subf %0, %7 : vector<8x32xf32>
    %9 = arith.mulf %8, %8 : vector<8x32xf32>
    %cst_6 = arith.constant dense<0.000000e+00> : vector<8xf32>
    %10 = vector.multi_reduction <add>, %9, %cst_6 [1] : vector<8x32xf32> to vector<8xf32>
    %11 = vector.shape_cast %10 : vector<8xf32> to vector<8x1xf32>
    %cst_7 = arith.constant 3.200000e+01 : f32
    %12 = vector.broadcast %cst_7 : f32 to vector<8x1xf32>
    %13 = arith.divf %11, %12 : vector<8x1xf32>
    %cst_8 = arith.constant 9.99999974E-6 : f32
    %14 = vector.broadcast %cst_8 : f32 to vector<8x1xf32>
    %15 = arith.addf %13, %14 : vector<8x1xf32>
    %16 = math.rsqrt %15 : vector<8x1xf32>
    %17 = vector.broadcast %16 : vector<8x1xf32> to vector<8x32xf32>
    %18 = arith.mulf %8, %17 : vector<8x32xf32>
    %19 = vector.broadcast %1 : vector<1x32xf32> to vector<8x32xf32>
    %20 = arith.mulf %18, %19 : vector<8x32xf32>
    %21 = vector.broadcast %2 : vector<1x32xf32> to vector<8x32xf32>
    %22 = arith.addf %20, %21 : vector<8x32xf32>
    %c0_9 = arith.constant 0 : index
    %c0_10 = arith.constant 0 : index
    %23 = vector.load %arg4[%c0_9, %c0_10] : memref<8x32xf32, #tpu.memory_space<vmem>>, vector<8x32xf32>
    tpu.vector_store %arg4[%c0_9, %c0_10], %22 {strides = array<i32>} : memref<8x32xf32, #tpu.memory_space<vmem>>, vector<8x32xf32>,
    return
  }
  func.func @transform_0(%arg0: i32) -> (i32, i32) {
    %c0_i32 = arith.constant 0 : i32
    %c0_i32_0 = arith.constant 0 : i32
    return %arg0, %c0_i32 : i32, i32
  }
  func.func @transform_1(%arg0: i32) -> (i32, i32) {
    %c0_i32 = arith.constant 0 : i32
    %c0_i32_0 = arith.constant 0 : i32
    %c0_i32_1 = arith.constant 0 : i32
    return %c0_i32, %c0_i32_0 : i32, i32
  }
  func.func @transform_2(%arg0: i32) -> (i32, i32) {
    %c0_i32 = arith.constant 0 : i32
    %c0_i32_0 = arith.constant 0 : i32
    %c0_i32_1 = arith.constant 0 : i32
    return %c0_i32, %c0_i32_0 : i32, i32
  }
  func.func @transform_3(%arg0: i32) -> (i32, i32) {
    %c0_i32 = arith.constant 0 : i32
    %c0_i32_0 = arith.constant 0 : i32
    return %arg0, %c0_i32 : i32, i32
  }
}

module attributes {stable_mosaic.version = 11 : i64} {
  func.func @_linear_kernel(%arg0: i32, %arg1: i32, %arg2: memref<8x32xf32, #tpu.memory_space<vmem>>, %arg3: memref<32x128xbf16, #tpu.memory_space<vmem>>, %arg4: memref<1x128xf32, #tpu.memory_space<vmem>>, %arg5: memref<8x128xf32, #tpu.memory_space<vmem>>) attributes {dimension_semantics = [#tpu.dimension_semantics<parallel>, #tpu.dimension_semantics<parallel>], iteration_bounds = array<i64: 2, 1>, scalar_prefetch = 0 : i64, scratch_operands = 0 : i64, tpu.core_type = #tpu.core_type<tc>, window_params = [{transform_indices = @transform_0, window_bounds = array<i64: 8, 32>}, {transform_indices = @transform_1, window_bounds = array<i64: 32, 128>}, {transform_indices = @transform_2, window_bounds = array<i64: 1, 128>}, {transform_indices = @transform_3, window_bounds = array<i64: 8, 128>}]} {
    %c0 = arith.constant 0 : index
    %c0_0 = arith.constant 0 : index
    %0 = vector.load %arg2[%c0, %c0_0] : memref<8x32xf32, #tpu.memory_space<vmem>>, vector<8x32xf32>
    %1 = arith.truncf %0 : vector<8x32xf32> to vector<8x32xbf16>
    %c0_1 = arith.constant 0 : index
    %c0_2 = arith.constant 0 : index
    %2 = vector.load %arg3[%c0_1, %c0_2] : memref<32x128xbf16, #tpu.memory_space<vmem>>, vector<32x128xbf16>
    %cst = arith.constant dense<0.000000e+00> : vector<8x128xf32>
    %3 = tpu.matmul %1, %2, %cst {dimension_numbers = #tpu.dot_dimension_numbers<[1], [0], [0], [1], [0, 0, 1, 1], [], []>} : vector<8x32xbf16>, vector<32x128xbf16>, vector<8x128xf32> -> vector<8x128xf32>
    %c0_3 = arith.constant 0 : index
    %c0_4 = arith.constant 0 : index
    %4 = vector.load %arg4[%c0_3, %c0_4] : memref<1x128xf32, #tpu.memory_space<vmem>>, vector<1x128xf32>
    %5 = vector.broadcast %4 : vector<1x128xf32> to vector<8x128xf32>
    %6 = arith.addf %3, %5 : vector<8x128xf32>
    %c0_5 = arith.constant 0 : index
    %c0_6 = arith.constant 0 : index
    %7 = vector.load %arg5[%c0_5, %c0_6] : memref<8x128xf32, #tpu.memory_space<vmem>>, vector<8x128xf32>
    tpu.vector_store %arg5[%c0_5, %c0_6], %6 {strides = array<i32>} : memref<8x128xf32, #tpu.memory_space<vmem>>, vector<8x128xf32>,
    return
  }
  func.func @transform_0(%arg0: i32, %arg1: i32) -> (i32, i32) {
    %c0_i32 = arith.constant 0 : i32
    %c0_i32_0 = arith.constant 0 : i32
    return %arg0, %c0_i32 : i32, i32
  }
  func.func @transform_1(%arg0: i32, %arg1: i32) -> (i32, i32) {
    %c0_i32 = arith.constant 0 : i32
    %c0_i32_0 = arith.constant 0 : i32
    return %c0_i32, %arg1 : i32, i32
  }
  func.func @transform_2(%arg0: i32, %arg1: i32) -> (i32, i32) {
    %c0_i32 = arith.constant 0 : i32
    %c0_i32_0 = arith.constant 0 : i32
    return %c0_i32, %arg1 : i32, i32
  }
  func.func @transform_3(%arg0: i32, %arg1: i32) -> (i32, i32) {
    %c0_i32 = arith.constant 0 : i32
    return %arg0, %arg1 : i32, i32
  }
}

</mosaic_0001>

<llo_original>
// kernel: seq2seq_transformer_forward.17
$region0: #{seq2seq_transformer_forward.17}
  #allocation0 [shape = 'u32[]', space=smem, size = 0x4, offset = 0x4, fixed_abs, tag = 'smem constant byte address 0x4 - core index']
  #allocation1 [shape = 'u32[144,128]{1,0:T(1,128)}', space=vmem, size = 0x12000, scoped, tag = 'internal scratch']
  %s0 = inlined_call_operand.vmem [shape: f32[16,32], index: 0, kind: input, shape index: {}]
  %s1 = inlined_call_operand.vmem [shape: f32[1,32], index: 1, kind: input, shape index: {}]
  %s2 = inlined_call_operand.vmem [shape: f32[1,32], index: 2, kind: input, shape index: {}]
  %s3 = inlined_call_operand.vmem [shape: f32[16,32], index: 3, kind: output, shape index: {}]
  %s4 = sld [smem:[#allocation0]]
  $region45: #{seq2seq_transformer_forward.17} parent=0
    _
  %s6 = ssub.s32 1, %s4
  %s7 = scalar_select 0, %s6, %s4
  loop: start=0, step=1, limit=4
  $region2: #{seq2seq_transformer_forward.17} parent=0 // loop_pre_header
    _
  $region3: #{seq2seq_transformer_forward.17} parent=0 // loop_header
    %s9 = sphi 0, %s13
    %p10 = scmp.ge.s32.totalorder %s9, 4
    %s19 = sphi 0, %s21
    %s22 = sphi 0, %s19
    %s23 = sphi 0, %s22
    %s39 = sphi 0, %s23
    %s43 = sphi 0, %s43
    %s45 = sphi 0, %s43
    %s46 = sphi 0, %s45
    %s60 = sphi 0, %s46
    %s64 = sphi 0, %s64
    %s66 = sphi 0, %s64
    %s67 = sphi 0, %s66
    %s81 = sphi 0, %s67
    %s87 = sphi 0, %s89
    %s90 = sphi 0, %s87
    %s91 = sphi 0, %s90
    %s107 = sphi 0, %s91
  $region4: #{seq2seq_transformer_forward.17} parent=0 // loop_header_branch
    %12 = sbr.rel (%p10) target = $region8
  $region5: #{seq2seq_transformer_forward.17} parent=0 // loop_body
    %s14 = ssub.s32 %s9, 1
    %s15 = ssub.s32 %s9, 2
    %s16 = sadd.s32 %s9, 1
    %s17 = ssub.s32 %s9, %s16
    %p18 = scmp.eq.s32.totalorder %s17, 0
    %s20 = sadd.s32 %s19, 1
    %s21 = scalar_select %p18, %s19, %s20
    %p24 = pneg %p18
    %p25 = scmp.eq.s32.totalorder %s9, 1
    %p26 = por %p24, %p25
    %p27 = scmp.ne.s32.totalorder %s19, %s22
    %p28 = scmp.eq.s32.totalorder %s9, 0
    %p29 = por %p27, %p28
    %p30 = scmp.ne.s32.totalorder %s19, %s22
    %p31 = scmp.eq.s32.totalorder %s14, 1
    %p32 = por %p30, %p31
    %p33 = scmp.ne.s32.totalorder %s22, %s23
    %p34 = scmp.eq.s32.totalorder %s14, 0
    %p35 = por %p33, %p34
    %p36 = scmp.ne.s32.totalorder %s22, %s23
    %p37 = scmp.eq.s32.totalorder %s15, 1
    %p38 = por %p36, %p37
    %p40 = scmp.ne.s32.totalorder %s23, %s39
    %p41 = scmp.eq.s32.totalorder %s15, 0
    %p42 = por %p40, %p41
    %s44 = sadd.s32 %s43, 1
    %p47 = scmp.eq.s32.totalorder %s9, 1
    %p48 = scmp.ne.s32.totalorder %s43, %s45
    %p49 = scmp.eq.s32.totalorder %s9, 0
    %p50 = por %p48, %p49
    %p51 = scmp.ne.s32.totalorder %s43, %s45
    %p52 = scmp.eq.s32.totalorder %s14, 1
    %p53 = por %p51, %p52
    %p54 = scmp.ne.s32.totalorder %s45, %s46
    %p55 = scmp.eq.s32.totalorder %s14, 0
    %p56 = por %p54, %p55
    %p57 = scmp.ne.s32.totalorder %s45, %s46
    %p58 = scmp.eq.s32.totalorder %s15, 1
    %p59 = por %p57, %p58
    %p61 = scmp.ne.s32.totalorder %s46, %s60
    %p62 = scmp.eq.s32.totalorder %s15, 0
    %p63 = por %p61, %p62
    %s65 = sadd.s32 %s64, 1
    %p68 = scmp.eq.s32.totalorder %s9, 1
    %p69 = scmp.ne.s32.totalorder %s64, %s66
    %p70 = scmp.eq.s32.totalorder %s9, 0
    %p71 = por %p69, %p70
    %p72 = scmp.ne.s32.totalorder %s64, %s66
    %p73 = scmp.eq.s32.totalorder %s14, 1
    %p74 = por %p72, %p73
    %p75 = scmp.ne.s32.totalorder %s66, %s67
    %p76 = scmp.eq.s32.totalorder %s14, 0
    %p77 = por %p75, %p76
    %p78 = scmp.ne.s32.totalorder %s66, %s67
    %p79 = scmp.eq.s32.totalorder %s15, 1
    %p80 = por %p78, %p79
    %p82 = scmp.ne.s32.totalorder %s67, %s81
    %p83 = scmp.eq.s32.totalorder %s15, 0
    %p84 = por %p82, %p83
    %s85 = ssub.s32 %s9, %s16
    %p86 = scmp.eq.s32.totalorder %s85, 0
    %s88 = sadd.s32 %s87, 1
    %s89 = scalar_select %p86, %s87, %s88
    %p92 = pneg %p86
    %p93 = scmp.eq.s32.totalorder %s9, 1
    %p94 = por %p92, %p93
    %p95 = scmp.ne.s32.totalorder %s87, %s90
    %p96 = scmp.eq.s32.totalorder %s9, 0
    %p97 = por %p95, %p96
    %p98 = scmp.ne.s32.totalorder %s87, %s90
    %p99 = scmp.eq.s32.totalorder %s14, 1
    %p100 = por %p98, %p99
    %p101 = scmp.ne.s32.totalorder %s90, %s91
    %p102 = scmp.eq.s32.totalorder %s14, 0
    %p103 = por %p101, %p102
    %p104 = scmp.ne.s32.totalorder %s90, %s91
    %p105 = scmp.eq.s32.totalorder %s15, 1
    %p106 = por %p104, %p105
    %p108 = scmp.ne.s32.totalorder %s91, %s107
    %p109 = scmp.eq.s32.totalorder %s15, 0
    %p110 = por %p108, %p109
    %p111 = scmp.le.s32.totalorder 1, %s9
    %p112 = scmp.lt.s32.totalorder %s9, 3
    %p113 = pnand %p111, %p112
    %p114 = pneg %p113
    // Predicated region
    $region9: #{seq2seq_transformer_forward.17} parent=5 // pred_check
      _
    $region10: #{seq2seq_transformer_forward.17} parent=5 // pred_check_branch
      %116 = sbr.rel (%p113) target = $region12
    $region11: #{seq2seq_transformer_forward.17} parent=5 // pred_region
      %s117 = ssub.s32 %s9, 1
      // Predicated region
      $region13: #{seq2seq_transformer_forward.17} parent=11 // pred_check
        %p118 = pneg %p56
      $region14: #{seq2seq_transformer_forward.17} parent=11 // pred_check_branch
        %120 = sbr.rel (%p118) target = $region16
      $region15: #{seq2seq_transformer_forward.17} parent=11 // pred_region
        _
      $region16: #{seq2seq_transformer_forward.17} parent=11 // pred_fallthru
        _
      // Predicated region
      $region17: #{seq2seq_transformer_forward.17} parent=11 // pred_check
        %p121 = pneg %p77
      $region18: #{seq2seq_transformer_forward.17} parent=11 // pred_check_branch
        %123 = sbr.rel (%p121) target = $region20
      $region19: #{seq2seq_transformer_forward.17} parent=11 // pred_region
        _
      $region20: #{seq2seq_transformer_forward.17} parent=11 // pred_fallthru
        _
    $region12: #{seq2seq_transformer_forward.17} parent=5 // pred_fallthru
      _
    %p124 = scmp.lt.s32.totalorder %s9, 2
    // Predicated region
    $region21: #{seq2seq_transformer_forward.17} parent=5 // pred_check
      %p125 = pneg %p124
    $region22: #{seq2seq_transformer_forward.17} parent=5 // pred_check_branch
      %127 = sbr.rel (%p125) target = $region24
    $region23: #{seq2seq_transformer_forward.17} parent=5 // pred_region
      // Predicated region
      $region25: #{seq2seq_transformer_forward.17} parent=23 // pred_check
        %p128 = pneg %p29
      $region26: #{seq2seq_transformer_forward.17} parent=23 // pred_check_branch
        %130 = sbr.rel (%p128) target = $region28
      $region27: #{seq2seq_transformer_forward.17} parent=23 // pred_region
        %p131 = scmp.lt.s32.totalorder %s9, 1
        %s132 = scalar_select %p131, %s9, 1
        %s133 = smul.addr %s132, 8
        %s134 = scalar_lea.vmem %s0, %s133
      $region28: #{seq2seq_transformer_forward.17} parent=23 // pred_fallthru
        _
    $region24: #{seq2seq_transformer_forward.17} parent=5 // pred_fallthru
      _
    %p135 = scmp.le.s32.totalorder 1, %s9
    %p136 = scmp.lt.s32.totalorder %s9, 3
    %p137 = pnand %p135, %p136
    %p138 = pneg %p137
    // Predicated region
    $region29: #{seq2seq_transformer_forward.17} parent=5 // pred_check
      _
    $region30: #{seq2seq_transformer_forward.17} parent=5 // pred_check_branch
      %140 = sbr.rel (%p137) target = $region32
    $region31: #{seq2seq_transformer_forward.17} parent=5 // pred_region
      %s141 = ssub.s32 %s9, 1
      %p142 = scmp.lt.s32.totalorder %s14, 1
      %s143 = scalar_select %p142, %s14, 1
      %s144 = smul.addr %s143, 8
      %s145 = scalar_lea.vmem %s0, %s144
      %p146 = pneg %p35
      %p147 = pneg %p32
      %p148 = pneg %p56
      %p149 = pneg %p53
      %p150 = pneg %p77
      %p151 = pneg %p74
      %p152 = pneg %p103
      %p153 = pneg %p100
      %p154 = scmp.lt.s32.totalorder %s14, 1
      %s155 = scalar_select %p154, %s14, 1
      %s156 = smul.addr %s155, 8
      %s157 = scalar_lea.vmem %s3, %s156
      %p158 = scmp.lt.s32.totalorder %s14, 1
      %s159 = scalar_select %p158, %s14, 1
      %s160 = smul.addr %s159, 8
      %s161 = scalar_lea.vmem %s0, %s160
      %p162 = scmp.lt.s32.totalorder %s14, 1
      %s163 = scalar_select %p162, %s14, 1
      %s164 = smul.addr %s163, 8
      %s165 = scalar_lea.vmem %s3, %s164
      %v166 = vld [vmem:[%s161] sm:$0xff]
      %v167 = vld [vmem:[%s1] sm:$0x1]
      %v168 = vld [vmem:[%s2] sm:$0x1]
      %vm169 = vcmask 261120
      %v170 = vsel %vm169, %v166, 0.0
      %171 = vadd.xlane.f32.xlu0 %v170
      %v172 = vpop.xlane.xlu0 %171
      %v173 = vrcp.pop 32.0
      %v174 = vmul.f32 %v172, %v173
      %v175 = vsub.f32 %v166, %v174
      %v176 = vmul.f32 %v175, %v175
      %v177 = vsel %vm169, %v176, 0.0
      %178 = vadd.xlane.f32.xlu0 %v177
      %v179 = vpop.xlane.xlu0 %178
      %v180 = vmul.f32 %v179, %v173
      %v181 = vadd.f32 %v180, 1e-05
      %v182 = vrsqrt.pop %v181
      %v183 = vmul.f32 %v175, %v182
      %v185 = vlaneseq
      %v186 = vshrl.u32 %v185, 7
      %v187 = vsub.s32 0, %v186
      %v188 = vrot.slane %v167, %v187
      %v190 = vmul.f32 %v183, %v188
      %v192 = vlaneseq
      %v193 = vshrl.u32 %v192, 7
      %v194 = vsub.s32 0, %v193
      %v195 = vrot.slane %v168, %v194
      %v197 = vadd.f32 %v190, %v195
      %198 = vst.msk [vmem:[%s165] sm:$0xff] %vm169, %v197
      %p199 = scmp.lt.s32.totalorder %s14, 1
      %s200 = scalar_select %p199, %s14, 1
      %s201 = smul.addr %s200, 8
      %s202 = scalar_lea.vmem %s3, %s201
      // Predicated region
      $region33: #{seq2seq_transformer_forward.17} parent=31 // pred_check
        %p203 = pneg %p100
      $region34: #{seq2seq_transformer_forward.17} parent=31 // pred_check_branch
        %205 = sbr.rel (%p203) target = $region36
      $region35: #{seq2seq_transformer_forward.17} parent=31 // pred_region
        _
      $region36: #{seq2seq_transformer_forward.17} parent=31 // pred_fallthru
        _
    $region32: #{seq2seq_transformer_forward.17} parent=5 // pred_fallthru
      _
    %p206 = scmp.le.s32.totalorder 2, %s9
    // Predicated region
    $region37: #{seq2seq_transformer_forward.17} parent=5 // pred_check
      %p207 = pneg %p206
    $region38: #{seq2seq_transformer_forward.17} parent=5 // pred_check_branch
      %209 = sbr.rel (%p207) target = $region40
    $region39: #{seq2seq_transformer_forward.17} parent=5 // pred_region
      %s210 = ssub.s32 %s9, 2
      // Predicated region
      $region41: #{seq2seq_transformer_forward.17} parent=39 // pred_check
        %p211 = pneg %p106
      $region42: #{seq2seq_transformer_forward.17} parent=39 // pred_check_branch
        %213 = sbr.rel (%p211) target = $region44
      $region43: #{seq2seq_transformer_forward.17} parent=39 // pred_region
        %p214 = scmp.lt.s32.totalorder %s15, 1
        %s215 = scalar_select %p214, %s15, 1
        %s216 = smul.addr %s215, 8
        %s217 = scalar_lea.vmem %s3, %s216
      $region44: #{seq2seq_transformer_forward.17} parent=39 // pred_fallthru
        _
    $region40: #{seq2seq_transformer_forward.17} parent=5 // pred_fallthru
      _
  $region6: #{seq2seq_transformer_forward.17} parent=0 // loop_footer
    %s13 = sadd.s32 1, %s9
  $region7: #{seq2seq_transformer_forward.17} parent=0 // loop_footer_branch
    %8 = sbr.rel target = $region3
  $region8: #{seq2seq_transformer_forward.17} parent=0 // loop_exit
    _

// kernel: seq2seq_transformer_forward.14
$region0: #{seq2seq_transformer_forward.14}
  #allocation0 [shape = 'u32[]', space=smem, size = 0x4, offset = 0x4, fixed_abs, tag = 'smem constant byte address 0x4 - core index']
  #allocation1 [shape = 'u32[144,128]{1,0:T(1,128)}', space=vmem, size = 0x12000, scoped, tag = 'internal scratch']
  %s0 = inlined_call_operand.vmem [shape: f32[16,32], index: 0, kind: input, shape index: {}]
  %s1 = inlined_call_operand.vmem [shape: bf16[32,64], index: 1, kind: input, shape index: {}]
  %s2 = inlined_call_operand.vmem [shape: f32[1,64], index: 2, kind: input, shape index: {}]
  %s3 = inlined_call_operand.vmem [shape: bf16[64,32], index: 3, kind: input, shape index: {}]
  %s4 = inlined_call_operand.vmem [shape: f32[1,32], index: 4, kind: input, shape index: {}]
  %s5 = inlined_call_operand.vmem [shape: f32[1,32], index: 5, kind: input, shape index: {}]
  %s6 = inlined_call_operand.vmem [shape: f32[1,32], index: 6, kind: input, shape index: {}]
  %s7 = inlined_call_operand.vmem [shape: f32[16,32], index: 7, kind: output, shape index: {}]
  %s8 = sld [smem:[#allocation0]]
  $region61: #{seq2seq_transformer_forward.14} parent=0
    _
  %s10 = ssub.s32 1, %s8
  %s11 = scalar_select 0, %s10, %s8
  loop: start=0, step=1, limit=4
  $region2: #{seq2seq_transformer_forward.14} parent=0 // loop_pre_header
    _
  $region3: #{seq2seq_transformer_forward.14} parent=0 // loop_header
    %s13 = sphi 0, %s17
    %p14 = scmp.ge.s32.totalorder %s13, 4
    %s23 = sphi 0, %s25
    %s26 = sphi 0, %s23
    %s27 = sphi 0, %s26
    %s43 = sphi 0, %s27
    %s47 = sphi 0, %s47
    %s49 = sphi 0, %s47
    %s50 = sphi 0, %s49
    %s64 = sphi 0, %s50
    %s68 = sphi 0, %s68
    %s70 = sphi 0, %s68
    %s71 = sphi 0, %s70
    %s85 = sphi 0, %s71
    %s89 = sphi 0, %s89
    %s91 = sphi 0, %s89
    %s92 = sphi 0, %s91
    %s106 = sphi 0, %s92
    %s110 = sphi 0, %s110
    %s112 = sphi 0, %s110
    %s113 = sphi 0, %s112
    %s127 = sphi 0, %s113
    %s131 = sphi 0, %s131
    %s133 = sphi 0, %s131
    %s134 = sphi 0, %s133
    %s148 = sphi 0, %s134
    %s152 = sphi 0, %s152
    %s154 = sphi 0, %s152
    %s155 = sphi 0, %s154
    %s169 = sphi 0, %s155
    %s175 = sphi 0, %s177
    %s178 = sphi 0, %s175
    %s179 = sphi 0, %s178
    %s195 = sphi 0, %s179
  $region4: #{seq2seq_transformer_forward.14} parent=0 // loop_header_branch
    %16 = sbr.rel (%p14) target = $region8
  $region5: #{seq2seq_transformer_forward.14} parent=0 // loop_body
    %s18 = ssub.s32 %s13, 1
    %s19 = ssub.s32 %s13, 2
    %s20 = sadd.s32 %s13, 1
    %s21 = ssub.s32 %s13, %s20
    %p22 = scmp.eq.s32.totalorder %s21, 0
    %s24 = sadd.s32 %s23, 1
    %s25 = scalar_select %p22, %s23, %s24
    %p28 = pneg %p22
    %p29 = scmp.eq.s32.totalorder %s13, 1
    %p30 = por %p28, %p29
    %p31 = scmp.ne.s32.totalorder %s23, %s26
    %p32 = scmp.eq.s32.totalorder %s13, 0
    %p33 = por %p31, %p32
    %p34 = scmp.ne.s32.totalorder %s23, %s26
    %p35 = scmp.eq.s32.totalorder %s18, 1
    %p36 = por %p34, %p35
    %p37 = scmp.ne.s32.totalorder %s26, %s27
    %p38 = scmp.eq.s32.totalorder %s18, 0
    %p39 = por %p37, %p38
    %p40 = scmp.ne.s32.totalorder %s26, %s27
    %p41 = scmp.eq.s32.totalorder %s19, 1
    %p42 = por %p40, %p41
    %p44 = scmp.ne.s32.totalorder %s27, %s43
    %p45 = scmp.eq.s32.totalorder %s19, 0
    %p46 = por %p44, %p45
    %s48 = sadd.s32 %s47, 1
    %p51 = scmp.eq.s32.totalorder %s13, 1
    %p52 = scmp.ne.s32.totalorder %s47, %s49
    %p53 = scmp.eq.s32.totalorder %s13, 0
    %p54 = por %p52, %p53
    %p55 = scmp.ne.s32.totalorder %s47, %s49
    %p56 = scmp.eq.s32.totalorder %s18, 1
    %p57 = por %p55, %p56
    %p58 = scmp.ne.s32.totalorder %s49, %s50
    %p59 = scmp.eq.s32.totalorder %s18, 0
    %p60 = por %p58, %p59
    %p61 = scmp.ne.s32.totalorder %s49, %s50
    %p62 = scmp.eq.s32.totalorder %s19, 1
    %p63 = por %p61, %p62
    %p65 = scmp.ne.s32.totalorder %s50, %s64
    %p66 = scmp.eq.s32.totalorder %s19, 0
    %p67 = por %p65, %p66
    %s69 = sadd.s32 %s68, 1
    %p72 = scmp.eq.s32.totalorder %s13, 1
    %p73 = scmp.ne.s32.totalorder %s68, %s70
    %p74 = scmp.eq.s32.totalorder %s13, 0
    %p75 = por %p73, %p74
    %p76 = scmp.ne.s32.totalorder %s68, %s70
    %p77 = scmp.eq.s32.totalorder %s18, 1
    %p78 = por %p76, %p77
    %p79 = scmp.ne.s32.totalorder %s70, %s71
    %p80 = scmp.eq.s32.totalorder %s18, 0
    %p81 = por %p79, %p80
    %p82 = scmp.ne.s32.totalorder %s70, %s71
    %p83 = scmp.eq.s32.totalorder %s19, 1
    %p84 = por %p82, %p83
    %p86 = scmp.ne.s32.totalorder %s71, %s85
    %p87 = scmp.eq.s32.totalorder %s19, 0
    %p88 = por %p86, %p87
    %s90 = sadd.s32 %s89, 1
    %p93 = scmp.eq.s32.totalorder %s13, 1
    %p94 = scmp.ne.s32.totalorder %s89, %s91
    %p95 = scmp.eq.s32.totalorder %s13, 0
    %p96 = por %p94, %p95
    %p97 = scmp.ne.s32.totalorder %s89, %s91
    %p98 = scmp.eq.s32.totalorder %s18, 1
    %p99 = por %p97, %p98
    %p100 = scmp.ne.s32.totalorder %s91, %s92
    %p101 = scmp.eq.s32.totalorder %s18, 0
    %p102 = por %p100, %p101
    %p103 = scmp.ne.s32.totalorder %s91, %s92
    %p104 = scmp.eq.s32.totalorder %s19, 1
    %p105 = por %p103, %p104
    %p107 = scmp.ne.s32.totalorder %s92, %s106
    %p108 = scmp.eq.s32.totalorder %s19, 0
    %p109 = por %p107, %p108
    %s111 = sadd.s32 %s110, 1
    %p114 = scmp.eq.s32.totalorder %s13, 1
    %p115 = scmp.ne.s32.totalorder %s110, %s112
    %p116 = scmp.eq.s32.totalorder %s13, 0
    %p117 = por %p115, %p116
    %p118 = scmp.ne.s32.totalorder %s110, %s112
    %p119 = scmp.eq.s32.totalorder %s18, 1
    %p120 = por %p118, %p119
    %p121 = scmp.ne.s32.totalorder %s112, %s113
    %p122 = scmp.eq.s32.totalorder %s18, 0
    %p123 = por %p121, %p122
    %p124 = scmp.ne.s32.totalorder %s112, %s113
    %p125 = scmp.eq.s32.totalorder %s19, 1
    %p126 = por %p124, %p125
    %p128 = scmp.ne.s32.totalorder %s113, %s127
    %p129 = scmp.eq.s32.totalorder %s19, 0
    %p130 = por %p128, %p129
    %s132 = sadd.s32 %s131, 1
    %p135 = scmp.eq.s32.totalorder %s13, 1
    %p136 = scmp.ne.s32.totalorder %s131, %s133
    %p137 = scmp.eq.s32.totalorder %s13, 0
    %p138 = por %p136, %p137
    %p139 = scmp.ne.s32.totalorder %s131, %s133
    %p140 = scmp.eq.s32.totalorder %s18, 1
    %p141 = por %p139, %p140
    %p142 = scmp.ne.s32.totalorder %s133, %s134
    %p143 = scmp.eq.s32.totalorder %s18, 0
    %p144 = por %p142, %p143
    %p145 = scmp.ne.s32.totalorder %s133, %s134
    %p146 = scmp.eq.s32.totalorder %s19, 1
    %p147 = por %p145, %p146
    %p149 = scmp.ne.s32.totalorder %s134, %s148
    %p150 = scmp.eq.s32.totalorder %s19, 0
    %p151 = por %p149, %p150
    %s153 = sadd.s32 %s152, 1
    %p156 = scmp.eq.s32.totalorder %s13, 1
    %p157 = scmp.ne.s32.totalorder %s152, %s154
    %p158 = scmp.eq.s32.totalorder %s13, 0
    %p159 = por %p157, %p158
    %p160 = scmp.ne.s32.totalorder %s152, %s154
    %p161 = scmp.eq.s32.totalorder %s18, 1
    %p162 = por %p160, %p161
    %p163 = scmp.ne.s32.totalorder %s154, %s155
    %p164 = scmp.eq.s32.totalorder %s18, 0
    %p165 = por %p163, %p164
    %p166 = scmp.ne.s32.totalorder %s154, %s155
    %p167 = scmp.eq.s32.totalorder %s19, 1
    %p168 = por %p166, %p167
    %p170 = scmp.ne.s32.totalorder %s155, %s169
    %p171 = scmp.eq.s32.totalorder %s19, 0
    %p172 = por %p170, %p171
    %s173 = ssub.s32 %s13, %s20
    %p174 = scmp.eq.s32.totalorder %s173, 0
    %s176 = sadd.s32 %s175, 1
    %s177 = scalar_select %p174, %s175, %s176
    %p180 = pneg %p174
    %p181 = scmp.eq.s32.totalorder %s13, 1
    %p182 = por %p180, %p181
    %p183 = scmp.ne.s32.totalorder %s175, %s178
    %p184 = scmp.eq.s32.totalorder %s13, 0
    %p185 = por %p183, %p184
    %p186 = scmp.ne.s32.totalorder %s175, %s178
    %p187 = scmp.eq.s32.totalorder %s18, 1
    %p188 = por %p186, %p187
    %p189 = scmp.ne.s32.totalorder %s178, %s179
    %p190 = scmp.eq.s32.totalorder %s18, 0
    %p191 = por %p189, %p190
    %p192 = scmp.ne.s32.totalorder %s178, %s179
    %p193 = scmp.eq.s32.totalorder %s19, 1
    %p194 = por %p192, %p193
    %p196 = scmp.ne.s32.totalorder %s179, %s195
    %p197 = scmp.eq.s32.totalorder %s19, 0
    %p198 = por %p196, %p197
    %p199 = scmp.le.s32.totalorder 1, %s13
    %p200 = scmp.lt.s32.totalorder %s13, 3
    %p201 = pnand %p199, %p200
    %p202 = pneg %p201
    // Predicated region
    $region9: #{seq2seq_transformer_forward.14} parent=5 // pred_check
      _
    $region10: #{seq2seq_transformer_forward.14} parent=5 // pred_check_branch
      %204 = sbr.rel (%p201) target = $region12
    $region11: #{seq2seq_transformer_forward.14} parent=5 // pred_region
      %s205 = ssub.s32 %s13, 1
      // Predicated region
      $region13: #{seq2seq_transformer_forward.14} parent=11 // pred_check
        %p206 = pneg %p60
      $region14: #{seq2seq_transformer_forward.14} parent=11 // pred_check_branch
        %208 = sbr.rel (%p206) target = $region16
      $region15: #{seq2seq_transformer_forward.14} parent=11 // pred_region
        _
      $region16: #{seq2seq_transformer_forward.14} parent=11 // pred_fallthru
        _
      // Predicated region
      $region17: #{seq2seq_transformer_forward.14} parent=11 // pred_check
        %p209 = pneg %p81
      $region18: #{seq2seq_transformer_forward.14} parent=11 // pred_check_branch
        %211 = sbr.rel (%p209) target = $region20
      $region19: #{seq2seq_transformer_forward.14} parent=11 // pred_region
        _
      $region20: #{seq2seq_transformer_forward.14} parent=11 // pred_fallthru
        _
      // Predicated region
      $region21: #{seq2seq_transformer_forward.14} parent=11 // pred_check
        %p212 = pneg %p102
      $region22: #{seq2seq_transformer_forward.14} parent=11 // pred_check_branch
        %214 = sbr.rel (%p212) target = $region24
      $region23: #{seq2seq_transformer_forward.14} parent=11 // pred_region
        _
      $region24: #{seq2seq_transformer_forward.14} parent=11 // pred_fallthru
        _
      // Predicated region
      $region25: #{seq2seq_transformer_forward.14} parent=11 // pred_check
        %p215 = pneg %p123
      $region26: #{seq2seq_transformer_forward.14} parent=11 // pred_check_branch
        %217 = sbr.rel (%p215) target = $region28
      $region27: #{seq2seq_transformer_forward.14} parent=11 // pred_region
        _
      $region28: #{seq2seq_transformer_forward.14} parent=11 // pred_fallthru
        _
      // Predicated region
      $region29: #{seq2seq_transformer_forward.14} parent=11 // pred_check
        %p218 = pneg %p144
      $region30: #{seq2seq_transformer_forward.14} parent=11 // pred_check_branch
        %220 = sbr.rel (%p218) target = $region32
      $region31: #{seq2seq_transformer_forward.14} parent=11 // pred_region
        _
      $region32: #{seq2seq_transformer_forward.14} parent=11 // pred_fallthru
        _
      // Predicated region
      $region33: #{seq2seq_transformer_forward.14} parent=11 // pred_check
        %p221 = pneg %p165
      $region34: #{seq2seq_transformer_forward.14} parent=11 // pred_check_branch
        %223 = sbr.rel (%p221) target = $region36
      $region35: #{seq2seq_transformer_forward.14} parent=11 // pred_region
        _
      $region36: #{seq2seq_transformer_forward.14} parent=11 // pred_fallthru
        _
    $region12: #{seq2seq_transformer_forward.14} parent=5 // pred_fallthru
      _
    %p224 = scmp.lt.s32.totalorder %s13, 2
    // Predicated region
    $region37: #{seq2seq_transformer_forward.14} parent=5 // pred_check
      %p225 = pneg %p224
    $region38: #{seq2seq_transformer_forward.14} parent=5 // pred_check_branch
      %227 = sbr.rel (%p225) target = $region40
    $region39: #{seq2seq_transformer_forward.14} parent=5 // pred_region
      // Predicated region
      $region41: #{seq2seq_transformer_forward.14} parent=39 // pred_check
        %p228 = pneg %p33
      $region42: #{seq2seq_transformer_forward.14} parent=39 // pred_check_branch
        %230 = sbr.rel (%p228) target = $region44
      $region43: #{seq2seq_transformer_forward.14} parent=39 // pred_region
        %p231 = scmp.lt.s32.totalorder %s13, 1
        %s232 = scalar_select %p231, %s13, 1
        %s233 = smul.addr %s232, 8
        %s234 = scalar_lea.vmem %s0, %s233
      $region44: #{seq2seq_transformer_forward.14} parent=39 // pred_fallthru
        _
    $region40: #{seq2seq_transformer_forward.14} parent=5 // pred_fallthru
      _
    %p235 = scmp.le.s32.totalorder 1, %s13
    %p236 = scmp.lt.s32.totalorder %s13, 3
    %p237 = pnand %p235, %p236
    %p238 = pneg %p237
    // Predicated region
    $region45: #{seq2seq_transformer_forward.14} parent=5 // pred_check
      _
    $region46: #{seq2seq_transformer_forward.14} parent=5 // pred_check_branch
      %240 = sbr.rel (%p237) target = $region48
    $region47: #{seq2seq_transformer_forward.14} parent=5 // pred_region
      %s241 = ssub.s32 %s13, 1
      %p242 = scmp.lt.s32.totalorder %s18, 1
      %s243 = scalar_select %p242, %s18, 1
      %s244 = smul.addr %s243, 8
      %s245 = scalar_lea.vmem %s0, %s244
      %p246 = pneg %p39
      %p247 = pneg %p36
      %p248 = pneg %p60
      %p249 = pneg %p57
      %p250 = pneg %p81
      %p251 = pneg %p78
      %p252 = pneg %p102
      %p253 = pneg %p99
      %p254 = pneg %p123
      %p255 = pneg %p120
      %p256 = pneg %p144
      %p257 = pneg %p141
      %p258 = pneg %p165
      %p259 = pneg %p162
      %p260 = pneg %p191
      %p261 = pneg %p188
      %p262 = scmp.lt.s32.totalorder %s18, 1
      %s263 = scalar_select %p262, %s18, 1
      %s264 = smul.addr %s263, 8
      %s265 = scalar_lea.vmem %s7, %s264
      %p266 = scmp.lt.s32.totalorder %s18, 1
      %s267 = scalar_select %p266, %s18, 1
      %s268 = smul.addr %s267, 8
      %s269 = scalar_lea.vmem %s0, %s268
      %p270 = scmp.lt.s32.totalorder %s18, 1
      %s271 = scalar_select %p270, %s18, 1
      %s272 = smul.addr %s271, 8
      %s273 = scalar_lea.vmem %s7, %s272
      %v275 = vld [vmem:[%s269] sm:$0xff]
      %v276 = vpack.c.bf16 %v275, %v275
      %v277 = vld [vmem:[%s1] sm:$0xf]
      %v278 = vld [vmem:[%s1 + $0x4] sm:$0xf]
      %v279 = vld [vmem:[%s1 + $0x8] sm:$0xf]
      %v280 = vld [vmem:[%s1 + $0xc] sm:$0xf]
      %v281 = vld [vmem:[%s2] sm:$0x1]
      %v283 = vlaneseq
      %v284 = vshrl.u32 %v283, 7
      %v285 = vsub.s32 0, %v284
      %v286 = vrot.slane %v281, %v285
      %v292 = vunpack.c.l.b16 %v277
      %v293 = vunpack.c.l.b16 %v278
      %v294 = vunpack.c.l.b16 %v279
      %v295 = vunpack.c.l.b16 %v280
      %v296 = vpack.c.b16 %v293, %v292
      %v297 = vpack.c.b16 %v295, %v294
      %vm300 = vcmask 261120
      %v302 = vsel %vm300, %v276, 0
      %304 = vmatprep.subr.bf16.mxu0 0
      %305 = vmatpush1.bf16.msra.mxu0 %v296
      %306 = vmatprep.subr.bf16.mxu0 0
      %307 = vmatpush1.bf16.msra.mxu0 %v297
      %308 = vmatprep.subr.bf16.mxu0 0
      %309 = vmatpush1.bf16.msra.mxu0 0
      %310 = vmatprep.subr.bf16.mxu0 0
      %311 = vmatpush1.bf16.msra.mxu0 0
      %312 = vmatprep.subr.bf16.mxu0 0
      %313 = vmatpush1.bf16.msra.mxu0 0
      %314 = vmatprep.subr.bf16.mxu0 0
      %315 = vmatpush1.bf16.msra.mxu0 0
      %316 = vmatprep.subr.bf16.mxu0 0
      %317 = vmatpush1.bf16.msra.mxu0 0
      %318 = vmatprep.subr.bf16.mxu0 0
      %319 = vmatpush1.bf16.msra.mxu0 0
      %320 = vmatprep.subr.bf16.mxu0 0
      %321 = vmatpush1.bf16.msra.mxu0 0
      %322 = vmatprep.subr.bf16.mxu0 0
      %323 = vmatpush1.bf16.msra.mxu0 0
      %324 = vmatprep.subr.bf16.mxu0 0
      %325 = vmatpush1.bf16.msra.mxu0 0
      %326 = vmatprep.subr.bf16.mxu0 0
      %327 = vmatpush1.bf16.msra.mxu0 0
      %328 = vmatprep.subr.bf16.mxu0 0
      %329 = vmatpush1.bf16.msra.mxu0 0
      %330 = vmatprep.subr.bf16.mxu0 0
      %331 = vmatpush1.bf16.msra.mxu0 0
      %332 = vmatprep.subr.bf16.mxu0 0
      %333 = vmatpush1.bf16.msra.mxu0 0
      %334 = vmatprep.subr.bf16.mxu0 0
      %335 = vmatpush1.bf16.msra.mxu0 0
      %336 = vmatprep.mubr.bf16.mxu0 0
      %337 = vmatmul.mubr.bf16.gmra.mrb[0].mxu0 %v302
      %v338 = vpop.f32.mrb[0].mxu0
      %v339 = vadd.f32 %v286, %v338
      %v340 = vpop.f32.mrb[0].mxu0
      %v341 = vpop.f32.mrb[0].mxu0
      %v342 = vpop.f32.mrb[0].mxu0
      %343 = vdwg.mxu0
      %v344 = vmax.f32 %v339, 0.0
      %v345 = vpack.c.bf16 %v344, %v344
      %v346 = vld [vmem:[%s3] sm:$0xf]
      %v347 = vld [vmem:[%s3 + $0x4] sm:$0xf]
      %v348 = vld [vmem:[%s3 + $0x8] sm:$0xf]
      %v349 = vld [vmem:[%s3 + $0xc] sm:$0xf]
      %v350 = vld [vmem:[%s3 + $0x10] sm:$0xf]
      %v351 = vld [vmem:[%s3 + $0x14] sm:$0xf]
      %v352 = vld [vmem:[%s3 + $0x18] sm:$0xf]
      %v353 = vld [vmem:[%s3 + $0x1c] sm:$0xf]
      %v354 = vld [vmem:[%s4] sm:$0x1]
      %v356 = vlaneseq
      %v357 = vshrl.u32 %v356, 7
      %v358 = vsub.s32 0, %v357
      %v359 = vrot.slane %v354, %v358
      %v369 = vunpack.c.l.b16 %v346
      %v370 = vunpack.c.l.b16 %v347
      %v371 = vunpack.c.l.b16 %v348
      %v372 = vunpack.c.l.b16 %v349
      %v373 = vunpack.c.l.b16 %v350
      %v374 = vunpack.c.l.b16 %v351
      %v375 = vunpack.c.l.b16 %v352
      %v376 = vunpack.c.l.b16 %v353
      %v377 = vpack.c.b16 %v370, %v369
      %v378 = vpack.c.b16 %v372, %v371
      %v379 = vpack.c.b16 %v374, %v373
      %v380 = vpack.c.b16 %v376, %v375
      %vm385 = vcmask 523264
      %v387 = vsel %vm385, %v345, 0
      %389 = vmatprep.subr.bf16.mxu0 0
      %390 = vmatpush1.bf16.msra.mxu0 %v377
      %391 = vmatprep.subr.bf16.mxu0 0
      %392 = vmatpush1.bf16.msra.mxu0 %v378
      %393 = vmatprep.subr.bf16.mxu0 0
      %394 = vmatpush1.bf16.msra.mxu0 %v379
      %395 = vmatprep.subr.bf16.mxu0 0
      %396 = vmatpush1.bf16.msra.mxu0 %v380
      %397 = vmatprep.subr.bf16.mxu0 0
      %398 = vmatpush1.bf16.msra.mxu0 0
      %399 = vmatprep.subr.bf16.mxu0 0
      %400 = vmatpush1.bf16.msra.mxu0 0
      %401 = vmatprep.subr.bf16.mxu0 0
      %402 = vmatpush1.bf16.msra.mxu0 0
      %403 = vmatprep.subr.bf16.mxu0 0
      %404 = vmatpush1.bf16.msra.mxu0 0
      %405 = vmatprep.subr.bf16.mxu0 0
      %406 = vmatpush1.bf16.msra.mxu0 0
      %407 = vmatprep.subr.bf16.mxu0 0
      %408 = vmatpush1.bf16.msra.mxu0 0
      %409 = vmatprep.subr.bf16.mxu0 0
      %410 = vmatpush1.bf16.msra.mxu0 0
      %411 = vmatprep.subr.bf16.mxu0 0
      %412 = vmatpush1.bf16.msra.mxu0 0
      %413 = vmatprep.subr.bf16.mxu0 0
      %414 = vmatpush1.bf16.msra.mxu0 0
      %415 = vmatprep.subr.bf16.mxu0 0
      %416 = vmatpush1.bf16.msra.mxu0 0
      %417 = vmatprep.subr.bf16.mxu0 0
      %418 = vmatpush1.bf16.msra.mxu0 0
      %419 = vmatprep.subr.bf16.mxu0 0
      %420 = vmatpush1.bf16.msra.mxu0 0
      %421 = vmatprep.mubr.bf16.mxu0 0
      %422 = vmatmul.mubr.bf16.gmra.mrb[0].mxu0 %v387
      %v423 = vpop.f32.mrb[0].mxu0
      %v424 = vadd.f32 %v359, %v423
      %v425 = vpop.f32.mrb[0].mxu0
      %v426 = vpop.f32.mrb[0].mxu0
      %v427 = vpop.f32.mrb[0].mxu0
      %428 = vdwg.mxu0
      %v429 = vadd.f32 %v275, %v424
      %v430 = vld [vmem:[%s5] sm:$0x1]
      %v431 = vld [vmem:[%s6] sm:$0x1]
      %v432 = vsel %vm300, %v429, 0.0
      %433 = vadd.xlane.f32.xlu0 %v432
      %v434 = vpop.xlane.xlu0 %433
      %v435 = vrcp.pop 32.0
      %v436 = vmul.f32 %v434, %v435
      %v437 = vsub.f32 %v429, %v436
      %v438 = vmul.f32 %v437, %v437
      %v439 = vsel %vm300, %v438, 0.0
      %440 = vadd.xlane.f32.xlu0 %v439
      %v441 = vpop.xlane.xlu0 %440
      %v442 = vmul.f32 %v441, %v435
      %v443 = vadd.f32 %v442, 1e-05
      %v444 = vrsqrt.pop %v443
      %v445 = vmul.f32 %v437, %v444
      %v447 = vlaneseq
      %v448 = vshrl.u32 %v447, 7
      %v449 = vsub.s32 0, %v448
      %v450 = vrot.slane %v430, %v449
      %v452 = vmul.f32 %v445, %v450
      %v454 = vlaneseq
      %v455 = vshrl.u32 %v454, 7
      %v456 = vsub.s32 0, %v455
      %v457 = vrot.slane %v431, %v456
      %v459 = vadd.f32 %v452, %v457
      %460 = vst.msk [vmem:[%s273] sm:$0xff] %vm300, %v459
      %p461 = scmp.lt.s32.totalorder %s18, 1
      %s462 = scalar_select %p461, %s18, 1
      %s463 = smul.addr %s462, 8
      %s464 = scalar_lea.vmem %s7, %s463
      // Predicated region
      $region49: #{seq2seq_transformer_forward.14} parent=47 // pred_check
        %p465 = pneg %p188
      $region50: #{seq2seq_transformer_forward.14} parent=47 // pred_check_branch
        %467 = sbr.rel (%p465) target = $region52
      $region51: #{seq2seq_transformer_forward.14} parent=47 // pred_region
        _
      $region52: #{seq2seq_transformer_forward.14} parent=47 // pred_fallthru
        _
    $region48: #{seq2seq_transformer_forward.14} parent=5 // pred_fallthru
      _
    %p468 = scmp.le.s32.totalorder 2, %s13
    // Predicated region
    $region53: #{seq2seq_transformer_forward.14} parent=5 // pred_check
      %p469 = pneg %p468
    $region54: #{seq2seq_transformer_forward.14} parent=5 // pred_check_branch
      %471 = sbr.rel (%p469) target = $region56
    $region55: #{seq2seq_transformer_forward.14} parent=5 // pred_region
      %s472 = ssub.s32 %s13, 2
      // Predicated region
      $region57: #{seq2seq_transformer_forward.14} parent=55 // pred_check
        %p473 = pneg %p194
      $region58: #{seq2seq_transformer_forward.14} parent=55 // pred_check_branch
        %475 = sbr.rel (%p473) target = $region60
      $region59: #{seq2seq_transformer_forward.14} parent=55 // pred_region
        %p476 = scmp.lt.s32.totalorder %s19, 1
        %s477 = scalar_select %p476, %s19, 1
        %s478 = smul.addr %s477, 8
        %s479 = scalar_lea.vmem %s7, %s478
      $region60: #{seq2seq_transformer_forward.14} parent=55 // pred_fallthru
        _
    $region56: #{seq2seq_transformer_forward.14} parent=5 // pred_fallthru
      _
  $region6: #{seq2seq_transformer_forward.14} parent=0 // loop_footer
    %s17 = sadd.s32 1, %s13
  $region7: #{seq2seq_transformer_forward.14} parent=0 // loop_footer_branch
    %12 = sbr.rel target = $region3
  $region8: #{seq2seq_transformer_forward.14} parent=0 // loop_exit
    _

// kernel: seq2seq_transformer_forward.13
$region0: #{seq2seq_transformer_forward.13}
  #allocation0 [shape = 'u32[]', space=smem, size = 0x4, offset = 0x4, fixed_abs, tag = 'smem constant byte address 0x4 - core index']
  #allocation1 [shape = 'u32[144,128]{1,0:T(1,128)}', space=vmem, size = 0x12000, scoped, tag = 'internal scratch']
  %s0 = inlined_call_operand.vmem [shape: f32[2,8,32], index: 0, kind: input, shape index: {}]
  %s1 = inlined_call_operand.vmem [shape: f32[8,8], index: 1, kind: input, shape index: {}]
  %s2 = inlined_call_operand.vmem [shape: f32[2,1,8], index: 2, kind: input, shape index: {}]
  %s3 = inlined_call_operand.vmem [shape: bf16[32,96], index: 3, kind: input, shape index: {}]
  %s4 = inlined_call_operand.vmem [shape: f32[1,96], index: 4, kind: input, shape index: {}]
  %s5 = inlined_call_operand.vmem [shape: bf16[32,32], index: 5, kind: input, shape index: {}]
  %s6 = inlined_call_operand.vmem [shape: f32[1,32], index: 6, kind: input, shape index: {}]
  %s7 = inlined_call_operand.vmem [shape: f32[1,32], index: 7, kind: input, shape index: {}]
  %s8 = inlined_call_operand.vmem [shape: f32[1,32], index: 8, kind: input, shape index: {}]
  %s9 = inlined_call_operand.vmem [shape: f32[2,8,32], index: 9, kind: output, shape index: {}]
  %s10 = sld [smem:[#allocation0]]
  $region69: #{seq2seq_transformer_forward.13} parent=0
    _
  %s12 = ssub.s32 1, %s10
  %s13 = scalar_select 0, %s12, %s10
  loop: start=0, step=1, limit=4
  $region2: #{seq2seq_transformer_forward.13} parent=0 // loop_pre_header
    _
  $region3: #{seq2seq_transformer_forward.13} parent=0 // loop_header
    %s15 = sphi 0, %s19
    %p16 = scmp.ge.s32.totalorder %s15, 4
    %s25 = sphi 0, %s27
    %s28 = sphi 0, %s25
    %s29 = sphi 0, %s28
    %s45 = sphi 0, %s29
    %s49 = sphi 0, %s49
    %s51 = sphi 0, %s49
    %s52 = sphi 0, %s51
    %s66 = sphi 0, %s52
    %s72 = sphi 0, %s74
    %s75 = sphi 0, %s72
    %s76 = sphi 0, %s75
    %s92 = sphi 0, %s76
    %s96 = sphi 0, %s96
    %s98 = sphi 0, %s96
    %s99 = sphi 0, %s98
    %s113 = sphi 0, %s99
    %s117 = sphi 0, %s117
    %s119 = sphi 0, %s117
    %s120 = sphi 0, %s119
    %s134 = sphi 0, %s120
    %s138 = sphi 0, %s138
    %s140 = sphi 0, %s138
    %s141 = sphi 0, %s140
    %s155 = sphi 0, %s141
    %s159 = sphi 0, %s159
    %s161 = sphi 0, %s159
    %s162 = sphi 0, %s161
    %s176 = sphi 0, %s162
    %s180 = sphi 0, %s180
    %s182 = sphi 0, %s180
    %s183 = sphi 0, %s182
    %s197 = sphi 0, %s183
    %s201 = sphi 0, %s201
    %s203 = sphi 0, %s201
    %s204 = sphi 0, %s203
    %s218 = sphi 0, %s204
    %s224 = sphi 0, %s226
    %s227 = sphi 0, %s224
    %s228 = sphi 0, %s227
    %s244 = sphi 0, %s228
  $region4: #{seq2seq_transformer_forward.13} parent=0 // loop_header_branch
    %18 = sbr.rel (%p16) target = $region8
  $region5: #{seq2seq_transformer_forward.13} parent=0 // loop_body
    %s20 = ssub.s32 %s15, 1
    %s21 = ssub.s32 %s15, 2
    %s22 = sadd.s32 %s15, 1
    %s23 = ssub.s32 %s15, %s22
    %p24 = scmp.eq.s32.totalorder %s23, 0
    %s26 = sadd.s32 %s25, 1
    %s27 = scalar_select %p24, %s25, %s26
    %p30 = pneg %p24
    %p31 = scmp.eq.s32.totalorder %s15, 1
    %p32 = por %p30, %p31
    %p33 = scmp.ne.s32.totalorder %s25, %s28
    %p34 = scmp.eq.s32.totalorder %s15, 0
    %p35 = por %p33, %p34
    %p36 = scmp.ne.s32.totalorder %s25, %s28
    %p37 = scmp.eq.s32.totalorder %s20, 1
    %p38 = por %p36, %p37
    %p39 = scmp.ne.s32.totalorder %s28, %s29
    %p40 = scmp.eq.s32.totalorder %s20, 0
    %p41 = por %p39, %p40
    %p42 = scmp.ne.s32.totalorder %s28, %s29
    %p43 = scmp.eq.s32.totalorder %s21, 1
    %p44 = por %p42, %p43
    %p46 = scmp.ne.s32.totalorder %s29, %s45
    %p47 = scmp.eq.s32.totalorder %s21, 0
    %p48 = por %p46, %p47
    %s50 = sadd.s32 %s49, 1
    %p53 = scmp.eq.s32.totalorder %s15, 1
    %p54 = scmp.ne.s32.totalorder %s49, %s51
    %p55 = scmp.eq.s32.totalorder %s15, 0
    %p56 = por %p54, %p55
    %p57 = scmp.ne.s32.totalorder %s49, %s51
    %p58 = scmp.eq.s32.totalorder %s20, 1
    %p59 = por %p57, %p58
    %p60 = scmp.ne.s32.totalorder %s51, %s52
    %p61 = scmp.eq.s32.totalorder %s20, 0
    %p62 = por %p60, %p61
    %p63 = scmp.ne.s32.totalorder %s51, %s52
    %p64 = scmp.eq.s32.totalorder %s21, 1
    %p65 = por %p63, %p64
    %p67 = scmp.ne.s32.totalorder %s52, %s66
    %p68 = scmp.eq.s32.totalorder %s21, 0
    %p69 = por %p67, %p68
    %s70 = ssub.s32 %s15, %s22
    %p71 = scmp.eq.s32.totalorder %s70, 0
    %s73 = sadd.s32 %s72, 1
    %s74 = scalar_select %p71, %s72, %s73
    %p77 = pneg %p71
    %p78 = scmp.eq.s32.totalorder %s15, 1
    %p79 = por %p77, %p78
    %p80 = scmp.ne.s32.totalorder %s72, %s75
    %p81 = scmp.eq.s32.totalorder %s15, 0
    %p82 = por %p80, %p81
    %p83 = scmp.ne.s32.totalorder %s72, %s75
    %p84 = scmp.eq.s32.totalorder %s20, 1
    %p85 = por %p83, %p84
    %p86 = scmp.ne.s32.totalorder %s75, %s76
    %p87 = scmp.eq.s32.totalorder %s20, 0
    %p88 = por %p86, %p87
    %p89 = scmp.ne.s32.totalorder %s75, %s76
    %p90 = scmp.eq.s32.totalorder %s21, 1
    %p91 = por %p89, %p90
    %p93 = scmp.ne.s32.totalorder %s76, %s92
    %p94 = scmp.eq.s32.totalorder %s21, 0
    %p95 = por %p93, %p94
    %s97 = sadd.s32 %s96, 1
    %p100 = scmp.eq.s32.totalorder %s15, 1
    %p101 = scmp.ne.s32.totalorder %s96, %s98
    %p102 = scmp.eq.s32.totalorder %s15, 0
    %p103 = por %p101, %p102
    %p104 = scmp.ne.s32.totalorder %s96, %s98
    %p105 = scmp.eq.s32.totalorder %s20, 1
    %p106 = por %p104, %p105
    %p107 = scmp.ne.s32.totalorder %s98, %s99
    %p108 = scmp.eq.s32.totalorder %s20, 0
    %p109 = por %p107, %p108
    %p110 = scmp.ne.s32.totalorder %s98, %s99
    %p111 = scmp.eq.s32.totalorder %s21, 1
    %p112 = por %p110, %p111
    %p114 = scmp.ne.s32.totalorder %s99, %s113
    %p115 = scmp.eq.s32.totalorder %s21, 0
    %p116 = por %p114, %p115
    %s118 = sadd.s32 %s117, 1
    %p121 = scmp.eq.s32.totalorder %s15, 1
    %p122 = scmp.ne.s32.totalorder %s117, %s119
    %p123 = scmp.eq.s32.totalorder %s15, 0
    %p124 = por %p122, %p123
    %p125 = scmp.ne.s32.totalorder %s117, %s119
    %p126 = scmp.eq.s32.totalorder %s20, 1
    %p127 = por %p125, %p126
    %p128 = scmp.ne.s32.totalorder %s119, %s120
    %p129 = scmp.eq.s32.totalorder %s20, 0
    %p130 = por %p128, %p129
    %p131 = scmp.ne.s32.totalorder %s119, %s120
    %p132 = scmp.eq.s32.totalorder %s21, 1
    %p133 = por %p131, %p132
    %p135 = scmp.ne.s32.totalorder %s120, %s134
    %p136 = scmp.eq.s32.totalorder %s21, 0
    %p137 = por %p135, %p136
    %s139 = sadd.s32 %s138, 1
    %p142 = scmp.eq.s32.totalorder %s15, 1
    %p143 = scmp.ne.s32.totalorder %s138, %s140
    %p144 = scmp.eq.s32.totalorder %s15, 0
    %p145 = por %p143, %p144
    %p146 = scmp.ne.s32.totalorder %s138, %s140
    %p147 = scmp.eq.s32.totalorder %s20, 1
    %p148 = por %p146, %p147
    %p149 = scmp.ne.s32.totalorder %s140, %s141
    %p150 = scmp.eq.s32.totalorder %s20, 0
    %p151 = por %p149, %p150
    %p152 = scmp.ne.s32.totalorder %s140, %s141
    %p153 = scmp.eq.s32.totalorder %s21, 1
    %p154 = por %p152, %p153
    %p156 = scmp.ne.s32.totalorder %s141, %s155
    %p157 = scmp.eq.s32.totalorder %s21, 0
    %p158 = por %p156, %p157
    %s160 = sadd.s32 %s159, 1
    %p163 = scmp.eq.s32.totalorder %s15, 1
    %p164 = scmp.ne.s32.totalorder %s159, %s161
    %p165 = scmp.eq.s32.totalorder %s15, 0
    %p166 = por %p164, %p165
    %p167 = scmp.ne.s32.totalorder %s159, %s161
    %p168 = scmp.eq.s32.totalorder %s20, 1
    %p169 = por %p167, %p168
    %p170 = scmp.ne.s32.totalorder %s161, %s162
    %p171 = scmp.eq.s32.totalorder %s20, 0
    %p172 = por %p170, %p171
    %p173 = scmp.ne.s32.totalorder %s161, %s162
    %p174 = scmp.eq.s32.totalorder %s21, 1
    %p175 = por %p173, %p174
    %p177 = scmp.ne.s32.totalorder %s162, %s176
    %p178 = scmp.eq.s32.totalorder %s21, 0
    %p179 = por %p177, %p178
    %s181 = sadd.s32 %s180, 1
    %p184 = scmp.eq.s32.totalorder %s15, 1
    %p185 = scmp.ne.s32.totalorder %s180, %s182
    %p186 = scmp.eq.s32.totalorder %s15, 0
    %p187 = por %p185, %p186
    %p188 = scmp.ne.s32.totalorder %s180, %s182
    %p189 = scmp.eq.s32.totalorder %s20, 1
    %p190 = por %p188, %p189
    %p191 = scmp.ne.s32.totalorder %s182, %s183
    %p192 = scmp.eq.s32.totalorder %s20, 0
    %p193 = por %p191, %p192
    %p194 = scmp.ne.s32.totalorder %s182, %s183
    %p195 = scmp.eq.s32.totalorder %s21, 1
    %p196 = por %p194, %p195
    %p198 = scmp.ne.s32.totalorder %s183, %s197
    %p199 = scmp.eq.s32.totalorder %s21, 0
    %p200 = por %p198, %p199
    %s202 = sadd.s32 %s201, 1
    %p205 = scmp.eq.s32.totalorder %s15, 1
    %p206 = scmp.ne.s32.totalorder %s201, %s203
    %p207 = scmp.eq.s32.totalorder %s15, 0
    %p208 = por %p206, %p207
    %p209 = scmp.ne.s32.totalorder %s201, %s203
    %p210 = scmp.eq.s32.totalorder %s20, 1
    %p211 = por %p209, %p210
    %p212 = scmp.ne.s32.totalorder %s203, %s204
    %p213 = scmp.eq.s32.totalorder %s20, 0
    %p214 = por %p212, %p213
    %p215 = scmp.ne.s32.totalorder %s203, %s204
    %p216 = scmp.eq.s32.totalorder %s21, 1
    %p217 = por %p215, %p216
    %p219 = scmp.ne.s32.totalorder %s204, %s218
    %p220 = scmp.eq.s32.totalorder %s21, 0
    %p221 = por %p219, %p220
    %s222 = ssub.s32 %s15, %s22
    %p223 = scmp.eq.s32.totalorder %s222, 0
    %s225 = sadd.s32 %s224, 1
    %s226 = scalar_select %p223, %s224, %s225
    %p229 = pneg %p223
    %p230 = scmp.eq.s32.totalorder %s15, 1
    %p231 = por %p229, %p230
    %p232 = scmp.ne.s32.totalorder %s224, %s227
    %p233 = scmp.eq.s32.totalorder %s15, 0
    %p234 = por %p232, %p233
    %p235 = scmp.ne.s32.totalorder %s224, %s227
    %p236 = scmp.eq.s32.totalorder %s20, 1
    %p237 = por %p235, %p236
    %p238 = scmp.ne.s32.totalorder %s227, %s228
    %p239 = scmp.eq.s32.totalorder %s20, 0
    %p240 = por %p238, %p239
    %p241 = scmp.ne.s32.totalorder %s227, %s228
    %p242 = scmp.eq.s32.totalorder %s21, 1
    %p243 = por %p241, %p242
    %p245 = scmp.ne.s32.totalorder %s228, %s244
    %p246 = scmp.eq.s32.totalorder %s21, 0
    %p247 = por %p245, %p246
    %p248 = scmp.le.s32.totalorder 1, %s15
    %p249 = scmp.lt.s32.totalorder %s15, 3
    %p250 = pnand %p248, %p249
    %p251 = pneg %p250
    // Predicated region
    $region9: #{seq2seq_transformer_forward.13} parent=5 // pred_check
      _
    $region10: #{seq2seq_transformer_forward.13} parent=5 // pred_check_branch
      %253 = sbr.rel (%p250) target = $region12
    $region11: #{seq2seq_transformer_forward.13} parent=5 // pred_region
      %s254 = ssub.s32 %s15, 1
      // Predicated region
      $region13: #{seq2seq_transformer_forward.13} parent=11 // pred_check
        %p255 = pneg %p62
      $region14: #{seq2seq_transformer_forward.13} parent=11 // pred_check_branch
        %257 = sbr.rel (%p255) target = $region16
      $region15: #{seq2seq_transformer_forward.13} parent=11 // pred_region
        _
      $region16: #{seq2seq_transformer_forward.13} parent=11 // pred_fallthru
        _
      // Predicated region
      $region17: #{seq2seq_transformer_forward.13} parent=11 // pred_check
        %p258 = pneg %p109
      $region18: #{seq2seq_transformer_forward.13} parent=11 // pred_check_branch
        %260 = sbr.rel (%p258) target = $region20
      $region19: #{seq2seq_transformer_forward.13} parent=11 // pred_region
        _
      $region20: #{seq2seq_transformer_forward.13} parent=11 // pred_fallthru
        _
      // Predicated region
      $region21: #{seq2seq_transformer_forward.13} parent=11 // pred_check
        %p261 = pneg %p130
      $region22: #{seq2seq_transformer_forward.13} parent=11 // pred_check_branch
        %263 = sbr.rel (%p261) target = $region24
      $region23: #{seq2seq_transformer_forward.13} parent=11 // pred_region
        _
      $region24: #{seq2seq_transformer_forward.13} parent=11 // pred_fallthru
        _
      // Predicated region
      $region25: #{seq2seq_transformer_forward.13} parent=11 // pred_check
        %p264 = pneg %p151
      $region26: #{seq2seq_transformer_forward.13} parent=11 // pred_check_branch
        %266 = sbr.rel (%p264) target = $region28
      $region27: #{seq2seq_transformer_forward.13} parent=11 // pred_region
        _
      $region28: #{seq2seq_transformer_forward.13} parent=11 // pred_fallthru
        _
      // Predicated region
      $region29: #{seq2seq_transformer_forward.13} parent=11 // pred_check
        %p267 = pneg %p172
      $region30: #{seq2seq_transformer_forward.13} parent=11 // pred_check_branch
        %269 = sbr.rel (%p267) target = $region32
      $region31: #{seq2seq_transformer_forward.13} parent=11 // pred_region
        _
      $region32: #{seq2seq_transformer_forward.13} parent=11 // pred_fallthru
        _
      // Predicated region
      $region33: #{seq2seq_transformer_forward.13} parent=11 // pred_check
        %p270 = pneg %p193
      $region34: #{seq2seq_transformer_forward.13} parent=11 // pred_check_branch
        %272 = sbr.rel (%p270) target = $region36
      $region35: #{seq2seq_transformer_forward.13} parent=11 // pred_region
        _
      $region36: #{seq2seq_transformer_forward.13} parent=11 // pred_fallthru
        _
      // Predicated region
      $region37: #{seq2seq_transformer_forward.13} parent=11 // pred_check
        %p273 = pneg %p214
      $region38: #{seq2seq_transformer_forward.13} parent=11 // pred_check_branch
        %275 = sbr.rel (%p273) target = $region40
      $region39: #{seq2seq_transformer_forward.13} parent=11 // pred_region
        _
      $region40: #{seq2seq_transformer_forward.13} parent=11 // pred_fallthru
        _
    $region12: #{seq2seq_transformer_forward.13} parent=5 // pred_fallthru
      _
    %p276 = scmp.lt.s32.totalorder %s15, 2
    // Predicated region
    $region41: #{seq2seq_transformer_forward.13} parent=5 // pred_check
      %p277 = pneg %p276
    $region42: #{seq2seq_transformer_forward.13} parent=5 // pred_check_branch
      %279 = sbr.rel (%p277) target = $region44
    $region43: #{seq2seq_transformer_forward.13} parent=5 // pred_region
      // Predicated region
      $region45: #{seq2seq_transformer_forward.13} parent=43 // pred_check
        %p280 = pneg %p35
      $region46: #{seq2seq_transformer_forward.13} parent=43 // pred_check_branch
        %282 = sbr.rel (%p280) target = $region48
      $region47: #{seq2seq_transformer_forward.13} parent=43 // pred_region
        %p283 = scmp.lt.s32.totalorder %s15, 1
        %s284 = scalar_select %p283, %s15, 1
        %s285 = smul.addr %s284, 8
        %s286 = scalar_lea.vmem %s0, %s285
      $region48: #{seq2seq_transformer_forward.13} parent=43 // pred_fallthru
        _
      // Predicated region
      $region49: #{seq2seq_transformer_forward.13} parent=43 // pred_check
        %p287 = pneg %p82
      $region50: #{seq2seq_transformer_forward.13} parent=43 // pred_check_branch
        %289 = sbr.rel (%p287) target = $region52
      $region51: #{seq2seq_transformer_forward.13} parent=43 // pred_region
        %p290 = scmp.lt.s32.totalorder %s15, 1
        %s291 = scalar_select %p290, %s15, 1
        %s292 = scalar_lea.vmem %s2, %s291
      $region52: #{seq2seq_transformer_forward.13} parent=43 // pred_fallthru
        _
    $region44: #{seq2seq_transformer_forward.13} parent=5 // pred_fallthru
      _
    %p293 = scmp.le.s32.totalorder 1, %s15
    %p294 = scmp.lt.s32.totalorder %s15, 3
    %p295 = pnand %p293, %p294
    %p296 = pneg %p295
    // Predicated region
    $region53: #{seq2seq_transformer_forward.13} parent=5 // pred_check
      _
    $region54: #{seq2seq_transformer_forward.13} parent=5 // pred_check_branch
      %298 = sbr.rel (%p295) target = $region56
    $region55: #{seq2seq_transformer_forward.13} parent=5 // pred_region
      %s299 = ssub.s32 %s15, 1
      %p300 = scmp.lt.s32.totalorder %s20, 1
      %s301 = scalar_select %p300, %s20, 1
      %s302 = smul.addr %s301, 8
      %s303 = scalar_lea.vmem %s0, %s302
      %p304 = pneg %p41
      %p305 = pneg %p38
      %p306 = pneg %p62
      %p307 = pneg %p59
      %p308 = scmp.lt.s32.totalorder %s20, 1
      %s309 = scalar_select %p308, %s20, 1
      %s310 = scalar_lea.vmem %s2, %s309
      %p311 = pneg %p88
      %p312 = pneg %p85
      %p313 = pneg %p109
      %p314 = pneg %p106
      %p315 = pneg %p130
      %p316 = pneg %p127
      %p317 = pneg %p151
      %p318 = pneg %p148
      %p319 = pneg %p172
      %p320 = pneg %p169
      %p321 = pneg %p193
      %p322 = pneg %p190
      %p323 = pneg %p214
      %p324 = pneg %p211
      %p325 = pneg %p240
      %p326 = pneg %p237
      %p327 = scmp.lt.s32.totalorder %s20, 1
      %s328 = scalar_select %p327, %s20, 1
      %s329 = smul.addr %s328, 8
      %s330 = scalar_lea.vmem %s9, %s329
      %p331 = scmp.lt.s32.totalorder %s20, 1
      %s332 = scalar_select %p331, %s20, 1
      %s333 = smul.addr %s332, 8
      %s334 = scalar_lea.vmem %s0, %s333
      %p335 = scmp.lt.s32.totalorder %s20, 1
      %s336 = scalar_select %p335, %s20, 1
      %s337 = scalar_lea.vmem %s2, %s336
      %p338 = scmp.lt.s32.totalorder %s20, 1
      %s339 = scalar_select %p338, %s20, 1
      %s340 = smul.addr %s339, 8
      %s341 = scalar_lea.vmem %s9, %s340
      %v343 = vld [vmem:[%s334] sm:$0xff]
      %v344 = vpack.c.bf16 %v343, %v343
      %v345 = vld [vmem:[%s3] sm:$0xf]
      %v346 = vld [vmem:[%s3 + $0x4] sm:$0xf]
      %v347 = vld [vmem:[%s3 + $0x8] sm:$0xf]
      %v348 = vld [vmem:[%s3 + $0xc] sm:$0xf]
      %v349 = vld [vmem:[%s4] sm:$0x1]
      %v351 = vlaneseq
      %v352 = vshrl.u32 %v351, 7
      %v353 = vsub.s32 0, %v352
      %v354 = vrot.slane %v349, %v353
      %v360 = vunpack.c.l.b16 %v345
      %v361 = vunpack.c.l.b16 %v346
      %v362 = vunpack.c.l.b16 %v347
      %v363 = vunpack.c.l.b16 %v348
      %v364 = vpack.c.b16 %v361, %v360
      %v365 = vpack.c.b16 %v363, %v362
      %vm368 = vcmask 261120
      %v370 = vsel %vm368, %v344, 0
      %372 = vmatprep.subr.bf16.mxu0 0
      %373 = vmatpush1.bf16.msra.mxu0 %v364
      %374 = vmatprep.subr.bf16.mxu0 0
      %375 = vmatpush1.bf16.msra.mxu0 %v365
      %376 = vmatprep.subr.bf16.mxu0 0
      %377 = vmatpush1.bf16.msra.mxu0 0
      %378 = vmatprep.subr.bf16.mxu0 0
      %379 = vmatpush1.bf16.msra.mxu0 0
      %380 = vmatprep.subr.bf16.mxu0 0
      %381 = vmatpush1.bf16.msra.mxu0 0
      %382 = vmatprep.subr.bf16.mxu0 0
      %383 = vmatpush1.bf16.msra.mxu0 0
      %384 = vmatprep.subr.bf16.mxu0 0
      %385 = vmatpush1.bf16.msra.mxu0 0
      %386 = vmatprep.subr.bf16.mxu0 0
      %387 = vmatpush1.bf16.msra.mxu0 0
      %388 = vmatprep.subr.bf16.mxu0 0
      %389 = vmatpush1.bf16.msra.mxu0 0
      %390 = vmatprep.subr.bf16.mxu0 0
      %391 = vmatpush1.bf16.msra.mxu0 0
      %392 = vmatprep.subr.bf16.mxu0 0
      %393 = vmatpush1.bf16.msra.mxu0 0
      %394 = vmatprep.subr.bf16.mxu0 0
      %395 = vmatpush1.bf16.msra.mxu0 0
      %396 = vmatprep.subr.bf16.mxu0 0
      %397 = vmatpush1.bf16.msra.mxu0 0
      %398 = vmatprep.subr.bf16.mxu0 0
      %399 = vmatpush1.bf16.msra.mxu0 0
      %400 = vmatprep.subr.bf16.mxu0 0
      %401 = vmatpush1.bf16.msra.mxu0 0
      %402 = vmatprep.subr.bf16.mxu0 0
      %403 = vmatpush1.bf16.msra.mxu0 0
      %404 = vmatprep.mubr.bf16.mxu0 0
      %405 = vmatmul.mubr.bf16.gmra.mrb[0].mxu0 %v370
      %v406 = vpop.f32.mrb[0].mxu0
      %v407 = vadd.f32 %v354, %v406
      %v408 = vpop.f32.mrb[0].mxu0
      %v409 = vpop.f32.mrb[0].mxu0
      %v410 = vpop.f32.mrb[0].mxu0
      %411 = vdwg.mxu0
      %v412 = vpack.c.bf16 %v407, %v407
      %v413 = vld [vmem:[%s1] sm:$0xff]
      %v414 = vld [vmem:[%s337] sm:$0x1]
      %v416 = vlaneseq
      %v417 = vshrl.u32 %v416, 7
      %v418 = vsub.s32 0, %v417
      %v419 = vrot.slane %v414, %v418
      %v421 = vadd.f32 %v413, %v419
      %423 = vrot.lane.b32.xlu0 %v412, 96
      %v424 = vpop.permute.xlu0 %423
      %vm425 = vcmask 64512
      %v427 = vsel %vm425, %v412, 0
      %v430 = vsel %vm425, %v424, 0
      %432 = vmatprep.subr.bf16.mxu0 0
      %433 = vmatpush1.bf16.xpose.msra.mxu0 %v430
      %434 = vmatprep.subr.bf16.mxu0 0
      %435 = vmatpush1.bf16.xpose.msra.mxu0 0
      %436 = vmatprep.subr.bf16.mxu0 0
      %437 = vmatpush1.bf16.xpose.msra.mxu0 0
      %438 = vmatprep.subr.bf16.mxu0 0
      %439 = vmatpush1.bf16.xpose.msra.mxu0 0
      %440 = vmatprep.subr.bf16.mxu0 0
      %441 = vmatpush1.bf16.xpose.msra.mxu0 0
      %442 = vmatprep.subr.bf16.mxu0 0
      %443 = vmatpush1.bf16.xpose.msra.mxu0 0
      %444 = vmatprep.subr.bf16.mxu0 0
      %445 = vmatpush1.bf16.xpose.msra.mxu0 0
      %446 = vmatprep.subr.bf16.mxu0 0
      %447 = vmatpush1.bf16.xpose.msra.mxu0 0
      %448 = vmatprep.subr.bf16.mxu0 0
      %449 = vmatpush1.bf16.xpose.msra.mxu0 0
      %450 = vmatprep.subr.bf16.mxu0 0
      %451 = vmatpush1.bf16.xpose.msra.mxu0 0
      %452 = vmatprep.subr.bf16.mxu0 0
      %453 = vmatpush1.bf16.xpose.msra.mxu0 0
      %454 = vmatprep.subr.bf16.mxu0 0
      %455 = vmatpush1.bf16.xpose.msra.mxu0 0
      %456 = vmatprep.subr.bf16.mxu0 0
      %457 = vmatpush1.bf16.xpose.msra.mxu0 0
      %458 = vmatprep.subr.bf16.mxu0 0
      %459 = vmatpush1.bf16.xpose.msra.mxu0 0
      %460 = vmatprep.subr.bf16.mxu0 0
      %461 = vmatpush1.bf16.xpose.msra.mxu0 0
      %462 = vmatprep.subr.bf16.mxu0 0
      %463 = vmatpush1.bf16.xpose.msra.mxu0 0
      %464 = vmatprep.mubr.bf16.mxu0 0
      %465 = vmatmul.mubr.bf16.gmra.mrb[0].mxu0 %v427
      %v466 = vpop.f32.mrb[0].mxu0
      %v467 = vadd.f32 %v421, %v466
      %v468 = vpop.f32.mrb[0].mxu0
      %v469 = vpop.f32.mrb[0].mxu0
      %v470 = vpop.f32.mrb[0].mxu0
      %471 = vdwg.mxu0
      %v472 = vsel %vm425, %v467, -inf
      %473 = vmax.xlane.f32.xlu0 %v472
      %v474 = vpop.xlane.xlu0 %473
      %v475 = vsub.f32 %v467, %v474
      %v476 = vmul.f32 %v475, 1.442695
      %v477 = vpow.pop %v476
      %v478 = vsel %vm425, %v477, 0.0
      %479 = vadd.xlane.f32.xlu0 %v478
      %v480 = vpop.xlane.xlu0 %479
      %v481 = vrcp.pop %v480
      %v482 = vmul.f32 %v477, %v481
      %v483 = vpack.c.bf16 %v482, %v482
      %484 = vrot.lane.b32.xlu0 %v412, 64
      %v485 = vpop.permute.xlu0 %484
      %v487 = vsel %vm425, %v483, 0
      %vm489 = vcmask 1043456
      %v491 = vsel %vm489, %v485, 0
      %493 = vmatprep.subr.bf16.mxu0 0
      %494 = vmatpush1.bf16.msra.mxu0 %v491
      %495 = vmatprep.subr.bf16.mxu0 0
      %496 = vmatpush1.bf16.msra.mxu0 0
      %497 = vmatprep.subr.bf16.mxu0 0
      %498 = vmatpush1.bf16.msra.mxu0 0
      %499 = vmatprep.subr.bf16.mxu0 0
      %500 = vmatpush1.bf16.msra.mxu0 0
      %501 = vmatprep.subr.bf16.mxu0 0
      %502 = vmatpush1.bf16.msra.mxu0 0
      %503 = vmatprep.subr.bf16.mxu0 0
      %504 = vmatpush1.bf16.msra.mxu0 0
      %505 = vmatprep.subr.bf16.mxu0 0
      %506 = vmatpush1.bf16.msra.mxu0 0
      %507 = vmatprep.subr.bf16.mxu0 0
      %508 = vmatpush1.bf16.msra.mxu0 0
      %509 = vmatprep.subr.bf16.mxu0 0
      %510 = vmatpush1.bf16.msra.mxu0 0
      %511 = vmatprep.subr.bf16.mxu0 0
      %512 = vmatpush1.bf16.msra.mxu0 0
      %513 = vmatprep.subr.bf16.mxu0 0
      %514 = vmatpush1.bf16.msra.mxu0 0
      %515 = vmatprep.subr.bf16.mxu0 0
      %516 = vmatpush1.bf16.msra.mxu0 0
      %517 = vmatprep.subr.bf16.mxu0 0
      %518 = vmatpush1.bf16.msra.mxu0 0
      %519 = vmatprep.subr.bf16.mxu0 0
      %520 = vmatpush1.bf16.msra.mxu0 0
      %521 = vmatprep.subr.bf16.mxu0 0
      %522 = vmatpush1.bf16.msra.mxu0 0
      %523 = vmatprep.subr.bf16.mxu0 0
      %524 = vmatpush1.bf16.msra.mxu0 0
      %525 = vmatprep.mubr.bf16.mxu0 0
      %526 = vmatmul.mubr.bf16.gmra.mrb[0].mxu0 %v487
      %v527 = vpop.f32.mrb[0].mxu0
      %v528 = vadd.f32 0.0, %v527
      %v529 = vpop.f32.mrb[0].mxu0
      %v530 = vpop.f32.mrb[0].mxu0
      %v531 = vpop.f32.mrb[0].mxu0
      %532 = vdwg.mxu0
      %533 = vrot.lane.b32.xlu0 %v412, 120
      %v534 = vpop.permute.xlu0 %533
      %535 = vrot.lane.b32.xlu0 %v412, 88
      %v536 = vpop.permute.xlu0 %535
      %v538 = vsel %vm425, %v534, 0
      %v541 = vsel %vm425, %v536, 0
      %543 = vmatprep.subr.bf16.mxu0 0
      %544 = vmatpush1.bf16.xpose.msra.mxu0 %v541
      %545 = vmatprep.subr.bf16.mxu0 0
      %546 = vmatpush1.bf16.xpose.msra.mxu0 0
      %547 = vmatprep.subr.bf16.mxu0 0
      %548 = vmatpush1.bf16.xpose.msra.mxu0 0
      %549 = vmatprep.subr.bf16.mxu0 0
      %550 = vmatpush1.bf16.xpose.msra.mxu0 0
      %551 = vmatprep.subr.bf16.mxu0 0
      %552 = vmatpush1.bf16.xpose.msra.mxu0 0
      %553 = vmatprep.subr.bf16.mxu0 0
      %554 = vmatpush1.bf16.xpose.msra.mxu0 0
      %555 = vmatprep.subr.bf16.mxu0 0
      %556 = vmatpush1.bf16.xpose.msra.mxu0 0
      %557 = vmatprep.subr.bf16.mxu0 0
      %558 = vmatpush1.bf16.xpose.msra.mxu0 0
      %559 = vmatprep.subr.bf16.mxu0 0
      %560 = vmatpush1.bf16.xpose.msra.mxu0 0
      %561 = vmatprep.subr.bf16.mxu0 0
      %562 = vmatpush1.bf16.xpose.msra.mxu0 0
      %563 = vmatprep.subr.bf16.mxu0 0
      %564 = vmatpush1.bf16.xpose.msra.mxu0 0
      %565 = vmatprep.subr.bf16.mxu0 0
      %566 = vmatpush1.bf16.xpose.msra.mxu0 0
      %567 = vmatprep.subr.bf16.mxu0 0
      %568 = vmatpush1.bf16.xpose.msra.mxu0 0
      %569 = vmatprep.subr.bf16.mxu0 0
      %570 = vmatpush1.bf16.xpose.msra.mxu0 0
      %571 = vmatprep.subr.bf16.mxu0 0
      %572 = vmatpush1.bf16.xpose.msra.mxu0 0
      %573 = vmatprep.subr.bf16.mxu0 0
      %574 = vmatpush1.bf16.xpose.msra.mxu0 0
      %575 = vmatprep.mubr.bf16.mxu0 0
      %576 = vmatmul.mubr.bf16.gmra.mrb[0].mxu0 %v538
      %v577 = vpop.f32.mrb[0].mxu0
      %v578 = vadd.f32 %v421, %v577
      %v579 = vpop.f32.mrb[0].mxu0
      %v580 = vpop.f32.mrb[0].mxu0
      %v581 = vpop.f32.mrb[0].mxu0
      %582 = vdwg.mxu0
      %v583 = vsel %vm425, %v578, -inf
      %584 = vmax.xlane.f32.xlu0 %v583
      %v585 = vpop.xlane.xlu0 %584
      %v586 = vsub.f32 %v578, %v585
      %v587 = vmul.f32 %v586, 1.442695
      %v588 = vpow.pop %v587
      %v589 = vsel %vm425, %v588, 0.0
      %590 = vadd.xlane.f32.xlu0 %v589
      %v591 = vpop.xlane.xlu0 %590
      %v592 = vrcp.pop %v591
      %v593 = vmul.f32 %v588, %v592
      %v594 = vpack.c.bf16 %v593, %v593
      %595 = vrot.lane.b32.xlu0 %v412, 56
      %v596 = vpop.permute.xlu0 %595
      %v598 = vsel %vm425, %v594, 0
      %v601 = vsel %vm489, %v596, 0
      %603 = vmatprep.subr.bf16.mxu0 0
      %604 = vmatpush1.bf16.msra.mxu0 %v601
      %605 = vmatprep.subr.bf16.mxu0 0
      %606 = vmatpush1.bf16.msra.mxu0 0
      %607 = vmatprep.subr.bf16.mxu0 0
      %608 = vmatpush1.bf16.msra.mxu0 0
      %609 = vmatprep.subr.bf16.mxu0 0
      %610 = vmatpush1.bf16.msra.mxu0 0
      %611 = vmatprep.subr.bf16.mxu0 0
      %612 = vmatpush1.bf16.msra.mxu0 0
      %613 = vmatprep.subr.bf16.mxu0 0
      %614 = vmatpush1.bf16.msra.mxu0 0
      %615 = vmatprep.subr.bf16.mxu0 0
      %616 = vmatpush1.bf16.msra.mxu0 0
      %617 = vmatprep.subr.bf16.mxu0 0
      %618 = vmatpush1.bf16.msra.mxu0 0
      %619 = vmatprep.subr.bf16.mxu0 0
      %620 = vmatpush1.bf16.msra.mxu0 0
      %621 = vmatprep.subr.bf16.mxu0 0
      %622 = vmatpush1.bf16.msra.mxu0 0
      %623 = vmatprep.subr.bf16.mxu0 0
      %624 = vmatpush1.bf16.msra.mxu0 0
      %625 = vmatprep.subr.bf16.mxu0 0
      %626 = vmatpush1.bf16.msra.mxu0 0
      %627 = vmatprep.subr.bf16.mxu0 0
      %628 = vmatpush1.bf16.msra.mxu0 0
      %629 = vmatprep.subr.bf16.mxu0 0
      %630 = vmatpush1.bf16.msra.mxu0 0
      %631 = vmatprep.subr.bf16.mxu0 0
      %632 = vmatpush1.bf16.msra.mxu0 0
      %633 = vmatprep.subr.bf16.mxu0 0
      %634 = vmatpush1.bf16.msra.mxu0 0
      %635 = vmatprep.mubr.bf16.mxu0 0
      %636 = vmatmul.mubr.bf16.gmra.mrb[0].mxu0 %v598
      %v637 = vpop.f32.mrb[0].mxu0
      %v638 = vadd.f32 0.0, %v637
      %v639 = vpop.f32.mrb[0].mxu0
      %v640 = vpop.f32.mrb[0].mxu0
      %v641 = vpop.f32.mrb[0].mxu0
      %642 = vdwg.mxu0
      %643 = vrot.lane.b32.xlu0 %v412, 112
      %v644 = vpop.permute.xlu0 %643
      %645 = vrot.lane.b32.xlu0 %v412, 80
      %v646 = vpop.permute.xlu0 %645
      %v648 = vsel %vm425, %v644, 0
      %v651 = vsel %vm425, %v646, 0
      %653 = vmatprep.subr.bf16.mxu0 0
      %654 = vmatpush1.bf16.xpose.msra.mxu0 %v651
      %655 = vmatprep.subr.bf16.mxu0 0
      %656 = vmatpush1.bf16.xpose.msra.mxu0 0
      %657 = vmatprep.subr.bf16.mxu0 0
      %658 = vmatpush1.bf16.xpose.msra.mxu0 0
      %659 = vmatprep.subr.bf16.mxu0 0
      %660 = vmatpush1.bf16.xpose.msra.mxu0 0
      %661 = vmatprep.subr.bf16.mxu0 0
      %662 = vmatpush1.bf16.xpose.msra.mxu0 0
      %663 = vmatprep.subr.bf16.mxu0 0
      %664 = vmatpush1.bf16.xpose.msra.mxu0 0
      %665 = vmatprep.subr.bf16.mxu0 0
      %666 = vmatpush1.bf16.xpose.msra.mxu0 0
      %667 = vmatprep.subr.bf16.mxu0 0
      %668 = vmatpush1.bf16.xpose.msra.mxu0 0
      %669 = vmatprep.subr.bf16.mxu0 0
      %670 = vmatpush1.bf16.xpose.msra.mxu0 0
      %671 = vmatprep.subr.bf16.mxu0 0
      %672 = vmatpush1.bf16.xpose.msra.mxu0 0
      %673 = vmatprep.subr.bf16.mxu0 0
      %674 = vmatpush1.bf16.xpose.msra.mxu0 0
      %675 = vmatprep.subr.bf16.mxu0 0
      %676 = vmatpush1.bf16.xpose.msra.mxu0 0
      %677 = vmatprep.subr.bf16.mxu0 0
      %678 = vmatpush1.bf16.xpose.msra.mxu0 0
      %679 = vmatprep.subr.bf16.mxu0 0
      %680 = vmatpush1.bf16.xpose.msra.mxu0 0
      %681 = vmatprep.subr.bf16.mxu0 0
      %682 = vmatpush1.bf16.xpose.msra.mxu0 0
      %683 = vmatprep.subr.bf16.mxu0 0
      %684 = vmatpush1.bf16.xpose.msra.mxu0 0
      %685 = vmatprep.mubr.bf16.mxu0 0
      %686 = vmatmul.mubr.bf16.gmra.mrb[0].mxu0 %v648
      %v687 = vpop.f32.mrb[0].mxu0
      %v688 = vadd.f32 %v421, %v687
      %v689 = vpop.f32.mrb[0].mxu0
      %v690 = vpop.f32.mrb[0].mxu0
      %v691 = vpop.f32.mrb[0].mxu0
      %692 = vdwg.mxu0
      %v693 = vsel %vm425, %v688, -inf
      %694 = vmax.xlane.f32.xlu0 %v693
      %v695 = vpop.xlane.xlu0 %694
      %v696 = vsub.f32 %v688, %v695
      %v697 = vmul.f32 %v696, 1.442695
      %v698 = vpow.pop %v697
      %v699 = vsel %vm425, %v698, 0.0
      %700 = vadd.xlane.f32.xlu0 %v699
      %v701 = vpop.xlane.xlu0 %700
      %v702 = vrcp.pop %v701
      %v703 = vmul.f32 %v698, %v702
      %v704 = vpack.c.bf16 %v703, %v703
      %705 = vrot.lane.b32.xlu0 %v412, 48
      %v706 = vpop.permute.xlu0 %705
      %v708 = vsel %vm425, %v704, 0
      %v711 = vsel %vm489, %v706, 0
      %713 = vmatprep.subr.bf16.mxu0 0
      %714 = vmatpush1.bf16.msra.mxu0 %v711
      %715 = vmatprep.subr.bf16.mxu0 0
      %716 = vmatpush1.bf16.msra.mxu0 0
      %717 = vmatprep.subr.bf16.mxu0 0
      %718 = vmatpush1.bf16.msra.mxu0 0
      %719 = vmatprep.subr.bf16.mxu0 0
      %720 = vmatpush1.bf16.msra.mxu0 0
      %721 = vmatprep.subr.bf16.mxu0 0
      %722 = vmatpush1.bf16.msra.mxu0 0
      %723 = vmatprep.subr.bf16.mxu0 0
      %724 = vmatpush1.bf16.msra.mxu0 0
      %725 = vmatprep.subr.bf16.mxu0 0
      %726 = vmatpush1.bf16.msra.mxu0 0
      %727 = vmatprep.subr.bf16.mxu0 0
      %728 = vmatpush1.bf16.msra.mxu0 0
      %729 = vmatprep.subr.bf16.mxu0 0
      %730 = vmatpush1.bf16.msra.mxu0 0
      %731 = vmatprep.subr.bf16.mxu0 0
      %732 = vmatpush1.bf16.msra.mxu0 0
      %733 = vmatprep.subr.bf16.mxu0 0
      %734 = vmatpush1.bf16.msra.mxu0 0
      %735 = vmatprep.subr.bf16.mxu0 0
      %736 = vmatpush1.bf16.msra.mxu0 0
      %737 = vmatprep.subr.bf16.mxu0 0
      %738 = vmatpush1.bf16.msra.mxu0 0
      %739 = vmatprep.subr.bf16.mxu0 0
      %740 = vmatpush1.bf16.msra.mxu0 0
      %741 = vmatprep.subr.bf16.mxu0 0
      %742 = vmatpush1.bf16.msra.mxu0 0
      %743 = vmatprep.subr.bf16.mxu0 0
      %744 = vmatpush1.bf16.msra.mxu0 0
      %745 = vmatprep.mubr.bf16.mxu0 0
      %746 = vmatmul.mubr.bf16.gmra.mrb[0].mxu0 %v708
      %v747 = vpop.f32.mrb[0].mxu0
      %v748 = vadd.f32 0.0, %v747
      %v749 = vpop.f32.mrb[0].mxu0
      %v750 = vpop.f32.mrb[0].mxu0
      %v751 = vpop.f32.mrb[0].mxu0
      %752 = vdwg.mxu0
      %753 = vrot.lane.b32.xlu0 %v412, 104
      %v754 = vpop.permute.xlu0 %753
      %755 = vrot.lane.b32.xlu0 %v412, 72
      %v756 = vpop.permute.xlu0 %755
      %v758 = vsel %vm425, %v754, 0
      %v761 = vsel %vm425, %v756, 0
      %763 = vmatprep.subr.bf16.mxu0 0
      %764 = vmatpush1.bf16.xpose.msra.mxu0 %v761
      %765 = vmatprep.subr.bf16.mxu0 0
      %766 = vmatpush1.bf16.xpose.msra.mxu0 0
      %767 = vmatprep.subr.bf16.mxu0 0
      %768 = vmatpush1.bf16.xpose.msra.mxu0 0
      %769 = vmatprep.subr.bf16.mxu0 0
      %770 = vmatpush1.bf16.xpose.msra.mxu0 0
      %771 = vmatprep.subr.bf16.mxu0 0
      %772 = vmatpush1.bf16.xpose.msra.mxu0 0
      %773 = vmatprep.subr.bf16.mxu0 0
      %774 = vmatpush1.bf16.xpose.msra.mxu0 0
      %775 = vmatprep.subr.bf16.mxu0 0
      %776 = vmatpush1.bf16.xpose.msra.mxu0 0
      %777 = vmatprep.subr.bf16.mxu0 0
      %778 = vmatpush1.bf16.xpose.msra.mxu0 0
      %779 = vmatprep.subr.bf16.mxu0 0
      %780 = vmatpush1.bf16.xpose.msra.mxu0 0
      %781 = vmatprep.subr.bf16.mxu0 0
      %782 = vmatpush1.bf16.xpose.msra.mxu0 0
      %783 = vmatprep.subr.bf16.mxu0 0
      %784 = vmatpush1.bf16.xpose.msra.mxu0 0
      %785 = vmatprep.subr.bf16.mxu0 0
      %786 = vmatpush1.bf16.xpose.msra.mxu0 0
      %787 = vmatprep.subr.bf16.mxu0 0
      %788 = vmatpush1.bf16.xpose.msra.mxu0 0
      %789 = vmatprep.subr.bf16.mxu0 0
      %790 = vmatpush1.bf16.xpose.msra.mxu0 0
      %791 = vmatprep.subr.bf16.mxu0 0
      %792 = vmatpush1.bf16.xpose.msra.mxu0 0
      %793 = vmatprep.subr.bf16.mxu0 0
      %794 = vmatpush1.bf16.xpose.msra.mxu0 0
      %795 = vmatprep.mubr.bf16.mxu0 0
      %796 = vmatmul.mubr.bf16.gmra.mrb[0].mxu0 %v758
      %v797 = vpop.f32.mrb[0].mxu0
      %v798 = vadd.f32 %v421, %v797
      %v799 = vpop.f32.mrb[0].mxu0
      %v800 = vpop.f32.mrb[0].mxu0
      %v801 = vpop.f32.mrb[0].mxu0
      %802 = vdwg.mxu0
      %v803 = vsel %vm425, %v798, -inf
      %804 = vmax.xlane.f32.xlu0 %v803
      %v805 = vpop.xlane.xlu0 %804
      %v806 = vsub.f32 %v798, %v805
      %v807 = vmul.f32 %v806, 1.442695
      %v808 = vpow.pop %v807
      %v809 = vsel %vm425, %v808, 0.0
      %810 = vadd.xlane.f32.xlu0 %v809
      %v811 = vpop.xlane.xlu0 %810
      %v812 = vrcp.pop %v811
      %v813 = vmul.f32 %v808, %v812
      %v814 = vpack.c.bf16 %v813, %v813
      %815 = vrot.lane.b32.xlu0 %v412, 40
      %v816 = vpop.permute.xlu0 %815
      %v818 = vsel %vm425, %v814, 0
      %v821 = vsel %vm489, %v816, 0
      %823 = vmatprep.subr.bf16.mxu0 0
      %824 = vmatpush1.bf16.msra.mxu0 %v821
      %825 = vmatprep.subr.bf16.mxu0 0
      %826 = vmatpush1.bf16.msra.mxu0 0
      %827 = vmatprep.subr.bf16.mxu0 0
      %828 = vmatpush1.bf16.msra.mxu0 0
      %829 = vmatprep.subr.bf16.mxu0 0
      %830 = vmatpush1.bf16.msra.mxu0 0
      %831 = vmatprep.subr.bf16.mxu0 0
      %832 = vmatpush1.bf16.msra.mxu0 0
      %833 = vmatprep.subr.bf16.mxu0 0
      %834 = vmatpush1.bf16.msra.mxu0 0
      %835 = vmatprep.subr.bf16.mxu0 0
      %836 = vmatpush1.bf16.msra.mxu0 0
      %837 = vmatprep.subr.bf16.mxu0 0
      %838 = vmatpush1.bf16.msra.mxu0 0
      %839 = vmatprep.subr.bf16.mxu0 0
      %840 = vmatpush1.bf16.msra.mxu0 0
      %841 = vmatprep.subr.bf16.mxu0 0
      %842 = vmatpush1.bf16.msra.mxu0 0
      %843 = vmatprep.subr.bf16.mxu0 0
      %844 = vmatpush1.bf16.msra.mxu0 0
      %845 = vmatprep.subr.bf16.mxu0 0
      %846 = vmatpush1.bf16.msra.mxu0 0
      %847 = vmatprep.subr.bf16.mxu0 0
      %848 = vmatpush1.bf16.msra.mxu0 0
      %849 = vmatprep.subr.bf16.mxu0 0
      %850 = vmatpush1.bf16.msra.mxu0 0
      %851 = vmatprep.subr.bf16.mxu0 0
      %852 = vmatpush1.bf16.msra.mxu0 0
      %853 = vmatprep.subr.bf16.mxu0 0
      %854 = vmatpush1.bf16.msra.mxu0 0
      %855 = vmatprep.mubr.bf16.mxu0 0
      %856 = vmatmul.mubr.bf16.gmra.mrb[0].mxu0 %v818
      %v857 = vpop.f32.mrb[0].mxu0
      %v858 = vadd.f32 0.0, %v857
      %v859 = vpop.f32.mrb[0].mxu0
      %v860 = vpop.f32.mrb[0].mxu0
      %v861 = vpop.f32.mrb[0].mxu0
      %862 = vdwg.mxu0
      %864 = vrot.lane.b32.xlu0 %v638, 8
      %v865 = vpop.permute.xlu0 %864
      %868 = vrot.lane.b32.xlu0 %v748, 16
      %v869 = vpop.permute.xlu0 %868
      %872 = vrot.lane.b32.xlu0 %v858, 24
      %v873 = vpop.permute.xlu0 %872
      %v875 = vsel %vm425, %v528, %v865
      %vm876 = vcmask 130048
      %v877 = vsel %vm876, %v875, %v869
      %vm878 = vcmask 195584
      %v879 = vsel %vm878, %v877, %v873
      %v880 = vpack.c.bf16 %v879, %v879
      %v881 = vld [vmem:[%s5] sm:$0xf]
      %v882 = vld [vmem:[%s5 + $0x4] sm:$0xf]
      %v883 = vld [vmem:[%s5 + $0x8] sm:$0xf]
      %v884 = vld [vmem:[%s5 + $0xc] sm:$0xf]
      %v885 = vld [vmem:[%s6] sm:$0x1]
      %v887 = vlaneseq
      %v888 = vshrl.u32 %v887, 7
      %v889 = vsub.s32 0, %v888
      %v890 = vrot.slane %v885, %v889
      %v896 = vunpack.c.l.b16 %v881
      %v897 = vunpack.c.l.b16 %v882
      %v898 = vunpack.c.l.b16 %v883
      %v899 = vunpack.c.l.b16 %v884
      %v900 = vpack.c.b16 %v897, %v896
      %v901 = vpack.c.b16 %v899, %v898
      %v905 = vsel %vm368, %v880, 0
      %907 = vmatprep.subr.bf16.mxu0 0
      %908 = vmatpush1.bf16.msra.mxu0 %v900
      %909 = vmatprep.subr.bf16.mxu0 0
      %910 = vmatpush1.bf16.msra.mxu0 %v901
      %911 = vmatprep.subr.bf16.mxu0 0
      %912 = vmatpush1.bf16.msra.mxu0 0
      %913 = vmatprep.subr.bf16.mxu0 0
      %914 = vmatpush1.bf16.msra.mxu0 0
      %915 = vmatprep.subr.bf16.mxu0 0
      %916 = vmatpush1.bf16.msra.mxu0 0
      %917 = vmatprep.subr.bf16.mxu0 0
      %918 = vmatpush1.bf16.msra.mxu0 0
      %919 = vmatprep.subr.bf16.mxu0 0
      %920 = vmatpush1.bf16.msra.mxu0 0
      %921 = vmatprep.subr.bf16.mxu0 0
      %922 = vmatpush1.bf16.msra.mxu0 0
      %923 = vmatprep.subr.bf16.mxu0 0
      %924 = vmatpush1.bf16.msra.mxu0 0
      %925 = vmatprep.subr.bf16.mxu0 0
      %926 = vmatpush1.bf16.msra.mxu0 0
      %927 = vmatprep.subr.bf16.mxu0 0
      %928 = vmatpush1.bf16.msra.mxu0 0
      %929 = vmatprep.subr.bf16.mxu0 0
      %930 = vmatpush1.bf16.msra.mxu0 0
      %931 = vmatprep.subr.bf16.mxu0 0
      %932 = vmatpush1.bf16.msra.mxu0 0
      %933 = vmatprep.subr.bf16.mxu0 0
      %934 = vmatpush1.bf16.msra.mxu0 0
      %935 = vmatprep.subr.bf16.mxu0 0
      %936 = vmatpush1.bf16.msra.mxu0 0
      %937 = vmatprep.subr.bf16.mxu0 0
      %938 = vmatpush1.bf16.msra.mxu0 0
      %939 = vmatprep.mubr.bf16.mxu0 0
      %940 = vmatmul.mubr.bf16.gmra.mrb[0].mxu0 %v905
      %v941 = vpop.f32.mrb[0].mxu0
      %v942 = vadd.f32 %v890, %v941
      %v943 = vpop.f32.mrb[0].mxu0
      %v944 = vpop.f32.mrb[0].mxu0
      %v945 = vpop.f32.mrb[0].mxu0
      %946 = vdwg.mxu0
      %v947 = vadd.f32 %v343, %v942
      %v948 = vld [vmem:[%s7] sm:$0x1]
      %v949 = vld [vmem:[%s8] sm:$0x1]
      %v950 = vsel %vm368, %v947, 0.0
      %951 = vadd.xlane.f32.xlu0 %v950
      %v952 = vpop.xlane.xlu0 %951
      %v953 = vrcp.pop 32.0
      %v954 = vmul.f32 %v952, %v953
      %v955 = vsub.f32 %v947, %v954
      %v956 = vmul.f32 %v955, %v955
      %v957 = vsel %vm368, %v956, 0.0
      %958 = vadd.xlane.f32.xlu0 %v957
      %v959 = vpop.xlane.xlu0 %958
      %v960 = vmul.f32 %v959, %v953
      %v961 = vadd.f32 %v960, 1e-05
      %v962 = vrsqrt.pop %v961
      %v963 = vmul.f32 %v955, %v962
      %v965 = vlaneseq
      %v966 = vshrl.u32 %v965, 7
      %v967 = vsub.s32 0, %v966
      %v968 = vrot.slane %v948, %v967
      %v970 = vmul.f32 %v963, %v968
      %v972 = vlaneseq
      %v973 = vshrl.u32 %v972, 7
      %v974 = vsub.s32 0, %v973
      %v975 = vrot.slane %v949, %v974
      %v977 = vadd.f32 %v970, %v975
      %978 = vst.msk [vmem:[%s341] sm:$0xff] %vm368, %v977
      %p979 = scmp.lt.s32.totalorder %s20, 1
      %s980 = scalar_select %p979, %s20, 1
      %s981 = smul.addr %s980, 8
      %s982 = scalar_lea.vmem %s9, %s981
      // Predicated region
      $region57: #{seq2seq_transformer_forward.13} parent=55 // pred_check
        %p983 = pneg %p237
      $region58: #{seq2seq_transformer_forward.13} parent=55 // pred_check_branch
        %985 = sbr.rel (%p983) target = $region60
      $region59: #{seq2seq_transformer_forward.13} parent=55 // pred_region
        _
      $region60: #{seq2seq_transformer_forward.13} parent=55 // pred_fallthru
        _
    $region56: #{seq2seq_transformer_forward.13} parent=5 // pred_fallthru
      _
    %p986 = scmp.le.s32.totalorder 2, %s15
    // Predicated region
    $region61: #{seq2seq_transformer_forward.13} parent=5 // pred_check
      %p987 = pneg %p986
    $region62: #{seq2seq_transformer_forward.13} parent=5 // pred_check_branch
      %989 = sbr.rel (%p987) target = $region64
    $region63: #{seq2seq_transformer_forward.13} parent=5 // pred_region
      %s990 = ssub.s32 %s15, 2
      // Predicated region
      $region65: #{seq2seq_transformer_forward.13} parent=63 // pred_check
        %p991 = pneg %p243
      $region66: #{seq2seq_transformer_forward.13} parent=63 // pred_check_branch
        %993 = sbr.rel (%p991) target = $region68
      $region67: #{seq2seq_transformer_forward.13} parent=63 // pred_region
        %p994 = scmp.lt.s32.totalorder %s21, 1
        %s995 = scalar_select %p994, %s21, 1
        %s996 = smul.addr %s995, 8
        %s997 = scalar_lea.vmem %s9, %s996
      $region68: #{seq2seq_transformer_forward.13} parent=63 // pred_fallthru
        _
    $region64: #{seq2seq_transformer_forward.13} parent=5 // pred_fallthru
      _
  $region6: #{seq2seq_transformer_forward.13} parent=0 // loop_footer
    %s19 = sadd.s32 1, %s15
  $region7: #{seq2seq_transformer_forward.13} parent=0 // loop_footer_branch
    %14 = sbr.rel target = $region3
  $region8: #{seq2seq_transformer_forward.13} parent=0 // loop_exit
    _

// kernel: seq2seq_transformer_forward.24
$region0: #{seq2seq_transformer_forward.24}
  #allocation0 [shape = 'u32[]', space=smem, size = 0x4, offset = 0x4, fixed_abs, tag = 'smem constant byte address 0x4 - core index']
  #allocation1 [shape = 'u32[144,128]{1,0:T(1,128)}', space=vmem, size = 0x12000, scoped, tag = 'internal scratch']
  %s0 = inlined_call_operand.vmem [shape: f32[14,32], index: 0, kind: input, shape index: {}]
  %s1 = inlined_call_operand.vmem [shape: f32[1,32], index: 1, kind: input, shape index: {}]
  %s2 = inlined_call_operand.vmem [shape: f32[1,32], index: 2, kind: input, shape index: {}]
  %s3 = inlined_call_operand.vmem [shape: f32[14,32], index: 3, kind: output, shape index: {}]
  %s4 = sld [smem:[#allocation0]]
  $region45: #{seq2seq_transformer_forward.24} parent=0
    _
  %s6 = ssub.s32 1, %s4
  %s7 = scalar_select 0, %s6, %s4
  loop: start=0, step=1, limit=4
  $region2: #{seq2seq_transformer_forward.24} parent=0 // loop_pre_header
    _
  $region3: #{seq2seq_transformer_forward.24} parent=0 // loop_header
    %s9 = sphi 0, %s13
    %p10 = scmp.ge.s32.totalorder %s9, 4
    %s19 = sphi 0, %s21
    %s22 = sphi 0, %s19
    %s23 = sphi 0, %s22
    %s39 = sphi 0, %s23
    %s43 = sphi 0, %s43
    %s45 = sphi 0, %s43
    %s46 = sphi 0, %s45
    %s60 = sphi 0, %s46
    %s64 = sphi 0, %s64
    %s66 = sphi 0, %s64
    %s67 = sphi 0, %s66
    %s81 = sphi 0, %s67
    %s87 = sphi 0, %s89
    %s90 = sphi 0, %s87
    %s91 = sphi 0, %s90
    %s107 = sphi 0, %s91
  $region4: #{seq2seq_transformer_forward.24} parent=0 // loop_header_branch
    %12 = sbr.rel (%p10) target = $region8
  $region5: #{seq2seq_transformer_forward.24} parent=0 // loop_body
    %s14 = ssub.s32 %s9, 1
    %s15 = ssub.s32 %s9, 2
    %s16 = sadd.s32 %s9, 1
    %s17 = ssub.s32 %s9, %s16
    %p18 = scmp.eq.s32.totalorder %s17, 0
    %s20 = sadd.s32 %s19, 1
    %s21 = scalar_select %p18, %s19, %s20
    %p24 = pneg %p18
    %p25 = scmp.eq.s32.totalorder %s9, 1
    %p26 = por %p24, %p25
    %p27 = scmp.ne.s32.totalorder %s19, %s22
    %p28 = scmp.eq.s32.totalorder %s9, 0
    %p29 = por %p27, %p28
    %p30 = scmp.ne.s32.totalorder %s19, %s22
    %p31 = scmp.eq.s32.totalorder %s14, 1
    %p32 = por %p30, %p31
    %p33 = scmp.ne.s32.totalorder %s22, %s23
    %p34 = scmp.eq.s32.totalorder %s14, 0
    %p35 = por %p33, %p34
    %p36 = scmp.ne.s32.totalorder %s22, %s23
    %p37 = scmp.eq.s32.totalorder %s15, 1
    %p38 = por %p36, %p37
    %p40 = scmp.ne.s32.totalorder %s23, %s39
    %p41 = scmp.eq.s32.totalorder %s15, 0
    %p42 = por %p40, %p41
    %s44 = sadd.s32 %s43, 1
    %p47 = scmp.eq.s32.totalorder %s9, 1
    %p48 = scmp.ne.s32.totalorder %s43, %s45
    %p49 = scmp.eq.s32.totalorder %s9, 0
    %p50 = por %p48, %p49
    %p51 = scmp.ne.s32.totalorder %s43, %s45
    %p52 = scmp.eq.s32.totalorder %s14, 1
    %p53 = por %p51, %p52
    %p54 = scmp.ne.s32.totalorder %s45, %s46
    %p55 = scmp.eq.s32.totalorder %s14, 0
    %p56 = por %p54, %p55
    %p57 = scmp.ne.s32.totalorder %s45, %s46
    %p58 = scmp.eq.s32.totalorder %s15, 1
    %p59 = por %p57, %p58
    %p61 = scmp.ne.s32.totalorder %s46, %s60
    %p62 = scmp.eq.s32.totalorder %s15, 0
    %p63 = por %p61, %p62
    %s65 = sadd.s32 %s64, 1
    %p68 = scmp.eq.s32.totalorder %s9, 1
    %p69 = scmp.ne.s32.totalorder %s64, %s66
    %p70 = scmp.eq.s32.totalorder %s9, 0
    %p71 = por %p69, %p70
    %p72 = scmp.ne.s32.totalorder %s64, %s66
    %p73 = scmp.eq.s32.totalorder %s14, 1
    %p74 = por %p72, %p73
    %p75 = scmp.ne.s32.totalorder %s66, %s67
    %p76 = scmp.eq.s32.totalorder %s14, 0
    %p77 = por %p75, %p76
    %p78 = scmp.ne.s32.totalorder %s66, %s67
    %p79 = scmp.eq.s32.totalorder %s15, 1
    %p80 = por %p78, %p79
    %p82 = scmp.ne.s32.totalorder %s67, %s81
    %p83 = scmp.eq.s32.totalorder %s15, 0
    %p84 = por %p82, %p83
    %s85 = ssub.s32 %s9, %s16
    %p86 = scmp.eq.s32.totalorder %s85, 0
    %s88 = sadd.s32 %s87, 1
    %s89 = scalar_select %p86, %s87, %s88
    %p92 = pneg %p86
    %p93 = scmp.eq.s32.totalorder %s9, 1
    %p94 = por %p92, %p93
    %p95 = scmp.ne.s32.totalorder %s87, %s90
    %p96 = scmp.eq.s32.totalorder %s9, 0
    %p97 = por %p95, %p96
    %p98 = scmp.ne.s32.totalorder %s87, %s90
    %p99 = scmp.eq.s32.totalorder %s14, 1
    %p100 = por %p98, %p99
    %p101 = scmp.ne.s32.totalorder %s90, %s91
    %p102 = scmp.eq.s32.totalorder %s14, 0
    %p103 = por %p101, %p102
    %p104 = scmp.ne.s32.totalorder %s90, %s91
    %p105 = scmp.eq.s32.totalorder %s15, 1
    %p106 = por %p104, %p105
    %p108 = scmp.ne.s32.totalorder %s91, %s107
    %p109 = scmp.eq.s32.totalorder %s15, 0
    %p110 = por %p108, %p109
    %p111 = scmp.le.s32.totalorder 1, %s9
    %p112 = scmp.lt.s32.totalorder %s9, 3
    %p113 = pnand %p111, %p112
    %p114 = pneg %p113
    // Predicated region
    $region9: #{seq2seq_transformer_forward.24} parent=5 // pred_check
      _
    $region10: #{seq2seq_transformer_forward.24} parent=5 // pred_check_branch
      %116 = sbr.rel (%p113) target = $region12
    $region11: #{seq2seq_transformer_forward.24} parent=5 // pred_region
      %s117 = ssub.s32 %s9, 1
      // Predicated region
      $region13: #{seq2seq_transformer_forward.24} parent=11 // pred_check
        %p118 = pneg %p56
      $region14: #{seq2seq_transformer_forward.24} parent=11 // pred_check_branch
        %120 = sbr.rel (%p118) target = $region16
      $region15: #{seq2seq_transformer_forward.24} parent=11 // pred_region
        _
      $region16: #{seq2seq_transformer_forward.24} parent=11 // pred_fallthru
        _
      // Predicated region
      $region17: #{seq2seq_transformer_forward.24} parent=11 // pred_check
        %p121 = pneg %p77
      $region18: #{seq2seq_transformer_forward.24} parent=11 // pred_check_branch
        %123 = sbr.rel (%p121) target = $region20
      $region19: #{seq2seq_transformer_forward.24} parent=11 // pred_region
        _
      $region20: #{seq2seq_transformer_forward.24} parent=11 // pred_fallthru
        _
    $region12: #{seq2seq_transformer_forward.24} parent=5 // pred_fallthru
      _
    %p124 = scmp.lt.s32.totalorder %s9, 2
    // Predicated region
    $region21: #{seq2seq_transformer_forward.24} parent=5 // pred_check
      %p125 = pneg %p124
    $region22: #{seq2seq_transformer_forward.24} parent=5 // pred_check_branch
      %127 = sbr.rel (%p125) target = $region24
    $region23: #{seq2seq_transformer_forward.24} parent=5 // pred_region
      // Predicated region
      $region25: #{seq2seq_transformer_forward.24} parent=23 // pred_check
        %p128 = pneg %p29
      $region26: #{seq2seq_transformer_forward.24} parent=23 // pred_check_branch
        %130 = sbr.rel (%p128) target = $region28
      $region27: #{seq2seq_transformer_forward.24} parent=23 // pred_region
        %p131 = scmp.lt.s32.totalorder %s9, 1
        %s132 = scalar_select %p131, %s9, 1
        %s133 = smul.addr %s132, 8
        %s134 = scalar_lea.vmem %s0, %s133
      $region28: #{seq2seq_transformer_forward.24} parent=23 // pred_fallthru
        _
    $region24: #{seq2seq_transformer_forward.24} parent=5 // pred_fallthru
      _
    %p135 = scmp.le.s32.totalorder 1, %s9
    %p136 = scmp.lt.s32.totalorder %s9, 3
    %p137 = pnand %p135, %p136
    %p138 = pneg %p137
    // Predicated region
    $region29: #{seq2seq_transformer_forward.24} parent=5 // pred_check
      _
    $region30: #{seq2seq_transformer_forward.24} parent=5 // pred_check_branch
      %140 = sbr.rel (%p137) target = $region32
    $region31: #{seq2seq_transformer_forward.24} parent=5 // pred_region
      %s141 = ssub.s32 %s9, 1
      %p142 = scmp.lt.s32.totalorder %s14, 1
      %s143 = scalar_select %p142, %s14, 1
      %s144 = smul.addr %s143, 8
      %s145 = scalar_lea.vmem %s0, %s144
      %p146 = pneg %p35
      %p147 = pneg %p32
      %p148 = pneg %p56
      %p149 = pneg %p53
      %p150 = pneg %p77
      %p151 = pneg %p74
      %p152 = pneg %p103
      %p153 = pneg %p100
      %p154 = scmp.lt.s32.totalorder %s14, 1
      %s155 = scalar_select %p154, %s14, 1
      %s156 = smul.addr %s155, 8
      %s157 = scalar_lea.vmem %s3, %s156
      %p158 = scmp.lt.s32.totalorder %s14, 1
      %s159 = scalar_select %p158, %s14, 1
      %s160 = smul.addr %s159, 8
      %s161 = scalar_lea.vmem %s0, %s160
      %p162 = scmp.lt.s32.totalorder %s14, 1
      %s163 = scalar_select %p162, %s14, 1
      %s164 = smul.addr %s163, 8
      %s165 = scalar_lea.vmem %s3, %s164
      %v166 = vld [vmem:[%s161] sm:$0xff]
      %v167 = vld [vmem:[%s1] sm:$0x1]
      %v168 = vld [vmem:[%s2] sm:$0x1]
      %vm169 = vcmask 261120
      %v170 = vsel %vm169, %v166, 0.0
      %171 = vadd.xlane.f32.xlu0 %v170
      %v172 = vpop.xlane.xlu0 %171
      %v173 = vrcp.pop 32.0
      %v174 = vmul.f32 %v172, %v173
      %v175 = vsub.f32 %v166, %v174
      %v176 = vmul.f32 %v175, %v175
      %v177 = vsel %vm169, %v176, 0.0
      %178 = vadd.xlane.f32.xlu0 %v177
      %v179 = vpop.xlane.xlu0 %178
      %v180 = vmul.f32 %v179, %v173
      %v181 = vadd.f32 %v180, 1e-05
      %v182 = vrsqrt.pop %v181
      %v183 = vmul.f32 %v175, %v182
      %v185 = vlaneseq
      %v186 = vshrl.u32 %v185, 7
      %v187 = vsub.s32 0, %v186
      %v188 = vrot.slane %v167, %v187
      %v190 = vmul.f32 %v183, %v188
      %v192 = vlaneseq
      %v193 = vshrl.u32 %v192, 7
      %v194 = vsub.s32 0, %v193
      %v195 = vrot.slane %v168, %v194
      %v197 = vadd.f32 %v190, %v195
      %198 = vst.msk [vmem:[%s165] sm:$0xff] %vm169, %v197
      %p199 = scmp.lt.s32.totalorder %s14, 1
      %s200 = scalar_select %p199, %s14, 1
      %s201 = smul.addr %s200, 8
      %s202 = scalar_lea.vmem %s3, %s201
      // Predicated region
      $region33: #{seq2seq_transformer_forward.24} parent=31 // pred_check
        %p203 = pneg %p100
      $region34: #{seq2seq_transformer_forward.24} parent=31 // pred_check_branch
        %205 = sbr.rel (%p203) target = $region36
      $region35: #{seq2seq_transformer_forward.24} parent=31 // pred_region
        _
      $region36: #{seq2seq_transformer_forward.24} parent=31 // pred_fallthru
        _
    $region32: #{seq2seq_transformer_forward.24} parent=5 // pred_fallthru
      _
    %p206 = scmp.le.s32.totalorder 2, %s9
    // Predicated region
    $region37: #{seq2seq_transformer_forward.24} parent=5 // pred_check
      %p207 = pneg %p206
    $region38: #{seq2seq_transformer_forward.24} parent=5 // pred_check_branch
      %209 = sbr.rel (%p207) target = $region40
    $region39: #{seq2seq_transformer_forward.24} parent=5 // pred_region
      %s210 = ssub.s32 %s9, 2
      // Predicated region
      $region41: #{seq2seq_transformer_forward.24} parent=39 // pred_check
        %p211 = pneg %p106
      $region42: #{seq2seq_transformer_forward.24} parent=39 // pred_check_branch
        %213 = sbr.rel (%p211) target = $region44
      $region43: #{seq2seq_transformer_forward.24} parent=39 // pred_region
        %p214 = scmp.lt.s32.totalorder %s15, 1
        %s215 = scalar_select %p214, %s15, 1
        %s216 = smul.addr %s215, 8
        %s217 = scalar_lea.vmem %s3, %s216
      $region44: #{seq2seq_transformer_forward.24} parent=39 // pred_fallthru
        _
    $region40: #{seq2seq_transformer_forward.24} parent=5 // pred_fallthru
      _
  $region6: #{seq2seq_transformer_forward.24} parent=0 // loop_footer
    %s13 = sadd.s32 1, %s9
  $region7: #{seq2seq_transformer_forward.24} parent=0 // loop_footer_branch
    %8 = sbr.rel target = $region3
  $region8: #{seq2seq_transformer_forward.24} parent=0 // loop_exit
    _

// kernel: seq2seq_transformer_forward.20
$region0: #{seq2seq_transformer_forward.20}
  #allocation0 [shape = 'u32[]', space=smem, size = 0x4, offset = 0x4, fixed_abs, tag = 'smem constant byte address 0x4 - core index']
  #allocation1 [shape = 'u32[144,128]{1,0:T(1,128)}', space=vmem, size = 0x12000, scoped, tag = 'internal scratch']
  %s0 = inlined_call_operand.vmem [shape: f32[14,32], index: 0, kind: input, shape index: {}]
  %s1 = inlined_call_operand.vmem [shape: bf16[32,64], index: 1, kind: input, shape index: {}]
  %s2 = inlined_call_operand.vmem [shape: f32[1,64], index: 2, kind: input, shape index: {}]
  %s3 = inlined_call_operand.vmem [shape: bf16[64,32], index: 3, kind: input, shape index: {}]
  %s4 = inlined_call_operand.vmem [shape: f32[1,32], index: 4, kind: input, shape index: {}]
  %s5 = inlined_call_operand.vmem [shape: f32[1,32], index: 5, kind: input, shape index: {}]
  %s6 = inlined_call_operand.vmem [shape: f32[1,32], index: 6, kind: input, shape index: {}]
  %s7 = inlined_call_operand.vmem [shape: f32[14,32], index: 7, kind: output, shape index: {}]
  %s8 = sld [smem:[#allocation0]]
  $region61: #{seq2seq_transformer_forward.20} parent=0
    _
  %s10 = ssub.s32 1, %s8
  %s11 = scalar_select 0, %s10, %s8
  loop: start=0, step=1, limit=4
  $region2: #{seq2seq_transformer_forward.20} parent=0 // loop_pre_header
    _
  $region3: #{seq2seq_transformer_forward.20} parent=0 // loop_header
    %s13 = sphi 0, %s17
    %p14 = scmp.ge.s32.totalorder %s13, 4
    %s23 = sphi 0, %s25
    %s26 = sphi 0, %s23
    %s27 = sphi 0, %s26
    %s43 = sphi 0, %s27
    %s47 = sphi 0, %s47
    %s49 = sphi 0, %s47
    %s50 = sphi 0, %s49
    %s64 = sphi 0, %s50
    %s68 = sphi 0, %s68
    %s70 = sphi 0, %s68
    %s71 = sphi 0, %s70
    %s85 = sphi 0, %s71
    %s89 = sphi 0, %s89
    %s91 = sphi 0, %s89
    %s92 = sphi 0, %s91
    %s106 = sphi 0, %s92
    %s110 = sphi 0, %s110
    %s112 = sphi 0, %s110
    %s113 = sphi 0, %s112
    %s127 = sphi 0, %s113
    %s131 = sphi 0, %s131
    %s133 = sphi 0, %s131
    %s134 = sphi 0, %s133
    %s148 = sphi 0, %s134
    %s152 = sphi 0, %s152
    %s154 = sphi 0, %s152
    %s155 = sphi 0, %s154
    %s169 = sphi 0, %s155
    %s175 = sphi 0, %s177
    %s178 = sphi 0, %s175
    %s179 = sphi 0, %s178
    %s195 = sphi 0, %s179
  $region4: #{seq2seq_transformer_forward.20} parent=0 // loop_header_branch
    %16 = sbr.rel (%p14) target = $region8
  $region5: #{seq2seq_transformer_forward.20} parent=0 // loop_body
    %s18 = ssub.s32 %s13, 1
    %s19 = ssub.s32 %s13, 2
    %s20 = sadd.s32 %s13, 1
    %s21 = ssub.s32 %s13, %s20
    %p22 = scmp.eq.s32.totalorder %s21, 0
    %s24 = sadd.s32 %s23, 1
    %s25 = scalar_select %p22, %s23, %s24
    %p28 = pneg %p22
    %p29 = scmp.eq.s32.totalorder %s13, 1
    %p30 = por %p28, %p29
    %p31 = scmp.ne.s32.totalorder %s23, %s26
    %p32 = scmp.eq.s32.totalorder %s13, 0
    %p33 = por %p31, %p32
    %p34 = scmp.ne.s32.totalorder %s23, %s26
    %p35 = scmp.eq.s32.totalorder %s18, 1
    %p36 = por %p34, %p35
    %p37 = scmp.ne.s32.totalorder %s26, %s27
    %p38 = scmp.eq.s32.totalorder %s18, 0
    %p39 = por %p37, %p38
    %p40 = scmp.ne.s32.totalorder %s26, %s27
    %p41 = scmp.eq.s32.totalorder %s19, 1
    %p42 = por %p40, %p41
    %p44 = scmp.ne.s32.totalorder %s27, %s43
    %p45 = scmp.eq.s32.totalorder %s19, 0
    %p46 = por %p44, %p45
    %s48 = sadd.s32 %s47, 1
    %p51 = scmp.eq.s32.totalorder %s13, 1
    %p52 = scmp.ne.s32.totalorder %s47, %s49
    %p53 = scmp.eq.s32.totalorder %s13, 0
    %p54 = por %p52, %p53
    %p55 = scmp.ne.s32.totalorder %s47, %s49
    %p56 = scmp.eq.s32.totalorder %s18, 1
    %p57 = por %p55, %p56
    %p58 = scmp.ne.s32.totalorder %s49, %s50
    %p59 = scmp.eq.s32.totalorder %s18, 0
    %p60 = por %p58, %p59
    %p61 = scmp.ne.s32.totalorder %s49, %s50
    %p62 = scmp.eq.s32.totalorder %s19, 1
    %p63 = por %p61, %p62
    %p65 = scmp.ne.s32.totalorder %s50, %s64
    %p66 = scmp.eq.s32.totalorder %s19, 0
    %p67 = por %p65, %p66
    %s69 = sadd.s32 %s68, 1
    %p72 = scmp.eq.s32.totalorder %s13, 1
    %p73 = scmp.ne.s32.totalorder %s68, %s70
    %p74 = scmp.eq.s32.totalorder %s13, 0
    %p75 = por %p73, %p74
    %p76 = scmp.ne.s32.totalorder %s68, %s70
    %p77 = scmp.eq.s32.totalorder %s18, 1
    %p78 = por %p76, %p77
    %p79 = scmp.ne.s32.totalorder %s70, %s71
    %p80 = scmp.eq.s32.totalorder %s18, 0
    %p81 = por %p79, %p80
    %p82 = scmp.ne.s32.totalorder %s70, %s71
    %p83 = scmp.eq.s32.totalorder %s19, 1
    %p84 = por %p82, %p83
    %p86 = scmp.ne.s32.totalorder %s71, %s85
    %p87 = scmp.eq.s32.totalorder %s19, 0
    %p88 = por %p86, %p87
    %s90 = sadd.s32 %s89, 1
    %p93 = scmp.eq.s32.totalorder %s13, 1
    %p94 = scmp.ne.s32.totalorder %s89, %s91
    %p95 = scmp.eq.s32.totalorder %s13, 0
    %p96 = por %p94, %p95
    %p97 = scmp.ne.s32.totalorder %s89, %s91
    %p98 = scmp.eq.s32.totalorder %s18, 1
    %p99 = por %p97, %p98
    %p100 = scmp.ne.s32.totalorder %s91, %s92
    %p101 = scmp.eq.s32.totalorder %s18, 0
    %p102 = por %p100, %p101
    %p103 = scmp.ne.s32.totalorder %s91, %s92
    %p104 = scmp.eq.s32.totalorder %s19, 1
    %p105 = por %p103, %p104
    %p107 = scmp.ne.s32.totalorder %s92, %s106
    %p108 = scmp.eq.s32.totalorder %s19, 0
    %p109 = por %p107, %p108
    %s111 = sadd.s32 %s110, 1
    %p114 = scmp.eq.s32.totalorder %s13, 1
    %p115 = scmp.ne.s32.totalorder %s110, %s112
    %p116 = scmp.eq.s32.totalorder %s13, 0
    %p117 = por %p115, %p116
    %p118 = scmp.ne.s32.totalorder %s110, %s112
    %p119 = scmp.eq.s32.totalorder %s18, 1
    %p120 = por %p118, %p119
    %p121 = scmp.ne.s32.totalorder %s112, %s113
    %p122 = scmp.eq.s32.totalorder %s18, 0
    %p123 = por %p121, %p122
    %p124 = scmp.ne.s32.totalorder %s112, %s113
    %p125 = scmp.eq.s32.totalorder %s19, 1
    %p126 = por %p124, %p125
    %p128 = scmp.ne.s32.totalorder %s113, %s127
    %p129 = scmp.eq.s32.totalorder %s19, 0
    %p130 = por %p128, %p129
    %s132 = sadd.s32 %s131, 1
    %p135 = scmp.eq.s32.totalorder %s13, 1
    %p136 = scmp.ne.s32.totalorder %s131, %s133
    %p137 = scmp.eq.s32.totalorder %s13, 0
    %p138 = por %p136, %p137
    %p139 = scmp.ne.s32.totalorder %s131, %s133
    %p140 = scmp.eq.s32.totalorder %s18, 1
    %p141 = por %p139, %p140
    %p142 = scmp.ne.s32.totalorder %s133, %s134
    %p143 = scmp.eq.s32.totalorder %s18, 0
    %p144 = por %p142, %p143
    %p145 = scmp.ne.s32.totalorder %s133, %s134
    %p146 = scmp.eq.s32.totalorder %s19, 1
    %p147 = por %p145, %p146
    %p149 = scmp.ne.s32.totalorder %s134, %s148
    %p150 = scmp.eq.s32.totalorder %s19, 0
    %p151 = por %p149, %p150
    %s153 = sadd.s32 %s152, 1
    %p156 = scmp.eq.s32.totalorder %s13, 1
    %p157 = scmp.ne.s32.totalorder %s152, %s154
    %p158 = scmp.eq.s32.totalorder %s13, 0
    %p159 = por %p157, %p158
    %p160 = scmp.ne.s32.totalorder %s152, %s154
    %p161 = scmp.eq.s32.totalorder %s18, 1
    %p162 = por %p160, %p161
    %p163 = scmp.ne.s32.totalorder %s154, %s155
    %p164 = scmp.eq.s32.totalorder %s18, 0
    %p165 = por %p163, %p164
    %p166 = scmp.ne.s32.totalorder %s154, %s155
    %p167 = scmp.eq.s32.totalorder %s19, 1
    %p168 = por %p166, %p167
    %p170 = scmp.ne.s32.totalorder %s155, %s169
    %p171 = scmp.eq.s32.totalorder %s19, 0
    %p172 = por %p170, %p171
    %s173 = ssub.s32 %s13, %s20
    %p174 = scmp.eq.s32.totalorder %s173, 0
    %s176 = sadd.s32 %s175, 1
    %s177 = scalar_select %p174, %s175, %s176
    %p180 = pneg %p174
    %p181 = scmp.eq.s32.totalorder %s13, 1
    %p182 = por %p180, %p181
    %p183 = scmp.ne.s32.totalorder %s175, %s178
    %p184 = scmp.eq.s32.totalorder %s13, 0
    %p185 = por %p183, %p184
    %p186 = scmp.ne.s32.totalorder %s175, %s178
    %p187 = scmp.eq.s32.totalorder %s18, 1
    %p188 = por %p186, %p187
    %p189 = scmp.ne.s32.totalorder %s178, %s179
    %p190 = scmp.eq.s32.totalorder %s18, 0
    %p191 = por %p189, %p190
    %p192 = scmp.ne.s32.totalorder %s178, %s179
    %p193 = scmp.eq.s32.totalorder %s19, 1
    %p194 = por %p192, %p193
    %p196 = scmp.ne.s32.totalorder %s179, %s195
    %p197 = scmp.eq.s32.totalorder %s19, 0
    %p198 = por %p196, %p197
    %p199 = scmp.le.s32.totalorder 1, %s13
    %p200 = scmp.lt.s32.totalorder %s13, 3
    %p201 = pnand %p199, %p200
    %p202 = pneg %p201
    // Predicated region
    $region9: #{seq2seq_transformer_forward.20} parent=5 // pred_check
      _
    $region10: #{seq2seq_transformer_forward.20} parent=5 // pred_check_branch
      %204 = sbr.rel (%p201) target = $region12
    $region11: #{seq2seq_transformer_forward.20} parent=5 // pred_region
      %s205 = ssub.s32 %s13, 1
      // Predicated region
      $region13: #{seq2seq_transformer_forward.20} parent=11 // pred_check
        %p206 = pneg %p60
      $region14: #{seq2seq_transformer_forward.20} parent=11 // pred_check_branch
        %208 = sbr.rel (%p206) target = $region16
      $region15: #{seq2seq_transformer_forward.20} parent=11 // pred_region
        _
      $region16: #{seq2seq_transformer_forward.20} parent=11 // pred_fallthru
        _
      // Predicated region
      $region17: #{seq2seq_transformer_forward.20} parent=11 // pred_check
        %p209 = pneg %p81
      $region18: #{seq2seq_transformer_forward.20} parent=11 // pred_check_branch
        %211 = sbr.rel (%p209) target = $region20
      $region19: #{seq2seq_transformer_forward.20} parent=11 // pred_region
        _
      $region20: #{seq2seq_transformer_forward.20} parent=11 // pred_fallthru
        _
      // Predicated region
      $region21: #{seq2seq_transformer_forward.20} parent=11 // pred_check
        %p212 = pneg %p102
      $region22: #{seq2seq_transformer_forward.20} parent=11 // pred_check_branch
        %214 = sbr.rel (%p212) target = $region24
      $region23: #{seq2seq_transformer_forward.20} parent=11 // pred_region
        _
      $region24: #{seq2seq_transformer_forward.20} parent=11 // pred_fallthru
        _
      // Predicated region
      $region25: #{seq2seq_transformer_forward.20} parent=11 // pred_check
        %p215 = pneg %p123
      $region26: #{seq2seq_transformer_forward.20} parent=11 // pred_check_branch
        %217 = sbr.rel (%p215) target = $region28
      $region27: #{seq2seq_transformer_forward.20} parent=11 // pred_region
        _
      $region28: #{seq2seq_transformer_forward.20} parent=11 // pred_fallthru
        _
      // Predicated region
      $region29: #{seq2seq_transformer_forward.20} parent=11 // pred_check
        %p218 = pneg %p144
      $region30: #{seq2seq_transformer_forward.20} parent=11 // pred_check_branch
        %220 = sbr.rel (%p218) target = $region32
      $region31: #{seq2seq_transformer_forward.20} parent=11 // pred_region
        _
      $region32: #{seq2seq_transformer_forward.20} parent=11 // pred_fallthru
        _
      // Predicated region
      $region33: #{seq2seq_transformer_forward.20} parent=11 // pred_check
        %p221 = pneg %p165
      $region34: #{seq2seq_transformer_forward.20} parent=11 // pred_check_branch
        %223 = sbr.rel (%p221) target = $region36
      $region35: #{seq2seq_transformer_forward.20} parent=11 // pred_region
        _
      $region36: #{seq2seq_transformer_forward.20} parent=11 // pred_fallthru
        _
    $region12: #{seq2seq_transformer_forward.20} parent=5 // pred_fallthru
      _
    %p224 = scmp.lt.s32.totalorder %s13, 2
    // Predicated region
    $region37: #{seq2seq_transformer_forward.20} parent=5 // pred_check
      %p225 = pneg %p224
    $region38: #{seq2seq_transformer_forward.20} parent=5 // pred_check_branch
      %227 = sbr.rel (%p225) target = $region40
    $region39: #{seq2seq_transformer_forward.20} parent=5 // pred_region
      // Predicated region
      $region41: #{seq2seq_transformer_forward.20} parent=39 // pred_check
        %p228 = pneg %p33
      $region42: #{seq2seq_transformer_forward.20} parent=39 // pred_check_branch
        %230 = sbr.rel (%p228) target = $region44
      $region43: #{seq2seq_transformer_forward.20} parent=39 // pred_region
        %p231 = scmp.lt.s32.totalorder %s13, 1
        %s232 = scalar_select %p231, %s13, 1
        %s233 = smul.addr %s232, 8
        %s234 = scalar_lea.vmem %s0, %s233
      $region44: #{seq2seq_transformer_forward.20} parent=39 // pred_fallthru
        _
    $region40: #{seq2seq_transformer_forward.20} parent=5 // pred_fallthru
      _
    %p235 = scmp.le.s32.totalorder 1, %s13
    %p236 = scmp.lt.s32.totalorder %s13, 3
    %p237 = pnand %p235, %p236
    %p238 = pneg %p237
    // Predicated region
    $region45: #{seq2seq_transformer_forward.20} parent=5 // pred_check
      _
    $region46: #{seq2seq_transformer_forward.20} parent=5 // pred_check_branch
      %240 = sbr.rel (%p237) target = $region48
    $region47: #{seq2seq_transformer_forward.20} parent=5 // pred_region
      %s241 = ssub.s32 %s13, 1
      %p242 = scmp.lt.s32.totalorder %s18, 1
      %s243 = scalar_select %p242, %s18, 1
      %s244 = smul.addr %s243, 8
      %s245 = scalar_lea.vmem %s0, %s244
      %p246 = pneg %p39
      %p247 = pneg %p36
      %p248 = pneg %p60
      %p249 = pneg %p57
      %p250 = pneg %p81
      %p251 = pneg %p78
      %p252 = pneg %p102
      %p253 = pneg %p99
      %p254 = pneg %p123
      %p255 = pneg %p120
      %p256 = pneg %p144
      %p257 = pneg %p141
      %p258 = pneg %p165
      %p259 = pneg %p162
      %p260 = pneg %p191
      %p261 = pneg %p188
      %p262 = scmp.lt.s32.totalorder %s18, 1
      %s263 = scalar_select %p262, %s18, 1
      %s264 = smul.addr %s263, 8
      %s265 = scalar_lea.vmem %s7, %s264
      %p266 = scmp.lt.s32.totalorder %s18, 1
      %s267 = scalar_select %p266, %s18, 1
      %s268 = smul.addr %s267, 8
      %s269 = scalar_lea.vmem %s0, %s268
      %p270 = scmp.lt.s32.totalorder %s18, 1
      %s271 = scalar_select %p270, %s18, 1
      %s272 = smul.addr %s271, 8
      %s273 = scalar_lea.vmem %s7, %s272
      %v275 = vld [vmem:[%s269] sm:$0xff]
      %v276 = vpack.c.bf16 %v275, %v275
      %v277 = vld [vmem:[%s1] sm:$0xf]
      %v278 = vld [vmem:[%s1 + $0x4] sm:$0xf]
      %v279 = vld [vmem:[%s1 + $0x8] sm:$0xf]
      %v280 = vld [vmem:[%s1 + $0xc] sm:$0xf]
      %v281 = vld [vmem:[%s2] sm:$0x1]
      %v283 = vlaneseq
      %v284 = vshrl.u32 %v283, 7
      %v285 = vsub.s32 0, %v284
      %v286 = vrot.slane %v281, %v285
      %v292 = vunpack.c.l.b16 %v277
      %v293 = vunpack.c.l.b16 %v278
      %v294 = vunpack.c.l.b16 %v279
      %v295 = vunpack.c.l.b16 %v280
      %v296 = vpack.c.b16 %v293, %v292
      %v297 = vpack.c.b16 %v295, %v294
      %vm300 = vcmask 261120
      %v302 = vsel %vm300, %v276, 0
      %304 = vmatprep.subr.bf16.mxu0 0
      %305 = vmatpush1.bf16.msra.mxu0 %v296
      %306 = vmatprep.subr.bf16.mxu0 0
      %307 = vmatpush1.bf16.msra.mxu0 %v297
      %308 = vmatprep.subr.bf16.mxu0 0
      %309 = vmatpush1.bf16.msra.mxu0 0
      %310 = vmatprep.subr.bf16.mxu0 0
      %311 = vmatpush1.bf16.msra.mxu0 0
      %312 = vmatprep.subr.bf16.mxu0 0
      %313 = vmatpush1.bf16.msra.mxu0 0
      %314 = vmatprep.subr.bf16.mxu0 0
      %315 = vmatpush1.bf16.msra.mxu0 0
      %316 = vmatprep.subr.bf16.mxu0 0
      %317 = vmatpush1.bf16.msra.mxu0 0
      %318 = vmatprep.subr.bf16.mxu0 0
      %319 = vmatpush1.bf16.msra.mxu0 0
      %320 = vmatprep.subr.bf16.mxu0 0
      %321 = vmatpush1.bf16.msra.mxu0 0
      %322 = vmatprep.subr.bf16.mxu0 0
      %323 = vmatpush1.bf16.msra.mxu0 0
      %324 = vmatprep.subr.bf16.mxu0 0
      %325 = vmatpush1.bf16.msra.mxu0 0
      %326 = vmatprep.subr.bf16.mxu0 0
      %327 = vmatpush1.bf16.msra.mxu0 0
      %328 = vmatprep.subr.bf16.mxu0 0
      %329 = vmatpush1.bf16.msra.mxu0 0
      %330 = vmatprep.subr.bf16.mxu0 0
      %331 = vmatpush1.bf16.msra.mxu0 0
      %332 = vmatprep.subr.bf16.mxu0 0
      %333 = vmatpush1.bf16.msra.mxu0 0
      %334 = vmatprep.subr.bf16.mxu0 0
      %335 = vmatpush1.bf16.msra.mxu0 0
      %336 = vmatprep.mubr.bf16.mxu0 0
      %337 = vmatmul.mubr.bf16.gmra.mrb[0].mxu0 %v302
      %v338 = vpop.f32.mrb[0].mxu0
      %v339 = vadd.f32 %v286, %v338
      %v340 = vpop.f32.mrb[0].mxu0
      %v341 = vpop.f32.mrb[0].mxu0
      %v342 = vpop.f32.mrb[0].mxu0
      %343 = vdwg.mxu0
      %v344 = vmax.f32 %v339, 0.0
      %v345 = vpack.c.bf16 %v344, %v344
      %v346 = vld [vmem:[%s3] sm:$0xf]
      %v347 = vld [vmem:[%s3 + $0x4] sm:$0xf]
      %v348 = vld [vmem:[%s3 + $0x8] sm:$0xf]
      %v349 = vld [vmem:[%s3 + $0xc] sm:$0xf]
      %v350 = vld [vmem:[%s3 + $0x10] sm:$0xf]
      %v351 = vld [vmem:[%s3 + $0x14] sm:$0xf]
      %v352 = vld [vmem:[%s3 + $0x18] sm:$0xf]
      %v353 = vld [vmem:[%s3 + $0x1c] sm:$0xf]
      %v354 = vld [vmem:[%s4] sm:$0x1]
      %v356 = vlaneseq
      %v357 = vshrl.u32 %v356, 7
      %v358 = vsub.s32 0, %v357
      %v359 = vrot.slane %v354, %v358
      %v369 = vunpack.c.l.b16 %v346
      %v370 = vunpack.c.l.b16 %v347
      %v371 = vunpack.c.l.b16 %v348
      %v372 = vunpack.c.l.b16 %v349
      %v373 = vunpack.c.l.b16 %v350
      %v374 = vunpack.c.l.b16 %v351
      %v375 = vunpack.c.l.b16 %v352
      %v376 = vunpack.c.l.b16 %v353
      %v377 = vpack.c.b16 %v370, %v369
      %v378 = vpack.c.b16 %v372, %v371
      %v379 = vpack.c.b16 %v374, %v373
      %v380 = vpack.c.b16 %v376, %v375
      %vm385 = vcmask 523264
      %v387 = vsel %vm385, %v345, 0
      %389 = vmatprep.subr.bf16.mxu0 0
      %390 = vmatpush1.bf16.msra.mxu0 %v377
      %391 = vmatprep.subr.bf16.mxu0 0
      %392 = vmatpush1.bf16.msra.mxu0 %v378
      %393 = vmatprep.subr.bf16.mxu0 0
      %394 = vmatpush1.bf16.msra.mxu0 %v379
      %395 = vmatprep.subr.bf16.mxu0 0
      %396 = vmatpush1.bf16.msra.mxu0 %v380
      %397 = vmatprep.subr.bf16.mxu0 0
      %398 = vmatpush1.bf16.msra.mxu0 0
      %399 = vmatprep.subr.bf16.mxu0 0
      %400 = vmatpush1.bf16.msra.mxu0 0
      %401 = vmatprep.subr.bf16.mxu0 0
      %402 = vmatpush1.bf16.msra.mxu0 0
      %403 = vmatprep.subr.bf16.mxu0 0
      %404 = vmatpush1.bf16.msra.mxu0 0
      %405 = vmatprep.subr.bf16.mxu0 0
      %406 = vmatpush1.bf16.msra.mxu0 0
      %407 = vmatprep.subr.bf16.mxu0 0
      %408 = vmatpush1.bf16.msra.mxu0 0
      %409 = vmatprep.subr.bf16.mxu0 0
      %410 = vmatpush1.bf16.msra.mxu0 0
      %411 = vmatprep.subr.bf16.mxu0 0
      %412 = vmatpush1.bf16.msra.mxu0 0
      %413 = vmatprep.subr.bf16.mxu0 0
      %414 = vmatpush1.bf16.msra.mxu0 0
      %415 = vmatprep.subr.bf16.mxu0 0
      %416 = vmatpush1.bf16.msra.mxu0 0
      %417 = vmatprep.subr.bf16.mxu0 0
      %418 = vmatpush1.bf16.msra.mxu0 0
      %419 = vmatprep.subr.bf16.mxu0 0
      %420 = vmatpush1.bf16.msra.mxu0 0
      %421 = vmatprep.mubr.bf16.mxu0 0
      %422 = vmatmul.mubr.bf16.gmra.mrb[0].mxu0 %v387
      %v423 = vpop.f32.mrb[0].mxu0
      %v424 = vadd.f32 %v359, %v423
      %v425 = vpop.f32.mrb[0].mxu0
      %v426 = vpop.f32.mrb[0].mxu0
      %v427 = vpop.f32.mrb[0].mxu0
      %428 = vdwg.mxu0
      %v429 = vadd.f32 %v275, %v424
      %v430 = vld [vmem:[%s5] sm:$0x1]
      %v431 = vld [vmem:[%s6] sm:$0x1]
      %v432 = vsel %vm300, %v429, 0.0
      %433 = vadd.xlane.f32.xlu0 %v432
      %v434 = vpop.xlane.xlu0 %433
      %v435 = vrcp.pop 32.0
      %v436 = vmul.f32 %v434, %v435
      %v437 = vsub.f32 %v429, %v436
      %v438 = vmul.f32 %v437, %v437
      %v439 = vsel %vm300, %v438, 0.0
      %440 = vadd.xlane.f32.xlu0 %v439
      %v441 = vpop.xlane.xlu0 %440
      %v442 = vmul.f32 %v441, %v435
      %v443 = vadd.f32 %v442, 1e-05
      %v444 = vrsqrt.pop %v443
      %v445 = vmul.f32 %v437, %v444
      %v447 = vlaneseq
      %v448 = vshrl.u32 %v447, 7
      %v449 = vsub.s32 0, %v448
      %v450 = vrot.slane %v430, %v449
      %v452 = vmul.f32 %v445, %v450
      %v454 = vlaneseq
      %v455 = vshrl.u32 %v454, 7
      %v456 = vsub.s32 0, %v455
      %v457 = vrot.slane %v431, %v456
      %v459 = vadd.f32 %v452, %v457
      %460 = vst.msk [vmem:[%s273] sm:$0xff] %vm300, %v459
      %p461 = scmp.lt.s32.totalorder %s18, 1
      %s462 = scalar_select %p461, %s18, 1
      %s463 = smul.addr %s462, 8
      %s464 = scalar_lea.vmem %s7, %s463
      // Predicated region
      $region49: #{seq2seq_transformer_forward.20} parent=47 // pred_check
        %p465 = pneg %p188
      $region50: #{seq2seq_transformer_forward.20} parent=47 // pred_check_branch
        %467 = sbr.rel (%p465) target = $region52
      $region51: #{seq2seq_transformer_forward.20} parent=47 // pred_region
        _
      $region52: #{seq2seq_transformer_forward.20} parent=47 // pred_fallthru
        _
    $region48: #{seq2seq_transformer_forward.20} parent=5 // pred_fallthru
      _
    %p468 = scmp.le.s32.totalorder 2, %s13
    // Predicated region
    $region53: #{seq2seq_transformer_forward.20} parent=5 // pred_check
      %p469 = pneg %p468
    $region54: #{seq2seq_transformer_forward.20} parent=5 // pred_check_branch
      %471 = sbr.rel (%p469) target = $region56
    $region55: #{seq2seq_transformer_forward.20} parent=5 // pred_region
      %s472 = ssub.s32 %s13, 2
      // Predicated region
      $region57: #{seq2seq_transformer_forward.20} parent=55 // pred_check
        %p473 = pneg %p194
      $region58: #{seq2seq_transformer_forward.20} parent=55 // pred_check_branch
        %475 = sbr.rel (%p473) target = $region60
      $region59: #{seq2seq_transformer_forward.20} parent=55 // pred_region
        %p476 = scmp.lt.s32.totalorder %s19, 1
        %s477 = scalar_select %p476, %s19, 1
        %s478 = smul.addr %s477, 8
        %s479 = scalar_lea.vmem %s7, %s478
      $region60: #{seq2seq_transformer_forward.20} parent=55 // pred_fallthru
        _
    $region56: #{seq2seq_transformer_forward.20} parent=5 // pred_fallthru
      _
  $region6: #{seq2seq_transformer_forward.20} parent=0 // loop_footer
    %s17 = sadd.s32 1, %s13
  $region7: #{seq2seq_transformer_forward.20} parent=0 // loop_footer_branch
    %12 = sbr.rel target = $region3
  $region8: #{seq2seq_transformer_forward.20} parent=0 // loop_exit
    _

// kernel: seq2seq_transformer_forward.18
$region0: #{seq2seq_transformer_forward.18}
  #allocation0 [shape = 'u32[]', space=smem, size = 0x4, offset = 0x4, fixed_abs, tag = 'smem constant byte address 0x4 - core index']
  #allocation1 [shape = 'u32[144,128]{1,0:T(1,128)}', space=vmem, size = 0x12000, scoped, tag = 'internal scratch']
  %s0 = inlined_call_operand.vmem [shape: f32[2,7,32], index: 0, kind: input, shape index: {}]
  %s1 = inlined_call_operand.vmem [shape: f32[7,7], index: 1, kind: input, shape index: {}]
  %s2 = inlined_call_operand.vmem [shape: f32[2,1,7], index: 2, kind: input, shape index: {}]
  %s3 = inlined_call_operand.vmem [shape: bf16[32,96], index: 3, kind: input, shape index: {}]
  %s4 = inlined_call_operand.vmem [shape: f32[1,96], index: 4, kind: input, shape index: {}]
  %s5 = inlined_call_operand.vmem [shape: bf16[32,32], index: 5, kind: input, shape index: {}]
  %s6 = inlined_call_operand.vmem [shape: f32[1,32], index: 6, kind: input, shape index: {}]
  %s7 = inlined_call_operand.vmem [shape: f32[1,32], index: 7, kind: input, shape index: {}]
  %s8 = inlined_call_operand.vmem [shape: f32[1,32], index: 8, kind: input, shape index: {}]
  %s9 = inlined_call_operand.vmem [shape: f32[2,7,32], index: 9, kind: output, shape index: {}]
  %s10 = sld [smem:[#allocation0]]
  $region69: #{seq2seq_transformer_forward.18} parent=0
    _
  %s12 = ssub.s32 1, %s10
  %s13 = scalar_select 0, %s12, %s10
  loop: start=0, step=1, limit=4
  $region2: #{seq2seq_transformer_forward.18} parent=0 // loop_pre_header
    _
  $region3: #{seq2seq_transformer_forward.18} parent=0 // loop_header
    %s15 = sphi 0, %s19
    %p16 = scmp.ge.s32.totalorder %s15, 4
    %s25 = sphi 0, %s27
    %s28 = sphi 0, %s25
    %s29 = sphi 0, %s28
    %s45 = sphi 0, %s29
    %s49 = sphi 0, %s49
    %s51 = sphi 0, %s49
    %s52 = sphi 0, %s51
    %s66 = sphi 0, %s52
    %s72 = sphi 0, %s74
    %s75 = sphi 0, %s72
    %s76 = sphi 0, %s75
    %s92 = sphi 0, %s76
    %s96 = sphi 0, %s96
    %s98 = sphi 0, %s96
    %s99 = sphi 0, %s98
    %s113 = sphi 0, %s99
    %s117 = sphi 0, %s117
    %s119 = sphi 0, %s117
    %s120 = sphi 0, %s119
    %s134 = sphi 0, %s120
    %s138 = sphi 0, %s138
    %s140 = sphi 0, %s138
    %s141 = sphi 0, %s140
    %s155 = sphi 0, %s141
    %s159 = sphi 0, %s159
    %s161 = sphi 0, %s159
    %s162 = sphi 0, %s161
    %s176 = sphi 0, %s162
    %s180 = sphi 0, %s180
    %s182 = sphi 0, %s180
    %s183 = sphi 0, %s182
    %s197 = sphi 0, %s183
    %s201 = sphi 0, %s201
    %s203 = sphi 0, %s201
    %s204 = sphi 0, %s203
    %s218 = sphi 0, %s204
    %s224 = sphi 0, %s226
    %s227 = sphi 0, %s224
    %s228 = sphi 0, %s227
    %s244 = sphi 0, %s228
  $region4: #{seq2seq_transformer_forward.18} parent=0 // loop_header_branch
    %18 = sbr.rel (%p16) target = $region8
  $region5: #{seq2seq_transformer_forward.18} parent=0 // loop_body
    %s20 = ssub.s32 %s15, 1
    %s21 = ssub.s32 %s15, 2
    %s22 = sadd.s32 %s15, 1
    %s23 = ssub.s32 %s15, %s22
    %p24 = scmp.eq.s32.totalorder %s23, 0
    %s26 = sadd.s32 %s25, 1
    %s27 = scalar_select %p24, %s25, %s26
    %p30 = pneg %p24
    %p31 = scmp.eq.s32.totalorder %s15, 1
    %p32 = por %p30, %p31
    %p33 = scmp.ne.s32.totalorder %s25, %s28
    %p34 = scmp.eq.s32.totalorder %s15, 0
    %p35 = por %p33, %p34
    %p36 = scmp.ne.s32.totalorder %s25, %s28
    %p37 = scmp.eq.s32.totalorder %s20, 1
    %p38 = por %p36, %p37
    %p39 = scmp.ne.s32.totalorder %s28, %s29
    %p40 = scmp.eq.s32.totalorder %s20, 0
    %p41 = por %p39, %p40
    %p42 = scmp.ne.s32.totalorder %s28, %s29
    %p43 = scmp.eq.s32.totalorder %s21, 1
    %p44 = por %p42, %p43
    %p46 = scmp.ne.s32.totalorder %s29, %s45
    %p47 = scmp.eq.s32.totalorder %s21, 0
    %p48 = por %p46, %p47
    %s50 = sadd.s32 %s49, 1
    %p53 = scmp.eq.s32.totalorder %s15, 1
    %p54 = scmp.ne.s32.totalorder %s49, %s51
    %p55 = scmp.eq.s32.totalorder %s15, 0
    %p56 = por %p54, %p55
    %p57 = scmp.ne.s32.totalorder %s49, %s51
    %p58 = scmp.eq.s32.totalorder %s20, 1
    %p59 = por %p57, %p58
    %p60 = scmp.ne.s32.totalorder %s51, %s52
    %p61 = scmp.eq.s32.totalorder %s20, 0
    %p62 = por %p60, %p61
    %p63 = scmp.ne.s32.totalorder %s51, %s52
    %p64 = scmp.eq.s32.totalorder %s21, 1
    %p65 = por %p63, %p64
    %p67 = scmp.ne.s32.totalorder %s52, %s66
    %p68 = scmp.eq.s32.totalorder %s21, 0
    %p69 = por %p67, %p68
    %s70 = ssub.s32 %s15, %s22
    %p71 = scmp.eq.s32.totalorder %s70, 0
    %s73 = sadd.s32 %s72, 1
    %s74 = scalar_select %p71, %s72, %s73
    %p77 = pneg %p71
    %p78 = scmp.eq.s32.totalorder %s15, 1
    %p79 = por %p77, %p78
    %p80 = scmp.ne.s32.totalorder %s72, %s75
    %p81 = scmp.eq.s32.totalorder %s15, 0
    %p82 = por %p80, %p81
    %p83 = scmp.ne.s32.totalorder %s72, %s75
    %p84 = scmp.eq.s32.totalorder %s20, 1
    %p85 = por %p83, %p84
    %p86 = scmp.ne.s32.totalorder %s75, %s76
    %p87 = scmp.eq.s32.totalorder %s20, 0
    %p88 = por %p86, %p87
    %p89 = scmp.ne.s32.totalorder %s75, %s76
    %p90 = scmp.eq.s32.totalorder %s21, 1
    %p91 = por %p89, %p90
    %p93 = scmp.ne.s32.totalorder %s76, %s92
    %p94 = scmp.eq.s32.totalorder %s21, 0
    %p95 = por %p93, %p94
    %s97 = sadd.s32 %s96, 1
    %p100 = scmp.eq.s32.totalorder %s15, 1
    %p101 = scmp.ne.s32.totalorder %s96, %s98
    %p102 = scmp.eq.s32.totalorder %s15, 0
    %p103 = por %p101, %p102
    %p104 = scmp.ne.s32.totalorder %s96, %s98
    %p105 = scmp.eq.s32.totalorder %s20, 1
    %p106 = por %p104, %p105
    %p107 = scmp.ne.s32.totalorder %s98, %s99
    %p108 = scmp.eq.s32.totalorder %s20, 0
    %p109 = por %p107, %p108
    %p110 = scmp.ne.s32.totalorder %s98, %s99
    %p111 = scmp.eq.s32.totalorder %s21, 1
    %p112 = por %p110, %p111
    %p114 = scmp.ne.s32.totalorder %s99, %s113
    %p115 = scmp.eq.s32.totalorder %s21, 0
    %p116 = por %p114, %p115
    %s118 = sadd.s32 %s117, 1
    %p121 = scmp.eq.s32.totalorder %s15, 1
    %p122 = scmp.ne.s32.totalorder %s117, %s119
    %p123 = scmp.eq.s32.totalorder %s15, 0
    %p124 = por %p122, %p123
    %p125 = scmp.ne.s32.totalorder %s117, %s119
    %p126 = scmp.eq.s32.totalorder %s20, 1
    %p127 = por %p125, %p126
    %p128 = scmp.ne.s32.totalorder %s119, %s120
    %p129 = scmp.eq.s32.totalorder %s20, 0
    %p130 = por %p128, %p129
    %p131 = scmp.ne.s32.totalorder %s119, %s120
    %p132 = scmp.eq.s32.totalorder %s21, 1
    %p133 = por %p131, %p132
    %p135 = scmp.ne.s32.totalorder %s120, %s134
    %p136 = scmp.eq.s32.totalorder %s21, 0
    %p137 = por %p135, %p136
    %s139 = sadd.s32 %s138, 1
    %p142 = scmp.eq.s32.totalorder %s15, 1
    %p143 = scmp.ne.s32.totalorder %s138, %s140
    %p144 = scmp.eq.s32.totalorder %s15, 0
    %p145 = por %p143, %p144
    %p146 = scmp.ne.s32.totalorder %s138, %s140
    %p147 = scmp.eq.s32.totalorder %s20, 1
    %p148 = por %p146, %p147
    %p149 = scmp.ne.s32.totalorder %s140, %s141
    %p150 = scmp.eq.s32.totalorder %s20, 0
    %p151 = por %p149, %p150
    %p152 = scmp.ne.s32.totalorder %s140, %s141
    %p153 = scmp.eq.s32.totalorder %s21, 1
    %p154 = por %p152, %p153
    %p156 = scmp.ne.s32.totalorder %s141, %s155
    %p157 = scmp.eq.s32.totalorder %s21, 0
    %p158 = por %p156, %p157
    %s160 = sadd.s32 %s159, 1
    %p163 = scmp.eq.s32.totalorder %s15, 1
    %p164 = scmp.ne.s32.totalorder %s159, %s161
    %p165 = scmp.eq.s32.totalorder %s15, 0
    %p166 = por %p164, %p165
    %p167 = scmp.ne.s32.totalorder %s159, %s161
    %p168 = scmp.eq.s32.totalorder %s20, 1
    %p169 = por %p167, %p168
    %p170 = scmp.ne.s32.totalorder %s161, %s162
    %p171 = scmp.eq.s32.totalorder %s20, 0
    %p172 = por %p170, %p171
    %p173 = scmp.ne.s32.totalorder %s161, %s162
    %p174 = scmp.eq.s32.totalorder %s21, 1
    %p175 = por %p173, %p174
    %p177 = scmp.ne.s32.totalorder %s162, %s176
    %p178 = scmp.eq.s32.totalorder %s21, 0
    %p179 = por %p177, %p178
    %s181 = sadd.s32 %s180, 1
    %p184 = scmp.eq.s32.totalorder %s15, 1
    %p185 = scmp.ne.s32.totalorder %s180, %s182
    %p186 = scmp.eq.s32.totalorder %s15, 0
    %p187 = por %p185, %p186
    %p188 = scmp.ne.s32.totalorder %s180, %s182
    %p189 = scmp.eq.s32.totalorder %s20, 1
    %p190 = por %p188, %p189
    %p191 = scmp.ne.s32.totalorder %s182, %s183
    %p192 = scmp.eq.s32.totalorder %s20, 0
    %p193 = por %p191, %p192
    %p194 = scmp.ne.s32.totalorder %s182, %s183
    %p195 = scmp.eq.s32.totalorder %s21, 1
    %p196 = por %p194, %p195
    %p198 = scmp.ne.s32.totalorder %s183, %s197
    %p199 = scmp.eq.s32.totalorder %s21, 0
    %p200 = por %p198, %p199
    %s202 = sadd.s32 %s201, 1
    %p205 = scmp.eq.s32.totalorder %s15, 1
    %p206 = scmp.ne.s32.totalorder %s201, %s203
    %p207 = scmp.eq.s32.totalorder %s15, 0
    %p208 = por %p206, %p207
    %p209 = scmp.ne.s32.totalorder %s201, %s203
    %p210 = scmp.eq.s32.totalorder %s20, 1
    %p211 = por %p209, %p210
    %p212 = scmp.ne.s32.totalorder %s203, %s204
    %p213 = scmp.eq.s32.totalorder %s20, 0
    %p214 = por %p212, %p213
    %p215 = scmp.ne.s32.totalorder %s203, %s204
    %p216 = scmp.eq.s32.totalorder %s21, 1
    %p217 = por %p215, %p216
    %p219 = scmp.ne.s32.totalorder %s204, %s218
    %p220 = scmp.eq.s32.totalorder %s21, 0
    %p221 = por %p219, %p220
    %s222 = ssub.s32 %s15, %s22
    %p223 = scmp.eq.s32.totalorder %s222, 0
    %s225 = sadd.s32 %s224, 1
    %s226 = scalar_select %p223, %s224, %s225
    %p229 = pneg %p223
    %p230 = scmp.eq.s32.totalorder %s15, 1
    %p231 = por %p229, %p230
    %p232 = scmp.ne.s32.totalorder %s224, %s227
    %p233 = scmp.eq.s32.totalorder %s15, 0
    %p234 = por %p232, %p233
    %p235 = scmp.ne.s32.totalorder %s224, %s227
    %p236 = scmp.eq.s32.totalorder %s20, 1
    %p237 = por %p235, %p236
    %p238 = scmp.ne.s32.totalorder %s227, %s228
    %p239 = scmp.eq.s32.totalorder %s20, 0
    %p240 = por %p238, %p239
    %p241 = scmp.ne.s32.totalorder %s227, %s228
    %p242 = scmp.eq.s32.totalorder %s21, 1
    %p243 = por %p241, %p242
    %p245 = scmp.ne.s32.totalorder %s228, %s244
    %p246 = scmp.eq.s32.totalorder %s21, 0
    %p247 = por %p245, %p246
    %p248 = scmp.le.s32.totalorder 1, %s15
    %p249 = scmp.lt.s32.totalorder %s15, 3
    %p250 = pnand %p248, %p249
    %p251 = pneg %p250
    // Predicated region
    $region9: #{seq2seq_transformer_forward.18} parent=5 // pred_check
      _
    $region10: #{seq2seq_transformer_forward.18} parent=5 // pred_check_branch
      %253 = sbr.rel (%p250) target = $region12
    $region11: #{seq2seq_transformer_forward.18} parent=5 // pred_region
      %s254 = ssub.s32 %s15, 1
      // Predicated region
      $region13: #{seq2seq_transformer_forward.18} parent=11 // pred_check
        %p255 = pneg %p62
      $region14: #{seq2seq_transformer_forward.18} parent=11 // pred_check_branch
        %257 = sbr.rel (%p255) target = $region16
      $region15: #{seq2seq_transformer_forward.18} parent=11 // pred_region
        _
      $region16: #{seq2seq_transformer_forward.18} parent=11 // pred_fallthru
        _
      // Predicated region
      $region17: #{seq2seq_transformer_forward.18} parent=11 // pred_check
        %p258 = pneg %p109
      $region18: #{seq2seq_transformer_forward.18} parent=11 // pred_check_branch
        %260 = sbr.rel (%p258) target = $region20
      $region19: #{seq2seq_transformer_forward.18} parent=11 // pred_region
        _
      $region20: #{seq2seq_transformer_forward.18} parent=11 // pred_fallthru
        _
      // Predicated region
      $region21: #{seq2seq_transformer_forward.18} parent=11 // pred_check
        %p261 = pneg %p130
      $region22: #{seq2seq_transformer_forward.18} parent=11 // pred_check_branch
        %263 = sbr.rel (%p261) target = $region24
      $region23: #{seq2seq_transformer_forward.18} parent=11 // pred_region
        _
      $region24: #{seq2seq_transformer_forward.18} parent=11 // pred_fallthru
        _
      // Predicated region
      $region25: #{seq2seq_transformer_forward.18} parent=11 // pred_check
        %p264 = pneg %p151
      $region26: #{seq2seq_transformer_forward.18} parent=11 // pred_check_branch
        %266 = sbr.rel (%p264) target = $region28
      $region27: #{seq2seq_transformer_forward.18} parent=11 // pred_region
        _
      $region28: #{seq2seq_transformer_forward.18} parent=11 // pred_fallthru
        _
      // Predicated region
      $region29: #{seq2seq_transformer_forward.18} parent=11 // pred_check
        %p267 = pneg %p172
      $region30: #{seq2seq_transformer_forward.18} parent=11 // pred_check_branch
        %269 = sbr.rel (%p267) target = $region32
      $region31: #{seq2seq_transformer_forward.18} parent=11 // pred_region
        _
      $region32: #{seq2seq_transformer_forward.18} parent=11 // pred_fallthru
        _
      // Predicated region
      $region33: #{seq2seq_transformer_forward.18} parent=11 // pred_check
        %p270 = pneg %p193
      $region34: #{seq2seq_transformer_forward.18} parent=11 // pred_check_branch
        %272 = sbr.rel (%p270) target = $region36
      $region35: #{seq2seq_transformer_forward.18} parent=11 // pred_region
        _
      $region36: #{seq2seq_transformer_forward.18} parent=11 // pred_fallthru
        _
      // Predicated region
      $region37: #{seq2seq_transformer_forward.18} parent=11 // pred_check
        %p273 = pneg %p214
      $region38: #{seq2seq_transformer_forward.18} parent=11 // pred_check_branch
        %275 = sbr.rel (%p273) target = $region40
      $region39: #{seq2seq_transformer_forward.18} parent=11 // pred_region
        _
      $region40: #{seq2seq_transformer_forward.18} parent=11 // pred_fallthru
        _
    $region12: #{seq2seq_transformer_forward.18} parent=5 // pred_fallthru
      _
    %p276 = scmp.lt.s32.totalorder %s15, 2
    // Predicated region
    $region41: #{seq2seq_transformer_forward.18} parent=5 // pred_check
      %p277 = pneg %p276
    $region42: #{seq2seq_transformer_forward.18} parent=5 // pred_check_branch
      %279 = sbr.rel (%p277) target = $region44
    $region43: #{seq2seq_transformer_forward.18} parent=5 // pred_region
      // Predicated region
      $region45: #{seq2seq_transformer_forward.18} parent=43 // pred_check
        %p280 = pneg %p35
      $region46: #{seq2seq_transformer_forward.18} parent=43 // pred_check_branch
        %282 = sbr.rel (%p280) target = $region48
      $region47: #{seq2seq_transformer_forward.18} parent=43 // pred_region
        %p283 = scmp.lt.s32.totalorder %s15, 1
        %s284 = scalar_select %p283, %s15, 1
        %s285 = smul.addr %s284, 8
        %s286 = scalar_lea.vmem %s0, %s285
      $region48: #{seq2seq_transformer_forward.18} parent=43 // pred_fallthru
        _
      // Predicated region
      $region49: #{seq2seq_transformer_forward.18} parent=43 // pred_check
        %p287 = pneg %p82
      $region50: #{seq2seq_transformer_forward.18} parent=43 // pred_check_branch
        %289 = sbr.rel (%p287) target = $region52
      $region51: #{seq2seq_transformer_forward.18} parent=43 // pred_region
        %p290 = scmp.lt.s32.totalorder %s15, 1
        %s291 = scalar_select %p290, %s15, 1
        %s292 = scalar_lea.vmem %s2, %s291
      $region52: #{seq2seq_transformer_forward.18} parent=43 // pred_fallthru
        _
    $region44: #{seq2seq_transformer_forward.18} parent=5 // pred_fallthru
      _
    %p293 = scmp.le.s32.totalorder 1, %s15
    %p294 = scmp.lt.s32.totalorder %s15, 3
    %p295 = pnand %p293, %p294
    %p296 = pneg %p295
    // Predicated region
    $region53: #{seq2seq_transformer_forward.18} parent=5 // pred_check
      _
    $region54: #{seq2seq_transformer_forward.18} parent=5 // pred_check_branch
      %298 = sbr.rel (%p295) target = $region56
    $region55: #{seq2seq_transformer_forward.18} parent=5 // pred_region
      %s299 = ssub.s32 %s15, 1
      %p300 = scmp.lt.s32.totalorder %s20, 1
      %s301 = scalar_select %p300, %s20, 1
      %s302 = smul.addr %s301, 8
      %s303 = scalar_lea.vmem %s0, %s302
      %p304 = pneg %p41
      %p305 = pneg %p38
      %p306 = pneg %p62
      %p307 = pneg %p59
      %p308 = scmp.lt.s32.totalorder %s20, 1
      %s309 = scalar_select %p308, %s20, 1
      %s310 = scalar_lea.vmem %s2, %s309
      %p311 = pneg %p88
      %p312 = pneg %p85
      %p313 = pneg %p109
      %p314 = pneg %p106
      %p315 = pneg %p130
      %p316 = pneg %p127
      %p317 = pneg %p151
      %p318 = pneg %p148
      %p319 = pneg %p172
      %p320 = pneg %p169
      %p321 = pneg %p193
      %p322 = pneg %p190
      %p323 = pneg %p214
      %p324 = pneg %p211
      %p325 = pneg %p240
      %p326 = pneg %p237
      %p327 = scmp.lt.s32.totalorder %s20, 1
      %s328 = scalar_select %p327, %s20, 1
      %s329 = smul.addr %s328, 8
      %s330 = scalar_lea.vmem %s9, %s329
      %p331 = scmp.lt.s32.totalorder %s20, 1
      %s332 = scalar_select %p331, %s20, 1
      %s333 = smul.addr %s332, 8
      %s334 = scalar_lea.vmem %s0, %s333
      %p335 = scmp.lt.s32.totalorder %s20, 1
      %s336 = scalar_select %p335, %s20, 1
      %s337 = scalar_lea.vmem %s2, %s336
      %p338 = scmp.lt.s32.totalorder %s20, 1
      %s339 = scalar_select %p338, %s20, 1
      %s340 = smul.addr %s339, 8
      %s341 = scalar_lea.vmem %s9, %s340
      %v343 = vld [vmem:[%s334] sm:$0x7f]
      %v344 = vpack.c.bf16 %v343, %v343
      %v345 = vld [vmem:[%s3] sm:$0xf]
      %v346 = vld [vmem:[%s3 + $0x4] sm:$0xf]
      %v347 = vld [vmem:[%s3 + $0x8] sm:$0xf]
      %v348 = vld [vmem:[%s3 + $0xc] sm:$0xf]
      %v349 = vld [vmem:[%s4] sm:$0x1]
      %v351 = vlaneseq
      %v352 = vshrl.u32 %v351, 7
      %v353 = vsub.s32 0, %v352
      %v354 = vrot.slane %v349, %v353
      %v360 = vunpack.c.l.b16 %v345
      %v361 = vunpack.c.l.b16 %v346
      %v362 = vunpack.c.l.b16 %v347
      %v363 = vunpack.c.l.b16 %v348
      %v364 = vpack.c.b16 %v361, %v360
      %v365 = vpack.c.b16 %v363, %v362
      %vm368 = vcmask 261120
      %v370 = vsel %vm368, %v344, 0
      %372 = vmatprep.subr.bf16.mxu0 0
      %373 = vmatpush1.bf16.msra.mxu0 %v364
      %374 = vmatprep.subr.bf16.mxu0 0
      %375 = vmatpush1.bf16.msra.mxu0 %v365
      %376 = vmatprep.subr.bf16.mxu0 0
      %377 = vmatpush1.bf16.msra.mxu0 0
      %378 = vmatprep.subr.bf16.mxu0 0
      %379 = vmatpush1.bf16.msra.mxu0 0
      %380 = vmatprep.subr.bf16.mxu0 0
      %381 = vmatpush1.bf16.msra.mxu0 0
      %382 = vmatprep.subr.bf16.mxu0 0
      %383 = vmatpush1.bf16.msra.mxu0 0
      %384 = vmatprep.subr.bf16.mxu0 0
      %385 = vmatpush1.bf16.msra.mxu0 0
      %386 = vmatprep.subr.bf16.mxu0 0
      %387 = vmatpush1.bf16.msra.mxu0 0
      %388 = vmatprep.subr.bf16.mxu0 0
      %389 = vmatpush1.bf16.msra.mxu0 0
      %390 = vmatprep.subr.bf16.mxu0 0
      %391 = vmatpush1.bf16.msra.mxu0 0
      %392 = vmatprep.subr.bf16.mxu0 0
      %393 = vmatpush1.bf16.msra.mxu0 0
      %394 = vmatprep.subr.bf16.mxu0 0
      %395 = vmatpush1.bf16.msra.mxu0 0
      %396 = vmatprep.subr.bf16.mxu0 0
      %397 = vmatpush1.bf16.msra.mxu0 0
      %398 = vmatprep.subr.bf16.mxu0 0
      %399 = vmatpush1.bf16.msra.mxu0 0
      %400 = vmatprep.subr.bf16.mxu0 0
      %401 = vmatpush1.bf16.msra.mxu0 0
      %402 = vmatprep.subr.bf16.mxu0 0
      %403 = vmatpush1.bf16.msra.mxu0 0
      %404 = vmatprep.mubr.bf16.mxu0 0
      %405 = vmatmul.mubr.bf16.gmra.mrb[0].mxu0 %v370
      %v406 = vpop.f32.mrb[0].mxu0
      %v407 = vadd.f32 %v354, %v406
      %v408 = vpop.f32.mrb[0].mxu0
      %v409 = vpop.f32.mrb[0].mxu0
      %v410 = vpop.f32.mrb[0].mxu0
      %411 = vdwg.mxu0
      %v412 = vpack.c.bf16 %v407, %v407
      %v413 = vld [vmem:[%s1] sm:$0x7f]
      %v414 = vld [vmem:[%s337] sm:$0x1]
      %v416 = vlaneseq
      %v417 = vshrl.u32 %v416, 7
      %v418 = vsub.s32 0, %v417
      %v419 = vrot.slane %v414, %v418
      %v421 = vadd.f32 %v413, %v419
      %423 = vrot.lane.b32.xlu0 %v412, 96
      %v424 = vpop.permute.xlu0 %423
      %vm425 = vcmask 64512
      %v427 = vsel %vm425, %v412, 0
      %v430 = vsel %vm425, %v424, 0
      %432 = vmatprep.subr.bf16.mxu0 0
      %433 = vmatpush1.bf16.xpose.msra.mxu0 %v430
      %434 = vmatprep.subr.bf16.mxu0 0
      %435 = vmatpush1.bf16.xpose.msra.mxu0 0
      %436 = vmatprep.subr.bf16.mxu0 0
      %437 = vmatpush1.bf16.xpose.msra.mxu0 0
      %438 = vmatprep.subr.bf16.mxu0 0
      %439 = vmatpush1.bf16.xpose.msra.mxu0 0
      %440 = vmatprep.subr.bf16.mxu0 0
      %441 = vmatpush1.bf16.xpose.msra.mxu0 0
      %442 = vmatprep.subr.bf16.mxu0 0
      %443 = vmatpush1.bf16.xpose.msra.mxu0 0
      %444 = vmatprep.subr.bf16.mxu0 0
      %445 = vmatpush1.bf16.xpose.msra.mxu0 0
      %446 = vmatprep.subr.bf16.mxu0 0
      %447 = vmatpush1.bf16.xpose.msra.mxu0 0
      %448 = vmatprep.subr.bf16.mxu0 0
      %449 = vmatpush1.bf16.xpose.msra.mxu0 0
      %450 = vmatprep.subr.bf16.mxu0 0
      %451 = vmatpush1.bf16.xpose.msra.mxu0 0
      %452 = vmatprep.subr.bf16.mxu0 0
      %453 = vmatpush1.bf16.xpose.msra.mxu0 0
      %454 = vmatprep.subr.bf16.mxu0 0
      %455 = vmatpush1.bf16.xpose.msra.mxu0 0
      %456 = vmatprep.subr.bf16.mxu0 0
      %457 = vmatpush1.bf16.xpose.msra.mxu0 0
      %458 = vmatprep.subr.bf16.mxu0 0
      %459 = vmatpush1.bf16.xpose.msra.mxu0 0
      %460 = vmatprep.subr.bf16.mxu0 0
      %461 = vmatpush1.bf16.xpose.msra.mxu0 0
      %462 = vmatprep.subr.bf16.mxu0 0
      %463 = vmatpush1.bf16.xpose.msra.mxu0 0
      %464 = vmatprep.mubr.bf16.mxu0 0
      %465 = vmatmul.mubr.bf16.gmra.mrb[0].mxu0 %v427
      %v466 = vpop.f32.mrb[0].mxu0
      %v467 = vadd.f32 %v421, %v466
      %v468 = vpop.f32.mrb[0].mxu0
      %v469 = vpop.f32.mrb[0].mxu0
      %v470 = vpop.f32.mrb[0].mxu0
      %471 = vdwg.mxu0
      %vm472 = vcmask 55296
      %v473 = vsel %vm472, %v467, -inf
      %474 = vmax.xlane.f32.xlu0 %v473
      %v475 = vpop.xlane.xlu0 %474
      %v476 = vsub.f32 %v467, %v475
      %v477 = vmul.f32 %v476, 1.442695
      %v478 = vpow.pop %v477
      %v479 = vsel %vm472, %v478, 0.0
      %480 = vadd.xlane.f32.xlu0 %v479
      %v481 = vpop.xlane.xlu0 %480
      %v482 = vrcp.pop %v481
      %v483 = vmul.f32 %v478, %v482
      %v484 = vpack.c.bf16 %v483, %v483
      %485 = vrot.lane.b32.xlu0 %v412, 64
      %v486 = vpop.permute.xlu0 %485
      %vm487 = vcmask 56320
      %v489 = vsel %vm487, %v484, 0
      %vm491 = vcmask 1042432
      %vm492 = vcmask 1043456
      %v493 = vsel %vm491, 4294967295, 65535
      %v494 = vsel %vm492, %v493, 0
      %v496 = vand.u32 %v486, %v494
      %498 = vmatprep.subr.bf16.mxu0 0
      %499 = vmatpush1.bf16.msra.mxu0 %v496
      %500 = vmatprep.subr.bf16.mxu0 0
      %501 = vmatpush1.bf16.msra.mxu0 0
      %502 = vmatprep.subr.bf16.mxu0 0
      %503 = vmatpush1.bf16.msra.mxu0 0
      %504 = vmatprep.subr.bf16.mxu0 0
      %505 = vmatpush1.bf16.msra.mxu0 0
      %506 = vmatprep.subr.bf16.mxu0 0
      %507 = vmatpush1.bf16.msra.mxu0 0
      %508 = vmatprep.subr.bf16.mxu0 0
      %509 = vmatpush1.bf16.msra.mxu0 0
      %510 = vmatprep.subr.bf16.mxu0 0
      %511 = vmatpush1.bf16.msra.mxu0 0
      %512 = vmatprep.subr.bf16.mxu0 0
      %513 = vmatpush1.bf16.msra.mxu0 0
      %514 = vmatprep.subr.bf16.mxu0 0
      %515 = vmatpush1.bf16.msra.mxu0 0
      %516 = vmatprep.subr.bf16.mxu0 0
      %517 = vmatpush1.bf16.msra.mxu0 0
      %518 = vmatprep.subr.bf16.mxu0 0
      %519 = vmatpush1.bf16.msra.mxu0 0
      %520 = vmatprep.subr.bf16.mxu0 0
      %521 = vmatpush1.bf16.msra.mxu0 0
      %522 = vmatprep.subr.bf16.mxu0 0
      %523 = vmatpush1.bf16.msra.mxu0 0
      %524 = vmatprep.subr.bf16.mxu0 0
      %525 = vmatpush1.bf16.msra.mxu0 0
      %526 = vmatprep.subr.bf16.mxu0 0
      %527 = vmatpush1.bf16.msra.mxu0 0
      %528 = vmatprep.subr.bf16.mxu0 0
      %529 = vmatpush1.bf16.msra.mxu0 0
      %530 = vmatprep.mubr.bf16.mxu0 0
      %531 = vmatmul.mubr.bf16.gmra.mrb[0].mxu0 %v489
      %v532 = vpop.f32.mrb[0].mxu0
      %v533 = vadd.f32 0.0, %v532
      %v534 = vpop.f32.mrb[0].mxu0
      %v535 = vpop.f32.mrb[0].mxu0
      %v536 = vpop.f32.mrb[0].mxu0
      %537 = vdwg.mxu0
      %538 = vrot.lane.b32.xlu0 %v412, 120
      %v539 = vpop.permute.xlu0 %538
      %540 = vrot.lane.b32.xlu0 %v412, 88
      %v541 = vpop.permute.xlu0 %540
      %v543 = vsel %vm425, %v539, 0
      %v546 = vsel %vm425, %v541, 0
      %548 = vmatprep.subr.bf16.mxu0 0
      %549 = vmatpush1.bf16.xpose.msra.mxu0 %v546
      %550 = vmatprep.subr.bf16.mxu0 0
      %551 = vmatpush1.bf16.xpose.msra.mxu0 0
      %552 = vmatprep.subr.bf16.mxu0 0
      %553 = vmatpush1.bf16.xpose.msra.mxu0 0
      %554 = vmatprep.subr.bf16.mxu0 0
      %555 = vmatpush1.bf16.xpose.msra.mxu0 0
      %556 = vmatprep.subr.bf16.mxu0 0
      %557 = vmatpush1.bf16.xpose.msra.mxu0 0
      %558 = vmatprep.subr.bf16.mxu0 0
      %559 = vmatpush1.bf16.xpose.msra.mxu0 0
      %560 = vmatprep.subr.bf16.mxu0 0
      %561 = vmatpush1.bf16.xpose.msra.mxu0 0
      %562 = vmatprep.subr.bf16.mxu0 0
      %563 = vmatpush1.bf16.xpose.msra.mxu0 0
      %564 = vmatprep.subr.bf16.mxu0 0
      %565 = vmatpush1.bf16.xpose.msra.mxu0 0
      %566 = vmatprep.subr.bf16.mxu0 0
      %567 = vmatpush1.bf16.xpose.msra.mxu0 0
      %568 = vmatprep.subr.bf16.mxu0 0
      %569 = vmatpush1.bf16.xpose.msra.mxu0 0
      %570 = vmatprep.subr.bf16.mxu0 0
      %571 = vmatpush1.bf16.xpose.msra.mxu0 0
      %572 = vmatprep.subr.bf16.mxu0 0
      %573 = vmatpush1.bf16.xpose.msra.mxu0 0
      %574 = vmatprep.subr.bf16.mxu0 0
      %575 = vmatpush1.bf16.xpose.msra.mxu0 0
      %576 = vmatprep.subr.bf16.mxu0 0
      %577 = vmatpush1.bf16.xpose.msra.mxu0 0
      %578 = vmatprep.subr.bf16.mxu0 0
      %579 = vmatpush1.bf16.xpose.msra.mxu0 0
      %580 = vmatprep.mubr.bf16.mxu0 0
      %581 = vmatmul.mubr.bf16.gmra.mrb[0].mxu0 %v543
      %v582 = vpop.f32.mrb[0].mxu0
      %v583 = vadd.f32 %v421, %v582
      %v584 = vpop.f32.mrb[0].mxu0
      %v585 = vpop.f32.mrb[0].mxu0
      %v586 = vpop.f32.mrb[0].mxu0
      %587 = vdwg.mxu0
      %v588 = vsel %vm472, %v583, -inf
      %589 = vmax.xlane.f32.xlu0 %v588
      %v590 = vpop.xlane.xlu0 %589
      %v591 = vsub.f32 %v583, %v590
      %v592 = vmul.f32 %v591, 1.442695
      %v593 = vpow.pop %v592
      %v594 = vsel %vm472, %v593, 0.0
      %595 = vadd.xlane.f32.xlu0 %v594
      %v596 = vpop.xlane.xlu0 %595
      %v597 = vrcp.pop %v596
      %v598 = vmul.f32 %v593, %v597
      %v599 = vpack.c.bf16 %v598, %v598
      %600 = vrot.lane.b32.xlu0 %v412, 56
      %v601 = vpop.permute.xlu0 %600
      %v603 = vsel %vm487, %v599, 0
      %v606 = vand.u32 %v601, %v494
      %608 = vmatprep.subr.bf16.mxu0 0
      %609 = vmatpush1.bf16.msra.mxu0 %v606
      %610 = vmatprep.subr.bf16.mxu0 0
      %611 = vmatpush1.bf16.msra.mxu0 0
      %612 = vmatprep.subr.bf16.mxu0 0
      %613 = vmatpush1.bf16.msra.mxu0 0
      %614 = vmatprep.subr.bf16.mxu0 0
      %615 = vmatpush1.bf16.msra.mxu0 0
      %616 = vmatprep.subr.bf16.mxu0 0
      %617 = vmatpush1.bf16.msra.mxu0 0
      %618 = vmatprep.subr.bf16.mxu0 0
      %619 = vmatpush1.bf16.msra.mxu0 0
      %620 = vmatprep.subr.bf16.mxu0 0
      %621 = vmatpush1.bf16.msra.mxu0 0
      %622 = vmatprep.subr.bf16.mxu0 0
      %623 = vmatpush1.bf16.msra.mxu0 0
      %624 = vmatprep.subr.bf16.mxu0 0
      %625 = vmatpush1.bf16.msra.mxu0 0
      %626 = vmatprep.subr.bf16.mxu0 0
      %627 = vmatpush1.bf16.msra.mxu0 0
      %628 = vmatprep.subr.bf16.mxu0 0
      %629 = vmatpush1.bf16.msra.mxu0 0
      %630 = vmatprep.subr.bf16.mxu0 0
      %631 = vmatpush1.bf16.msra.mxu0 0
      %632 = vmatprep.subr.bf16.mxu0 0
      %633 = vmatpush1.bf16.msra.mxu0 0
      %634 = vmatprep.subr.bf16.mxu0 0
      %635 = vmatpush1.bf16.msra.mxu0 0
      %636 = vmatprep.subr.bf16.mxu0 0
      %637 = vmatpush1.bf16.msra.mxu0 0
      %638 = vmatprep.subr.bf16.mxu0 0
      %639 = vmatpush1.bf16.msra.mxu0 0
      %640 = vmatprep.mubr.bf16.mxu0 0
      %641 = vmatmul.mubr.bf16.gmra.mrb[0].mxu0 %v603
      %v642 = vpop.f32.mrb[0].mxu0
      %v643 = vadd.f32 0.0, %v642
      %v644 = vpop.f32.mrb[0].mxu0
      %v645 = vpop.f32.mrb[0].mxu0
      %v646 = vpop.f32.mrb[0].mxu0
      %647 = vdwg.mxu0
      %648 = vrot.lane.b32.xlu0 %v412, 112
      %v649 = vpop.permute.xlu0 %648
      %650 = vrot.lane.b32.xlu0 %v412, 80
      %v651 = vpop.permute.xlu0 %650
      %v653 = vsel %vm425, %v649, 0
      %v656 = vsel %vm425, %v651, 0
      %658 = vmatprep.subr.bf16.mxu0 0
      %659 = vmatpush1.bf16.xpose.msra.mxu0 %v656
      %660 = vmatprep.subr.bf16.mxu0 0
      %661 = vmatpush1.bf16.xpose.msra.mxu0 0
      %662 = vmatprep.subr.bf16.mxu0 0
      %663 = vmatpush1.bf16.xpose.msra.mxu0 0
      %664 = vmatprep.subr.bf16.mxu0 0
      %665 = vmatpush1.bf16.xpose.msra.mxu0 0
      %666 = vmatprep.subr.bf16.mxu0 0
      %667 = vmatpush1.bf16.xpose.msra.mxu0 0
      %668 = vmatprep.subr.bf16.mxu0 0
      %669 = vmatpush1.bf16.xpose.msra.mxu0 0
      %670 = vmatprep.subr.bf16.mxu0 0
      %671 = vmatpush1.bf16.xpose.msra.mxu0 0
      %672 = vmatprep.subr.bf16.mxu0 0
      %673 = vmatpush1.bf16.xpose.msra.mxu0 0
      %674 = vmatprep.subr.bf16.mxu0 0
      %675 = vmatpush1.bf16.xpose.msra.mxu0 0
      %676 = vmatprep.subr.bf16.mxu0 0
      %677 = vmatpush1.bf16.xpose.msra.mxu0 0
      %678 = vmatprep.subr.bf16.mxu0 0
      %679 = vmatpush1.bf16.xpose.msra.mxu0 0
      %680 = vmatprep.subr.bf16.mxu0 0
      %681 = vmatpush1.bf16.xpose.msra.mxu0 0
      %682 = vmatprep.subr.bf16.mxu0 0
      %683 = vmatpush1.bf16.xpose.msra.mxu0 0
      %684 = vmatprep.subr.bf16.mxu0 0
      %685 = vmatpush1.bf16.xpose.msra.mxu0 0
      %686 = vmatprep.subr.bf16.mxu0 0
      %687 = vmatpush1.bf16.xpose.msra.mxu0 0
      %688 = vmatprep.subr.bf16.mxu0 0
      %689 = vmatpush1.bf16.xpose.msra.mxu0 0
      %690 = vmatprep.mubr.bf16.mxu0 0
      %691 = vmatmul.mubr.bf16.gmra.mrb[0].mxu0 %v653
      %v692 = vpop.f32.mrb[0].mxu0
      %v693 = vadd.f32 %v421, %v692
      %v694 = vpop.f32.mrb[0].mxu0
      %v695 = vpop.f32.mrb[0].mxu0
      %v696 = vpop.f32.mrb[0].mxu0
      %697 = vdwg.mxu0
      %v698 = vsel %vm472, %v693, -inf
      %699 = vmax.xlane.f32.xlu0 %v698
      %v700 = vpop.xlane.xlu0 %699
      %v701 = vsub.f32 %v693, %v700
      %v702 = vmul.f32 %v701, 1.442695
      %v703 = vpow.pop %v702
      %v704 = vsel %vm472, %v703, 0.0
      %705 = vadd.xlane.f32.xlu0 %v704
      %v706 = vpop.xlane.xlu0 %705
      %v707 = vrcp.pop %v706
      %v708 = vmul.f32 %v703, %v707
      %v709 = vpack.c.bf16 %v708, %v708
      %710 = vrot.lane.b32.xlu0 %v412, 48
      %v711 = vpop.permute.xlu0 %710
      %v713 = vsel %vm487, %v709, 0
      %v716 = vand.u32 %v711, %v494
      %718 = vmatprep.subr.bf16.mxu0 0
      %719 = vmatpush1.bf16.msra.mxu0 %v716
      %720 = vmatprep.subr.bf16.mxu0 0
      %721 = vmatpush1.bf16.msra.mxu0 0
      %722 = vmatprep.subr.bf16.mxu0 0
      %723 = vmatpush1.bf16.msra.mxu0 0
      %724 = vmatprep.subr.bf16.mxu0 0
      %725 = vmatpush1.bf16.msra.mxu0 0
      %726 = vmatprep.subr.bf16.mxu0 0
      %727 = vmatpush1.bf16.msra.mxu0 0
      %728 = vmatprep.subr.bf16.mxu0 0
      %729 = vmatpush1.bf16.msra.mxu0 0
      %730 = vmatprep.subr.bf16.mxu0 0
      %731 = vmatpush1.bf16.msra.mxu0 0
      %732 = vmatprep.subr.bf16.mxu0 0
      %733 = vmatpush1.bf16.msra.mxu0 0
      %734 = vmatprep.subr.bf16.mxu0 0
      %735 = vmatpush1.bf16.msra.mxu0 0
      %736 = vmatprep.subr.bf16.mxu0 0
      %737 = vmatpush1.bf16.msra.mxu0 0
      %738 = vmatprep.subr.bf16.mxu0 0
      %739 = vmatpush1.bf16.msra.mxu0 0
      %740 = vmatprep.subr.bf16.mxu0 0
      %741 = vmatpush1.bf16.msra.mxu0 0
      %742 = vmatprep.subr.bf16.mxu0 0
      %743 = vmatpush1.bf16.msra.mxu0 0
      %744 = vmatprep.subr.bf16.mxu0 0
      %745 = vmatpush1.bf16.msra.mxu0 0
      %746 = vmatprep.subr.bf16.mxu0 0
      %747 = vmatpush1.bf16.msra.mxu0 0
      %748 = vmatprep.subr.bf16.mxu0 0
      %749 = vmatpush1.bf16.msra.mxu0 0
      %750 = vmatprep.mubr.bf16.mxu0 0
      %751 = vmatmul.mubr.bf16.gmra.mrb[0].mxu0 %v713
      %v752 = vpop.f32.mrb[0].mxu0
      %v753 = vadd.f32 0.0, %v752
      %v754 = vpop.f32.mrb[0].mxu0
      %v755 = vpop.f32.mrb[0].mxu0
      %v756 = vpop.f32.mrb[0].mxu0
      %757 = vdwg.mxu0
      %758 = vrot.lane.b32.xlu0 %v412, 104
      %v759 = vpop.permute.xlu0 %758
      %760 = vrot.lane.b32.xlu0 %v412, 72
      %v761 = vpop.permute.xlu0 %760
      %v763 = vsel %vm425, %v759, 0
      %v766 = vsel %vm425, %v761, 0
      %768 = vmatprep.subr.bf16.mxu0 0
      %769 = vmatpush1.bf16.xpose.msra.mxu0 %v766
      %770 = vmatprep.subr.bf16.mxu0 0
      %771 = vmatpush1.bf16.xpose.msra.mxu0 0
      %772 = vmatprep.subr.bf16.mxu0 0
      %773 = vmatpush1.bf16.xpose.msra.mxu0 0
      %774 = vmatprep.subr.bf16.mxu0 0
      %775 = vmatpush1.bf16.xpose.msra.mxu0 0
      %776 = vmatprep.subr.bf16.mxu0 0
      %777 = vmatpush1.bf16.xpose.msra.mxu0 0
      %778 = vmatprep.subr.bf16.mxu0 0
      %779 = vmatpush1.bf16.xpose.msra.mxu0 0
      %780 = vmatprep.subr.bf16.mxu0 0
      %781 = vmatpush1.bf16.xpose.msra.mxu0 0
      %782 = vmatprep.subr.bf16.mxu0 0
      %783 = vmatpush1.bf16.xpose.msra.mxu0 0
      %784 = vmatprep.subr.bf16.mxu0 0
      %785 = vmatpush1.bf16.xpose.msra.mxu0 0
      %786 = vmatprep.subr.bf16.mxu0 0
      %787 = vmatpush1.bf16.xpose.msra.mxu0 0
      %788 = vmatprep.subr.bf16.mxu0 0
      %789 = vmatpush1.bf16.xpose.msra.mxu0 0
      %790 = vmatprep.subr.bf16.mxu0 0
      %791 = vmatpush1.bf16.xpose.msra.mxu0 0
      %792 = vmatprep.subr.bf16.mxu0 0
      %793 = vmatpush1.bf16.xpose.msra.mxu0 0
      %794 = vmatprep.subr.bf16.mxu0 0
      %795 = vmatpush1.bf16.xpose.msra.mxu0 0
      %796 = vmatprep.subr.bf16.mxu0 0
      %797 = vmatpush1.bf16.xpose.msra.mxu0 0
      %798 = vmatprep.subr.bf16.mxu0 0
      %799 = vmatpush1.bf16.xpose.msra.mxu0 0
      %800 = vmatprep.mubr.bf16.mxu0 0
      %801 = vmatmul.mubr.bf16.gmra.mrb[0].mxu0 %v763
      %v802 = vpop.f32.mrb[0].mxu0
      %v803 = vadd.f32 %v421, %v802
      %v804 = vpop.f32.mrb[0].mxu0
      %v805 = vpop.f32.mrb[0].mxu0
      %v806 = vpop.f32.mrb[0].mxu0
      %807 = vdwg.mxu0
      %v808 = vsel %vm472, %v803, -inf
      %809 = vmax.xlane.f32.xlu0 %v808
      %v810 = vpop.xlane.xlu0 %809
      %v811 = vsub.f32 %v803, %v810
      %v812 = vmul.f32 %v811, 1.442695
      %v813 = vpow.pop %v812
      %v814 = vsel %vm472, %v813, 0.0
      %815 = vadd.xlane.f32.xlu0 %v814
      %v816 = vpop.xlane.xlu0 %815
      %v817 = vrcp.pop %v816
      %v818 = vmul.f32 %v813, %v817
      %v819 = vpack.c.bf16 %v818, %v818
      %820 = vrot.lane.b32.xlu0 %v412, 40
      %v821 = vpop.permute.xlu0 %820
      %v823 = vsel %vm487, %v819, 0
      %v826 = vand.u32 %v821, %v494
      %828 = vmatprep.subr.bf16.mxu0 0
      %829 = vmatpush1.bf16.msra.mxu0 %v826
      %830 = vmatprep.subr.bf16.mxu0 0
      %831 = vmatpush1.bf16.msra.mxu0 0
      %832 = vmatprep.subr.bf16.mxu0 0
      %833 = vmatpush1.bf16.msra.mxu0 0
      %834 = vmatprep.subr.bf16.mxu0 0
      %835 = vmatpush1.bf16.msra.mxu0 0
      %836 = vmatprep.subr.bf16.mxu0 0
      %837 = vmatpush1.bf16.msra.mxu0 0
      %838 = vmatprep.subr.bf16.mxu0 0
      %839 = vmatpush1.bf16.msra.mxu0 0
      %840 = vmatprep.subr.bf16.mxu0 0
      %841 = vmatpush1.bf16.msra.mxu0 0
      %842 = vmatprep.subr.bf16.mxu0 0
      %843 = vmatpush1.bf16.msra.mxu0 0
      %844 = vmatprep.subr.bf16.mxu0 0
      %845 = vmatpush1.bf16.msra.mxu0 0
      %846 = vmatprep.subr.bf16.mxu0 0
      %847 = vmatpush1.bf16.msra.mxu0 0
      %848 = vmatprep.subr.bf16.mxu0 0
      %849 = vmatpush1.bf16.msra.mxu0 0
      %850 = vmatprep.subr.bf16.mxu0 0
      %851 = vmatpush1.bf16.msra.mxu0 0
      %852 = vmatprep.subr.bf16.mxu0 0
      %853 = vmatpush1.bf16.msra.mxu0 0
      %854 = vmatprep.subr.bf16.mxu0 0
      %855 = vmatpush1.bf16.msra.mxu0 0
      %856 = vmatprep.subr.bf16.mxu0 0
      %857 = vmatpush1.bf16.msra.mxu0 0
      %858 = vmatprep.subr.bf16.mxu0 0
      %859 = vmatpush1.bf16.msra.mxu0 0
      %860 = vmatprep.mubr.bf16.mxu0 0
      %861 = vmatmul.mubr.bf16.gmra.mrb[0].mxu0 %v823
      %v862 = vpop.f32.mrb[0].mxu0
      %v863 = vadd.f32 0.0, %v862
      %v864 = vpop.f32.mrb[0].mxu0
      %v865 = vpop.f32.mrb[0].mxu0
      %v866 = vpop.f32.mrb[0].mxu0
      %867 = vdwg.mxu0
      %869 = vrot.lane.b32.xlu0 %v643, 8
      %v870 = vpop.permute.xlu0 %869
      %873 = vrot.lane.b32.xlu0 %v753, 16
      %v874 = vpop.permute.xlu0 %873
      %877 = vrot.lane.b32.xlu0 %v863, 24
      %v878 = vpop.permute.xlu0 %877
      %v880 = vsel %vm425, %v533, %v870
      %vm881 = vcmask 130048
      %v882 = vsel %vm881, %v880, %v874
      %vm883 = vcmask 195584
      %v884 = vsel %vm883, %v882, %v878
      %v885 = vpack.c.bf16 %v884, %v884
      %v886 = vld [vmem:[%s5] sm:$0xf]
      %v887 = vld [vmem:[%s5 + $0x4] sm:$0xf]
      %v888 = vld [vmem:[%s5 + $0x8] sm:$0xf]
      %v889 = vld [vmem:[%s5 + $0xc] sm:$0xf]
      %v890 = vld [vmem:[%s6] sm:$0x1]
      %v892 = vlaneseq
      %v893 = vshrl.u32 %v892, 7
      %v894 = vsub.s32 0, %v893
      %v895 = vrot.slane %v890, %v894
      %v901 = vunpack.c.l.b16 %v886
      %v902 = vunpack.c.l.b16 %v887
      %v903 = vunpack.c.l.b16 %v888
      %v904 = vunpack.c.l.b16 %v889
      %v905 = vpack.c.b16 %v902, %v901
      %v906 = vpack.c.b16 %v904, %v903
      %v910 = vsel %vm368, %v885, 0
      %912 = vmatprep.subr.bf16.mxu0 0
      %913 = vmatpush1.bf16.msra.mxu0 %v905
      %914 = vmatprep.subr.bf16.mxu0 0
      %915 = vmatpush1.bf16.msra.mxu0 %v906
      %916 = vmatprep.subr.bf16.mxu0 0
      %917 = vmatpush1.bf16.msra.mxu0 0
      %918 = vmatprep.subr.bf16.mxu0 0
      %919 = vmatpush1.bf16.msra.mxu0 0
      %920 = vmatprep.subr.bf16.mxu0 0
      %921 = vmatpush1.bf16.msra.mxu0 0
      %922 = vmatprep.subr.bf16.mxu0 0
      %923 = vmatpush1.bf16.msra.mxu0 0
      %924 = vmatprep.subr.bf16.mxu0 0
      %925 = vmatpush1.bf16.msra.mxu0 0
      %926 = vmatprep.subr.bf16.mxu0 0
      %927 = vmatpush1.bf16.msra.mxu0 0
      %928 = vmatprep.subr.bf16.mxu0 0
      %929 = vmatpush1.bf16.msra.mxu0 0
      %930 = vmatprep.subr.bf16.mxu0 0
      %931 = vmatpush1.bf16.msra.mxu0 0
      %932 = vmatprep.subr.bf16.mxu0 0
      %933 = vmatpush1.bf16.msra.mxu0 0
      %934 = vmatprep.subr.bf16.mxu0 0
      %935 = vmatpush1.bf16.msra.mxu0 0
      %936 = vmatprep.subr.bf16.mxu0 0
      %937 = vmatpush1.bf16.msra.mxu0 0
      %938 = vmatprep.subr.bf16.mxu0 0
      %939 = vmatpush1.bf16.msra.mxu0 0
      %940 = vmatprep.subr.bf16.mxu0 0
      %941 = vmatpush1.bf16.msra.mxu0 0
      %942 = vmatprep.subr.bf16.mxu0 0
      %943 = vmatpush1.bf16.msra.mxu0 0
      %944 = vmatprep.mubr.bf16.mxu0 0
      %945 = vmatmul.mubr.bf16.gmra.mrb[0].mxu0 %v910
      %v946 = vpop.f32.mrb[0].mxu0
      %v947 = vadd.f32 %v895, %v946
      %v948 = vpop.f32.mrb[0].mxu0
      %v949 = vpop.f32.mrb[0].mxu0
      %v950 = vpop.f32.mrb[0].mxu0
      %951 = vdwg.mxu0
      %v952 = vadd.f32 %v343, %v947
      %v953 = vld [vmem:[%s7] sm:$0x1]
      %v954 = vld [vmem:[%s8] sm:$0x1]
      %vm955 = vcmask 260096
      %v956 = vsel %vm955, %v952, 0.0
      %957 = vadd.xlane.f32.xlu0 %v956
      %v958 = vpop.xlane.xlu0 %957
      %v959 = vrcp.pop 32.0
      %v960 = vmul.f32 %v958, %v959
      %v961 = vsub.f32 %v952, %v960
      %v962 = vmul.f32 %v961, %v961
      %v963 = vsel %vm955, %v962, 0.0
      %964 = vadd.xlane.f32.xlu0 %v963
      %v965 = vpop.xlane.xlu0 %964
      %v966 = vmul.f32 %v965, %v959
      %v967 = vadd.f32 %v966, 1e-05
      %v968 = vrsqrt.pop %v967
      %v969 = vmul.f32 %v961, %v968
      %v971 = vlaneseq
      %v972 = vshrl.u32 %v971, 7
      %v973 = vsub.s32 0, %v972
      %v974 = vrot.slane %v953, %v973
      %v976 = vmul.f32 %v969, %v974
      %v978 = vlaneseq
      %v979 = vshrl.u32 %v978, 7
      %v980 = vsub.s32 0, %v979
      %v981 = vrot.slane %v954, %v980
      %v983 = vadd.f32 %v976, %v981
      %984 = vst.msk [vmem:[%s341] sm:$0x7f] %vm955, %v983
      %p985 = scmp.lt.s32.totalorder %s20, 1
      %s986 = scalar_select %p985, %s20, 1
      %s987 = smul.addr %s986, 8
      %s988 = scalar_lea.vmem %s9, %s987
      // Predicated region
      $region57: #{seq2seq_transformer_forward.18} parent=55 // pred_check
        %p989 = pneg %p237
      $region58: #{seq2seq_transformer_forward.18} parent=55 // pred_check_branch
        %991 = sbr.rel (%p989) target = $region60
      $region59: #{seq2seq_transformer_forward.18} parent=55 // pred_region
        _
      $region60: #{seq2seq_transformer_forward.18} parent=55 // pred_fallthru
        _
    $region56: #{seq2seq_transformer_forward.18} parent=5 // pred_fallthru
      _
    %p992 = scmp.le.s32.totalorder 2, %s15
    // Predicated region
    $region61: #{seq2seq_transformer_forward.18} parent=5 // pred_check
      %p993 = pneg %p992
    $region62: #{seq2seq_transformer_forward.18} parent=5 // pred_check_branch
      %995 = sbr.rel (%p993) target = $region64
    $region63: #{seq2seq_transformer_forward.18} parent=5 // pred_region
      %s996 = ssub.s32 %s15, 2
      // Predicated region
      $region65: #{seq2seq_transformer_forward.18} parent=63 // pred_check
        %p997 = pneg %p243
      $region66: #{seq2seq_transformer_forward.18} parent=63 // pred_check_branch
        %999 = sbr.rel (%p997) target = $region68
      $region67: #{seq2seq_transformer_forward.18} parent=63 // pred_region
        %p1000 = scmp.lt.s32.totalorder %s21, 1
        %s1001 = scalar_select %p1000, %s21, 1
        %s1002 = smul.addr %s1001, 8
        %s1003 = scalar_lea.vmem %s9, %s1002
      $region68: #{seq2seq_transformer_forward.18} parent=63 // pred_fallthru
        _
    $region64: #{seq2seq_transformer_forward.18} parent=5 // pred_fallthru
      _
  $region6: #{seq2seq_transformer_forward.18} parent=0 // loop_footer
    %s19 = sadd.s32 1, %s15
  $region7: #{seq2seq_transformer_forward.18} parent=0 // loop_footer_branch
    %14 = sbr.rel target = $region3
  $region8: #{seq2seq_transformer_forward.18} parent=0 // loop_exit
    _

// kernel: seq2seq_transformer_forward.19
$region0: #{seq2seq_transformer_forward.19}
  #allocation0 [shape = 'u32[]', space=smem, size = 0x4, offset = 0x4, fixed_abs, tag = 'smem constant byte address 0x4 - core index']
  #allocation1 [shape = 'u32[144,128]{1,0:T(1,128)}', space=vmem, size = 0x12000, scoped, tag = 'internal scratch']
  %s0 = inlined_call_operand.vmem [shape: f32[2,7,32], index: 0, kind: input, shape index: {}]
  %s1 = inlined_call_operand.vmem [shape: f32[2,8,32], index: 1, kind: input, shape index: {}]
  %s2 = inlined_call_operand.vmem [shape: f32[2,1,8], index: 2, kind: input, shape index: {}]
  %s3 = inlined_call_operand.vmem [shape: bf16[32,32], index: 3, kind: input, shape index: {}]
  %s4 = inlined_call_operand.vmem [shape: f32[1,32], index: 4, kind: input, shape index: {}]
  %s5 = inlined_call_operand.vmem [shape: bf16[32,64], index: 5, kind: input, shape index: {}]
  %s6 = inlined_call_operand.vmem [shape: f32[1,64], index: 6, kind: input, shape index: {}]
  %s7 = inlined_call_operand.vmem [shape: bf16[32,32], index: 7, kind: input, shape index: {}]
  %s8 = inlined_call_operand.vmem [shape: f32[1,32], index: 8, kind: input, shape index: {}]
  %s9 = inlined_call_operand.vmem [shape: f32[1,32], index: 9, kind: input, shape index: {}]
  %s10 = inlined_call_operand.vmem [shape: f32[1,32], index: 10, kind: input, shape index: {}]
  %s11 = inlined_call_operand.vmem [shape: f32[2,7,32], index: 11, kind: output, shape index: {}]
  %s12 = sld [smem:[#allocation0]]
  $region77: #{seq2seq_transformer_forward.19} parent=0
    _
  %s14 = ssub.s32 1, %s12
  %s15 = scalar_select 0, %s14, %s12
  loop: start=0, step=1, limit=4
  $region2: #{seq2seq_transformer_forward.19} parent=0 // loop_pre_header
    _
  $region3: #{seq2seq_transformer_forward.19} parent=0 // loop_header
    %s17 = sphi 0, %s21
    %p18 = scmp.ge.s32.totalorder %s17, 4
    %s27 = sphi 0, %s29
    %s30 = sphi 0, %s27
    %s31 = sphi 0, %s30
    %s47 = sphi 0, %s31
    %s53 = sphi 0, %s55
    %s56 = sphi 0, %s53
    %s57 = sphi 0, %s56
    %s73 = sphi 0, %s57
    %s79 = sphi 0, %s81
    %s82 = sphi 0, %s79
    %s83 = sphi 0, %s82
    %s99 = sphi 0, %s83
    %s103 = sphi 0, %s103
    %s105 = sphi 0, %s103
    %s106 = sphi 0, %s105
    %s120 = sphi 0, %s106
    %s124 = sphi 0, %s124
    %s126 = sphi 0, %s124
    %s127 = sphi 0, %s126
    %s141 = sphi 0, %s127
    %s145 = sphi 0, %s145
    %s147 = sphi 0, %s145
    %s148 = sphi 0, %s147
    %s162 = sphi 0, %s148
    %s166 = sphi 0, %s166
    %s168 = sphi 0, %s166
    %s169 = sphi 0, %s168
    %s183 = sphi 0, %s169
    %s187 = sphi 0, %s187
    %s189 = sphi 0, %s187
    %s190 = sphi 0, %s189
    %s204 = sphi 0, %s190
    %s208 = sphi 0, %s208
    %s210 = sphi 0, %s208
    %s211 = sphi 0, %s210
    %s225 = sphi 0, %s211
    %s229 = sphi 0, %s229
    %s231 = sphi 0, %s229
    %s232 = sphi 0, %s231
    %s246 = sphi 0, %s232
    %s250 = sphi 0, %s250
    %s252 = sphi 0, %s250
    %s253 = sphi 0, %s252
    %s267 = sphi 0, %s253
    %s273 = sphi 0, %s275
    %s276 = sphi 0, %s273
    %s277 = sphi 0, %s276
    %s293 = sphi 0, %s277
  $region4: #{seq2seq_transformer_forward.19} parent=0 // loop_header_branch
    %20 = sbr.rel (%p18) target = $region8
  $region5: #{seq2seq_transformer_forward.19} parent=0 // loop_body
    %s22 = ssub.s32 %s17, 1
    %s23 = ssub.s32 %s17, 2
    %s24 = sadd.s32 %s17, 1
    %s25 = ssub.s32 %s17, %s24
    %p26 = scmp.eq.s32.totalorder %s25, 0
    %s28 = sadd.s32 %s27, 1
    %s29 = scalar_select %p26, %s27, %s28
    %p32 = pneg %p26
    %p33 = scmp.eq.s32.totalorder %s17, 1
    %p34 = por %p32, %p33
    %p35 = scmp.ne.s32.totalorder %s27, %s30
    %p36 = scmp.eq.s32.totalorder %s17, 0
    %p37 = por %p35, %p36
    %p38 = scmp.ne.s32.totalorder %s27, %s30
    %p39 = scmp.eq.s32.totalorder %s22, 1
    %p40 = por %p38, %p39
    %p41 = scmp.ne.s32.totalorder %s30, %s31
    %p42 = scmp.eq.s32.totalorder %s22, 0
    %p43 = por %p41, %p42
    %p44 = scmp.ne.s32.totalorder %s30, %s31
    %p45 = scmp.eq.s32.totalorder %s23, 1
    %p46 = por %p44, %p45
    %p48 = scmp.ne.s32.totalorder %s31, %s47
    %p49 = scmp.eq.s32.totalorder %s23, 0
    %p50 = por %p48, %p49
    %s51 = ssub.s32 %s17, %s24
    %p52 = scmp.eq.s32.totalorder %s51, 0
    %s54 = sadd.s32 %s53, 1
    %s55 = scalar_select %p52, %s53, %s54
    %p58 = pneg %p52
    %p59 = scmp.eq.s32.totalorder %s17, 1
    %p60 = por %p58, %p59
    %p61 = scmp.ne.s32.totalorder %s53, %s56
    %p62 = scmp.eq.s32.totalorder %s17, 0
    %p63 = por %p61, %p62
    %p64 = scmp.ne.s32.totalorder %s53, %s56
    %p65 = scmp.eq.s32.totalorder %s22, 1
    %p66 = por %p64, %p65
    %p67 = scmp.ne.s32.totalorder %s56, %s57
    %p68 = scmp.eq.s32.totalorder %s22, 0
    %p69 = por %p67, %p68
    %p70 = scmp.ne.s32.totalorder %s56, %s57
    %p71 = scmp.eq.s32.totalorder %s23, 1
    %p72 = por %p70, %p71
    %p74 = scmp.ne.s32.totalorder %s57, %s73
    %p75 = scmp.eq.s32.totalorder %s23, 0
    %p76 = por %p74, %p75
    %s77 = ssub.s32 %s17, %s24
    %p78 = scmp.eq.s32.totalorder %s77, 0
    %s80 = sadd.s32 %s79, 1
    %s81 = scalar_select %p78, %s79, %s80
    %p84 = pneg %p78
    %p85 = scmp.eq.s32.totalorder %s17, 1
    %p86 = por %p84, %p85
    %p87 = scmp.ne.s32.totalorder %s79, %s82
    %p88 = scmp.eq.s32.totalorder %s17, 0
    %p89 = por %p87, %p88
    %p90 = scmp.ne.s32.totalorder %s79, %s82
    %p91 = scmp.eq.s32.totalorder %s22, 1
    %p92 = por %p90, %p91
    %p93 = scmp.ne.s32.totalorder %s82, %s83
    %p94 = scmp.eq.s32.totalorder %s22, 0
    %p95 = por %p93, %p94
    %p96 = scmp.ne.s32.totalorder %s82, %s83
    %p97 = scmp.eq.s32.totalorder %s23, 1
    %p98 = por %p96, %p97
    %p100 = scmp.ne.s32.totalorder %s83, %s99
    %p101 = scmp.eq.s32.totalorder %s23, 0
    %p102 = por %p100, %p101
    %s104 = sadd.s32 %s103, 1
    %p107 = scmp.eq.s32.totalorder %s17, 1
    %p108 = scmp.ne.s32.totalorder %s103, %s105
    %p109 = scmp.eq.s32.totalorder %s17, 0
    %p110 = por %p108, %p109
    %p111 = scmp.ne.s32.totalorder %s103, %s105
    %p112 = scmp.eq.s32.totalorder %s22, 1
    %p113 = por %p111, %p112
    %p114 = scmp.ne.s32.totalorder %s105, %s106
    %p115 = scmp.eq.s32.totalorder %s22, 0
    %p116 = por %p114, %p115
    %p117 = scmp.ne.s32.totalorder %s105, %s106
    %p118 = scmp.eq.s32.totalorder %s23, 1
    %p119 = por %p117, %p118
    %p121 = scmp.ne.s32.totalorder %s106, %s120
    %p122 = scmp.eq.s32.totalorder %s23, 0
    %p123 = por %p121, %p122
    %s125 = sadd.s32 %s124, 1
    %p128 = scmp.eq.s32.totalorder %s17, 1
    %p129 = scmp.ne.s32.totalorder %s124, %s126
    %p130 = scmp.eq.s32.totalorder %s17, 0
    %p131 = por %p129, %p130
    %p132 = scmp.ne.s32.totalorder %s124, %s126
    %p133 = scmp.eq.s32.totalorder %s22, 1
    %p134 = por %p132, %p133
    %p135 = scmp.ne.s32.totalorder %s126, %s127
    %p136 = scmp.eq.s32.totalorder %s22, 0
    %p137 = por %p135, %p136
    %p138 = scmp.ne.s32.totalorder %s126, %s127
    %p139 = scmp.eq.s32.totalorder %s23, 1
    %p140 = por %p138, %p139
    %p142 = scmp.ne.s32.totalorder %s127, %s141
    %p143 = scmp.eq.s32.totalorder %s23, 0
    %p144 = por %p142, %p143
    %s146 = sadd.s32 %s145, 1
    %p149 = scmp.eq.s32.totalorder %s17, 1
    %p150 = scmp.ne.s32.totalorder %s145, %s147
    %p151 = scmp.eq.s32.totalorder %s17, 0
    %p152 = por %p150, %p151
    %p153 = scmp.ne.s32.totalorder %s145, %s147
    %p154 = scmp.eq.s32.totalorder %s22, 1
    %p155 = por %p153, %p154
    %p156 = scmp.ne.s32.totalorder %s147, %s148
    %p157 = scmp.eq.s32.totalorder %s22, 0
    %p158 = por %p156, %p157
    %p159 = scmp.ne.s32.totalorder %s147, %s148
    %p160 = scmp.eq.s32.totalorder %s23, 1
    %p161 = por %p159, %p160
    %p163 = scmp.ne.s32.totalorder %s148, %s162
    %p164 = scmp.eq.s32.totalorder %s23, 0
    %p165 = por %p163, %p164
    %s167 = sadd.s32 %s166, 1
    %p170 = scmp.eq.s32.totalorder %s17, 1
    %p171 = scmp.ne.s32.totalorder %s166, %s168
    %p172 = scmp.eq.s32.totalorder %s17, 0
    %p173 = por %p171, %p172
    %p174 = scmp.ne.s32.totalorder %s166, %s168
    %p175 = scmp.eq.s32.totalorder %s22, 1
    %p176 = por %p174, %p175
    %p177 = scmp.ne.s32.totalorder %s168, %s169
    %p178 = scmp.eq.s32.totalorder %s22, 0
    %p179 = por %p177, %p178
    %p180 = scmp.ne.s32.totalorder %s168, %s169
    %p181 = scmp.eq.s32.totalorder %s23, 1
    %p182 = por %p180, %p181
    %p184 = scmp.ne.s32.totalorder %s169, %s183
    %p185 = scmp.eq.s32.totalorder %s23, 0
    %p186 = por %p184, %p185
    %s188 = sadd.s32 %s187, 1
    %p191 = scmp.eq.s32.totalorder %s17, 1
    %p192 = scmp.ne.s32.totalorder %s187, %s189
    %p193 = scmp.eq.s32.totalorder %s17, 0
    %p194 = por %p192, %p193
    %p195 = scmp.ne.s32.totalorder %s187, %s189
    %p196 = scmp.eq.s32.totalorder %s22, 1
    %p197 = por %p195, %p196
    %p198 = scmp.ne.s32.totalorder %s189, %s190
    %p199 = scmp.eq.s32.totalorder %s22, 0
    %p200 = por %p198, %p199
    %p201 = scmp.ne.s32.totalorder %s189, %s190
    %p202 = scmp.eq.s32.totalorder %s23, 1
    %p203 = por %p201, %p202
    %p205 = scmp.ne.s32.totalorder %s190, %s204
    %p206 = scmp.eq.s32.totalorder %s23, 0
    %p207 = por %p205, %p206
    %s209 = sadd.s32 %s208, 1
    %p212 = scmp.eq.s32.totalorder %s17, 1
    %p213 = scmp.ne.s32.totalorder %s208, %s210
    %p214 = scmp.eq.s32.totalorder %s17, 0
    %p215 = por %p213, %p214
    %p216 = scmp.ne.s32.totalorder %s208, %s210
    %p217 = scmp.eq.s32.totalorder %s22, 1
    %p218 = por %p216, %p217
    %p219 = scmp.ne.s32.totalorder %s210, %s211
    %p220 = scmp.eq.s32.totalorder %s22, 0
    %p221 = por %p219, %p220
    %p222 = scmp.ne.s32.totalorder %s210, %s211
    %p223 = scmp.eq.s32.totalorder %s23, 1
    %p224 = por %p222, %p223
    %p226 = scmp.ne.s32.totalorder %s211, %s225
    %p227 = scmp.eq.s32.totalorder %s23, 0
    %p228 = por %p226, %p227
    %s230 = sadd.s32 %s229, 1
    %p233 = scmp.eq.s32.totalorder %s17, 1
    %p234 = scmp.ne.s32.totalorder %s229, %s231
    %p235 = scmp.eq.s32.totalorder %s17, 0
    %p236 = por %p234, %p235
    %p237 = scmp.ne.s32.totalorder %s229, %s231
    %p238 = scmp.eq.s32.totalorder %s22, 1
    %p239 = por %p237, %p238
    %p240 = scmp.ne.s32.totalorder %s231, %s232
    %p241 = scmp.eq.s32.totalorder %s22, 0
    %p242 = por %p240, %p241
    %p243 = scmp.ne.s32.totalorder %s231, %s232
    %p244 = scmp.eq.s32.totalorder %s23, 1
    %p245 = por %p243, %p244
    %p247 = scmp.ne.s32.totalorder %s232, %s246
    %p248 = scmp.eq.s32.totalorder %s23, 0
    %p249 = por %p247, %p248
    %s251 = sadd.s32 %s250, 1
    %p254 = scmp.eq.s32.totalorder %s17, 1
    %p255 = scmp.ne.s32.totalorder %s250, %s252
    %p256 = scmp.eq.s32.totalorder %s17, 0
    %p257 = por %p255, %p256
    %p258 = scmp.ne.s32.totalorder %s250, %s252
    %p259 = scmp.eq.s32.totalorder %s22, 1
    %p260 = por %p258, %p259
    %p261 = scmp.ne.s32.totalorder %s252, %s253
    %p262 = scmp.eq.s32.totalorder %s22, 0
    %p263 = por %p261, %p262
    %p264 = scmp.ne.s32.totalorder %s252, %s253
    %p265 = scmp.eq.s32.totalorder %s23, 1
    %p266 = por %p264, %p265
    %p268 = scmp.ne.s32.totalorder %s253, %s267
    %p269 = scmp.eq.s32.totalorder %s23, 0
    %p270 = por %p268, %p269
    %s271 = ssub.s32 %s17, %s24
    %p272 = scmp.eq.s32.totalorder %s271, 0
    %s274 = sadd.s32 %s273, 1
    %s275 = scalar_select %p272, %s273, %s274
    %p278 = pneg %p272
    %p279 = scmp.eq.s32.totalorder %s17, 1
    %p280 = por %p278, %p279
    %p281 = scmp.ne.s32.totalorder %s273, %s276
    %p282 = scmp.eq.s32.totalorder %s17, 0
    %p283 = por %p281, %p282
    %p284 = scmp.ne.s32.totalorder %s273, %s276
    %p285 = scmp.eq.s32.totalorder %s22, 1
    %p286 = por %p284, %p285
    %p287 = scmp.ne.s32.totalorder %s276, %s277
    %p288 = scmp.eq.s32.totalorder %s22, 0
    %p289 = por %p287, %p288
    %p290 = scmp.ne.s32.totalorder %s276, %s277
    %p291 = scmp.eq.s32.totalorder %s23, 1
    %p292 = por %p290, %p291
    %p294 = scmp.ne.s32.totalorder %s277, %s293
    %p295 = scmp.eq.s32.totalorder %s23, 0
    %p296 = por %p294, %p295
    %p297 = scmp.le.s32.totalorder 1, %s17
    %p298 = scmp.lt.s32.totalorder %s17, 3
    %p299 = pnand %p297, %p298
    %p300 = pneg %p299
    // Predicated region
    $region9: #{seq2seq_transformer_forward.19} parent=5 // pred_check
      _
    $region10: #{seq2seq_transformer_forward.19} parent=5 // pred_check_branch
      %302 = sbr.rel (%p299) target = $region12
    $region11: #{seq2seq_transformer_forward.19} parent=5 // pred_region
      %s303 = ssub.s32 %s17, 1
      // Predicated region
      $region13: #{seq2seq_transformer_forward.19} parent=11 // pred_check
        %p304 = pneg %p116
      $region14: #{seq2seq_transformer_forward.19} parent=11 // pred_check_branch
        %306 = sbr.rel (%p304) target = $region16
      $region15: #{seq2seq_transformer_forward.19} parent=11 // pred_region
        _
      $region16: #{seq2seq_transformer_forward.19} parent=11 // pred_fallthru
        _
      // Predicated region
      $region17: #{seq2seq_transformer_forward.19} parent=11 // pred_check
        %p307 = pneg %p137
      $region18: #{seq2seq_transformer_forward.19} parent=11 // pred_check_branch
        %309 = sbr.rel (%p307) target = $region20
      $region19: #{seq2seq_transformer_forward.19} parent=11 // pred_region
        _
      $region20: #{seq2seq_transformer_forward.19} parent=11 // pred_fallthru
        _
      // Predicated region
      $region21: #{seq2seq_transformer_forward.19} parent=11 // pred_check
        %p310 = pneg %p158
      $region22: #{seq2seq_transformer_forward.19} parent=11 // pred_check_branch
        %312 = sbr.rel (%p310) target = $region24
      $region23: #{seq2seq_transformer_forward.19} parent=11 // pred_region
        _
      $region24: #{seq2seq_transformer_forward.19} parent=11 // pred_fallthru
        _
      // Predicated region
      $region25: #{seq2seq_transformer_forward.19} parent=11 // pred_check
        %p313 = pneg %p179
      $region26: #{seq2seq_transformer_forward.19} parent=11 // pred_check_branch
        %315 = sbr.rel (%p313) target = $region28
      $region27: #{seq2seq_transformer_forward.19} parent=11 // pred_region
        _
      $region28: #{seq2seq_transformer_forward.19} parent=11 // pred_fallthru
        _
      // Predicated region
      $region29: #{seq2seq_transformer_forward.19} parent=11 // pred_check
        %p316 = pneg %p200
      $region30: #{seq2seq_transformer_forward.19} parent=11 // pred_check_branch
        %318 = sbr.rel (%p316) target = $region32
      $region31: #{seq2seq_transformer_forward.19} parent=11 // pred_region
        _
      $region32: #{seq2seq_transformer_forward.19} parent=11 // pred_fallthru
        _
      // Predicated region
      $region33: #{seq2seq_transformer_forward.19} parent=11 // pred_check
        %p319 = pneg %p221
      $region34: #{seq2seq_transformer_forward.19} parent=11 // pred_check_branch
        %321 = sbr.rel (%p319) target = $region36
      $region35: #{seq2seq_transformer_forward.19} parent=11 // pred_region
        _
      $region36: #{seq2seq_transformer_forward.19} parent=11 // pred_fallthru
        _
      // Predicated region
      $region37: #{seq2seq_transformer_forward.19} parent=11 // pred_check
        %p322 = pneg %p242
      $region38: #{seq2seq_transformer_forward.19} parent=11 // pred_check_branch
        %324 = sbr.rel (%p322) target = $region40
      $region39: #{seq2seq_transformer_forward.19} parent=11 // pred_region
        _
      $region40: #{seq2seq_transformer_forward.19} parent=11 // pred_fallthru
        _
      // Predicated region
      $region41: #{seq2seq_transformer_forward.19} parent=11 // pred_check
        %p325 = pneg %p263
      $region42: #{seq2seq_transformer_forward.19} parent=11 // pred_check_branch
        %327 = sbr.rel (%p325) target = $region44
      $region43: #{seq2seq_transformer_forward.19} parent=11 // pred_region
        _
      $region44: #{seq2seq_transformer_forward.19} parent=11 // pred_fallthru
        _
    $region12: #{seq2seq_transformer_forward.19} parent=5 // pred_fallthru
      _
    %p328 = scmp.lt.s32.totalorder %s17, 2
    // Predicated region
    $region45: #{seq2seq_transformer_forward.19} parent=5 // pred_check
      %p329 = pneg %p328
    $region46: #{seq2seq_transformer_forward.19} parent=5 // pred_check_branch
      %331 = sbr.rel (%p329) target = $region48
    $region47: #{seq2seq_transformer_forward.19} parent=5 // pred_region
      // Predicated region
      $region49: #{seq2seq_transformer_forward.19} parent=47 // pred_check
        %p332 = pneg %p37
      $region50: #{seq2seq_transformer_forward.19} parent=47 // pred_check_branch
        %334 = sbr.rel (%p332) target = $region52
      $region51: #{seq2seq_transformer_forward.19} parent=47 // pred_region
        %p335 = scmp.lt.s32.totalorder %s17, 1
        %s336 = scalar_select %p335, %s17, 1
        %s337 = smul.addr %s336, 8
        %s338 = scalar_lea.vmem %s0, %s337
      $region52: #{seq2seq_transformer_forward.19} parent=47 // pred_fallthru
        _
      // Predicated region
      $region53: #{seq2seq_transformer_forward.19} parent=47 // pred_check
        %p339 = pneg %p63
      $region54: #{seq2seq_transformer_forward.19} parent=47 // pred_check_branch
        %341 = sbr.rel (%p339) target = $region56
      $region55: #{seq2seq_transformer_forward.19} parent=47 // pred_region
        %p342 = scmp.lt.s32.totalorder %s17, 1
        %s343 = scalar_select %p342, %s17, 1
        %s344 = smul.addr %s343, 8
        %s345 = scalar_lea.vmem %s1, %s344
      $region56: #{seq2seq_transformer_forward.19} parent=47 // pred_fallthru
        _
      // Predicated region
      $region57: #{seq2seq_transformer_forward.19} parent=47 // pred_check
        %p346 = pneg %p89
      $region58: #{seq2seq_transformer_forward.19} parent=47 // pred_check_branch
        %348 = sbr.rel (%p346) target = $region60
      $region59: #{seq2seq_transformer_forward.19} parent=47 // pred_region
        %p349 = scmp.lt.s32.totalorder %s17, 1
        %s350 = scalar_select %p349, %s17, 1
        %s351 = scalar_lea.vmem %s2, %s350
      $region60: #{seq2seq_transformer_forward.19} parent=47 // pred_fallthru
        _
    $region48: #{seq2seq_transformer_forward.19} parent=5 // pred_fallthru
      _
    %p352 = scmp.le.s32.totalorder 1, %s17
    %p353 = scmp.lt.s32.totalorder %s17, 3
    %p354 = pnand %p352, %p353
    %p355 = pneg %p354
    // Predicated region
    $region61: #{seq2seq_transformer_forward.19} parent=5 // pred_check
      _
    $region62: #{seq2seq_transformer_forward.19} parent=5 // pred_check_branch
      %357 = sbr.rel (%p354) target = $region64
    $region63: #{seq2seq_transformer_forward.19} parent=5 // pred_region
      %s358 = ssub.s32 %s17, 1
      %p359 = scmp.lt.s32.totalorder %s22, 1
      %s360 = scalar_select %p359, %s22, 1
      %s361 = smul.addr %s360, 8
      %s362 = scalar_lea.vmem %s0, %s361
      %p363 = pneg %p43
      %p364 = pneg %p40
      %p365 = scmp.lt.s32.totalorder %s22, 1
      %s366 = scalar_select %p365, %s22, 1
      %s367 = smul.addr %s366, 8
      %s368 = scalar_lea.vmem %s1, %s367
      %p369 = pneg %p69
      %p370 = pneg %p66
      %p371 = scmp.lt.s32.totalorder %s22, 1
      %s372 = scalar_select %p371, %s22, 1
      %s373 = scalar_lea.vmem %s2, %s372
      %p374 = pneg %p95
      %p375 = pneg %p92
      %p376 = pneg %p116
      %p377 = pneg %p113
      %p378 = pneg %p137
      %p379 = pneg %p134
      %p380 = pneg %p158
      %p381 = pneg %p155
      %p382 = pneg %p179
      %p383 = pneg %p176
      %p384 = pneg %p200
      %p385 = pneg %p197
      %p386 = pneg %p221
      %p387 = pneg %p218
      %p388 = pneg %p242
      %p389 = pneg %p239
      %p390 = pneg %p263
      %p391 = pneg %p260
      %p392 = pneg %p289
      %p393 = pneg %p286
      %p394 = scmp.lt.s32.totalorder %s22, 1
      %s395 = scalar_select %p394, %s22, 1
      %s396 = smul.addr %s395, 8
      %s397 = scalar_lea.vmem %s11, %s396
      %p398 = scmp.lt.s32.totalorder %s22, 1
      %s399 = scalar_select %p398, %s22, 1
      %s400 = smul.addr %s399, 8
      %s401 = scalar_lea.vmem %s0, %s400
      %p402 = scmp.lt.s32.totalorder %s22, 1
      %s403 = scalar_select %p402, %s22, 1
      %s404 = smul.addr %s403, 8
      %s405 = scalar_lea.vmem %s1, %s404
      %p406 = scmp.lt.s32.totalorder %s22, 1
      %s407 = scalar_select %p406, %s22, 1
      %s408 = scalar_lea.vmem %s2, %s407
      %p409 = scmp.lt.s32.totalorder %s22, 1
      %s410 = scalar_select %p409, %s22, 1
      %s411 = smul.addr %s410, 8
      %s412 = scalar_lea.vmem %s11, %s411
      %v414 = vld [vmem:[%s401] sm:$0x7f]
      %v415 = vld [vmem:[%s405] sm:$0xff]
      %v416 = vpack.c.bf16 %v415, %v415
      %v417 = vpack.c.bf16 %v414, %v414
      %v418 = vld [vmem:[%s3] sm:$0xf]
      %v419 = vld [vmem:[%s3 + $0x4] sm:$0xf]
      %v420 = vld [vmem:[%s3 + $0x8] sm:$0xf]
      %v421 = vld [vmem:[%s3 + $0xc] sm:$0xf]
      %v422 = vld [vmem:[%s4] sm:$0x1]
      %v424 = vlaneseq
      %v425 = vshrl.u32 %v424, 7
      %v426 = vsub.s32 0, %v425
      %v427 = vrot.slane %v422, %v426
      %v433 = vunpack.c.l.b16 %v418
      %v434 = vunpack.c.l.b16 %v419
      %v435 = vunpack.c.l.b16 %v420
      %v436 = vunpack.c.l.b16 %v421
      %v437 = vpack.c.b16 %v434, %v433
      %v438 = vpack.c.b16 %v436, %v435
      %vm441 = vcmask 261120
      %v443 = vsel %vm441, %v417, 0
      %445 = vmatprep.subr.bf16.mxu0 0
      %446 = vmatpush1.bf16.msra.mxu0 %v437
      %447 = vmatprep.subr.bf16.mxu0 0
      %448 = vmatpush1.bf16.msra.mxu0 %v438
      %449 = vmatprep.subr.bf16.mxu0 0
      %450 = vmatpush1.bf16.msra.mxu0 0
      %451 = vmatprep.subr.bf16.mxu0 0
      %452 = vmatpush1.bf16.msra.mxu0 0
      %453 = vmatprep.subr.bf16.mxu0 0
      %454 = vmatpush1.bf16.msra.mxu0 0
      %455 = vmatprep.subr.bf16.mxu0 0
      %456 = vmatpush1.bf16.msra.mxu0 0
      %457 = vmatprep.subr.bf16.mxu0 0
      %458 = vmatpush1.bf16.msra.mxu0 0
      %459 = vmatprep.subr.bf16.mxu0 0
      %460 = vmatpush1.bf16.msra.mxu0 0
      %461 = vmatprep.subr.bf16.mxu0 0
      %462 = vmatpush1.bf16.msra.mxu0 0
      %463 = vmatprep.subr.bf16.mxu0 0
      %464 = vmatpush1.bf16.msra.mxu0 0
      %465 = vmatprep.subr.bf16.mxu0 0
      %466 = vmatpush1.bf16.msra.mxu0 0
      %467 = vmatprep.subr.bf16.mxu0 0
      %468 = vmatpush1.bf16.msra.mxu0 0
      %469 = vmatprep.subr.bf16.mxu0 0
      %470 = vmatpush1.bf16.msra.mxu0 0
      %471 = vmatprep.subr.bf16.mxu0 0
      %472 = vmatpush1.bf16.msra.mxu0 0
      %473 = vmatprep.subr.bf16.mxu0 0
      %474 = vmatpush1.bf16.msra.mxu0 0
      %475 = vmatprep.subr.bf16.mxu0 0
      %476 = vmatpush1.bf16.msra.mxu0 0
      %477 = vmatprep.mubr.bf16.mxu0 0
      %478 = vmatmul.mubr.bf16.gmra.mrb[0].mxu0 %v443
      %v479 = vpop.f32.mrb[0].mxu0
      %v480 = vadd.f32 %v427, %v479
      %v481 = vpop.f32.mrb[0].mxu0
      %v482 = vpop.f32.mrb[0].mxu0
      %v483 = vpop.f32.mrb[0].mxu0
      %484 = vdwg.mxu0
      %v485 = vpack.c.bf16 %v480, %v480
      %v486 = vld [vmem:[%s5] sm:$0xf]
      %v487 = vld [vmem:[%s5 + $0x4] sm:$0xf]
      %v488 = vld [vmem:[%s5 + $0x8] sm:$0xf]
      %v489 = vld [vmem:[%s5 + $0xc] sm:$0xf]
      %v490 = vld [vmem:[%s6] sm:$0x1]
      %v492 = vlaneseq
      %v493 = vshrl.u32 %v492, 7
      %v494 = vsub.s32 0, %v493
      %v495 = vrot.slane %v490, %v494
      %v501 = vunpack.c.l.b16 %v486
      %v502 = vunpack.c.l.b16 %v487
      %v503 = vunpack.c.l.b16 %v488
      %v504 = vunpack.c.l.b16 %v489
      %v505 = vpack.c.b16 %v502, %v501
      %v506 = vpack.c.b16 %v504, %v503
      %v510 = vsel %vm441, %v416, 0
      %512 = vmatprep.subr.bf16.mxu0 0
      %513 = vmatpush1.bf16.msra.mxu0 %v505
      %514 = vmatprep.subr.bf16.mxu0 0
      %515 = vmatpush1.bf16.msra.mxu0 %v506
      %516 = vmatprep.subr.bf16.mxu0 0
      %517 = vmatpush1.bf16.msra.mxu0 0
      %518 = vmatprep.subr.bf16.mxu0 0
      %519 = vmatpush1.bf16.msra.mxu0 0
      %520 = vmatprep.subr.bf16.mxu0 0
      %521 = vmatpush1.bf16.msra.mxu0 0
      %522 = vmatprep.subr.bf16.mxu0 0
      %523 = vmatpush1.bf16.msra.mxu0 0
      %524 = vmatprep.subr.bf16.mxu0 0
      %525 = vmatpush1.bf16.msra.mxu0 0
      %526 = vmatprep.subr.bf16.mxu0 0
      %527 = vmatpush1.bf16.msra.mxu0 0
      %528 = vmatprep.subr.bf16.mxu0 0
      %529 = vmatpush1.bf16.msra.mxu0 0
      %530 = vmatprep.subr.bf16.mxu0 0
      %531 = vmatpush1.bf16.msra.mxu0 0
      %532 = vmatprep.subr.bf16.mxu0 0
      %533 = vmatpush1.bf16.msra.mxu0 0
      %534 = vmatprep.subr.bf16.mxu0 0
      %535 = vmatpush1.bf16.msra.mxu0 0
      %536 = vmatprep.subr.bf16.mxu0 0
      %537 = vmatpush1.bf16.msra.mxu0 0
      %538 = vmatprep.subr.bf16.mxu0 0
      %539 = vmatpush1.bf16.msra.mxu0 0
      %540 = vmatprep.subr.bf16.mxu0 0
      %541 = vmatpush1.bf16.msra.mxu0 0
      %542 = vmatprep.subr.bf16.mxu0 0
      %543 = vmatpush1.bf16.msra.mxu0 0
      %544 = vmatprep.mubr.bf16.mxu0 0
      %545 = vmatmul.mubr.bf16.gmra.mrb[0].mxu0 %v510
      %v546 = vpop.f32.mrb[0].mxu0
      %v547 = vadd.f32 %v495, %v546
      %v548 = vpop.f32.mrb[0].mxu0
      %v549 = vpop.f32.mrb[0].mxu0
      %v550 = vpop.f32.mrb[0].mxu0
      %551 = vdwg.mxu0
      %v552 = vpack.c.bf16 %v547, %v547
      %v553 = vld [vmem:[%s408] sm:$0x1]
      %v555 = vlaneseq
      %v556 = vshrl.u32 %v555, 7
      %v557 = vsub.s32 0, %v556
      %v558 = vrot.slane %v553, %v557
      %vm560 = vcmask 64512
      %v562 = vsel %vm560, %v485, 0
      %v565 = vsel %vm560, %v552, 0
      %567 = vmatprep.subr.bf16.mxu0 0
      %568 = vmatpush1.bf16.xpose.msra.mxu0 %v565
      %569 = vmatprep.subr.bf16.mxu0 0
      %570 = vmatpush1.bf16.xpose.msra.mxu0 0
      %571 = vmatprep.subr.bf16.mxu0 0
      %572 = vmatpush1.bf16.xpose.msra.mxu0 0
      %573 = vmatprep.subr.bf16.mxu0 0
      %574 = vmatpush1.bf16.xpose.msra.mxu0 0
      %575 = vmatprep.subr.bf16.mxu0 0
      %576 = vmatpush1.bf16.xpose.msra.mxu0 0
      %577 = vmatprep.subr.bf16.mxu0 0
      %578 = vmatpush1.bf16.xpose.msra.mxu0 0
      %579 = vmatprep.subr.bf16.mxu0 0
      %580 = vmatpush1.bf16.xpose.msra.mxu0 0
      %581 = vmatprep.subr.bf16.mxu0 0
      %582 = vmatpush1.bf16.xpose.msra.mxu0 0
      %583 = vmatprep.subr.bf16.mxu0 0
      %584 = vmatpush1.bf16.xpose.msra.mxu0 0
      %585 = vmatprep.subr.bf16.mxu0 0
      %586 = vmatpush1.bf16.xpose.msra.mxu0 0
      %587 = vmatprep.subr.bf16.mxu0 0
      %588 = vmatpush1.bf16.xpose.msra.mxu0 0
      %589 = vmatprep.subr.bf16.mxu0 0
      %590 = vmatpush1.bf16.xpose.msra.mxu0 0
      %591 = vmatprep.subr.bf16.mxu0 0
      %592 = vmatpush1.bf16.xpose.msra.mxu0 0
      %593 = vmatprep.subr.bf16.mxu0 0
      %594 = vmatpush1.bf16.xpose.msra.mxu0 0
      %595 = vmatprep.subr.bf16.mxu0 0
      %596 = vmatpush1.bf16.xpose.msra.mxu0 0
      %597 = vmatprep.subr.bf16.mxu0 0
      %598 = vmatpush1.bf16.xpose.msra.mxu0 0
      %599 = vmatprep.mubr.bf16.mxu0 0
      %600 = vmatmul.mubr.bf16.gmra.mrb[0].mxu0 %v562
      %v601 = vpop.f32.mrb[0].mxu0
      %v602 = vadd.f32 %v558, %v601
      %v603 = vpop.f32.mrb[0].mxu0
      %v604 = vpop.f32.mrb[0].mxu0
      %v605 = vpop.f32.mrb[0].mxu0
      %606 = vdwg.mxu0
      %vm607 = vcmask 63488
      %v608 = vsel %vm607, %v602, -inf
      %609 = vmax.xlane.f32.xlu0 %v608
      %v610 = vpop.xlane.xlu0 %609
      %v611 = vsub.f32 %v602, %v610
      %v612 = vmul.f32 %v611, 1.442695
      %v613 = vpow.pop %v612
      %v614 = vsel %vm607, %v613, 0.0
      %615 = vadd.xlane.f32.xlu0 %v614
      %v616 = vpop.xlane.xlu0 %615
      %v617 = vrcp.pop %v616
      %v618 = vmul.f32 %v613, %v617
      %v619 = vpack.c.bf16 %v618, %v618
      %621 = vrot.lane.b32.xlu0 %v552, 96
      %v622 = vpop.permute.xlu0 %621
      %v624 = vsel %vm560, %v619, 0
      %vm626 = vcmask 1043456
      %v628 = vsel %vm626, %v622, 0
      %630 = vmatprep.subr.bf16.mxu0 0
      %631 = vmatpush1.bf16.msra.mxu0 %v628
      %632 = vmatprep.subr.bf16.mxu0 0
      %633 = vmatpush1.bf16.msra.mxu0 0
      %634 = vmatprep.subr.bf16.mxu0 0
      %635 = vmatpush1.bf16.msra.mxu0 0
      %636 = vmatprep.subr.bf16.mxu0 0
      %637 = vmatpush1.bf16.msra.mxu0 0
      %638 = vmatprep.subr.bf16.mxu0 0
      %639 = vmatpush1.bf16.msra.mxu0 0
      %640 = vmatprep.subr.bf16.mxu0 0
      %641 = vmatpush1.bf16.msra.mxu0 0
      %642 = vmatprep.subr.bf16.mxu0 0
      %643 = vmatpush1.bf16.msra.mxu0 0
      %644 = vmatprep.subr.bf16.mxu0 0
      %645 = vmatpush1.bf16.msra.mxu0 0
      %646 = vmatprep.subr.bf16.mxu0 0
      %647 = vmatpush1.bf16.msra.mxu0 0
      %648 = vmatprep.subr.bf16.mxu0 0
      %649 = vmatpush1.bf16.msra.mxu0 0
      %650 = vmatprep.subr.bf16.mxu0 0
      %651 = vmatpush1.bf16.msra.mxu0 0
      %652 = vmatprep.subr.bf16.mxu0 0
      %653 = vmatpush1.bf16.msra.mxu0 0
      %654 = vmatprep.subr.bf16.mxu0 0
      %655 = vmatpush1.bf16.msra.mxu0 0
      %656 = vmatprep.subr.bf16.mxu0 0
      %657 = vmatpush1.bf16.msra.mxu0 0
      %658 = vmatprep.subr.bf16.mxu0 0
      %659 = vmatpush1.bf16.msra.mxu0 0
      %660 = vmatprep.subr.bf16.mxu0 0
      %661 = vmatpush1.bf16.msra.mxu0 0
      %662 = vmatprep.mubr.bf16.mxu0 0
      %663 = vmatmul.mubr.bf16.gmra.mrb[0].mxu0 %v624
      %v664 = vpop.f32.mrb[0].mxu0
      %v665 = vadd.f32 0.0, %v664
      %v666 = vpop.f32.mrb[0].mxu0
      %v667 = vpop.f32.mrb[0].mxu0
      %v668 = vpop.f32.mrb[0].mxu0
      %669 = vdwg.mxu0
      %671 = vrot.lane.b32.xlu0 %v485, 120
      %v672 = vpop.permute.xlu0 %671
      %673 = vrot.lane.b32.xlu0 %v552, 120
      %v674 = vpop.permute.xlu0 %673
      %v676 = vsel %vm560, %v672, 0
      %v679 = vsel %vm560, %v674, 0
      %681 = vmatprep.subr.bf16.mxu0 0
      %682 = vmatpush1.bf16.xpose.msra.mxu0 %v679
      %683 = vmatprep.subr.bf16.mxu0 0
      %684 = vmatpush1.bf16.xpose.msra.mxu0 0
      %685 = vmatprep.subr.bf16.mxu0 0
      %686 = vmatpush1.bf16.xpose.msra.mxu0 0
      %687 = vmatprep.subr.bf16.mxu0 0
      %688 = vmatpush1.bf16.xpose.msra.mxu0 0
      %689 = vmatprep.subr.bf16.mxu0 0
      %690 = vmatpush1.bf16.xpose.msra.mxu0 0
      %691 = vmatprep.subr.bf16.mxu0 0
      %692 = vmatpush1.bf16.xpose.msra.mxu0 0
      %693 = vmatprep.subr.bf16.mxu0 0
      %694 = vmatpush1.bf16.xpose.msra.mxu0 0
      %695 = vmatprep.subr.bf16.mxu0 0
      %696 = vmatpush1.bf16.xpose.msra.mxu0 0
      %697 = vmatprep.subr.bf16.mxu0 0
      %698 = vmatpush1.bf16.xpose.msra.mxu0 0
      %699 = vmatprep.subr.bf16.mxu0 0
      %700 = vmatpush1.bf16.xpose.msra.mxu0 0
      %701 = vmatprep.subr.bf16.mxu0 0
      %702 = vmatpush1.bf16.xpose.msra.mxu0 0
      %703 = vmatprep.subr.bf16.mxu0 0
      %704 = vmatpush1.bf16.xpose.msra.mxu0 0
      %705 = vmatprep.subr.bf16.mxu0 0
      %706 = vmatpush1.bf16.xpose.msra.mxu0 0
      %707 = vmatprep.subr.bf16.mxu0 0
      %708 = vmatpush1.bf16.xpose.msra.mxu0 0
      %709 = vmatprep.subr.bf16.mxu0 0
      %710 = vmatpush1.bf16.xpose.msra.mxu0 0
      %711 = vmatprep.subr.bf16.mxu0 0
      %712 = vmatpush1.bf16.xpose.msra.mxu0 0
      %713 = vmatprep.mubr.bf16.mxu0 0
      %714 = vmatmul.mubr.bf16.gmra.mrb[0].mxu0 %v676
      %v715 = vpop.f32.mrb[0].mxu0
      %v716 = vadd.f32 %v558, %v715
      %v717 = vpop.f32.mrb[0].mxu0
      %v718 = vpop.f32.mrb[0].mxu0
      %v719 = vpop.f32.mrb[0].mxu0
      %720 = vdwg.mxu0
      %v721 = vsel %vm607, %v716, -inf
      %722 = vmax.xlane.f32.xlu0 %v721
      %v723 = vpop.xlane.xlu0 %722
      %v724 = vsub.f32 %v716, %v723
      %v725 = vmul.f32 %v724, 1.442695
      %v726 = vpow.pop %v725
      %v727 = vsel %vm607, %v726, 0.0
      %728 = vadd.xlane.f32.xlu0 %v727
      %v729 = vpop.xlane.xlu0 %728
      %v730 = vrcp.pop %v729
      %v731 = vmul.f32 %v726, %v730
      %v732 = vpack.c.bf16 %v731, %v731
      %733 = vrot.lane.b32.xlu0 %v552, 88
      %v734 = vpop.permute.xlu0 %733
      %v736 = vsel %vm560, %v732, 0
      %v739 = vsel %vm626, %v734, 0
      %741 = vmatprep.subr.bf16.mxu0 0
      %742 = vmatpush1.bf16.msra.mxu0 %v739
      %743 = vmatprep.subr.bf16.mxu0 0
      %744 = vmatpush1.bf16.msra.mxu0 0
      %745 = vmatprep.subr.bf16.mxu0 0
      %746 = vmatpush1.bf16.msra.mxu0 0
      %747 = vmatprep.subr.bf16.mxu0 0
      %748 = vmatpush1.bf16.msra.mxu0 0
      %749 = vmatprep.subr.bf16.mxu0 0
      %750 = vmatpush1.bf16.msra.mxu0 0
      %751 = vmatprep.subr.bf16.mxu0 0
      %752 = vmatpush1.bf16.msra.mxu0 0
      %753 = vmatprep.subr.bf16.mxu0 0
      %754 = vmatpush1.bf16.msra.mxu0 0
      %755 = vmatprep.subr.bf16.mxu0 0
      %756 = vmatpush1.bf16.msra.mxu0 0
      %757 = vmatprep.subr.bf16.mxu0 0
      %758 = vmatpush1.bf16.msra.mxu0 0
      %759 = vmatprep.subr.bf16.mxu0 0
      %760 = vmatpush1.bf16.msra.mxu0 0
      %761 = vmatprep.subr.bf16.mxu0 0
      %762 = vmatpush1.bf16.msra.mxu0 0
      %763 = vmatprep.subr.bf16.mxu0 0
      %764 = vmatpush1.bf16.msra.mxu0 0
      %765 = vmatprep.subr.bf16.mxu0 0
      %766 = vmatpush1.bf16.msra.mxu0 0
      %767 = vmatprep.subr.bf16.mxu0 0
      %768 = vmatpush1.bf16.msra.mxu0 0
      %769 = vmatprep.subr.bf16.mxu0 0
      %770 = vmatpush1.bf16.msra.mxu0 0
      %771 = vmatprep.subr.bf16.mxu0 0
      %772 = vmatpush1.bf16.msra.mxu0 0
      %773 = vmatprep.mubr.bf16.mxu0 0
      %774 = vmatmul.mubr.bf16.gmra.mrb[0].mxu0 %v736
      %v775 = vpop.f32.mrb[0].mxu0
      %v776 = vadd.f32 0.0, %v775
      %v777 = vpop.f32.mrb[0].mxu0
      %v778 = vpop.f32.mrb[0].mxu0
      %v779 = vpop.f32.mrb[0].mxu0
      %780 = vdwg.mxu0
      %781 = vrot.lane.b32.xlu0 %v485, 112
      %v782 = vpop.permute.xlu0 %781
      %783 = vrot.lane.b32.xlu0 %v552, 112
      %v784 = vpop.permute.xlu0 %783
      %v786 = vsel %vm560, %v782, 0
      %v789 = vsel %vm560, %v784, 0
      %791 = vmatprep.subr.bf16.mxu0 0
      %792 = vmatpush1.bf16.xpose.msra.mxu0 %v789
      %793 = vmatprep.subr.bf16.mxu0 0
      %794 = vmatpush1.bf16.xpose.msra.mxu0 0
      %795 = vmatprep.subr.bf16.mxu0 0
      %796 = vmatpush1.bf16.xpose.msra.mxu0 0
      %797 = vmatprep.subr.bf16.mxu0 0
      %798 = vmatpush1.bf16.xpose.msra.mxu0 0
      %799 = vmatprep.subr.bf16.mxu0 0
      %800 = vmatpush1.bf16.xpose.msra.mxu0 0
      %801 = vmatprep.subr.bf16.mxu0 0
      %802 = vmatpush1.bf16.xpose.msra.mxu0 0
      %803 = vmatprep.subr.bf16.mxu0 0
      %804 = vmatpush1.bf16.xpose.msra.mxu0 0
      %805 = vmatprep.subr.bf16.mxu0 0
      %806 = vmatpush1.bf16.xpose.msra.mxu0 0
      %807 = vmatprep.subr.bf16.mxu0 0
      %808 = vmatpush1.bf16.xpose.msra.mxu0 0
      %809 = vmatprep.subr.bf16.mxu0 0
      %810 = vmatpush1.bf16.xpose.msra.mxu0 0
      %811 = vmatprep.subr.bf16.mxu0 0
      %812 = vmatpush1.bf16.xpose.msra.mxu0 0
      %813 = vmatprep.subr.bf16.mxu0 0
      %814 = vmatpush1.bf16.xpose.msra.mxu0 0
      %815 = vmatprep.subr.bf16.mxu0 0
      %816 = vmatpush1.bf16.xpose.msra.mxu0 0
      %817 = vmatprep.subr.bf16.mxu0 0
      %818 = vmatpush1.bf16.xpose.msra.mxu0 0
      %819 = vmatprep.subr.bf16.mxu0 0
      %820 = vmatpush1.bf16.xpose.msra.mxu0 0
      %821 = vmatprep.subr.bf16.mxu0 0
      %822 = vmatpush1.bf16.xpose.msra.mxu0 0
      %823 = vmatprep.mubr.bf16.mxu0 0
      %824 = vmatmul.mubr.bf16.gmra.mrb[0].mxu0 %v786
      %v825 = vpop.f32.mrb[0].mxu0
      %v826 = vadd.f32 %v558, %v825
      %v827 = vpop.f32.mrb[0].mxu0
      %v828 = vpop.f32.mrb[0].mxu0
      %v829 = vpop.f32.mrb[0].mxu0
      %830 = vdwg.mxu0
      %v831 = vsel %vm607, %v826, -inf
      %832 = vmax.xlane.f32.xlu0 %v831
      %v833 = vpop.xlane.xlu0 %832
      %v834 = vsub.f32 %v826, %v833
      %v835 = vmul.f32 %v834, 1.442695
      %v836 = vpow.pop %v835
      %v837 = vsel %vm607, %v836, 0.0
      %838 = vadd.xlane.f32.xlu0 %v837
      %v839 = vpop.xlane.xlu0 %838
      %v840 = vrcp.pop %v839
      %v841 = vmul.f32 %v836, %v840
      %v842 = vpack.c.bf16 %v841, %v841
      %843 = vrot.lane.b32.xlu0 %v552, 80
      %v844 = vpop.permute.xlu0 %843
      %v846 = vsel %vm560, %v842, 0
      %v849 = vsel %vm626, %v844, 0
      %851 = vmatprep.subr.bf16.mxu0 0
      %852 = vmatpush1.bf16.msra.mxu0 %v849
      %853 = vmatprep.subr.bf16.mxu0 0
      %854 = vmatpush1.bf16.msra.mxu0 0
      %855 = vmatprep.subr.bf16.mxu0 0
      %856 = vmatpush1.bf16.msra.mxu0 0
      %857 = vmatprep.subr.bf16.mxu0 0
      %858 = vmatpush1.bf16.msra.mxu0 0
      %859 = vmatprep.subr.bf16.mxu0 0
      %860 = vmatpush1.bf16.msra.mxu0 0
      %861 = vmatprep.subr.bf16.mxu0 0
      %862 = vmatpush1.bf16.msra.mxu0 0
      %863 = vmatprep.subr.bf16.mxu0 0
      %864 = vmatpush1.bf16.msra.mxu0 0
      %865 = vmatprep.subr.bf16.mxu0 0
      %866 = vmatpush1.bf16.msra.mxu0 0
      %867 = vmatprep.subr.bf16.mxu0 0
      %868 = vmatpush1.bf16.msra.mxu0 0
      %869 = vmatprep.subr.bf16.mxu0 0
      %870 = vmatpush1.bf16.msra.mxu0 0
      %871 = vmatprep.subr.bf16.mxu0 0
      %872 = vmatpush1.bf16.msra.mxu0 0
      %873 = vmatprep.subr.bf16.mxu0 0
      %874 = vmatpush1.bf16.msra.mxu0 0
      %875 = vmatprep.subr.bf16.mxu0 0
      %876 = vmatpush1.bf16.msra.mxu0 0
      %877 = vmatprep.subr.bf16.mxu0 0
      %878 = vmatpush1.bf16.msra.mxu0 0
      %879 = vmatprep.subr.bf16.mxu0 0
      %880 = vmatpush1.bf16.msra.mxu0 0
      %881 = vmatprep.subr.bf16.mxu0 0
      %882 = vmatpush1.bf16.msra.mxu0 0
      %883 = vmatprep.mubr.bf16.mxu0 0
      %884 = vmatmul.mubr.bf16.gmra.mrb[0].mxu0 %v846
      %v885 = vpop.f32.mrb[0].mxu0
      %v886 = vadd.f32 0.0, %v885
      %v887 = vpop.f32.mrb[0].mxu0
      %v888 = vpop.f32.mrb[0].mxu0
      %v889 = vpop.f32.mrb[0].mxu0
      %890 = vdwg.mxu0
      %891 = vrot.lane.b32.xlu0 %v485, 104
      %v892 = vpop.permute.xlu0 %891
      %893 = vrot.lane.b32.xlu0 %v552, 104
      %v894 = vpop.permute.xlu0 %893
      %v896 = vsel %vm560, %v892, 0
      %v899 = vsel %vm560, %v894, 0
      %901 = vmatprep.subr.bf16.mxu0 0
      %902 = vmatpush1.bf16.xpose.msra.mxu0 %v899
      %903 = vmatprep.subr.bf16.mxu0 0
      %904 = vmatpush1.bf16.xpose.msra.mxu0 0
      %905 = vmatprep.subr.bf16.mxu0 0
      %906 = vmatpush1.bf16.xpose.msra.mxu0 0
      %907 = vmatprep.subr.bf16.mxu0 0
      %908 = vmatpush1.bf16.xpose.msra.mxu0 0
      %909 = vmatprep.subr.bf16.mxu0 0
      %910 = vmatpush1.bf16.xpose.msra.mxu0 0
      %911 = vmatprep.subr.bf16.mxu0 0
      %912 = vmatpush1.bf16.xpose.msra.mxu0 0
      %913 = vmatprep.subr.bf16.mxu0 0
      %914 = vmatpush1.bf16.xpose.msra.mxu0 0
      %915 = vmatprep.subr.bf16.mxu0 0
      %916 = vmatpush1.bf16.xpose.msra.mxu0 0
      %917 = vmatprep.subr.bf16.mxu0 0
      %918 = vmatpush1.bf16.xpose.msra.mxu0 0
      %919 = vmatprep.subr.bf16.mxu0 0
      %920 = vmatpush1.bf16.xpose.msra.mxu0 0
      %921 = vmatprep.subr.bf16.mxu0 0
      %922 = vmatpush1.bf16.xpose.msra.mxu0 0
      %923 = vmatprep.subr.bf16.mxu0 0
      %924 = vmatpush1.bf16.xpose.msra.mxu0 0
      %925 = vmatprep.subr.bf16.mxu0 0
      %926 = vmatpush1.bf16.xpose.msra.mxu0 0
      %927 = vmatprep.subr.bf16.mxu0 0
      %928 = vmatpush1.bf16.xpose.msra.mxu0 0
      %929 = vmatprep.subr.bf16.mxu0 0
      %930 = vmatpush1.bf16.xpose.msra.mxu0 0
      %931 = vmatprep.subr.bf16.mxu0 0
      %932 = vmatpush1.bf16.xpose.msra.mxu0 0
      %933 = vmatprep.mubr.bf16.mxu0 0
      %934 = vmatmul.mubr.bf16.gmra.mrb[0].mxu0 %v896
      %v935 = vpop.f32.mrb[0].mxu0
      %v936 = vadd.f32 %v558, %v935
      %v937 = vpop.f32.mrb[0].mxu0
      %v938 = vpop.f32.mrb[0].mxu0
      %v939 = vpop.f32.mrb[0].mxu0
      %940 = vdwg.mxu0
      %v941 = vsel %vm607, %v936, -inf
      %942 = vmax.xlane.f32.xlu0 %v941
      %v943 = vpop.xlane.xlu0 %942
      %v944 = vsub.f32 %v936, %v943
      %v945 = vmul.f32 %v944, 1.442695
      %v946 = vpow.pop %v945
      %v947 = vsel %vm607, %v946, 0.0
      %948 = vadd.xlane.f32.xlu0 %v947
      %v949 = vpop.xlane.xlu0 %948
      %v950 = vrcp.pop %v949
      %v951 = vmul.f32 %v946, %v950
      %v952 = vpack.c.bf16 %v951, %v951
      %953 = vrot.lane.b32.xlu0 %v552, 72
      %v954 = vpop.permute.xlu0 %953
      %v956 = vsel %vm560, %v952, 0
      %v959 = vsel %vm626, %v954, 0
      %961 = vmatprep.subr.bf16.mxu0 0
      %962 = vmatpush1.bf16.msra.mxu0 %v959
      %963 = vmatprep.subr.bf16.mxu0 0
      %964 = vmatpush1.bf16.msra.mxu0 0
      %965 = vmatprep.subr.bf16.mxu0 0
      %966 = vmatpush1.bf16.msra.mxu0 0
      %967 = vmatprep.subr.bf16.mxu0 0
      %968 = vmatpush1.bf16.msra.mxu0 0
      %969 = vmatprep.subr.bf16.mxu0 0
      %970 = vmatpush1.bf16.msra.mxu0 0
      %971 = vmatprep.subr.bf16.mxu0 0
      %972 = vmatpush1.bf16.msra.mxu0 0
      %973 = vmatprep.subr.bf16.mxu0 0
      %974 = vmatpush1.bf16.msra.mxu0 0
      %975 = vmatprep.subr.bf16.mxu0 0
      %976 = vmatpush1.bf16.msra.mxu0 0
      %977 = vmatprep.subr.bf16.mxu0 0
      %978 = vmatpush1.bf16.msra.mxu0 0
      %979 = vmatprep.subr.bf16.mxu0 0
      %980 = vmatpush1.bf16.msra.mxu0 0
      %981 = vmatprep.subr.bf16.mxu0 0
      %982 = vmatpush1.bf16.msra.mxu0 0
      %983 = vmatprep.subr.bf16.mxu0 0
      %984 = vmatpush1.bf16.msra.mxu0 0
      %985 = vmatprep.subr.bf16.mxu0 0
      %986 = vmatpush1.bf16.msra.mxu0 0
      %987 = vmatprep.subr.bf16.mxu0 0
      %988 = vmatpush1.bf16.msra.mxu0 0
      %989 = vmatprep.subr.bf16.mxu0 0
      %990 = vmatpush1.bf16.msra.mxu0 0
      %991 = vmatprep.subr.bf16.mxu0 0
      %992 = vmatpush1.bf16.msra.mxu0 0
      %993 = vmatprep.mubr.bf16.mxu0 0
      %994 = vmatmul.mubr.bf16.gmra.mrb[0].mxu0 %v956
      %v995 = vpop.f32.mrb[0].mxu0
      %v996 = vadd.f32 0.0, %v995
      %v997 = vpop.f32.mrb[0].mxu0
      %v998 = vpop.f32.mrb[0].mxu0
      %v999 = vpop.f32.mrb[0].mxu0
      %1000 = vdwg.mxu0
      %1002 = vrot.lane.b32.xlu0 %v776, 8
      %v1003 = vpop.permute.xlu0 %1002
      %1006 = vrot.lane.b32.xlu0 %v886, 16
      %v1007 = vpop.permute.xlu0 %1006
      %1010 = vrot.lane.b32.xlu0 %v996, 24
      %v1011 = vpop.permute.xlu0 %1010
      %v1013 = vsel %vm560, %v665, %v1003
      %vm1014 = vcmask 130048
      %v1015 = vsel %vm1014, %v1013, %v1007
      %vm1016 = vcmask 195584
      %v1017 = vsel %vm1016, %v1015, %v1011
      %v1018 = vpack.c.bf16 %v1017, %v1017
      %v1019 = vld [vmem:[%s7] sm:$0xf]
      %v1020 = vld [vmem:[%s7 + $0x4] sm:$0xf]
      %v1021 = vld [vmem:[%s7 + $0x8] sm:$0xf]
      %v1022 = vld [vmem:[%s7 + $0xc] sm:$0xf]
      %v1023 = vld [vmem:[%s8] sm:$0x1]
      %v1025 = vlaneseq
      %v1026 = vshrl.u32 %v1025, 7
      %v1027 = vsub.s32 0, %v1026
      %v1028 = vrot.slane %v1023, %v1027
      %v1034 = vunpack.c.l.b16 %v1019
      %v1035 = vunpack.c.l.b16 %v1020
      %v1036 = vunpack.c.l.b16 %v1021
      %v1037 = vunpack.c.l.b16 %v1022
      %v1038 = vpack.c.b16 %v1035, %v1034
      %v1039 = vpack.c.b16 %v1037, %v1036
      %v1043 = vsel %vm441, %v1018, 0
      %1045 = vmatprep.subr.bf16.mxu0 0
      %1046 = vmatpush1.bf16.msra.mxu0 %v1038
      %1047 = vmatprep.subr.bf16.mxu0 0
      %1048 = vmatpush1.bf16.msra.mxu0 %v1039
      %1049 = vmatprep.subr.bf16.mxu0 0
      %1050 = vmatpush1.bf16.msra.mxu0 0
      %1051 = vmatprep.subr.bf16.mxu0 0
      %1052 = vmatpush1.bf16.msra.mxu0 0
      %1053 = vmatprep.subr.bf16.mxu0 0
      %1054 = vmatpush1.bf16.msra.mxu0 0
      %1055 = vmatprep.subr.bf16.mxu0 0
      %1056 = vmatpush1.bf16.msra.mxu0 0
      %1057 = vmatprep.subr.bf16.mxu0 0
      %1058 = vmatpush1.bf16.msra.mxu0 0
      %1059 = vmatprep.subr.bf16.mxu0 0
      %1060 = vmatpush1.bf16.msra.mxu0 0
      %1061 = vmatprep.subr.bf16.mxu0 0
      %1062 = vmatpush1.bf16.msra.mxu0 0
      %1063 = vmatprep.subr.bf16.mxu0 0
      %1064 = vmatpush1.bf16.msra.mxu0 0
      %1065 = vmatprep.subr.bf16.mxu0 0
      %1066 = vmatpush1.bf16.msra.mxu0 0
      %1067 = vmatprep.subr.bf16.mxu0 0
      %1068 = vmatpush1.bf16.msra.mxu0 0
      %1069 = vmatprep.subr.bf16.mxu0 0
      %1070 = vmatpush1.bf16.msra.mxu0 0
      %1071 = vmatprep.subr.bf16.mxu0 0
      %1072 = vmatpush1.bf16.msra.mxu0 0
      %1073 = vmatprep.subr.bf16.mxu0 0
      %1074 = vmatpush1.bf16.msra.mxu0 0
      %1075 = vmatprep.subr.bf16.mxu0 0
      %1076 = vmatpush1.bf16.msra.mxu0 0
      %1077 = vmatprep.mubr.bf16.mxu0 0
      %1078 = vmatmul.mubr.bf16.gmra.mrb[0].mxu0 %v1043
      %v1079 = vpop.f32.mrb[0].mxu0
      %v1080 = vadd.f32 %v1028, %v1079
      %v1081 = vpop.f32.mrb[0].mxu0
      %v1082 = vpop.f32.mrb[0].mxu0
      %v1083 = vpop.f32.mrb[0].mxu0
      %1084 = vdwg.mxu0
      %v1085 = vadd.f32 %v414, %v1080
      %v1086 = vld [vmem:[%s9] sm:$0x1]
      %v1087 = vld [vmem:[%s10] sm:$0x1]
      %vm1088 = vcmask 260096
      %v1089 = vsel %vm1088, %v1085, 0.0
      %1090 = vadd.xlane.f32.xlu0 %v1089
      %v1091 = vpop.xlane.xlu0 %1090
      %v1092 = vrcp.pop 32.0
      %v1093 = vmul.f32 %v1091, %v1092
      %v1094 = vsub.f32 %v1085, %v1093
      %v1095 = vmul.f32 %v1094, %v1094
      %v1096 = vsel %vm1088, %v1095, 0.0
      %1097 = vadd.xlane.f32.xlu0 %v1096
      %v1098 = vpop.xlane.xlu0 %1097
      %v1099 = vmul.f32 %v1098, %v1092
      %v1100 = vadd.f32 %v1099, 1e-05
      %v1101 = vrsqrt.pop %v1100
      %v1102 = vmul.f32 %v1094, %v1101
      %v1104 = vlaneseq
      %v1105 = vshrl.u32 %v1104, 7
      %v1106 = vsub.s32 0, %v1105
      %v1107 = vrot.slane %v1086, %v1106
      %v1109 = vmul.f32 %v1102, %v1107
      %v1111 = vlaneseq
      %v1112 = vshrl.u32 %v1111, 7
      %v1113 = vsub.s32 0, %v1112
      %v1114 = vrot.slane %v1087, %v1113
      %v1116 = vadd.f32 %v1109, %v1114
      %1117 = vst.msk [vmem:[%s412] sm:$0x7f] %vm1088, %v1116
      %p1118 = scmp.lt.s32.totalorder %s22, 1
      %s1119 = scalar_select %p1118, %s22, 1
      %s1120 = smul.addr %s1119, 8
      %s1121 = scalar_lea.vmem %s11, %s1120
      // Predicated region
      $region65: #{seq2seq_transformer_forward.19} parent=63 // pred_check
        %p1122 = pneg %p286
      $region66: #{seq2seq_transformer_forward.19} parent=63 // pred_check_branch
        %1124 = sbr.rel (%p1122) target = $region68
      $region67: #{seq2seq_transformer_forward.19} parent=63 // pred_region
        _
      $region68: #{seq2seq_transformer_forward.19} parent=63 // pred_fallthru
        _
    $region64: #{seq2seq_transformer_forward.19} parent=5 // pred_fallthru
      _
    %p1125 = scmp.le.s32.totalorder 2, %s17
    // Predicated region
    $region69: #{seq2seq_transformer_forward.19} parent=5 // pred_check
      %p1126 = pneg %p1125
    $region70: #{seq2seq_transformer_forward.19} parent=5 // pred_check_branch
      %1128 = sbr.rel (%p1126) target = $region72
    $region71: #{seq2seq_transformer_forward.19} parent=5 // pred_region
      %s1129 = ssub.s32 %s17, 2
      // Predicated region
      $region73: #{seq2seq_transformer_forward.19} parent=71 // pred_check
        %p1130 = pneg %p292
      $region74: #{seq2seq_transformer_forward.19} parent=71 // pred_check_branch
        %1132 = sbr.rel (%p1130) target = $region76
      $region75: #{seq2seq_transformer_forward.19} parent=71 // pred_region
        %p1133 = scmp.lt.s32.totalorder %s23, 1
        %s1134 = scalar_select %p1133, %s23, 1
        %s1135 = smul.addr %s1134, 8
        %s1136 = scalar_lea.vmem %s11, %s1135
      $region76: #{seq2seq_transformer_forward.19} parent=71 // pred_fallthru
        _
    $region72: #{seq2seq_transformer_forward.19} parent=5 // pred_fallthru
      _
  $region6: #{seq2seq_transformer_forward.19} parent=0 // loop_footer
    %s21 = sadd.s32 1, %s17
  $region7: #{seq2seq_transformer_forward.19} parent=0 // loop_footer_branch
    %16 = sbr.rel target = $region3
  $region8: #{seq2seq_transformer_forward.19} parent=0 // loop_exit
    _

// kernel: seq2seq_transformer_forward.25
$region0: #{seq2seq_transformer_forward.25}
  #allocation0 [shape = 'u32[]', space=smem, size = 0x4, offset = 0x4, fixed_abs, tag = 'smem constant byte address 0x4 - core index']
  #allocation1 [shape = 'u32[144,128]{1,0:T(1,128)}', space=vmem, size = 0x12000, scoped, tag = 'internal scratch']
  %s0 = inlined_call_operand.vmem [shape: f32[14,32], index: 0, kind: input, shape index: {}]
  %s1 = inlined_call_operand.vmem [shape: bf16[32,128], index: 1, kind: input, shape index: {}]
  %s2 = inlined_call_operand.vmem [shape: f32[1,128], index: 2, kind: input, shape index: {}]
  %s3 = inlined_call_operand.vmem [shape: f32[14,128], index: 3, kind: output, shape index: {}]
  %s4 = sld [smem:[#allocation0]]
  $region45: #{seq2seq_transformer_forward.25} parent=0
    _
  %s6 = ssub.s32 1, %s4
  %s7 = scalar_select 0, %s6, %s4
  loop: start=0, step=1, limit=4
  $region2: #{seq2seq_transformer_forward.25} parent=0 // loop_pre_header
    _
  $region3: #{seq2seq_transformer_forward.25} parent=0 // loop_header
    %s9 = sphi 0, %s13
    %p10 = scmp.ge.s32.totalorder %s9, 4
    %s16 = sphi 0, %s28
    %s17 = sphi 0, %s24
    %s18 = sphi 0, %s16
    %s19 = sphi 0, %s17
    %s20 = sphi 0, %s18
    %s21 = sphi 0, %s19
    %s31 = sphi 0, %s33
    %s34 = sphi 0, %s31
    %s35 = sphi 0, %s34
    %s51 = sphi 0, %s35
    %s57 = sphi 0, %s59
    %s60 = sphi 0, %s57
    %s61 = sphi 0, %s60
    %s77 = sphi 0, %s61
    %s83 = sphi 0, %s85
    %s86 = sphi 0, %s83
    %s87 = sphi 0, %s86
    %s103 = sphi 0, %s87
    %s111 = sphi 0, %s113
    %s114 = sphi 0, %s111
    %s115 = sphi 0, %s114
    %s131 = sphi 0, %s115
  $region4: #{seq2seq_transformer_forward.25} parent=0 // loop_header_branch
    %12 = sbr.rel (%p10) target = $region8
  $region5: #{seq2seq_transformer_forward.25} parent=0 // loop_body
    %s14 = ssub.s32 %s9, 1
    %s15 = ssub.s32 %s9, 2
    %s22 = sadd.s32 1, %s17
    %p23 = scmp.ge.s32.totalorder %s22, 1
    %s24 = scalar_select %p23, 0, %s22
    %s25 = sadd.s32 1, %s16
    %s26 = scalar_select %p23, %s25, %s16
    %p27 = scmp.ge.s32.totalorder %s26, 2
    %s28 = scalar_select %p27, 0, %s26
    %s29 = ssub.s32 %s16, %s28
    %p30 = scmp.eq.s32.totalorder %s29, 0
    %s32 = sadd.s32 %s31, 1
    %s33 = scalar_select %p30, %s31, %s32
    %p36 = pneg %p30
    %p37 = scmp.eq.s32.totalorder %s9, 1
    %p38 = por %p36, %p37
    %p39 = scmp.ne.s32.totalorder %s31, %s34
    %p40 = scmp.eq.s32.totalorder %s9, 0
    %p41 = por %p39, %p40
    %p42 = scmp.ne.s32.totalorder %s31, %s34
    %p43 = scmp.eq.s32.totalorder %s14, 1
    %p44 = por %p42, %p43
    %p45 = scmp.ne.s32.totalorder %s34, %s35
    %p46 = scmp.eq.s32.totalorder %s14, 0
    %p47 = por %p45, %p46
    %p48 = scmp.ne.s32.totalorder %s34, %s35
    %p49 = scmp.eq.s32.totalorder %s15, 1
    %p50 = por %p48, %p49
    %p52 = scmp.ne.s32.totalorder %s35, %s51
    %p53 = scmp.eq.s32.totalorder %s15, 0
    %p54 = por %p52, %p53
    %s55 = ssub.s32 %s17, %s24
    %p56 = scmp.eq.s32.totalorder %s55, 0
    %s58 = sadd.s32 %s57, 1
    %s59 = scalar_select %p56, %s57, %s58
    %p62 = pneg %p56
    %p63 = scmp.eq.s32.totalorder %s9, 1
    %p64 = por %p62, %p63
    %p65 = scmp.ne.s32.totalorder %s57, %s60
    %p66 = scmp.eq.s32.totalorder %s9, 0
    %p67 = por %p65, %p66
    %p68 = scmp.ne.s32.totalorder %s57, %s60
    %p69 = scmp.eq.s32.totalorder %s14, 1
    %p70 = por %p68, %p69
    %p71 = scmp.ne.s32.totalorder %s60, %s61
    %p72 = scmp.eq.s32.totalorder %s14, 0
    %p73 = por %p71, %p72
    %p74 = scmp.ne.s32.totalorder %s60, %s61
    %p75 = scmp.eq.s32.totalorder %s15, 1
    %p76 = por %p74, %p75
    %p78 = scmp.ne.s32.totalorder %s61, %s77
    %p79 = scmp.eq.s32.totalorder %s15, 0
    %p80 = por %p78, %p79
    %s81 = ssub.s32 %s17, %s24
    %p82 = scmp.eq.s32.totalorder %s81, 0
    %s84 = sadd.s32 %s83, 1
    %s85 = scalar_select %p82, %s83, %s84
    %p88 = pneg %p82
    %p89 = scmp.eq.s32.totalorder %s9, 1
    %p90 = por %p88, %p89
    %p91 = scmp.ne.s32.totalorder %s83, %s86
    %p92 = scmp.eq.s32.totalorder %s9, 0
    %p93 = por %p91, %p92
    %p94 = scmp.ne.s32.totalorder %s83, %s86
    %p95 = scmp.eq.s32.totalorder %s14, 1
    %p96 = por %p94, %p95
    %p97 = scmp.ne.s32.totalorder %s86, %s87
    %p98 = scmp.eq.s32.totalorder %s14, 0
    %p99 = por %p97, %p98
    %p100 = scmp.ne.s32.totalorder %s86, %s87
    %p101 = scmp.eq.s32.totalorder %s15, 1
    %p102 = por %p100, %p101
    %p104 = scmp.ne.s32.totalorder %s87, %s103
    %p105 = scmp.eq.s32.totalorder %s15, 0
    %p106 = por %p104, %p105
    %s107 = ssub.s32 %s16, %s28
    %s108 = ssub.s32 %s17, %s24
    %s109 = sor.u32 %s107, %s108
    %p110 = scmp.eq.s32.totalorder %s109, 0
    %s112 = sadd.s32 %s111, 1
    %s113 = scalar_select %p110, %s111, %s112
    %p116 = pneg %p110
    %p117 = scmp.eq.s32.totalorder %s9, 1
    %p118 = por %p116, %p117
    %p119 = scmp.ne.s32.totalorder %s111, %s114
    %p120 = scmp.eq.s32.totalorder %s9, 0
    %p121 = por %p119, %p120
    %p122 = scmp.ne.s32.totalorder %s111, %s114
    %p123 = scmp.eq.s32.totalorder %s14, 1
    %p124 = por %p122, %p123
    %p125 = scmp.ne.s32.totalorder %s114, %s115
    %p126 = scmp.eq.s32.totalorder %s14, 0
    %p127 = por %p125, %p126
    %p128 = scmp.ne.s32.totalorder %s114, %s115
    %p129 = scmp.eq.s32.totalorder %s15, 1
    %p130 = por %p128, %p129
    %p132 = scmp.ne.s32.totalorder %s115, %s131
    %p133 = scmp.eq.s32.totalorder %s15, 0
    %p134 = por %p132, %p133
    %p135 = scmp.le.s32.totalorder 1, %s9
    %p136 = scmp.lt.s32.totalorder %s9, 3
    %p137 = pnand %p135, %p136
    %p138 = pneg %p137
    // Predicated region
    $region9: #{seq2seq_transformer_forward.25} parent=5 // pred_check
      _
    $region10: #{seq2seq_transformer_forward.25} parent=5 // pred_check_branch
      %140 = sbr.rel (%p137) target = $region12
    $region11: #{seq2seq_transformer_forward.25} parent=5 // pred_region
      %s141 = ssub.s32 %s9, 1
      // Predicated region
      $region13: #{seq2seq_transformer_forward.25} parent=11 // pred_check
        %p142 = pneg %p73
      $region14: #{seq2seq_transformer_forward.25} parent=11 // pred_check_branch
        %144 = sbr.rel (%p142) target = $region16
      $region15: #{seq2seq_transformer_forward.25} parent=11 // pred_region
        %p145 = scmp.lt.s32.totalorder %s19, 0
        %s146 = scalar_select %p145, %s19, 0
        %s147 = smul.addr %s146, 4
        %s148 = scalar_lea.vmem %s1, %s147
      $region16: #{seq2seq_transformer_forward.25} parent=11 // pred_fallthru
        _
      // Predicated region
      $region17: #{seq2seq_transformer_forward.25} parent=11 // pred_check
        %p149 = pneg %p99
      $region18: #{seq2seq_transformer_forward.25} parent=11 // pred_check_branch
        %151 = sbr.rel (%p149) target = $region20
      $region19: #{seq2seq_transformer_forward.25} parent=11 // pred_region
        %p152 = scmp.lt.s32.totalorder %s19, 0
        %s153 = scalar_select %p152, %s19, 0
        %s154 = scalar_lea.vmem %s2, %s153
      $region20: #{seq2seq_transformer_forward.25} parent=11 // pred_fallthru
        _
    $region12: #{seq2seq_transformer_forward.25} parent=5 // pred_fallthru
      _
    %p155 = scmp.lt.s32.totalorder %s9, 2
    // Predicated region
    $region21: #{seq2seq_transformer_forward.25} parent=5 // pred_check
      %p156 = pneg %p155
    $region22: #{seq2seq_transformer_forward.25} parent=5 // pred_check_branch
      %158 = sbr.rel (%p156) target = $region24
    $region23: #{seq2seq_transformer_forward.25} parent=5 // pred_region
      // Predicated region
      $region25: #{seq2seq_transformer_forward.25} parent=23 // pred_check
        %p159 = pneg %p41
      $region26: #{seq2seq_transformer_forward.25} parent=23 // pred_check_branch
        %161 = sbr.rel (%p159) target = $region28
      $region27: #{seq2seq_transformer_forward.25} parent=23 // pred_region
        %p162 = scmp.lt.s32.totalorder %s16, 1
        %s163 = scalar_select %p162, %s16, 1
        %s164 = smul.addr %s163, 8
        %s165 = scalar_lea.vmem %s0, %s164
      $region28: #{seq2seq_transformer_forward.25} parent=23 // pred_fallthru
        _
    $region24: #{seq2seq_transformer_forward.25} parent=5 // pred_fallthru
      _
    %p166 = scmp.le.s32.totalorder 1, %s9
    %p167 = scmp.lt.s32.totalorder %s9, 3
    %p168 = pnand %p166, %p167
    %p169 = pneg %p168
    // Predicated region
    $region29: #{seq2seq_transformer_forward.25} parent=5 // pred_check
      _
    $region30: #{seq2seq_transformer_forward.25} parent=5 // pred_check_branch
      %171 = sbr.rel (%p168) target = $region32
    $region31: #{seq2seq_transformer_forward.25} parent=5 // pred_region
      %s172 = ssub.s32 %s9, 1
      %p173 = scmp.lt.s32.totalorder %s18, 1
      %s174 = scalar_select %p173, %s18, 1
      %s175 = smul.addr %s174, 8
      %s176 = scalar_lea.vmem %s0, %s175
      %p177 = pneg %p47
      %p178 = pneg %p44
      %p179 = scmp.lt.s32.totalorder %s19, 0
      %s180 = scalar_select %p179, %s19, 0
      %s181 = smul.addr %s180, 4
      %s182 = scalar_lea.vmem %s1, %s181
      %p183 = pneg %p73
      %p184 = pneg %p70
      %p185 = scmp.lt.s32.totalorder %s19, 0
      %s186 = scalar_select %p185, %s19, 0
      %s187 = scalar_lea.vmem %s2, %s186
      %p188 = pneg %p99
      %p189 = pneg %p96
      %p190 = pneg %p127
      %p191 = pneg %p124
      %p192 = scmp.lt.s32.totalorder %s18, 1
      %s193 = scalar_select %p192, %s18, 1
      %p194 = scmp.lt.s32.totalorder %s19, 0
      %s195 = scalar_select %p194, %s19, 0
      %s196 = sadd.s32 %s195, %s193
      %s197 = smul.addr %s196, 8
      %s198 = scalar_lea.vmem %s3, %s197
      %p199 = scmp.lt.s32.totalorder %s18, 1
      %s200 = scalar_select %p199, %s18, 1
      %s201 = smul.addr %s200, 8
      %s202 = scalar_lea.vmem %s0, %s201
      %p203 = scmp.lt.s32.totalorder %s19, 0
      %s204 = scalar_select %p203, %s19, 0
      %s205 = smul.addr %s204, 4
      %s206 = scalar_lea.vmem %s1, %s205
      %p207 = scmp.lt.s32.totalorder %s19, 0
      %s208 = scalar_select %p207, %s19, 0
      %s209 = scalar_lea.vmem %s2, %s208
      %p210 = scmp.lt.s32.totalorder %s18, 1
      %s211 = scalar_select %p210, %s18, 1
      %p212 = scmp.lt.s32.totalorder %s19, 0
      %s213 = scalar_select %p212, %s19, 0
      %s214 = sadd.s32 %s213, %s211
      %s215 = smul.addr %s214, 8
      %s216 = scalar_lea.vmem %s3, %s215
      %v218 = vld [vmem:[%s202] sm:$0xff]
      %v219 = vpack.c.bf16 %v218, %v218
      %v220 = vld [vmem:[%s206] sm:$0xf]
      %v221 = vld [vmem:[%s206 + $0x4] sm:$0xf]
      %v222 = vld [vmem:[%s206 + $0x8] sm:$0xf]
      %v223 = vld [vmem:[%s206 + $0xc] sm:$0xf]
      %v224 = vld [vmem:[%s209] sm:$0x1]
      %v226 = vlaneseq
      %v227 = vshrl.u32 %v226, 7
      %v228 = vsub.s32 0, %v227
      %v229 = vrot.slane %v224, %v228
      %v235 = vunpack.c.l.b16 %v220
      %v236 = vunpack.c.l.b16 %v221
      %v237 = vunpack.c.l.b16 %v222
      %v238 = vunpack.c.l.b16 %v223
      %v239 = vpack.c.b16 %v236, %v235
      %v240 = vpack.c.b16 %v238, %v237
      %vm243 = vcmask 261120
      %v245 = vsel %vm243, %v219, 0
      %247 = vmatprep.subr.bf16.mxu0 0
      %248 = vmatpush1.bf16.msra.mxu0 %v239
      %249 = vmatprep.subr.bf16.mxu0 0
      %250 = vmatpush1.bf16.msra.mxu0 %v240
      %251 = vmatprep.subr.bf16.mxu0 0
      %252 = vmatpush1.bf16.msra.mxu0 0
      %253 = vmatprep.subr.bf16.mxu0 0
      %254 = vmatpush1.bf16.msra.mxu0 0
      %255 = vmatprep.subr.bf16.mxu0 0
      %256 = vmatpush1.bf16.msra.mxu0 0
      %257 = vmatprep.subr.bf16.mxu0 0
      %258 = vmatpush1.bf16.msra.mxu0 0
      %259 = vmatprep.subr.bf16.mxu0 0
      %260 = vmatpush1.bf16.msra.mxu0 0
      %261 = vmatprep.subr.bf16.mxu0 0
      %262 = vmatpush1.bf16.msra.mxu0 0
      %263 = vmatprep.subr.bf16.mxu0 0
      %264 = vmatpush1.bf16.msra.mxu0 0
      %265 = vmatprep.subr.bf16.mxu0 0
      %266 = vmatpush1.bf16.msra.mxu0 0
      %267 = vmatprep.subr.bf16.mxu0 0
      %268 = vmatpush1.bf16.msra.mxu0 0
      %269 = vmatprep.subr.bf16.mxu0 0
      %270 = vmatpush1.bf16.msra.mxu0 0
      %271 = vmatprep.subr.bf16.mxu0 0
      %272 = vmatpush1.bf16.msra.mxu0 0
      %273 = vmatprep.subr.bf16.mxu0 0
      %274 = vmatpush1.bf16.msra.mxu0 0
      %275 = vmatprep.subr.bf16.mxu0 0
      %276 = vmatpush1.bf16.msra.mxu0 0
      %277 = vmatprep.subr.bf16.mxu0 0
      %278 = vmatpush1.bf16.msra.mxu0 0
      %279 = vmatprep.mubr.bf16.mxu0 0
      %280 = vmatmul.mubr.bf16.gmra.mrb[0].mxu0 %v245
      %v281 = vpop.f32.mrb[0].mxu0
      %v282 = vadd.f32 %v229, %v281
      %v283 = vpop.f32.mrb[0].mxu0
      %v284 = vpop.f32.mrb[0].mxu0
      %v285 = vpop.f32.mrb[0].mxu0
      %286 = vdwg.mxu0
      %287 = vst [vmem:[%s216] sm:$0xff] %v282
      %p288 = scmp.lt.s32.totalorder %s18, 1
      %s289 = scalar_select %p288, %s18, 1
      %p290 = scmp.lt.s32.totalorder %s19, 0
      %s291 = scalar_select %p290, %s19, 0
      %s292 = sadd.s32 %s291, %s289
      %s293 = smul.addr %s292, 8
      %s294 = scalar_lea.vmem %s3, %s293
      // Predicated region
      $region33: #{seq2seq_transformer_forward.25} parent=31 // pred_check
        %p295 = pneg %p124
      $region34: #{seq2seq_transformer_forward.25} parent=31 // pred_check_branch
        %297 = sbr.rel (%p295) target = $region36
      $region35: #{seq2seq_transformer_forward.25} parent=31 // pred_region
        _
      $region36: #{seq2seq_transformer_forward.25} parent=31 // pred_fallthru
        _
    $region32: #{seq2seq_transformer_forward.25} parent=5 // pred_fallthru
      _
    %p298 = scmp.le.s32.totalorder 2, %s9
    // Predicated region
    $region37: #{seq2seq_transformer_forward.25} parent=5 // pred_check
      %p299 = pneg %p298
    $region38: #{seq2seq_transformer_forward.25} parent=5 // pred_check_branch
      %301 = sbr.rel (%p299) target = $region40
    $region39: #{seq2seq_transformer_forward.25} parent=5 // pred_region
      %s302 = ssub.s32 %s9, 2
      // Predicated region
      $region41: #{seq2seq_transformer_forward.25} parent=39 // pred_check
        %p303 = pneg %p130
      $region42: #{seq2seq_transformer_forward.25} parent=39 // pred_check_branch
        %305 = sbr.rel (%p303) target = $region44
      $region43: #{seq2seq_transformer_forward.25} parent=39 // pred_region
        %p306 = scmp.lt.s32.totalorder %s20, 1
        %s307 = scalar_select %p306, %s20, 1
        %p308 = scmp.lt.s32.totalorder %s21, 0
        %s309 = scalar_select %p308, %s21, 0
        %s310 = sadd.s32 %s309, %s307
        %s311 = smul.addr %s310, 8
        %s312 = scalar_lea.vmem %s3, %s311
      $region44: #{seq2seq_transformer_forward.25} parent=39 // pred_fallthru
        _
    $region40: #{seq2seq_transformer_forward.25} parent=5 // pred_fallthru
      _
  $region6: #{seq2seq_transformer_forward.25} parent=0 // loop_footer
    %s13 = sadd.s32 1, %s9
  $region7: #{seq2seq_transformer_forward.25} parent=0 // loop_footer_branch
    %8 = sbr.rel target = $region3
  $region8: #{seq2seq_transformer_forward.25} parent=0 // loop_exit
    _

</llo_original>
